<compile_context>
chip_gen: v5e
topology: v5e:2x2
jax: 0.10.0
libtpu: 0.0.40
codegen_flags: <defaults>
</compile_context>

<pallas_src>
import jax
import jax.numpy as jnp
from jax.experimental import pallas as pl
from jax.experimental.pallas import tpu as pltpu

_H1, _H2, _H3 = 2048, 512, 256
_LANE = 128


def _round_up(a, m):
    return (a + m - 1) // m * m


def _mlp_kernel(x_ref,
                w1_ref, b1_ref,
                w2_ref, b2_ref,
                w3_ref, b3_ref,
                w4_ref, b4_ref,
                o_ref):
    bf16 = jnp.bfloat16
    # fc1 + ReLU  (bf16 x bf16 -> f32 accumulate on the MXU; f32 epilogue)
    h = jnp.dot(x_ref[...].astype(bf16), w1_ref[...],
                preferred_element_type=jnp.float32)
    h = jnp.maximum(h + b1_ref[...], 0.0)
    # fc2 + ReLU
    h = jnp.dot(h.astype(bf16), w2_ref[...],
                preferred_element_type=jnp.float32)
    h = jnp.maximum(h + b2_ref[...], 0.0)
    # fc3 + ReLU
    h = jnp.dot(h.astype(bf16), w3_ref[...],
                preferred_element_type=jnp.float32)
    h = jnp.maximum(h + b3_ref[...], 0.0)
    # output (linear, lane-padded to 128 columns -> lane-dense store)
    y = jnp.dot(h.astype(bf16), w4_ref[...],
                preferred_element_type=jnp.float32)
    o_ref[...] = (y + b4_ref[...]).astype(o_ref.dtype)


def _choose_tb(B):
    """Batch tile size.

    * B <= 128: a single tile (block == full batch dim, no remainder).
    * B  > 128: split into >= 2 grid steps so v7x's second TensorCore gets
      work, capped at 512 rows so the f32 intermediates stay ~6 MiB.
    """
    if B <= 128:
        return B
    return min(512, _round_up(pl.cdiv(B, 2), 8))


def q_model_forward(x, params):
    """x: [B, input_len] float32.  params: dict from init_params (bf16 W,
    f32 b, w4/b4 padded to 128 output lanes, 'out_len' = true output width)."""
    B, in_len = x.shape
    out_len = params["out_len"]
    out_pad = params["w4"].shape[1]          # lane-padded (multiple of 128)

    TB = _choose_tb(B)
    grid = (pl.cdiv(B, TB),)                 # tail block (if any) is masked

    weight_args = (params["w1"], params["b1"],
                   params["w2"], params["b2"],
                   params["w3"], params["b3"],
                   params["w4"], params["b4"])

    # Advisory cost for XLA's scheduler.
    flops = 2 * B * (in_len * _H1 + _H1 * _H2 + _H2 * _H3 + _H3 * out_pad)
    weight_bytes = sum(int(a.size) * a.dtype.itemsize for a in weight_args)
    bytes_accessed = weight_bytes + B * in_len * 4 + B * out_pad * 4

    # VMEM footprint estimate: resident weights (single-buffered), f32 + bf16
    # intermediates at TB rows, double-buffered x / out tiles.  Raise v5e's
    # 16 MiB default scoped limit; stay well under v7x's 64 MiB physical VMEM.
    act_bytes = TB * (_H1 + _H2 + _H3) * 4 + TB * (in_len + _H1 + _H2 + _H3) * 2
    io_bytes = 2 * TB * (in_len + out_pad) * 4
    vmem_limit = int(min(48 << 20,
                         max(32 << 20,
                             2 * (weight_bytes + act_bytes + io_bytes))))

    def build(single_buffer_weights):
        if single_buffer_weights:
            # Constant block index -> one fetch is enough; don't double-buffer.
            resident = lambda a: pl.BlockSpec(a.shape, lambda i: (0, 0),
                                              pipeline_mode=pl.Buffered(1))
        else:
            resident = lambda a: pl.BlockSpec(a.shape, lambda i: (0, 0))
        return pl.pallas_call(
            _mlp_kernel,
            out_shape=jax.ShapeDtypeStruct((B, out_pad), jnp.float32),
            grid_spec=pltpu.PrefetchScalarGridSpec(
                num_scalar_prefetch=0,
                grid=grid,
                in_specs=[pl.BlockSpec((TB, in_len), lambda i: (i, 0))]
                         + [resident(a) for a in weight_args],
                out_specs=pl.BlockSpec((TB, out_pad), lambda i: (i, 0)),
            ),
            compiler_params=pltpu.CompilerParams(
                dimension_semantics=("parallel",),
                vmem_limit_bytes=vmem_limit),
            cost_estimate=pl.CostEstimate(flops=flops,
                                          transcendentals=0,
                                          bytes_accessed=bytes_accessed),
        )

    try:
        out = build(single_buffer_weights=True)(x, *weight_args)
    except Exception:
        # Fallback for JAX versions where pl.Buffered(1) is not accepted:
        # identical kernel, default (double-buffered) resident weights.
        out = build(single_buffer_weights=False)(x, *weight_args)

    return out[:, :out_len]


def init_params(key, input_len, output_len):
    """Deterministic synthetic init (LeCun-ish normal).

    Weights are stored bf16 (streamed dtype), biases f32.  The final layer's
    columns are zero-padded to a multiple of 128 lanes so the kernel's output
    store is lane-dense; the true width is kept in params['out_len']."""
    out_pad = max(_LANE, _round_up(output_len, _LANE))
    dims = [(input_len, _H1), (_H1, _H2), (_H2, _H3), (_H3, output_len)]
    params = {"out_len": output_len}
    for i, (din, dout) in enumerate(dims, start=1):
        key, kw, kb = jax.random.split(key, 3)
        scale = 1.0 / jnp.sqrt(jnp.float32(din))
        w = jax.random.normal(kw, (din, dout), jnp.float32) * scale
        b = jax.random.normal(kb, (1, dout), jnp.float32) * 0.01
        if i == 4 and dout != out_pad:
            w = jnp.pad(w, ((0, 0), (0, out_pad - dout)))
            b = jnp.pad(b, ((0, 0), (0, out_pad - dout)))
        params[f"w{i}"] = w.astype(jnp.bfloat16)
        params[f"b{i}"] = b.astype(jnp.float32)
    return params


def reference_forward(x, p):
    """Pure-JAX reference using the same dtype strategy (bf16 operands,
    f32 accumulate) so the comparison isolates kernel mechanics."""
    bf16 = jnp.bfloat16

    def lin(h, w, b):
        return jnp.dot(h.astype(bf16), w,
                       preferred_element_type=jnp.float32) + b

    h = jnp.maximum(lin(x, p["w1"], p["b1"]), 0.0)
    h = jnp.maximum(lin(h, p["w2"], p["b2"]), 0.0)
    h = jnp.maximum(lin(h, p["w3"], p["b3"]), 0.0)
    y = lin(h, p["w4"], p["b4"])
    return y[:, :p["out_len"]]


if __name__ == "__main__":
    key = jax.random.PRNGKey(0)
    B, input_len, output_len = 8, 32, 8

    kx, kp = jax.random.split(key)
    x = jax.random.normal(kx, (B, input_len), jnp.float32)
    params = init_params(kp, input_len, output_len)

    out = q_model_forward(x, params)
    out = jax.block_until_ready(out)

    ref = reference_forward(x, params)
    assert out.shape == (B, output_len)
    assert jnp.allclose(out, ref, atol=1e-2, rtol=1e-2), "mismatch vs reference"

    print("KERNEL_OK")
</pallas_src>

<mosaic_0001>
module attributes {stable_mosaic.version = 11 : i64} {
  func.func @_mlp_kernel(%arg0: i32, %arg1: memref<8x32xf32, #tpu.memory_space<vmem>>, %arg2: memref<32x2048xbf16, #tpu.memory_space<vmem>>, %arg3: memref<1x2048xf32, #tpu.memory_space<vmem>>, %arg4: memref<2048x512xbf16, #tpu.memory_space<vmem>>, %arg5: memref<1x512xf32, #tpu.memory_space<vmem>>, %arg6: memref<512x256xbf16, #tpu.memory_space<vmem>>, %arg7: memref<1x256xf32, #tpu.memory_space<vmem>>, %arg8: memref<256x128xbf16, #tpu.memory_space<vmem>>, %arg9: memref<1x128xf32, #tpu.memory_space<vmem>>, %arg10: memref<8x128xf32, #tpu.memory_space<vmem>>) attributes {dimension_semantics = [#tpu.dimension_semantics<parallel>], iteration_bounds = array<i64: 1>, scalar_prefetch = 0 : i64, scratch_operands = 0 : i64, tpu.core_type = #tpu.core_type<tc>, window_params = [{transform_indices = @transform_0, window_bounds = array<i64: 8, 32>}, {pipeline_mode = #tpu.pipeline_mode<synchronous>, transform_indices = @transform_1, window_bounds = array<i64: 32, 2048>}, {pipeline_mode = #tpu.pipeline_mode<synchronous>, transform_indices = @transform_2, window_bounds = array<i64: 1, 2048>}, {pipeline_mode = #tpu.pipeline_mode<synchronous>, transform_indices = @transform_3, window_bounds = array<i64: 2048, 512>}, {pipeline_mode = #tpu.pipeline_mode<synchronous>, transform_indices = @transform_4, window_bounds = array<i64: 1, 512>}, {pipeline_mode = #tpu.pipeline_mode<synchronous>, transform_indices = @transform_5, window_bounds = array<i64: 512, 256>}, {pipeline_mode = #tpu.pipeline_mode<synchronous>, transform_indices = @transform_6, window_bounds = array<i64: 1, 256>}, {pipeline_mode = #tpu.pipeline_mode<synchronous>, transform_indices = @transform_7, window_bounds = array<i64: 256, 128>}, {pipeline_mode = #tpu.pipeline_mode<synchronous>, transform_indices = @transform_8, window_bounds = array<i64: 1, 128>}, {transform_indices = @transform_9, window_bounds = array<i64: 8, 128>}]} {
    %c0 = arith.constant 0 : index
    %c0_0 = arith.constant 0 : index
    %0 = vector.load %arg1[%c0, %c0_0] : memref<8x32xf32, #tpu.memory_space<vmem>>, vector<8x32xf32>
    %1 = arith.truncf %0 : vector<8x32xf32> to vector<8x32xbf16>
    %c0_1 = arith.constant 0 : index
    %c0_2 = arith.constant 0 : index
    %2 = vector.load %arg2[%c0_1, %c0_2] : memref<32x2048xbf16, #tpu.memory_space<vmem>>, vector<32x2048xbf16>
    %cst = arith.constant dense<0.000000e+00> : vector<8x2048xf32>
    %3 = tpu.matmul %1, %2, %cst {dimension_numbers = #tpu.dot_dimension_numbers<[1], [0], [0], [1], [0, 0, 1, 1], [], []>} : vector<8x32xbf16>, vector<32x2048xbf16>, vector<8x2048xf32> -> vector<8x2048xf32>
    %c0_3 = arith.constant 0 : index
    %c0_4 = arith.constant 0 : index
    %4 = vector.load %arg3[%c0_3, %c0_4] : memref<1x2048xf32, #tpu.memory_space<vmem>>, vector<1x2048xf32>
    %5 = vector.broadcast %4 : vector<1x2048xf32> to vector<8x2048xf32>
    %6 = arith.addf %3, %5 : vector<8x2048xf32>
    %cst_5 = arith.constant 0.000000e+00 : f32
    %7 = vector.broadcast %cst_5 : f32 to vector<8x2048xf32>
    %8 = arith.maximumf %6, %7 : vector<8x2048xf32>
    %9 = arith.truncf %8 : vector<8x2048xf32> to vector<8x2048xbf16>
    %c0_6 = arith.constant 0 : index
    %c0_7 = arith.constant 0 : index
    %10 = vector.load %arg4[%c0_6, %c0_7] : memref<2048x512xbf16, #tpu.memory_space<vmem>>, vector<2048x512xbf16>
    %cst_8 = arith.constant dense<0.000000e+00> : vector<8x512xf32>
    %11 = tpu.matmul %9, %10, %cst_8 {dimension_numbers = #tpu.dot_dimension_numbers<[1], [0], [0], [1], [0, 0, 1, 1], [], []>} : vector<8x2048xbf16>, vector<2048x512xbf16>, vector<8x512xf32> -> vector<8x512xf32>
    %c0_9 = arith.constant 0 : index
    %c0_10 = arith.constant 0 : index
    %12 = vector.load %arg5[%c0_9, %c0_10] : memref<1x512xf32, #tpu.memory_space<vmem>>, vector<1x512xf32>
    %13 = vector.broadcast %12 : vector<1x512xf32> to vector<8x512xf32>
    %14 = arith.addf %11, %13 : vector<8x512xf32>
    %cst_11 = arith.constant 0.000000e+00 : f32
    %15 = vector.broadcast %cst_11 : f32 to vector<8x512xf32>
    %16 = arith.maximumf %14, %15 : vector<8x512xf32>
    %17 = arith.truncf %16 : vector<8x512xf32> to vector<8x512xbf16>
    %c0_12 = arith.constant 0 : index
    %c0_13 = arith.constant 0 : index
    %18 = vector.load %arg6[%c0_12, %c0_13] : memref<512x256xbf16, #tpu.memory_space<vmem>>, vector<512x256xbf16>
    %cst_14 = arith.constant dense<0.000000e+00> : vector<8x256xf32>
    %19 = tpu.matmul %17, %18, %cst_14 {dimension_numbers = #tpu.dot_dimension_numbers<[1], [0], [0], [1], [0, 0, 1, 1], [], []>} : vector<8x512xbf16>, vector<512x256xbf16>, vector<8x256xf32> -> vector<8x256xf32>
    %c0_15 = arith.constant 0 : index
    %c0_16 = arith.constant 0 : index
    %20 = vector.load %arg7[%c0_15, %c0_16] : memref<1x256xf32, #tpu.memory_space<vmem>>, vector<1x256xf32>
    %21 = vector.broadcast %20 : vector<1x256xf32> to vector<8x256xf32>
    %22 = arith.addf %19, %21 : vector<8x256xf32>
    %cst_17 = arith.constant 0.000000e+00 : f32
    %23 = vector.broadcast %cst_17 : f32 to vector<8x256xf32>
    %24 = arith.maximumf %22, %23 : vector<8x256xf32>
    %25 = arith.truncf %24 : vector<8x256xf32> to vector<8x256xbf16>
    %c0_18 = arith.constant 0 : index
    %c0_19 = arith.constant 0 : index
    %26 = vector.load %arg8[%c0_18, %c0_19] : memref<256x128xbf16, #tpu.memory_space<vmem>>, vector<256x128xbf16>
    %cst_20 = arith.constant dense<0.000000e+00> : vector<8x128xf32>
    %27 = tpu.matmul %25, %26, %cst_20 {dimension_numbers = #tpu.dot_dimension_numbers<[1], [0], [0], [1], [0, 0, 1, 1], [], []>} : vector<8x256xbf16>, vector<256x128xbf16>, vector<8x128xf32> -> vector<8x128xf32>
    %c0_21 = arith.constant 0 : index
    %c0_22 = arith.constant 0 : index
    %28 = vector.load %arg9[%c0_21, %c0_22] : memref<1x128xf32, #tpu.memory_space<vmem>>, vector<1x128xf32>
    %29 = vector.broadcast %28 : vector<1x128xf32> to vector<8x128xf32>
    %30 = arith.addf %27, %29 : vector<8x128xf32>
    %c0_23 = arith.constant 0 : index
    %c0_24 = arith.constant 0 : index
    %31 = vector.load %arg10[%c0_23, %c0_24] : memref<8x128xf32, #tpu.memory_space<vmem>>, vector<8x128xf32>
    tpu.vector_store %arg10[%c0_23, %c0_24], %30 {strides = array<i32>} : memref<8x128xf32, #tpu.memory_space<vmem>>, vector<8x128xf32>,
    return
  }
  func.func @transform_0(%arg0: i32) -> (i32, i32) {
    %c0_i32 = arith.constant 0 : i32
    %c0_i32_0 = arith.constant 0 : i32
    return %arg0, %c0_i32 : i32, i32
  }
  func.func @transform_1(%arg0: i32) -> (i32, i32) {
    %c0_i32 = arith.constant 0 : i32
    %c0_i32_0 = arith.constant 0 : i32
    %c0_i32_1 = arith.constant 0 : i32
    return %c0_i32, %c0_i32_0 : i32, i32
  }
  func.func @transform_2(%arg0: i32) -> (i32, i32) {
    %c0_i32 = arith.constant 0 : i32
    %c0_i32_0 = arith.constant 0 : i32
    %c0_i32_1 = arith.constant 0 : i32
    return %c0_i32, %c0_i32_0 : i32, i32
  }
  func.func @transform_3(%arg0: i32) -> (i32, i32) {
    %c0_i32 = arith.constant 0 : i32
    %c0_i32_0 = arith.constant 0 : i32
    %c0_i32_1 = arith.constant 0 : i32
    return %c0_i32, %c0_i32_0 : i32, i32
  }
  func.func @transform_4(%arg0: i32) -> (i32, i32) {
    %c0_i32 = arith.constant 0 : i32
    %c0_i32_0 = arith.constant 0 : i32
    %c0_i32_1 = arith.constant 0 : i32
    return %c0_i32, %c0_i32_0 : i32, i32
  }
  func.func @transform_5(%arg0: i32) -> (i32, i32) {
    %c0_i32 = arith.constant 0 : i32
    %c0_i32_0 = arith.constant 0 : i32
    %c0_i32_1 = arith.constant 0 : i32
    return %c0_i32, %c0_i32_0 : i32, i32
  }
  func.func @transform_6(%arg0: i32) -> (i32, i32) {
    %c0_i32 = arith.constant 0 : i32
    %c0_i32_0 = arith.constant 0 : i32
    %c0_i32_1 = arith.constant 0 : i32
    return %c0_i32, %c0_i32_0 : i32, i32
  }
  func.func @transform_7(%arg0: i32) -> (i32, i32) {
    %c0_i32 = arith.constant 0 : i32
    %c0_i32_0 = arith.constant 0 : i32
    %c0_i32_1 = arith.constant 0 : i32
    return %c0_i32, %c0_i32_0 : i32, i32
  }
  func.func @transform_8(%arg0: i32) -> (i32, i32) {
    %c0_i32 = arith.constant 0 : i32
    %c0_i32_0 = arith.constant 0 : i32
    %c0_i32_1 = arith.constant 0 : i32
    return %c0_i32, %c0_i32_0 : i32, i32
  }
  func.func @transform_9(%arg0: i32) -> (i32, i32) {
    %c0_i32 = arith.constant 0 : i32
    %c0_i32_0 = arith.constant 0 : i32
    return %arg0, %c0_i32 : i32, i32
  }
}

module attributes {stable_mosaic.version = 11 : i64} {
  func.func @_mlp_kernel(%arg0: i32, %arg1: memref<8x32xf32, #tpu.memory_space<vmem>>, %arg2: memref<32x2048xbf16, #tpu.memory_space<vmem>>, %arg3: memref<1x2048xf32, #tpu.memory_space<vmem>>, %arg4: memref<2048x512xbf16, #tpu.memory_space<vmem>>, %arg5: memref<1x512xf32, #tpu.memory_space<vmem>>, %arg6: memref<512x256xbf16, #tpu.memory_space<vmem>>, %arg7: memref<1x256xf32, #tpu.memory_space<vmem>>, %arg8: memref<256x128xbf16, #tpu.memory_space<vmem>>, %arg9: memref<1x128xf32, #tpu.memory_space<vmem>>, %arg10: memref<8x128xf32, #tpu.memory_space<vmem>>) attributes {dimension_semantics = [#tpu.dimension_semantics<parallel>], iteration_bounds = array<i64: 1>, scalar_prefetch = 0 : i64, scratch_operands = 0 : i64, tpu.core_type = #tpu.core_type<tc>, window_params = [{transform_indices = @transform_0, window_bounds = array<i64: 8, 32>}, {pipeline_mode = #tpu.pipeline_mode<synchronous>, transform_indices = @transform_1, window_bounds = array<i64: 32, 2048>}, {pipeline_mode = #tpu.pipeline_mode<synchronous>, transform_indices = @transform_2, window_bounds = array<i64: 1, 2048>}, {pipeline_mode = #tpu.pipeline_mode<synchronous>, transform_indices = @transform_3, window_bounds = array<i64: 2048, 512>}, {pipeline_mode = #tpu.pipeline_mode<synchronous>, transform_indices = @transform_4, window_bounds = array<i64: 1, 512>}, {pipeline_mode = #tpu.pipeline_mode<synchronous>, transform_indices = @transform_5, window_bounds = array<i64: 512, 256>}, {pipeline_mode = #tpu.pipeline_mode<synchronous>, transform_indices = @transform_6, window_bounds = array<i64: 1, 256>}, {pipeline_mode = #tpu.pipeline_mode<synchronous>, transform_indices = @transform_7, window_bounds = array<i64: 256, 128>}, {pipeline_mode = #tpu.pipeline_mode<synchronous>, transform_indices = @transform_8, window_bounds = array<i64: 1, 128>}, {transform_indices = @transform_9, window_bounds = array<i64: 8, 128>}]} {
    %c0 = arith.constant 0 : index
    %c0_0 = arith.constant 0 : index
    %0 = vector.load %arg1[%c0, %c0_0] : memref<8x32xf32, #tpu.memory_space<vmem>>, vector<8x32xf32>
    %1 = arith.truncf %0 : vector<8x32xf32> to vector<8x32xbf16>
    %c0_1 = arith.constant 0 : index
    %c0_2 = arith.constant 0 : index
    %2 = vector.load %arg2[%c0_1, %c0_2] : memref<32x2048xbf16, #tpu.memory_space<vmem>>, vector<32x2048xbf16>
    %cst = arith.constant dense<0.000000e+00> : vector<8x2048xf32>
    %3 = tpu.matmul %1, %2, %cst {dimension_numbers = #tpu.dot_dimension_numbers<[1], [0], [0], [1], [0, 0, 1, 1], [], []>} : vector<8x32xbf16>, vector<32x2048xbf16>, vector<8x2048xf32> -> vector<8x2048xf32>
    %c0_3 = arith.constant 0 : index
    %c0_4 = arith.constant 0 : index
    %4 = vector.load %arg3[%c0_3, %c0_4] : memref<1x2048xf32, #tpu.memory_space<vmem>>, vector<1x2048xf32>
    %5 = vector.broadcast %4 : vector<1x2048xf32> to vector<8x2048xf32>
    %6 = arith.addf %3, %5 : vector<8x2048xf32>
    %cst_5 = arith.constant 0.000000e+00 : f32
    %7 = vector.broadcast %cst_5 : f32 to vector<8x2048xf32>
    %8 = arith.maximumf %6, %7 : vector<8x2048xf32>
    %9 = arith.truncf %8 : vector<8x2048xf32> to vector<8x2048xbf16>
    %c0_6 = arith.constant 0 : index
    %c0_7 = arith.constant 0 : index
    %10 = vector.load %arg4[%c0_6, %c0_7] : memref<2048x512xbf16, #tpu.memory_space<vmem>>, vector<2048x512xbf16>
    %cst_8 = arith.constant dense<0.000000e+00> : vector<8x512xf32>
    %11 = tpu.matmul %9, %10, %cst_8 {dimension_numbers = #tpu.dot_dimension_numbers<[1], [0], [0], [1], [0, 0, 1, 1], [], []>} : vector<8x2048xbf16>, vector<2048x512xbf16>, vector<8x512xf32> -> vector<8x512xf32>
    %c0_9 = arith.constant 0 : index
    %c0_10 = arith.constant 0 : index
    %12 = vector.load %arg5[%c0_9, %c0_10] : memref<1x512xf32, #tpu.memory_space<vmem>>, vector<1x512xf32>
    %13 = vector.broadcast %12 : vector<1x512xf32> to vector<8x512xf32>
    %14 = arith.addf %11, %13 : vector<8x512xf32>
    %cst_11 = arith.constant 0.000000e+00 : f32
    %15 = vector.broadcast %cst_11 : f32 to vector<8x512xf32>
    %16 = arith.maximumf %14, %15 : vector<8x512xf32>
    %17 = arith.truncf %16 : vector<8x512xf32> to vector<8x512xbf16>
    %c0_12 = arith.constant 0 : index
    %c0_13 = arith.constant 0 : index
    %18 = vector.load %arg6[%c0_12, %c0_13] : memref<512x256xbf16, #tpu.memory_space<vmem>>, vector<512x256xbf16>
    %cst_14 = arith.constant dense<0.000000e+00> : vector<8x256xf32>
    %19 = tpu.matmul %17, %18, %cst_14 {dimension_numbers = #tpu.dot_dimension_numbers<[1], [0], [0], [1], [0, 0, 1, 1], [], []>} : vector<8x512xbf16>, vector<512x256xbf16>, vector<8x256xf32> -> vector<8x256xf32>
    %c0_15 = arith.constant 0 : index
    %c0_16 = arith.constant 0 : index
    %20 = vector.load %arg7[%c0_15, %c0_16] : memref<1x256xf32, #tpu.memory_space<vmem>>, vector<1x256xf32>
    %21 = vector.broadcast %20 : vector<1x256xf32> to vector<8x256xf32>
    %22 = arith.addf %19, %21 : vector<8x256xf32>
    %cst_17 = arith.constant 0.000000e+00 : f32
    %23 = vector.broadcast %cst_17 : f32 to vector<8x256xf32>
    %24 = arith.maximumf %22, %23 : vector<8x256xf32>
    %25 = arith.truncf %24 : vector<8x256xf32> to vector<8x256xbf16>
    %c0_18 = arith.constant 0 : index
    %c0_19 = arith.constant 0 : index
    %26 = vector.load %arg8[%c0_18, %c0_19] : memref<256x128xbf16, #tpu.memory_space<vmem>>, vector<256x128xbf16>
    %cst_20 = arith.constant dense<0.000000e+00> : vector<8x128xf32>
    %27 = tpu.matmul %25, %26, %cst_20 {dimension_numbers = #tpu.dot_dimension_numbers<[1], [0], [0], [1], [0, 0, 1, 1], [], []>} : vector<8x256xbf16>, vector<256x128xbf16>, vector<8x128xf32> -> vector<8x128xf32>
    %c0_21 = arith.constant 0 : index
    %c0_22 = arith.constant 0 : index
    %28 = vector.load %arg9[%c0_21, %c0_22] : memref<1x128xf32, #tpu.memory_space<vmem>>, vector<1x128xf32>
    %29 = vector.broadcast %28 : vector<1x128xf32> to vector<8x128xf32>
    %30 = arith.addf %27, %29 : vector<8x128xf32>
    %c0_23 = arith.constant 0 : index
    %c0_24 = arith.constant 0 : index
    %31 = vector.load %arg10[%c0_23, %c0_24] : memref<8x128xf32, #tpu.memory_space<vmem>>, vector<8x128xf32>
    tpu.vector_store %arg10[%c0_23, %c0_24], %30 {strides = array<i32>} : memref<8x128xf32, #tpu.memory_space<vmem>>, vector<8x128xf32>,
    return
  }
  func.func @transform_0(%arg0: i32) -> (i32, i32) {
    %c0_i32 = arith.constant 0 : i32
    %c0_i32_0 = arith.constant 0 : i32
    return %arg0, %c0_i32 : i32, i32
  }
  func.func @transform_1(%arg0: i32) -> (i32, i32) {
    %c0_i32 = arith.constant 0 : i32
    %c0_i32_0 = arith.constant 0 : i32
    %c0_i32_1 = arith.constant 0 : i32
    return %c0_i32, %c0_i32_0 : i32, i32
  }
  func.func @transform_2(%arg0: i32) -> (i32, i32) {
    %c0_i32 = arith.constant 0 : i32
    %c0_i32_0 = arith.constant 0 : i32
    %c0_i32_1 = arith.constant 0 : i32
    return %c0_i32, %c0_i32_0 : i32, i32
  }
  func.func @transform_3(%arg0: i32) -> (i32, i32) {
    %c0_i32 = arith.constant 0 : i32
    %c0_i32_0 = arith.constant 0 : i32
    %c0_i32_1 = arith.constant 0 : i32
    return %c0_i32, %c0_i32_0 : i32, i32
  }
  func.func @transform_4(%arg0: i32) -> (i32, i32) {
    %c0_i32 = arith.constant 0 : i32
    %c0_i32_0 = arith.constant 0 : i32
    %c0_i32_1 = arith.constant 0 : i32
    return %c0_i32, %c0_i32_0 : i32, i32
  }
  func.func @transform_5(%arg0: i32) -> (i32, i32) {
    %c0_i32 = arith.constant 0 : i32
    %c0_i32_0 = arith.constant 0 : i32
    %c0_i32_1 = arith.constant 0 : i32
    return %c0_i32, %c0_i32_0 : i32, i32
  }
  func.func @transform_6(%arg0: i32) -> (i32, i32) {
    %c0_i32 = arith.constant 0 : i32
    %c0_i32_0 = arith.constant 0 : i32
    %c0_i32_1 = arith.constant 0 : i32
    return %c0_i32, %c0_i32_0 : i32, i32
  }
  func.func @transform_7(%arg0: i32) -> (i32, i32) {
    %c0_i32 = arith.constant 0 : i32
    %c0_i32_0 = arith.constant 0 : i32
    %c0_i32_1 = arith.constant 0 : i32
    return %c0_i32, %c0_i32_0 : i32, i32
  }
  func.func @transform_8(%arg0: i32) -> (i32, i32) {
    %c0_i32 = arith.constant 0 : i32
    %c0_i32_0 = arith.constant 0 : i32
    %c0_i32_1 = arith.constant 0 : i32
    return %c0_i32, %c0_i32_0 : i32, i32
  }
  func.func @transform_9(%arg0: i32) -> (i32, i32) {
    %c0_i32 = arith.constant 0 : i32
    %c0_i32_0 = arith.constant 0 : i32
    return %arg0, %c0_i32 : i32, i32
  }
}

</mosaic_0001>

<llo_original>
// kernel: tpu_custom_call.1
$region0: #{tpu_custom_call.1}
  #allocation0 [shape = 'u32[]', space=smem, size = 0x4, offset = 0x4, fixed_abs, tag = 'smem constant byte address 0x4 - core index']
  #allocation1 [shape = 'u32[72,128]{1,0:T(1,128)}', space=vmem, size = 0x9000, scoped, tag = 'internal scratch']
  %s0 = inlined_call_operand.hbm [shape: f32[8,32], index: 0, kind: input, shape index: {}]
  %s1 = inlined_call_operand.hbm [shape: bf16[32,2048], index: 1, kind: input, shape index: {}]
  %s2 = inlined_call_operand.hbm [shape: f32[1,2048], index: 2, kind: input, shape index: {}]
  %s3 = inlined_call_operand.hbm [shape: bf16[2048,512], index: 3, kind: input, shape index: {}]
  %s4 = inlined_call_operand.hbm [shape: f32[1,512], index: 4, kind: input, shape index: {}]
  %s5 = inlined_call_operand.hbm [shape: bf16[512,256], index: 5, kind: input, shape index: {}]
  %s6 = inlined_call_operand.hbm [shape: f32[1,256], index: 6, kind: input, shape index: {}]
  %s7 = inlined_call_operand.hbm [shape: bf16[256,128], index: 7, kind: input, shape index: {}]
  %s8 = inlined_call_operand.hbm [shape: f32[1,128], index: 8, kind: input, shape index: {}]
  %s9 = inlined_call_operand.hbm [shape: f32[8,128], index: 9, kind: output, shape index: {}]
  %s10 = sld [smem:[#allocation0]]
  $region82: #{tpu_custom_call.1} parent=0
    _
  %s12 = ssub.s32 1, %s10
  %s13 = scalar_select 0, %s12, %s10
  $region1: #{tpu_custom_call.1} parent=0
    #allocation2 [shape = 'u8[4096]{0}', space=vmem, size = 0x1000, scoped, tag = 'input window, operand 0, single buffered']
    #allocation3 [shape = 's32[1]{0}', space=sflag, size = 0x4, scoped, tag = 'scoped memory for tpu_custom_call.1']
    #allocation4 [shape = 's32[1]{0}', space=sflag, size = 0x4, scoped, tag = 'scoped memory for tpu_custom_call.1']
    #allocation5 [shape = 'u8[131072]{0}', space=vmem, size = 0x20000, scoped, tag = 'input window, operand 1, single buffered']
    #allocation6 [shape = 's32[1]{0}', space=sflag, size = 0x4, scoped, tag = 'scoped memory for tpu_custom_call.1']
    #allocation7 [shape = 'u8[8192]{0}', space=vmem, size = 0x2000, scoped, tag = 'input window, operand 2, single buffered']
    #allocation8 [shape = 'u8[2097152]{0}', space=vmem, size = 0x200000, scoped, tag = 'input window, operand 3, single buffered']
    #allocation9 [shape = 's32[1]{0}', space=sflag, size = 0x4, scoped, tag = 'scoped memory for tpu_custom_call.1']
    #allocation10 [shape = 'u8[2048]{0}', space=vmem, size = 0x800, scoped, tag = 'input window, operand 4, single buffered']
    #allocation11 [shape = 'u8[262144]{0}', space=vmem, size = 0x40000, scoped, tag = 'input window, operand 5, single buffered']
    #allocation12 [shape = 's32[1]{0}', space=sflag, size = 0x4, scoped, tag = 'scoped memory for tpu_custom_call.1']
    #allocation13 [shape = 'u8[1024]{0}', space=vmem, size = 0x400, scoped, tag = 'input window, operand 6, single buffered']
    #allocation14 [shape = 'u8[65536]{0}', space=vmem, size = 0x10000, scoped, tag = 'input window, operand 7, single buffered']
    #allocation15 [shape = 's32[1]{0}', space=sflag, size = 0x4, scoped, tag = 'scoped memory for tpu_custom_call.1']
    #allocation16 [shape = 'u8[512]{0}', space=vmem, size = 0x400, scoped, tag = 'input window, operand 8, single buffered']
    #allocation17 [shape = 'u8[4096]{0}', space=vmem, size = 0x1000, scoped, tag = 'output window, operand 0, single buffered']
    %14 = vsyncpa [#allocation3], 0
    %15 = vsyncpa [#allocation6], 0
    %16 = vsyncpa [#allocation9], 0
    %17 = vsyncpa [#allocation12], 0
    %18 = vsyncpa [#allocation15], 0
    %19 = vsyncpa [#allocation4], 0
    // Predicated region
    $region2: #{tpu_custom_call.1} parent=1 // pred_check
      _
    $region3: #{tpu_custom_call.1} parent=1 // pred_check_branch
      %21 = sbr.rel (0) target = $region5
    $region4: #{tpu_custom_call.1} parent=1 // pred_region
      %23 = vsyncadd [#allocation3], 0
      %s25 = sshll.u32 %s0, 4
      %s26 = int_to_ptr.hbm [resolvable:$true] %s25
      %s27 = sshll.u32 [#allocation2], 4
      %s28 = int_to_ptr.vmem [resolvable:$true] %s27
      %30 = dma.hbm_to_vmem [thread:$0]  %s26, 128, %s28, [#allocation3]
    $region5: #{tpu_custom_call.1} parent=1 // pred_fallthru
      _
    // Predicated region
    $region6: #{tpu_custom_call.1} parent=1 // pred_check
      _
    $region7: #{tpu_custom_call.1} parent=1 // pred_check_branch
      %32 = sbr.rel (0) target = $region9
    $region8: #{tpu_custom_call.1} parent=1 // pred_region
      %34 = vsyncadd [#allocation6], 0
      %s35 = sshll.u32 %s1, 4
      %s36 = int_to_ptr.hbm [resolvable:$true] %s35
      %s37 = sshll.u32 [#allocation5], 4
      %s38 = int_to_ptr.vmem [resolvable:$true] %s37
      %43 = dma.hbm_to_vmem [thread:$0]  %s36, 4096, %s38, [#allocation6], 1024, 1024, 64
    $region9: #{tpu_custom_call.1} parent=1 // pred_fallthru
      _
    // Predicated region
    $region10: #{tpu_custom_call.1} parent=1 // pred_check
      _
    $region11: #{tpu_custom_call.1} parent=1 // pred_check_branch
      %45 = sbr.rel (0) target = $region13
    $region12: #{tpu_custom_call.1} parent=1 // pred_region
      %47 = vsyncadd [#allocation6], 0
      %s49 = sshll.u32 %s2, 4
      %s50 = int_to_ptr.hbm [resolvable:$true] %s49
      %s51 = sshll.u32 [#allocation7], 4
      %s52 = int_to_ptr.vmem [resolvable:$true] %s51
      %54 = dma.hbm_to_vmem [thread:$0]  %s50, 256, %s52, [#allocation6]
    $region13: #{tpu_custom_call.1} parent=1 // pred_fallthru
      _
    // Predicated region
    $region14: #{tpu_custom_call.1} parent=1 // pred_check
      _
    $region15: #{tpu_custom_call.1} parent=1 // pred_check_branch
      %56 = sbr.rel (0) target = $region17
    $region16: #{tpu_custom_call.1} parent=1 // pred_region
      %58 = vsyncadd [#allocation9], 0
      %s59 = sshll.u32 %s3, 4
      %s60 = int_to_ptr.hbm [resolvable:$true] %s59
      %s61 = sshll.u32 [#allocation8], 4
      %s62 = int_to_ptr.vmem [resolvable:$true] %s61
      %67 = dma.hbm_to_vmem [thread:$0]  %s60, 65536, %s62, [#allocation9], 256, 256, 16
    $region17: #{tpu_custom_call.1} parent=1 // pred_fallthru
      _
    // Predicated region
    $region18: #{tpu_custom_call.1} parent=1 // pred_check
      _
    $region19: #{tpu_custom_call.1} parent=1 // pred_check_branch
      %69 = sbr.rel (0) target = $region21
    $region20: #{tpu_custom_call.1} parent=1 // pred_region
      %71 = vsyncadd [#allocation9], 0
      %s73 = sshll.u32 %s4, 4
      %s74 = int_to_ptr.hbm [resolvable:$true] %s73
      %s75 = sshll.u32 [#allocation10], 4
      %s76 = int_to_ptr.vmem [resolvable:$true] %s75
      %78 = dma.hbm_to_vmem [thread:$0]  %s74, 64, %s76, [#allocation9]
    $region21: #{tpu_custom_call.1} parent=1 // pred_fallthru
      _
    // Predicated region
    $region22: #{tpu_custom_call.1} parent=1 // pred_check
      _
    $region23: #{tpu_custom_call.1} parent=1 // pred_check_branch
      %80 = sbr.rel (0) target = $region25
    $region24: #{tpu_custom_call.1} parent=1 // pred_region
      %82 = vsyncadd [#allocation12], 0
      %s83 = sshll.u32 %s5, 4
      %s84 = int_to_ptr.hbm [resolvable:$true] %s83
      %s85 = sshll.u32 [#allocation11], 4
      %s86 = int_to_ptr.vmem [resolvable:$true] %s85
      %91 = dma.hbm_to_vmem [thread:$0]  %s84, 8192, %s86, [#allocation12], 128, 128, 8
    $region25: #{tpu_custom_call.1} parent=1 // pred_fallthru
      _
    // Predicated region
    $region26: #{tpu_custom_call.1} parent=1 // pred_check
      _
    $region27: #{tpu_custom_call.1} parent=1 // pred_check_branch
      %93 = sbr.rel (0) target = $region29
    $region28: #{tpu_custom_call.1} parent=1 // pred_region
      %95 = vsyncadd [#allocation12], 0
      %s97 = sshll.u32 %s6, 4
      %s98 = int_to_ptr.hbm [resolvable:$true] %s97
      %s99 = sshll.u32 [#allocation13], 4
      %s100 = int_to_ptr.vmem [resolvable:$true] %s99
      %102 = dma.hbm_to_vmem [thread:$0]  %s98, 32, %s100, [#allocation12]
    $region29: #{tpu_custom_call.1} parent=1 // pred_fallthru
      _
    // Predicated region
    $region30: #{tpu_custom_call.1} parent=1 // pred_check
      _
    $region31: #{tpu_custom_call.1} parent=1 // pred_check_branch
      %104 = sbr.rel (0) target = $region33
    $region32: #{tpu_custom_call.1} parent=1 // pred_region
      %106 = vsyncadd [#allocation15], 0
      %s107 = sshll.u32 %s7, 4
      %s108 = int_to_ptr.hbm [resolvable:$true] %s107
      %s109 = sshll.u32 [#allocation14], 4
      %s110 = int_to_ptr.vmem [resolvable:$true] %s109
      %115 = dma.hbm_to_vmem [thread:$0]  %s108, 2048, %s110, [#allocation15], 64, 64, 4
    $region33: #{tpu_custom_call.1} parent=1 // pred_fallthru
      _
    // Predicated region
    $region34: #{tpu_custom_call.1} parent=1 // pred_check
      _
    $region35: #{tpu_custom_call.1} parent=1 // pred_check_branch
      %117 = sbr.rel (0) target = $region37
    $region36: #{tpu_custom_call.1} parent=1 // pred_region
      %119 = vsyncadd [#allocation15], 0
      %s121 = sshll.u32 %s8, 4
      %s122 = int_to_ptr.hbm [resolvable:$true] %s121
      %s123 = sshll.u32 [#allocation16], 4
      %s124 = int_to_ptr.vmem [resolvable:$true] %s123
      %126 = dma.hbm_to_vmem [thread:$0]  %s122, 16, %s124, [#allocation15]
    $region37: #{tpu_custom_call.1} parent=1 // pred_fallthru
      _
    // Predicated region
    $region38: #{tpu_custom_call.1} parent=1 // pred_check
      _
    $region39: #{tpu_custom_call.1} parent=1 // pred_check_branch
      %128 = sbr.rel (0) target = $region41
    $region40: #{tpu_custom_call.1} parent=1 // pred_region
      %130 = dma.done [#allocation3], 128
    $region41: #{tpu_custom_call.1} parent=1 // pred_fallthru
      _
    // Predicated region
    $region42: #{tpu_custom_call.1} parent=1 // pred_check
      _
    $region43: #{tpu_custom_call.1} parent=1 // pred_check_branch
      %132 = sbr.rel (0) target = $region45
    $region44: #{tpu_custom_call.1} parent=1 // pred_region
      %134 = dma.done [#allocation6], 4096
    $region45: #{tpu_custom_call.1} parent=1 // pred_fallthru
      _
    // Predicated region
    $region46: #{tpu_custom_call.1} parent=1 // pred_check
      _
    $region47: #{tpu_custom_call.1} parent=1 // pred_check_branch
      %136 = sbr.rel (0) target = $region49
    $region48: #{tpu_custom_call.1} parent=1 // pred_region
      %138 = dma.done [#allocation6], 256
    $region49: #{tpu_custom_call.1} parent=1 // pred_fallthru
      _
    // Predicated region
    $region50: #{tpu_custom_call.1} parent=1 // pred_check
      _
    $region51: #{tpu_custom_call.1} parent=1 // pred_check_branch
      %140 = sbr.rel (0) target = $region53
    $region52: #{tpu_custom_call.1} parent=1 // pred_region
      %142 = dma.done [#allocation9], 65536
    $region53: #{tpu_custom_call.1} parent=1 // pred_fallthru
      _
    // Predicated region
    $region54: #{tpu_custom_call.1} parent=1 // pred_check
      _
    $region55: #{tpu_custom_call.1} parent=1 // pred_check_branch
      %144 = sbr.rel (0) target = $region57
    $region56: #{tpu_custom_call.1} parent=1 // pred_region
      %146 = dma.done [#allocation9], 64
    $region57: #{tpu_custom_call.1} parent=1 // pred_fallthru
      _
    // Predicated region
    $region58: #{tpu_custom_call.1} parent=1 // pred_check
      _
    $region59: #{tpu_custom_call.1} parent=1 // pred_check_branch
      %148 = sbr.rel (0) target = $region61
    $region60: #{tpu_custom_call.1} parent=1 // pred_region
      %150 = dma.done [#allocation12], 8192
    $region61: #{tpu_custom_call.1} parent=1 // pred_fallthru
      _
    // Predicated region
    $region62: #{tpu_custom_call.1} parent=1 // pred_check
      _
    $region63: #{tpu_custom_call.1} parent=1 // pred_check_branch
      %152 = sbr.rel (0) target = $region65
    $region64: #{tpu_custom_call.1} parent=1 // pred_region
      %154 = dma.done [#allocation12], 32
    $region65: #{tpu_custom_call.1} parent=1 // pred_fallthru
      _
    // Predicated region
    $region66: #{tpu_custom_call.1} parent=1 // pred_check
      _
    $region67: #{tpu_custom_call.1} parent=1 // pred_check_branch
      %156 = sbr.rel (0) target = $region69
    $region68: #{tpu_custom_call.1} parent=1 // pred_region
      %158 = dma.done [#allocation15], 2048
    $region69: #{tpu_custom_call.1} parent=1 // pred_fallthru
      _
    // Predicated region
    $region70: #{tpu_custom_call.1} parent=1 // pred_check
      _
    $region71: #{tpu_custom_call.1} parent=1 // pred_check_branch
      %160 = sbr.rel (0) target = $region73
    $region72: #{tpu_custom_call.1} parent=1 // pred_region
      %162 = dma.done [#allocation15], 16
    $region73: #{tpu_custom_call.1} parent=1 // pred_fallthru
      _
    %v164 = vld [vmem:[#allocation2] sm:$0xff]
    %v165 = vpack.c.bf16 %v164, %v164
    %v166 = vld [vmem:[#allocation5] sm:$0xff]
    %v167 = vld [vmem:[#allocation5 + $0x8] sm:$0xff]
    %v168 = vld [vmem:[#allocation5 + $0x10] sm:$0xff]
    %v169 = vld [vmem:[#allocation5 + $0x18] sm:$0xff]
    %v170 = vld [vmem:[#allocation5 + $0x20] sm:$0xff]
    %v171 = vld [vmem:[#allocation5 + $0x28] sm:$0xff]
    %v172 = vld [vmem:[#allocation5 + $0x30] sm:$0xff]
    %v173 = vld [vmem:[#allocation5 + $0x38] sm:$0xff]
    %v174 = vld [vmem:[#allocation5 + $0x40] sm:$0xff]
    %v175 = vld [vmem:[#allocation5 + $0x48] sm:$0xff]
    %v176 = vld [vmem:[#allocation5 + $0x50] sm:$0xff]
    %v177 = vld [vmem:[#allocation5 + $0x58] sm:$0xff]
    %v178 = vld [vmem:[#allocation5 + $0x60] sm:$0xff]
    %v179 = vld [vmem:[#allocation5 + $0x68] sm:$0xff]
    %v180 = vld [vmem:[#allocation5 + $0x70] sm:$0xff]
    %v181 = vld [vmem:[#allocation5 + $0x78] sm:$0xff]
    %v182 = vld [vmem:[#allocation5 + $0x80] sm:$0xff]
    %v183 = vld [vmem:[#allocation5 + $0x88] sm:$0xff]
    %v184 = vld [vmem:[#allocation5 + $0x90] sm:$0xff]
    %v185 = vld [vmem:[#allocation5 + $0x98] sm:$0xff]
    %v186 = vld [vmem:[#allocation5 + $0xa0] sm:$0xff]
    %v187 = vld [vmem:[#allocation5 + $0xa8] sm:$0xff]
    %v188 = vld [vmem:[#allocation5 + $0xb0] sm:$0xff]
    %v189 = vld [vmem:[#allocation5 + $0xb8] sm:$0xff]
    %v190 = vld [vmem:[#allocation5 + $0xc0] sm:$0xff]
    %v191 = vld [vmem:[#allocation5 + $0xc8] sm:$0xff]
    %v192 = vld [vmem:[#allocation5 + $0xd0] sm:$0xff]
    %v193 = vld [vmem:[#allocation5 + $0xd8] sm:$0xff]
    %v194 = vld [vmem:[#allocation5 + $0xe0] sm:$0xff]
    %v195 = vld [vmem:[#allocation5 + $0xe8] sm:$0xff]
    %v196 = vld [vmem:[#allocation5 + $0xf0] sm:$0xff]
    %v197 = vld [vmem:[#allocation5 + $0xf8] sm:$0xff]
    %v198 = vld [vmem:[#allocation7] sm:$0xff]
    %v199 = vld [vmem:[#allocation7 + $0x8] sm:$0xff]
    %v202 = vperm.slane %v198, 0
    %v203 = vperm.slane %v198, 1
    %v204 = vperm.slane %v198, 2
    %v205 = vperm.slane %v198, 3
    %v206 = vperm.slane %v198, 4
    %v207 = vperm.slane %v198, 5
    %v208 = vperm.slane %v198, 6
    %v209 = vperm.slane %v198, 7
    %v210 = vperm.slane %v199, 0
    %v211 = vperm.slane %v199, 1
    %v212 = vperm.slane %v199, 2
    %v213 = vperm.slane %v199, 3
    %v214 = vperm.slane %v199, 4
    %v215 = vperm.slane %v199, 5
    %v216 = vperm.slane %v199, 6
    %v217 = vperm.slane %v199, 7
    %v266 = vunpack.c.l.b16 %v166
    %v267 = vunpack.c.h.b16 %v166
    %v268 = vunpack.c.l.b16 %v167
    %v269 = vunpack.c.h.b16 %v167
    %v270 = vunpack.c.l.b16 %v168
    %v271 = vunpack.c.h.b16 %v168
    %v272 = vunpack.c.l.b16 %v169
    %v273 = vunpack.c.h.b16 %v169
    %v274 = vunpack.c.l.b16 %v170
    %v275 = vunpack.c.h.b16 %v170
    %v276 = vunpack.c.l.b16 %v171
    %v277 = vunpack.c.h.b16 %v171
    %v278 = vunpack.c.l.b16 %v172
    %v279 = vunpack.c.h.b16 %v172
    %v280 = vunpack.c.l.b16 %v173
    %v281 = vunpack.c.h.b16 %v173
    %v282 = vunpack.c.l.b16 %v174
    %v283 = vunpack.c.h.b16 %v174
    %v284 = vunpack.c.l.b16 %v175
    %v285 = vunpack.c.h.b16 %v175
    %v286 = vunpack.c.l.b16 %v176
    %v287 = vunpack.c.h.b16 %v176
    %v288 = vunpack.c.l.b16 %v177
    %v289 = vunpack.c.h.b16 %v177
    %v290 = vunpack.c.l.b16 %v178
    %v291 = vunpack.c.h.b16 %v178
    %v292 = vunpack.c.l.b16 %v179
    %v293 = vunpack.c.h.b16 %v179
    %v294 = vunpack.c.l.b16 %v180
    %v295 = vunpack.c.h.b16 %v180
    %v296 = vunpack.c.l.b16 %v181
    %v297 = vunpack.c.h.b16 %v181
    %v298 = vunpack.c.l.b16 %v182
    %v299 = vunpack.c.h.b16 %v182
    %v300 = vunpack.c.l.b16 %v183
    %v301 = vunpack.c.h.b16 %v183
    %v302 = vunpack.c.l.b16 %v184
    %v303 = vunpack.c.h.b16 %v184
    %v304 = vunpack.c.l.b16 %v185
    %v305 = vunpack.c.h.b16 %v185
    %v306 = vunpack.c.l.b16 %v186
    %v307 = vunpack.c.h.b16 %v186
    %v308 = vunpack.c.l.b16 %v187
    %v309 = vunpack.c.h.b16 %v187
    %v310 = vunpack.c.l.b16 %v188
    %v311 = vunpack.c.h.b16 %v188
    %v312 = vunpack.c.l.b16 %v189
    %v313 = vunpack.c.h.b16 %v189
    %v314 = vunpack.c.l.b16 %v190
    %v315 = vunpack.c.h.b16 %v190
    %v316 = vunpack.c.l.b16 %v191
    %v317 = vunpack.c.h.b16 %v191
    %v318 = vunpack.c.l.b16 %v192
    %v319 = vunpack.c.h.b16 %v192
    %v320 = vunpack.c.l.b16 %v193
    %v321 = vunpack.c.h.b16 %v193
    %v322 = vunpack.c.l.b16 %v194
    %v323 = vunpack.c.h.b16 %v194
    %v324 = vunpack.c.l.b16 %v195
    %v325 = vunpack.c.h.b16 %v195
    %v326 = vunpack.c.l.b16 %v196
    %v327 = vunpack.c.h.b16 %v196
    %v328 = vunpack.c.l.b16 %v197
    %v329 = vunpack.c.h.b16 %v197
    %v330 = vpack.c.b16 %v282, %v266
    %v331 = vpack.c.b16 %v283, %v267
    %v332 = vpack.c.b16 %v284, %v268
    %v333 = vpack.c.b16 %v285, %v269
    %v334 = vpack.c.b16 %v286, %v270
    %v335 = vpack.c.b16 %v287, %v271
    %v336 = vpack.c.b16 %v288, %v272
    %v337 = vpack.c.b16 %v289, %v273
    %v338 = vpack.c.b16 %v290, %v274
    %v339 = vpack.c.b16 %v291, %v275
    %v340 = vpack.c.b16 %v292, %v276
    %v341 = vpack.c.b16 %v293, %v277
    %v342 = vpack.c.b16 %v294, %v278
    %v343 = vpack.c.b16 %v295, %v279
    %v344 = vpack.c.b16 %v296, %v280
    %v345 = vpack.c.b16 %v297, %v281
    %v346 = vpack.c.b16 %v314, %v298
    %v347 = vpack.c.b16 %v315, %v299
    %v348 = vpack.c.b16 %v316, %v300
    %v349 = vpack.c.b16 %v317, %v301
    %v350 = vpack.c.b16 %v318, %v302
    %v351 = vpack.c.b16 %v319, %v303
    %v352 = vpack.c.b16 %v320, %v304
    %v353 = vpack.c.b16 %v321, %v305
    %v354 = vpack.c.b16 %v322, %v306
    %v355 = vpack.c.b16 %v323, %v307
    %v356 = vpack.c.b16 %v324, %v308
    %v357 = vpack.c.b16 %v325, %v309
    %v358 = vpack.c.b16 %v326, %v310
    %v359 = vpack.c.b16 %v327, %v311
    %v360 = vpack.c.b16 %v328, %v312
    %v361 = vpack.c.b16 %v329, %v313
    %vm394 = vcmask 261120
    %v396 = vsel %vm394, %v165, 0
    %398 = vmatpush.bf16.msra.mxu0 0
    %399 = vmatpush.bf16.msra.mxu0 0
    %400 = vmatpush.bf16.msra.mxu0 0
    %401 = vmatpush.bf16.msra.mxu0 0
    %402 = vmatpush.bf16.msra.mxu0 0
    %403 = vmatpush.bf16.msra.mxu0 0
    %404 = vmatpush.bf16.msra.mxu0 %v346
    %405 = vmatpush.bf16.msra.mxu0 %v330
    %406 = vmatmul.bf16.gmra.mxu0 %v396
    %v407 = vpop.f32.mrf.mxu0
    %v408 = vadd.f32 %v202, %v407
    %v409 = vpop.f32.mrf.mxu0
    %410 = vdwg.mxu0
    %411 = vmatpush.bf16.msra.mxu0 0
    %412 = vmatpush.bf16.msra.mxu0 0
    %413 = vmatpush.bf16.msra.mxu0 0
    %414 = vmatpush.bf16.msra.mxu0 0
    %415 = vmatpush.bf16.msra.mxu0 0
    %416 = vmatpush.bf16.msra.mxu0 0
    %417 = vmatpush.bf16.msra.mxu0 %v347
    %418 = vmatpush.bf16.msra.mxu0 %v331
    %419 = vmatmul.bf16.gmra.mxu0 %v396
    %v420 = vpop.f32.mrf.mxu0
    %v421 = vadd.f32 %v203, %v420
    %v422 = vpop.f32.mrf.mxu0
    %423 = vdwg.mxu0
    %424 = vmatpush.bf16.msra.mxu0 0
    %425 = vmatpush.bf16.msra.mxu0 0
    %426 = vmatpush.bf16.msra.mxu0 0
    %427 = vmatpush.bf16.msra.mxu0 0
    %428 = vmatpush.bf16.msra.mxu0 0
    %429 = vmatpush.bf16.msra.mxu0 0
    %430 = vmatpush.bf16.msra.mxu0 %v348
    %431 = vmatpush.bf16.msra.mxu0 %v332
    %432 = vmatmul.bf16.gmra.mxu0 %v396
    %v433 = vpop.f32.mrf.mxu0
    %v434 = vadd.f32 %v204, %v433
    %v435 = vpop.f32.mrf.mxu0
    %436 = vdwg.mxu0
    %437 = vmatpush.bf16.msra.mxu0 0
    %438 = vmatpush.bf16.msra.mxu0 0
    %439 = vmatpush.bf16.msra.mxu0 0
    %440 = vmatpush.bf16.msra.mxu0 0
    %441 = vmatpush.bf16.msra.mxu0 0
    %442 = vmatpush.bf16.msra.mxu0 0
    %443 = vmatpush.bf16.msra.mxu0 %v349
    %444 = vmatpush.bf16.msra.mxu0 %v333
    %445 = vmatmul.bf16.gmra.mxu0 %v396
    %v446 = vpop.f32.mrf.mxu0
    %v447 = vadd.f32 %v205, %v446
    %v448 = vpop.f32.mrf.mxu0
    %449 = vdwg.mxu0
    %450 = vmatpush.bf16.msra.mxu0 0
    %451 = vmatpush.bf16.msra.mxu0 0
    %452 = vmatpush.bf16.msra.mxu0 0
    %453 = vmatpush.bf16.msra.mxu0 0
    %454 = vmatpush.bf16.msra.mxu0 0
    %455 = vmatpush.bf16.msra.mxu0 0
    %456 = vmatpush.bf16.msra.mxu0 %v350
    %457 = vmatpush.bf16.msra.mxu0 %v334
    %458 = vmatmul.bf16.gmra.mxu0 %v396
    %v459 = vpop.f32.mrf.mxu0
    %v460 = vadd.f32 %v206, %v459
    %v461 = vpop.f32.mrf.mxu0
    %462 = vdwg.mxu0
    %463 = vmatpush.bf16.msra.mxu0 0
    %464 = vmatpush.bf16.msra.mxu0 0
    %465 = vmatpush.bf16.msra.mxu0 0
    %466 = vmatpush.bf16.msra.mxu0 0
    %467 = vmatpush.bf16.msra.mxu0 0
    %468 = vmatpush.bf16.msra.mxu0 0
    %469 = vmatpush.bf16.msra.mxu0 %v351
    %470 = vmatpush.bf16.msra.mxu0 %v335
    %471 = vmatmul.bf16.gmra.mxu0 %v396
    %v472 = vpop.f32.mrf.mxu0
    %v473 = vadd.f32 %v207, %v472
    %v474 = vpop.f32.mrf.mxu0
    %475 = vdwg.mxu0
    %476 = vmatpush.bf16.msra.mxu0 0
    %477 = vmatpush.bf16.msra.mxu0 0
    %478 = vmatpush.bf16.msra.mxu0 0
    %479 = vmatpush.bf16.msra.mxu0 0
    %480 = vmatpush.bf16.msra.mxu0 0
    %481 = vmatpush.bf16.msra.mxu0 0
    %482 = vmatpush.bf16.msra.mxu0 %v352
    %483 = vmatpush.bf16.msra.mxu0 %v336
    %484 = vmatmul.bf16.gmra.mxu0 %v396
    %v485 = vpop.f32.mrf.mxu0
    %v486 = vadd.f32 %v208, %v485
    %v487 = vpop.f32.mrf.mxu0
    %488 = vdwg.mxu0
    %489 = vmatpush.bf16.msra.mxu0 0
    %490 = vmatpush.bf16.msra.mxu0 0
    %491 = vmatpush.bf16.msra.mxu0 0
    %492 = vmatpush.bf16.msra.mxu0 0
    %493 = vmatpush.bf16.msra.mxu0 0
    %494 = vmatpush.bf16.msra.mxu0 0
    %495 = vmatpush.bf16.msra.mxu0 %v353
    %496 = vmatpush.bf16.msra.mxu0 %v337
    %497 = vmatmul.bf16.gmra.mxu0 %v396
    %v498 = vpop.f32.mrf.mxu0
    %v499 = vadd.f32 %v209, %v498
    %v500 = vpop.f32.mrf.mxu0
    %501 = vdwg.mxu0
    %502 = vmatpush.bf16.msra.mxu0 0
    %503 = vmatpush.bf16.msra.mxu0 0
    %504 = vmatpush.bf16.msra.mxu0 0
    %505 = vmatpush.bf16.msra.mxu0 0
    %506 = vmatpush.bf16.msra.mxu0 0
    %507 = vmatpush.bf16.msra.mxu0 0
    %508 = vmatpush.bf16.msra.mxu0 %v354
    %509 = vmatpush.bf16.msra.mxu0 %v338
    %510 = vmatmul.bf16.gmra.mxu0 %v396
    %v511 = vpop.f32.mrf.mxu0
    %v512 = vadd.f32 %v210, %v511
    %v513 = vpop.f32.mrf.mxu0
    %514 = vdwg.mxu0
    %515 = vmatpush.bf16.msra.mxu0 0
    %516 = vmatpush.bf16.msra.mxu0 0
    %517 = vmatpush.bf16.msra.mxu0 0
    %518 = vmatpush.bf16.msra.mxu0 0
    %519 = vmatpush.bf16.msra.mxu0 0
    %520 = vmatpush.bf16.msra.mxu0 0
    %521 = vmatpush.bf16.msra.mxu0 %v355
    %522 = vmatpush.bf16.msra.mxu0 %v339
    %523 = vmatmul.bf16.gmra.mxu0 %v396
    %v524 = vpop.f32.mrf.mxu0
    %v525 = vadd.f32 %v211, %v524
    %v526 = vpop.f32.mrf.mxu0
    %527 = vdwg.mxu0
    %528 = vmatpush.bf16.msra.mxu0 0
    %529 = vmatpush.bf16.msra.mxu0 0
    %530 = vmatpush.bf16.msra.mxu0 0
    %531 = vmatpush.bf16.msra.mxu0 0
    %532 = vmatpush.bf16.msra.mxu0 0
    %533 = vmatpush.bf16.msra.mxu0 0
    %534 = vmatpush.bf16.msra.mxu0 %v356
    %535 = vmatpush.bf16.msra.mxu0 %v340
    %536 = vmatmul.bf16.gmra.mxu0 %v396
    %v537 = vpop.f32.mrf.mxu0
    %v538 = vadd.f32 %v212, %v537
    %v539 = vpop.f32.mrf.mxu0
    %540 = vdwg.mxu0
    %541 = vmatpush.bf16.msra.mxu0 0
    %542 = vmatpush.bf16.msra.mxu0 0
    %543 = vmatpush.bf16.msra.mxu0 0
    %544 = vmatpush.bf16.msra.mxu0 0
    %545 = vmatpush.bf16.msra.mxu0 0
    %546 = vmatpush.bf16.msra.mxu0 0
    %547 = vmatpush.bf16.msra.mxu0 %v357
    %548 = vmatpush.bf16.msra.mxu0 %v341
    %549 = vmatmul.bf16.gmra.mxu0 %v396
    %v550 = vpop.f32.mrf.mxu0
    %v551 = vadd.f32 %v213, %v550
    %v552 = vpop.f32.mrf.mxu0
    %553 = vdwg.mxu0
    %554 = vmatpush.bf16.msra.mxu0 0
    %555 = vmatpush.bf16.msra.mxu0 0
    %556 = vmatpush.bf16.msra.mxu0 0
    %557 = vmatpush.bf16.msra.mxu0 0
    %558 = vmatpush.bf16.msra.mxu0 0
    %559 = vmatpush.bf16.msra.mxu0 0
    %560 = vmatpush.bf16.msra.mxu0 %v358
    %561 = vmatpush.bf16.msra.mxu0 %v342
    %562 = vmatmul.bf16.gmra.mxu0 %v396
    %v563 = vpop.f32.mrf.mxu0
    %v564 = vadd.f32 %v214, %v563
    %v565 = vpop.f32.mrf.mxu0
    %566 = vdwg.mxu0
    %567 = vmatpush.bf16.msra.mxu0 0
    %568 = vmatpush.bf16.msra.mxu0 0
    %569 = vmatpush.bf16.msra.mxu0 0
    %570 = vmatpush.bf16.msra.mxu0 0
    %571 = vmatpush.bf16.msra.mxu0 0
    %572 = vmatpush.bf16.msra.mxu0 0
    %573 = vmatpush.bf16.msra.mxu0 %v359
    %574 = vmatpush.bf16.msra.mxu0 %v343
    %575 = vmatmul.bf16.gmra.mxu0 %v396
    %v576 = vpop.f32.mrf.mxu0
    %v577 = vadd.f32 %v215, %v576
    %v578 = vpop.f32.mrf.mxu0
    %579 = vdwg.mxu0
    %580 = vmatpush.bf16.msra.mxu0 0
    %581 = vmatpush.bf16.msra.mxu0 0
    %582 = vmatpush.bf16.msra.mxu0 0
    %583 = vmatpush.bf16.msra.mxu0 0
    %584 = vmatpush.bf16.msra.mxu0 0
    %585 = vmatpush.bf16.msra.mxu0 0
    %586 = vmatpush.bf16.msra.mxu0 %v360
    %587 = vmatpush.bf16.msra.mxu0 %v344
    %588 = vmatmul.bf16.gmra.mxu0 %v396
    %v589 = vpop.f32.mrf.mxu0
    %v590 = vadd.f32 %v216, %v589
    %v591 = vpop.f32.mrf.mxu0
    %592 = vdwg.mxu0
    %593 = vmatpush.bf16.msra.mxu0 0
    %594 = vmatpush.bf16.msra.mxu0 0
    %595 = vmatpush.bf16.msra.mxu0 0
    %596 = vmatpush.bf16.msra.mxu0 0
    %597 = vmatpush.bf16.msra.mxu0 0
    %598 = vmatpush.bf16.msra.mxu0 0
    %599 = vmatpush.bf16.msra.mxu0 %v361
    %600 = vmatpush.bf16.msra.mxu0 %v345
    %601 = vmatmul.bf16.gmra.mxu0 %v396
    %v602 = vpop.f32.mrf.mxu0
    %v603 = vadd.f32 %v217, %v602
    %v604 = vpop.f32.mrf.mxu0
    %605 = vdwg.mxu0
    %v606 = vmax.f32 %v408, 0.0
    %v607 = vmax.f32 %v421, 0.0
    %v608 = vmax.f32 %v434, 0.0
    %v609 = vmax.f32 %v447, 0.0
    %v610 = vmax.f32 %v460, 0.0
    %v611 = vmax.f32 %v473, 0.0
    %v612 = vmax.f32 %v486, 0.0
    %v613 = vmax.f32 %v499, 0.0
    %v614 = vmax.f32 %v512, 0.0
    %v615 = vmax.f32 %v525, 0.0
    %v616 = vmax.f32 %v538, 0.0
    %v617 = vmax.f32 %v551, 0.0
    %v618 = vmax.f32 %v564, 0.0
    %v619 = vmax.f32 %v577, 0.0
    %v620 = vmax.f32 %v590, 0.0
    %v621 = vmax.f32 %v603, 0.0
    %v622 = vpack.c.bf16 %v606, %v606
    %v623 = vpack.c.bf16 %v607, %v607
    %v624 = vpack.c.bf16 %v608, %v608
    %v625 = vpack.c.bf16 %v609, %v609
    %v626 = vpack.c.bf16 %v610, %v610
    %v627 = vpack.c.bf16 %v611, %v611
    %v628 = vpack.c.bf16 %v612, %v612
    %v629 = vpack.c.bf16 %v613, %v613
    %v630 = vpack.c.bf16 %v614, %v614
    %v631 = vpack.c.bf16 %v615, %v615
    %v632 = vpack.c.bf16 %v616, %v616
    %v633 = vpack.c.bf16 %v617, %v617
    %v634 = vpack.c.bf16 %v618, %v618
    %v635 = vpack.c.bf16 %v619, %v619
    %v636 = vpack.c.bf16 %v620, %v620
    %v637 = vpack.c.bf16 %v621, %v621
    %v638 = vld [vmem:[#allocation8] sm:$0xff]
    %v639 = vld [vmem:[#allocation8 + $0x8] sm:$0xff]
    %v640 = vld [vmem:[#allocation8 + $0x10] sm:$0xff]
    %v641 = vld [vmem:[#allocation8 + $0x18] sm:$0xff]
    %v642 = vld [vmem:[#allocation8 + $0x20] sm:$0xff]
    %v643 = vld [vmem:[#allocation8 + $0x28] sm:$0xff]
    %v644 = vld [vmem:[#allocation8 + $0x30] sm:$0xff]
    %v645 = vld [vmem:[#allocation8 + $0x38] sm:$0xff]
    %v646 = vld [vmem:[#allocation8 + $0x40] sm:$0xff]
    %v647 = vld [vmem:[#allocation8 + $0x48] sm:$0xff]
    %v648 = vld [vmem:[#allocation8 + $0x50] sm:$0xff]
    %v649 = vld [vmem:[#allocation8 + $0x58] sm:$0xff]
    %v650 = vld [vmem:[#allocation8 + $0x60] sm:$0xff]
    %v651 = vld [vmem:[#allocation8 + $0x68] sm:$0xff]
    %v652 = vld [vmem:[#allocation8 + $0x70] sm:$0xff]
    %v653 = vld [vmem:[#allocation8 + $0x78] sm:$0xff]
    %v654 = vld [vmem:[#allocation8 + $0x80] sm:$0xff]
    %v655 = vld [vmem:[#allocation8 + $0x88] sm:$0xff]
    %v656 = vld [vmem:[#allocation8 + $0x90] sm:$0xff]
    %v657 = vld [vmem:[#allocation8 + $0x98] sm:$0xff]
    %v658 = vld [vmem:[#allocation8 + $0xa0] sm:$0xff]
    %v659 = vld [vmem:[#allocation8 + $0xa8] sm:$0xff]
    %v660 = vld [vmem:[#allocation8 + $0xb0] sm:$0xff]
    %v661 = vld [vmem:[#allocation8 + $0xb8] sm:$0xff]
    %v662 = vld [vmem:[#allocation8 + $0xc0] sm:$0xff]
    %v663 = vld [vmem:[#allocation8 + $0xc8] sm:$0xff]
    %v664 = vld [vmem:[#allocation8 + $0xd0] sm:$0xff]
    %v665 = vld [vmem:[#allocation8 + $0xd8] sm:$0xff]
    %v666 = vld [vmem:[#allocation8 + $0xe0] sm:$0xff]
    %v667 = vld [vmem:[#allocation8 + $0xe8] sm:$0xff]
    %v668 = vld [vmem:[#allocation8 + $0xf0] sm:$0xff]
    %v669 = vld [vmem:[#allocation8 + $0xf8] sm:$0xff]
    %v670 = vld [vmem:[#allocation8 + $0x100] sm:$0xff]
    %v671 = vld [vmem:[#allocation8 + $0x108] sm:$0xff]
    %v672 = vld [vmem:[#allocation8 + $0x110] sm:$0xff]
    %v673 = vld [vmem:[#allocation8 + $0x118] sm:$0xff]
    %v674 = vld [vmem:[#allocation8 + $0x120] sm:$0xff]
    %v675 = vld [vmem:[#allocation8 + $0x128] sm:$0xff]
    %v676 = vld [vmem:[#allocation8 + $0x130] sm:$0xff]
    %v677 = vld [vmem:[#allocation8 + $0x138] sm:$0xff]
    %v678 = vld [vmem:[#allocation8 + $0x140] sm:$0xff]
    %v679 = vld [vmem:[#allocation8 + $0x148] sm:$0xff]
    %v680 = vld [vmem:[#allocation8 + $0x150] sm:$0xff]
    %v681 = vld [vmem:[#allocation8 + $0x158] sm:$0xff]
    %v682 = vld [vmem:[#allocation8 + $0x160] sm:$0xff]
    %v683 = vld [vmem:[#allocation8 + $0x168] sm:$0xff]
    %v684 = vld [vmem:[#allocation8 + $0x170] sm:$0xff]
    %v685 = vld [vmem:[#allocation8 + $0x178] sm:$0xff]
    %v686 = vld [vmem:[#allocation8 + $0x180] sm:$0xff]
    %v687 = vld [vmem:[#allocation8 + $0x188] sm:$0xff]
    %v688 = vld [vmem:[#allocation8 + $0x190] sm:$0xff]
    %v689 = vld [vmem:[#allocation8 + $0x198] sm:$0xff]
    %v690 = vld [vmem:[#allocation8 + $0x1a0] sm:$0xff]
    %v691 = vld [vmem:[#allocation8 + $0x1a8] sm:$0xff]
    %v692 = vld [vmem:[#allocation8 + $0x1b0] sm:$0xff]
    %v693 = vld [vmem:[#allocation8 + $0x1b8] sm:$0xff]
    %v694 = vld [vmem:[#allocation8 + $0x1c0] sm:$0xff]
    %v695 = vld [vmem:[#allocation8 + $0x1c8] sm:$0xff]
    %v696 = vld [vmem:[#allocation8 + $0x1d0] sm:$0xff]
    %v697 = vld [vmem:[#allocation8 + $0x1d8] sm:$0xff]
    %v698 = vld [vmem:[#allocation8 + $0x1e0] sm:$0xff]
    %v699 = vld [vmem:[#allocation8 + $0x1e8] sm:$0xff]
    %v700 = vld [vmem:[#allocation8 + $0x1f0] sm:$0xff]
    %v701 = vld [vmem:[#allocation8 + $0x1f8] sm:$0xff]
    %v702 = vld [vmem:[#allocation8 + $0x200] sm:$0xff]
    %v703 = vld [vmem:[#allocation8 + $0x208] sm:$0xff]
    %v704 = vld [vmem:[#allocation8 + $0x210] sm:$0xff]
    %v705 = vld [vmem:[#allocation8 + $0x218] sm:$0xff]
    %v706 = vld [vmem:[#allocation8 + $0x220] sm:$0xff]
    %v707 = vld [vmem:[#allocation8 + $0x228] sm:$0xff]
    %v708 = vld [vmem:[#allocation8 + $0x230] sm:$0xff]
    %v709 = vld [vmem:[#allocation8 + $0x238] sm:$0xff]
    %v710 = vld [vmem:[#allocation8 + $0x240] sm:$0xff]
    %v711 = vld [vmem:[#allocation8 + $0x248] sm:$0xff]
    %v712 = vld [vmem:[#allocation8 + $0x250] sm:$0xff]
    %v713 = vld [vmem:[#allocation8 + $0x258] sm:$0xff]
    %v714 = vld [vmem:[#allocation8 + $0x260] sm:$0xff]
    %v715 = vld [vmem:[#allocation8 + $0x268] sm:$0xff]
    %v716 = vld [vmem:[#allocation8 + $0x270] sm:$0xff]
    %v717 = vld [vmem:[#allocation8 + $0x278] sm:$0xff]
    %v718 = vld [vmem:[#allocation8 + $0x280] sm:$0xff]
    %v719 = vld [vmem:[#allocation8 + $0x288] sm:$0xff]
    %v720 = vld [vmem:[#allocation8 + $0x290] sm:$0xff]
    %v721 = vld [vmem:[#allocation8 + $0x298] sm:$0xff]
    %v722 = vld [vmem:[#allocation8 + $0x2a0] sm:$0xff]
    %v723 = vld [vmem:[#allocation8 + $0x2a8] sm:$0xff]
    %v724 = vld [vmem:[#allocation8 + $0x2b0] sm:$0xff]
    %v725 = vld [vmem:[#allocation8 + $0x2b8] sm:$0xff]
    %v726 = vld [vmem:[#allocation8 + $0x2c0] sm:$0xff]
    %v727 = vld [vmem:[#allocation8 + $0x2c8] sm:$0xff]
    %v728 = vld [vmem:[#allocation8 + $0x2d0] sm:$0xff]
    %v729 = vld [vmem:[#allocation8 + $0x2d8] sm:$0xff]
    %v730 = vld [vmem:[#allocation8 + $0x2e0] sm:$0xff]
    %v731 = vld [vmem:[#allocation8 + $0x2e8] sm:$0xff]
    %v732 = vld [vmem:[#allocation8 + $0x2f0] sm:$0xff]
    %v733 = vld [vmem:[#allocation8 + $0x2f8] sm:$0xff]
    %v734 = vld [vmem:[#allocation8 + $0x300] sm:$0xff]
    %v735 = vld [vmem:[#allocation8 + $0x308] sm:$0xff]
    %v736 = vld [vmem:[#allocation8 + $0x310] sm:$0xff]
    %v737 = vld [vmem:[#allocation8 + $0x318] sm:$0xff]
    %v738 = vld [vmem:[#allocation8 + $0x320] sm:$0xff]
    %v739 = vld [vmem:[#allocation8 + $0x328] sm:$0xff]
    %v740 = vld [vmem:[#allocation8 + $0x330] sm:$0xff]
    %v741 = vld [vmem:[#allocation8 + $0x338] sm:$0xff]
    %v742 = vld [vmem:[#allocation8 + $0x340] sm:$0xff]
    %v743 = vld [vmem:[#allocation8 + $0x348] sm:$0xff]
    %v744 = vld [vmem:[#allocation8 + $0x350] sm:$0xff]
    %v745 = vld [vmem:[#allocation8 + $0x358] sm:$0xff]
    %v746 = vld [vmem:[#allocation8 + $0x360] sm:$0xff]
    %v747 = vld [vmem:[#allocation8 + $0x368] sm:$0xff]
    %v748 = vld [vmem:[#allocation8 + $0x370] sm:$0xff]
    %v749 = vld [vmem:[#allocation8 + $0x378] sm:$0xff]
    %v750 = vld [vmem:[#allocation8 + $0x380] sm:$0xff]
    %v751 = vld [vmem:[#allocation8 + $0x388] sm:$0xff]
    %v752 = vld [vmem:[#allocation8 + $0x390] sm:$0xff]
    %v753 = vld [vmem:[#allocation8 + $0x398] sm:$0xff]
    %v754 = vld [vmem:[#allocation8 + $0x3a0] sm:$0xff]
    %v755 = vld [vmem:[#allocation8 + $0x3a8] sm:$0xff]
    %v756 = vld [vmem:[#allocation8 + $0x3b0] sm:$0xff]
    %v757 = vld [vmem:[#allocation8 + $0x3b8] sm:$0xff]
    %v758 = vld [vmem:[#allocation8 + $0x3c0] sm:$0xff]
    %v759 = vld [vmem:[#allocation8 + $0x3c8] sm:$0xff]
    %v760 = vld [vmem:[#allocation8 + $0x3d0] sm:$0xff]
    %v761 = vld [vmem:[#allocation8 + $0x3d8] sm:$0xff]
    %v762 = vld [vmem:[#allocation8 + $0x3e0] sm:$0xff]
    %v763 = vld [vmem:[#allocation8 + $0x3e8] sm:$0xff]
    %v764 = vld [vmem:[#allocation8 + $0x3f0] sm:$0xff]
    %v765 = vld [vmem:[#allocation8 + $0x3f8] sm:$0xff]
    %v766 = vld [vmem:[#allocation8 + $0x400] sm:$0xff]
    %v767 = vld [vmem:[#allocation8 + $0x408] sm:$0xff]
    %v768 = vld [vmem:[#allocation8 + $0x410] sm:$0xff]
    %v769 = vld [vmem:[#allocation8 + $0x418] sm:$0xff]
    %v770 = vld [vmem:[#allocation8 + $0x420] sm:$0xff]
    %v771 = vld [vmem:[#allocation8 + $0x428] sm:$0xff]
    %v772 = vld [vmem:[#allocation8 + $0x430] sm:$0xff]
    %v773 = vld [vmem:[#allocation8 + $0x438] sm:$0xff]
    %v774 = vld [vmem:[#allocation8 + $0x440] sm:$0xff]
    %v775 = vld [vmem:[#allocation8 + $0x448] sm:$0xff]
    %v776 = vld [vmem:[#allocation8 + $0x450] sm:$0xff]
    %v777 = vld [vmem:[#allocation8 + $0x458] sm:$0xff]
    %v778 = vld [vmem:[#allocation8 + $0x460] sm:$0xff]
    %v779 = vld [vmem:[#allocation8 + $0x468] sm:$0xff]
    %v780 = vld [vmem:[#allocation8 + $0x470] sm:$0xff]
    %v781 = vld [vmem:[#allocation8 + $0x478] sm:$0xff]
    %v782 = vld [vmem:[#allocation8 + $0x480] sm:$0xff]
    %v783 = vld [vmem:[#allocation8 + $0x488] sm:$0xff]
    %v784 = vld [vmem:[#allocation8 + $0x490] sm:$0xff]
    %v785 = vld [vmem:[#allocation8 + $0x498] sm:$0xff]
    %v786 = vld [vmem:[#allocation8 + $0x4a0] sm:$0xff]
    %v787 = vld [vmem:[#allocation8 + $0x4a8] sm:$0xff]
    %v788 = vld [vmem:[#allocation8 + $0x4b0] sm:$0xff]
    %v789 = vld [vmem:[#allocation8 + $0x4b8] sm:$0xff]
    %v790 = vld [vmem:[#allocation8 + $0x4c0] sm:$0xff]
    %v791 = vld [vmem:[#allocation8 + $0x4c8] sm:$0xff]
    %v792 = vld [vmem:[#allocation8 + $0x4d0] sm:$0xff]
    %v793 = vld [vmem:[#allocation8 + $0x4d8] sm:$0xff]
    %v794 = vld [vmem:[#allocation8 + $0x4e0] sm:$0xff]
    %v795 = vld [vmem:[#allocation8 + $0x4e8] sm:$0xff]
    %v796 = vld [vmem:[#allocation8 + $0x4f0] sm:$0xff]
    %v797 = vld [vmem:[#allocation8 + $0x4f8] sm:$0xff]
    %v798 = vld [vmem:[#allocation8 + $0x500] sm:$0xff]
    %v799 = vld [vmem:[#allocation8 + $0x508] sm:$0xff]
    %v800 = vld [vmem:[#allocation8 + $0x510] sm:$0xff]
    %v801 = vld [vmem:[#allocation8 + $0x518] sm:$0xff]
    %v802 = vld [vmem:[#allocation8 + $0x520] sm:$0xff]
    %v803 = vld [vmem:[#allocation8 + $0x528] sm:$0xff]
    %v804 = vld [vmem:[#allocation8 + $0x530] sm:$0xff]
    %v805 = vld [vmem:[#allocation8 + $0x538] sm:$0xff]
    %v806 = vld [vmem:[#allocation8 + $0x540] sm:$0xff]
    %v807 = vld [vmem:[#allocation8 + $0x548] sm:$0xff]
    %v808 = vld [vmem:[#allocation8 + $0x550] sm:$0xff]
    %v809 = vld [vmem:[#allocation8 + $0x558] sm:$0xff]
    %v810 = vld [vmem:[#allocation8 + $0x560] sm:$0xff]
    %v811 = vld [vmem:[#allocation8 + $0x568] sm:$0xff]
    %v812 = vld [vmem:[#allocation8 + $0x570] sm:$0xff]
    %v813 = vld [vmem:[#allocation8 + $0x578] sm:$0xff]
    %v814 = vld [vmem:[#allocation8 + $0x580] sm:$0xff]
    %v815 = vld [vmem:[#allocation8 + $0x588] sm:$0xff]
    %v816 = vld [vmem:[#allocation8 + $0x590] sm:$0xff]
    %v817 = vld [vmem:[#allocation8 + $0x598] sm:$0xff]
    %v818 = vld [vmem:[#allocation8 + $0x5a0] sm:$0xff]
    %v819 = vld [vmem:[#allocation8 + $0x5a8] sm:$0xff]
    %v820 = vld [vmem:[#allocation8 + $0x5b0] sm:$0xff]
    %v821 = vld [vmem:[#allocation8 + $0x5b8] sm:$0xff]
    %v822 = vld [vmem:[#allocation8 + $0x5c0] sm:$0xff]
    %v823 = vld [vmem:[#allocation8 + $0x5c8] sm:$0xff]
    %v824 = vld [vmem:[#allocation8 + $0x5d0] sm:$0xff]
    %v825 = vld [vmem:[#allocation8 + $0x5d8] sm:$0xff]
    %v826 = vld [vmem:[#allocation8 + $0x5e0] sm:$0xff]
    %v827 = vld [vmem:[#allocation8 + $0x5e8] sm:$0xff]
    %v828 = vld [vmem:[#allocation8 + $0x5f0] sm:$0xff]
    %v829 = vld [vmem:[#allocation8 + $0x5f8] sm:$0xff]
    %v830 = vld [vmem:[#allocation8 + $0x600] sm:$0xff]
    %v831 = vld [vmem:[#allocation8 + $0x608] sm:$0xff]
    %v832 = vld [vmem:[#allocation8 + $0x610] sm:$0xff]
    %v833 = vld [vmem:[#allocation8 + $0x618] sm:$0xff]
    %v834 = vld [vmem:[#allocation8 + $0x620] sm:$0xff]
    %v835 = vld [vmem:[#allocation8 + $0x628] sm:$0xff]
    %v836 = vld [vmem:[#allocation8 + $0x630] sm:$0xff]
    %v837 = vld [vmem:[#allocation8 + $0x638] sm:$0xff]
    %v838 = vld [vmem:[#allocation8 + $0x640] sm:$0xff]
    %v839 = vld [vmem:[#allocation8 + $0x648] sm:$0xff]
    %v840 = vld [vmem:[#allocation8 + $0x650] sm:$0xff]
    %v841 = vld [vmem:[#allocation8 + $0x658] sm:$0xff]
    %v842 = vld [vmem:[#allocation8 + $0x660] sm:$0xff]
    %v843 = vld [vmem:[#allocation8 + $0x668] sm:$0xff]
    %v844 = vld [vmem:[#allocation8 + $0x670] sm:$0xff]
    %v845 = vld [vmem:[#allocation8 + $0x678] sm:$0xff]
    %v846 = vld [vmem:[#allocation8 + $0x680] sm:$0xff]
    %v847 = vld [vmem:[#allocation8 + $0x688] sm:$0xff]
    %v848 = vld [vmem:[#allocation8 + $0x690] sm:$0xff]
    %v849 = vld [vmem:[#allocation8 + $0x698] sm:$0xff]
    %v850 = vld [vmem:[#allocation8 + $0x6a0] sm:$0xff]
    %v851 = vld [vmem:[#allocation8 + $0x6a8] sm:$0xff]
    %v852 = vld [vmem:[#allocation8 + $0x6b0] sm:$0xff]
    %v853 = vld [vmem:[#allocation8 + $0x6b8] sm:$0xff]
    %v854 = vld [vmem:[#allocation8 + $0x6c0] sm:$0xff]
    %v855 = vld [vmem:[#allocation8 + $0x6c8] sm:$0xff]
    %v856 = vld [vmem:[#allocation8 + $0x6d0] sm:$0xff]
    %v857 = vld [vmem:[#allocation8 + $0x6d8] sm:$0xff]
    %v858 = vld [vmem:[#allocation8 + $0x6e0] sm:$0xff]
    %v859 = vld [vmem:[#allocation8 + $0x6e8] sm:$0xff]
    %v860 = vld [vmem:[#allocation8 + $0x6f0] sm:$0xff]
    %v861 = vld [vmem:[#allocation8 + $0x6f8] sm:$0xff]
    %v862 = vld [vmem:[#allocation8 + $0x700] sm:$0xff]
    %v863 = vld [vmem:[#allocation8 + $0x708] sm:$0xff]
    %v864 = vld [vmem:[#allocation8 + $0x710] sm:$0xff]
    %v865 = vld [vmem:[#allocation8 + $0x718] sm:$0xff]
    %v866 = vld [vmem:[#allocation8 + $0x720] sm:$0xff]
    %v867 = vld [vmem:[#allocation8 + $0x728] sm:$0xff]
    %v868 = vld [vmem:[#allocation8 + $0x730] sm:$0xff]
    %v869 = vld [vmem:[#allocation8 + $0x738] sm:$0xff]
    %v870 = vld [vmem:[#allocation8 + $0x740] sm:$0xff]
    %v871 = vld [vmem:[#allocation8 + $0x748] sm:$0xff]
    %v872 = vld [vmem:[#allocation8 + $0x750] sm:$0xff]
    %v873 = vld [vmem:[#allocation8 + $0x758] sm:$0xff]
    %v874 = vld [vmem:[#allocation8 + $0x760] sm:$0xff]
    %v875 = vld [vmem:[#allocation8 + $0x768] sm:$0xff]
    %v876 = vld [vmem:[#allocation8 + $0x770] sm:$0xff]
    %v877 = vld [vmem:[#allocation8 + $0x778] sm:$0xff]
    %v878 = vld [vmem:[#allocation8 + $0x780] sm:$0xff]
    %v879 = vld [vmem:[#allocation8 + $0x788] sm:$0xff]
    %v880 = vld [vmem:[#allocation8 + $0x790] sm:$0xff]
    %v881 = vld [vmem:[#allocation8 + $0x798] sm:$0xff]
    %v882 = vld [vmem:[#allocation8 + $0x7a0] sm:$0xff]
    %v883 = vld [vmem:[#allocation8 + $0x7a8] sm:$0xff]
    %v884 = vld [vmem:[#allocation8 + $0x7b0] sm:$0xff]
    %v885 = vld [vmem:[#allocation8 + $0x7b8] sm:$0xff]
    %v886 = vld [vmem:[#allocation8 + $0x7c0] sm:$0xff]
    %v887 = vld [vmem:[#allocation8 + $0x7c8] sm:$0xff]
    %v888 = vld [vmem:[#allocation8 + $0x7d0] sm:$0xff]
    %v889 = vld [vmem:[#allocation8 + $0x7d8] sm:$0xff]
    %v890 = vld [vmem:[#allocation8 + $0x7e0] sm:$0xff]
    %v891 = vld [vmem:[#allocation8 + $0x7e8] sm:$0xff]
    %v892 = vld [vmem:[#allocation8 + $0x7f0] sm:$0xff]
    %v893 = vld [vmem:[#allocation8 + $0x7f8] sm:$0xff]
    %v894 = vld [vmem:[#allocation8 + $0x800] sm:$0xff]
    %v895 = vld [vmem:[#allocation8 + $0x808] sm:$0xff]
    %v896 = vld [vmem:[#allocation8 + $0x810] sm:$0xff]
    %v897 = vld [vmem:[#allocation8 + $0x818] sm:$0xff]
    %v898 = vld [vmem:[#allocation8 + $0x820] sm:$0xff]
    %v899 = vld [vmem:[#allocation8 + $0x828] sm:$0xff]
    %v900 = vld [vmem:[#allocation8 + $0x830] sm:$0xff]
    %v901 = vld [vmem:[#allocation8 + $0x838] sm:$0xff]
    %v902 = vld [vmem:[#allocation8 + $0x840] sm:$0xff]
    %v903 = vld [vmem:[#allocation8 + $0x848] sm:$0xff]
    %v904 = vld [vmem:[#allocation8 + $0x850] sm:$0xff]
    %v905 = vld [vmem:[#allocation8 + $0x858] sm:$0xff]
    %v906 = vld [vmem:[#allocation8 + $0x860] sm:$0xff]
    %v907 = vld [vmem:[#allocation8 + $0x868] sm:$0xff]
    %v908 = vld [vmem:[#allocation8 + $0x870] sm:$0xff]
    %v909 = vld [vmem:[#allocation8 + $0x878] sm:$0xff]
    %v910 = vld [vmem:[#allocation8 + $0x880] sm:$0xff]
    %v911 = vld [vmem:[#allocation8 + $0x888] sm:$0xff]
    %v912 = vld [vmem:[#allocation8 + $0x890] sm:$0xff]
    %v913 = vld [vmem:[#allocation8 + $0x898] sm:$0xff]
    %v914 = vld [vmem:[#allocation8 + $0x8a0] sm:$0xff]
    %v915 = vld [vmem:[#allocation8 + $0x8a8] sm:$0xff]
    %v916 = vld [vmem:[#allocation8 + $0x8b0] sm:$0xff]
    %v917 = vld [vmem:[#allocation8 + $0x8b8] sm:$0xff]
    %v918 = vld [vmem:[#allocation8 + $0x8c0] sm:$0xff]
    %v919 = vld [vmem:[#allocation8 + $0x8c8] sm:$0xff]
    %v920 = vld [vmem:[#allocation8 + $0x8d0] sm:$0xff]
    %v921 = vld [vmem:[#allocation8 + $0x8d8] sm:$0xff]
    %v922 = vld [vmem:[#allocation8 + $0x8e0] sm:$0xff]
    %v923 = vld [vmem:[#allocation8 + $0x8e8] sm:$0xff]
    %v924 = vld [vmem:[#allocation8 + $0x8f0] sm:$0xff]
    %v925 = vld [vmem:[#allocation8 + $0x8f8] sm:$0xff]
    %v926 = vld [vmem:[#allocation8 + $0x900] sm:$0xff]
    %v927 = vld [vmem:[#allocation8 + $0x908] sm:$0xff]
    %v928 = vld [vmem:[#allocation8 + $0x910] sm:$0xff]
    %v929 = vld [vmem:[#allocation8 + $0x918] sm:$0xff]
    %v930 = vld [vmem:[#allocation8 + $0x920] sm:$0xff]
    %v931 = vld [vmem:[#allocation8 + $0x928] sm:$0xff]
    %v932 = vld [vmem:[#allocation8 + $0x930] sm:$0xff]
    %v933 = vld [vmem:[#allocation8 + $0x938] sm:$0xff]
    %v934 = vld [vmem:[#allocation8 + $0x940] sm:$0xff]
    %v935 = vld [vmem:[#allocation8 + $0x948] sm:$0xff]
    %v936 = vld [vmem:[#allocation8 + $0x950] sm:$0xff]
    %v937 = vld [vmem:[#allocation8 + $0x958] sm:$0xff]
    %v938 = vld [vmem:[#allocation8 + $0x960] sm:$0xff]
    %v939 = vld [vmem:[#allocation8 + $0x968] sm:$0xff]
    %v940 = vld [vmem:[#allocation8 + $0x970] sm:$0xff]
    %v941 = vld [vmem:[#allocation8 + $0x978] sm:$0xff]
    %v942 = vld [vmem:[#allocation8 + $0x980] sm:$0xff]
    %v943 = vld [vmem:[#allocation8 + $0x988] sm:$0xff]
    %v944 = vld [vmem:[#allocation8 + $0x990] sm:$0xff]
    %v945 = vld [vmem:[#allocation8 + $0x998] sm:$0xff]
    %v946 = vld [vmem:[#allocation8 + $0x9a0] sm:$0xff]
    %v947 = vld [vmem:[#allocation8 + $0x9a8] sm:$0xff]
    %v948 = vld [vmem:[#allocation8 + $0x9b0] sm:$0xff]
    %v949 = vld [vmem:[#allocation8 + $0x9b8] sm:$0xff]
    %v950 = vld [vmem:[#allocation8 + $0x9c0] sm:$0xff]
    %v951 = vld [vmem:[#allocation8 + $0x9c8] sm:$0xff]
    %v952 = vld [vmem:[#allocation8 + $0x9d0] sm:$0xff]
    %v953 = vld [vmem:[#allocation8 + $0x9d8] sm:$0xff]
    %v954 = vld [vmem:[#allocation8 + $0x9e0] sm:$0xff]
    %v955 = vld [vmem:[#allocation8 + $0x9e8] sm:$0xff]
    %v956 = vld [vmem:[#allocation8 + $0x9f0] sm:$0xff]
    %v957 = vld [vmem:[#allocation8 + $0x9f8] sm:$0xff]
    %v958 = vld [vmem:[#allocation8 + $0xa00] sm:$0xff]
    %v959 = vld [vmem:[#allocation8 + $0xa08] sm:$0xff]
    %v960 = vld [vmem:[#allocation8 + $0xa10] sm:$0xff]
    %v961 = vld [vmem:[#allocation8 + $0xa18] sm:$0xff]
    %v962 = vld [vmem:[#allocation8 + $0xa20] sm:$0xff]
    %v963 = vld [vmem:[#allocation8 + $0xa28] sm:$0xff]
    %v964 = vld [vmem:[#allocation8 + $0xa30] sm:$0xff]
    %v965 = vld [vmem:[#allocation8 + $0xa38] sm:$0xff]
    %v966 = vld [vmem:[#allocation8 + $0xa40] sm:$0xff]
    %v967 = vld [vmem:[#allocation8 + $0xa48] sm:$0xff]
    %v968 = vld [vmem:[#allocation8 + $0xa50] sm:$0xff]
    %v969 = vld [vmem:[#allocation8 + $0xa58] sm:$0xff]
    %v970 = vld [vmem:[#allocation8 + $0xa60] sm:$0xff]
    %v971 = vld [vmem:[#allocation8 + $0xa68] sm:$0xff]
    %v972 = vld [vmem:[#allocation8 + $0xa70] sm:$0xff]
    %v973 = vld [vmem:[#allocation8 + $0xa78] sm:$0xff]
    %v974 = vld [vmem:[#allocation8 + $0xa80] sm:$0xff]
    %v975 = vld [vmem:[#allocation8 + $0xa88] sm:$0xff]
    %v976 = vld [vmem:[#allocation8 + $0xa90] sm:$0xff]
    %v977 = vld [vmem:[#allocation8 + $0xa98] sm:$0xff]
    %v978 = vld [vmem:[#allocation8 + $0xaa0] sm:$0xff]
    %v979 = vld [vmem:[#allocation8 + $0xaa8] sm:$0xff]
    %v980 = vld [vmem:[#allocation8 + $0xab0] sm:$0xff]
    %v981 = vld [vmem:[#allocation8 + $0xab8] sm:$0xff]
    %v982 = vld [vmem:[#allocation8 + $0xac0] sm:$0xff]
    %v983 = vld [vmem:[#allocation8 + $0xac8] sm:$0xff]
    %v984 = vld [vmem:[#allocation8 + $0xad0] sm:$0xff]
    %v985 = vld [vmem:[#allocation8 + $0xad8] sm:$0xff]
    %v986 = vld [vmem:[#allocation8 + $0xae0] sm:$0xff]
    %v987 = vld [vmem:[#allocation8 + $0xae8] sm:$0xff]
    %v988 = vld [vmem:[#allocation8 + $0xaf0] sm:$0xff]
    %v989 = vld [vmem:[#allocation8 + $0xaf8] sm:$0xff]
    %v990 = vld [vmem:[#allocation8 + $0xb00] sm:$0xff]
    %v991 = vld [vmem:[#allocation8 + $0xb08] sm:$0xff]
    %v992 = vld [vmem:[#allocation8 + $0xb10] sm:$0xff]
    %v993 = vld [vmem:[#allocation8 + $0xb18] sm:$0xff]
    %v994 = vld [vmem:[#allocation8 + $0xb20] sm:$0xff]
    %v995 = vld [vmem:[#allocation8 + $0xb28] sm:$0xff]
    %v996 = vld [vmem:[#allocation8 + $0xb30] sm:$0xff]
    %v997 = vld [vmem:[#allocation8 + $0xb38] sm:$0xff]
    %v998 = vld [vmem:[#allocation8 + $0xb40] sm:$0xff]
    %v999 = vld [vmem:[#allocation8 + $0xb48] sm:$0xff]
    %v1000 = vld [vmem:[#allocation8 + $0xb50] sm:$0xff]
    %v1001 = vld [vmem:[#allocation8 + $0xb58] sm:$0xff]
    %v1002 = vld [vmem:[#allocation8 + $0xb60] sm:$0xff]
    %v1003 = vld [vmem:[#allocation8 + $0xb68] sm:$0xff]
    %v1004 = vld [vmem:[#allocation8 + $0xb70] sm:$0xff]
    %v1005 = vld [vmem:[#allocation8 + $0xb78] sm:$0xff]
    %v1006 = vld [vmem:[#allocation8 + $0xb80] sm:$0xff]
    %v1007 = vld [vmem:[#allocation8 + $0xb88] sm:$0xff]
    %v1008 = vld [vmem:[#allocation8 + $0xb90] sm:$0xff]
    %v1009 = vld [vmem:[#allocation8 + $0xb98] sm:$0xff]
    %v1010 = vld [vmem:[#allocation8 + $0xba0] sm:$0xff]
    %v1011 = vld [vmem:[#allocation8 + $0xba8] sm:$0xff]
    %v1012 = vld [vmem:[#allocation8 + $0xbb0] sm:$0xff]
    %v1013 = vld [vmem:[#allocation8 + $0xbb8] sm:$0xff]
    %v1014 = vld [vmem:[#allocation8 + $0xbc0] sm:$0xff]
    %v1015 = vld [vmem:[#allocation8 + $0xbc8] sm:$0xff]
    %v1016 = vld [vmem:[#allocation8 + $0xbd0] sm:$0xff]
    %v1017 = vld [vmem:[#allocation8 + $0xbd8] sm:$0xff]
    %v1018 = vld [vmem:[#allocation8 + $0xbe0] sm:$0xff]
    %v1019 = vld [vmem:[#allocation8 + $0xbe8] sm:$0xff]
    %v1020 = vld [vmem:[#allocation8 + $0xbf0] sm:$0xff]
    %v1021 = vld [vmem:[#allocation8 + $0xbf8] sm:$0xff]
    %v1022 = vld [vmem:[#allocation8 + $0xc00] sm:$0xff]
    %v1023 = vld [vmem:[#allocation8 + $0xc08] sm:$0xff]
    %v1024 = vld [vmem:[#allocation8 + $0xc10] sm:$0xff]
    %v1025 = vld [vmem:[#allocation8 + $0xc18] sm:$0xff]
    %v1026 = vld [vmem:[#allocation8 + $0xc20] sm:$0xff]
    %v1027 = vld [vmem:[#allocation8 + $0xc28] sm:$0xff]
    %v1028 = vld [vmem:[#allocation8 + $0xc30] sm:$0xff]
    %v1029 = vld [vmem:[#allocation8 + $0xc38] sm:$0xff]
    %v1030 = vld [vmem:[#allocation8 + $0xc40] sm:$0xff]
    %v1031 = vld [vmem:[#allocation8 + $0xc48] sm:$0xff]
    %v1032 = vld [vmem:[#allocation8 + $0xc50] sm:$0xff]
    %v1033 = vld [vmem:[#allocation8 + $0xc58] sm:$0xff]
    %v1034 = vld [vmem:[#allocation8 + $0xc60] sm:$0xff]
    %v1035 = vld [vmem:[#allocation8 + $0xc68] sm:$0xff]
    %v1036 = vld [vmem:[#allocation8 + $0xc70] sm:$0xff]
    %v1037 = vld [vmem:[#allocation8 + $0xc78] sm:$0xff]
    %v1038 = vld [vmem:[#allocation8 + $0xc80] sm:$0xff]
    %v1039 = vld [vmem:[#allocation8 + $0xc88] sm:$0xff]
    %v1040 = vld [vmem:[#allocation8 + $0xc90] sm:$0xff]
    %v1041 = vld [vmem:[#allocation8 + $0xc98] sm:$0xff]
    %v1042 = vld [vmem:[#allocation8 + $0xca0] sm:$0xff]
    %v1043 = vld [vmem:[#allocation8 + $0xca8] sm:$0xff]
    %v1044 = vld [vmem:[#allocation8 + $0xcb0] sm:$0xff]
    %v1045 = vld [vmem:[#allocation8 + $0xcb8] sm:$0xff]
    %v1046 = vld [vmem:[#allocation8 + $0xcc0] sm:$0xff]
    %v1047 = vld [vmem:[#allocation8 + $0xcc8] sm:$0xff]
    %v1048 = vld [vmem:[#allocation8 + $0xcd0] sm:$0xff]
    %v1049 = vld [vmem:[#allocation8 + $0xcd8] sm:$0xff]
    %v1050 = vld [vmem:[#allocation8 + $0xce0] sm:$0xff]
    %v1051 = vld [vmem:[#allocation8 + $0xce8] sm:$0xff]
    %v1052 = vld [vmem:[#allocation8 + $0xcf0] sm:$0xff]
    %v1053 = vld [vmem:[#allocation8 + $0xcf8] sm:$0xff]
    %v1054 = vld [vmem:[#allocation8 + $0xd00] sm:$0xff]
    %v1055 = vld [vmem:[#allocation8 + $0xd08] sm:$0xff]
    %v1056 = vld [vmem:[#allocation8 + $0xd10] sm:$0xff]
    %v1057 = vld [vmem:[#allocation8 + $0xd18] sm:$0xff]
    %v1058 = vld [vmem:[#allocation8 + $0xd20] sm:$0xff]
    %v1059 = vld [vmem:[#allocation8 + $0xd28] sm:$0xff]
    %v1060 = vld [vmem:[#allocation8 + $0xd30] sm:$0xff]
    %v1061 = vld [vmem:[#allocation8 + $0xd38] sm:$0xff]
    %v1062 = vld [vmem:[#allocation8 + $0xd40] sm:$0xff]
    %v1063 = vld [vmem:[#allocation8 + $0xd48] sm:$0xff]
    %v1064 = vld [vmem:[#allocation8 + $0xd50] sm:$0xff]
    %v1065 = vld [vmem:[#allocation8 + $0xd58] sm:$0xff]
    %v1066 = vld [vmem:[#allocation8 + $0xd60] sm:$0xff]
    %v1067 = vld [vmem:[#allocation8 + $0xd68] sm:$0xff]
    %v1068 = vld [vmem:[#allocation8 + $0xd70] sm:$0xff]
    %v1069 = vld [vmem:[#allocation8 + $0xd78] sm:$0xff]
    %v1070 = vld [vmem:[#allocation8 + $0xd80] sm:$0xff]
    %v1071 = vld [vmem:[#allocation8 + $0xd88] sm:$0xff]
    %v1072 = vld [vmem:[#allocation8 + $0xd90] sm:$0xff]
    %v1073 = vld [vmem:[#allocation8 + $0xd98] sm:$0xff]
    %v1074 = vld [vmem:[#allocation8 + $0xda0] sm:$0xff]
    %v1075 = vld [vmem:[#allocation8 + $0xda8] sm:$0xff]
    %v1076 = vld [vmem:[#allocation8 + $0xdb0] sm:$0xff]
    %v1077 = vld [vmem:[#allocation8 + $0xdb8] sm:$0xff]
    %v1078 = vld [vmem:[#allocation8 + $0xdc0] sm:$0xff]
    %v1079 = vld [vmem:[#allocation8 + $0xdc8] sm:$0xff]
    %v1080 = vld [vmem:[#allocation8 + $0xdd0] sm:$0xff]
    %v1081 = vld [vmem:[#allocation8 + $0xdd8] sm:$0xff]
    %v1082 = vld [vmem:[#allocation8 + $0xde0] sm:$0xff]
    %v1083 = vld [vmem:[#allocation8 + $0xde8] sm:$0xff]
    %v1084 = vld [vmem:[#allocation8 + $0xdf0] sm:$0xff]
    %v1085 = vld [vmem:[#allocation8 + $0xdf8] sm:$0xff]
    %v1086 = vld [vmem:[#allocation8 + $0xe00] sm:$0xff]
    %v1087 = vld [vmem:[#allocation8 + $0xe08] sm:$0xff]
    %v1088 = vld [vmem:[#allocation8 + $0xe10] sm:$0xff]
    %v1089 = vld [vmem:[#allocation8 + $0xe18] sm:$0xff]
    %v1090 = vld [vmem:[#allocation8 + $0xe20] sm:$0xff]
    %v1091 = vld [vmem:[#allocation8 + $0xe28] sm:$0xff]
    %v1092 = vld [vmem:[#allocation8 + $0xe30] sm:$0xff]
    %v1093 = vld [vmem:[#allocation8 + $0xe38] sm:$0xff]
    %v1094 = vld [vmem:[#allocation8 + $0xe40] sm:$0xff]
    %v1095 = vld [vmem:[#allocation8 + $0xe48] sm:$0xff]
    %v1096 = vld [vmem:[#allocation8 + $0xe50] sm:$0xff]
    %v1097 = vld [vmem:[#allocation8 + $0xe58] sm:$0xff]
    %v1098 = vld [vmem:[#allocation8 + $0xe60] sm:$0xff]
    %v1099 = vld [vmem:[#allocation8 + $0xe68] sm:$0xff]
    %v1100 = vld [vmem:[#allocation8 + $0xe70] sm:$0xff]
    %v1101 = vld [vmem:[#allocation8 + $0xe78] sm:$0xff]
    %v1102 = vld [vmem:[#allocation8 + $0xe80] sm:$0xff]
    %v1103 = vld [vmem:[#allocation8 + $0xe88] sm:$0xff]
    %v1104 = vld [vmem:[#allocation8 + $0xe90] sm:$0xff]
    %v1105 = vld [vmem:[#allocation8 + $0xe98] sm:$0xff]
    %v1106 = vld [vmem:[#allocation8 + $0xea0] sm:$0xff]
    %v1107 = vld [vmem:[#allocation8 + $0xea8] sm:$0xff]
    %v1108 = vld [vmem:[#allocation8 + $0xeb0] sm:$0xff]
    %v1109 = vld [vmem:[#allocation8 + $0xeb8] sm:$0xff]
    %v1110 = vld [vmem:[#allocation8 + $0xec0] sm:$0xff]
    %v1111 = vld [vmem:[#allocation8 + $0xec8] sm:$0xff]
    %v1112 = vld [vmem:[#allocation8 + $0xed0] sm:$0xff]
    %v1113 = vld [vmem:[#allocation8 + $0xed8] sm:$0xff]
    %v1114 = vld [vmem:[#allocation8 + $0xee0] sm:$0xff]
    %v1115 = vld [vmem:[#allocation8 + $0xee8] sm:$0xff]
    %v1116 = vld [vmem:[#allocation8 + $0xef0] sm:$0xff]
    %v1117 = vld [vmem:[#allocation8 + $0xef8] sm:$0xff]
    %v1118 = vld [vmem:[#allocation8 + $0xf00] sm:$0xff]
    %v1119 = vld [vmem:[#allocation8 + $0xf08] sm:$0xff]
    %v1120 = vld [vmem:[#allocation8 + $0xf10] sm:$0xff]
    %v1121 = vld [vmem:[#allocation8 + $0xf18] sm:$0xff]
    %v1122 = vld [vmem:[#allocation8 + $0xf20] sm:$0xff]
    %v1123 = vld [vmem:[#allocation8 + $0xf28] sm:$0xff]
    %v1124 = vld [vmem:[#allocation8 + $0xf30] sm:$0xff]
    %v1125 = vld [vmem:[#allocation8 + $0xf38] sm:$0xff]
    %v1126 = vld [vmem:[#allocation8 + $0xf40] sm:$0xff]
    %v1127 = vld [vmem:[#allocation8 + $0xf48] sm:$0xff]
    %v1128 = vld [vmem:[#allocation8 + $0xf50] sm:$0xff]
    %v1129 = vld [vmem:[#allocation8 + $0xf58] sm:$0xff]
    %v1130 = vld [vmem:[#allocation8 + $0xf60] sm:$0xff]
    %v1131 = vld [vmem:[#allocation8 + $0xf68] sm:$0xff]
    %v1132 = vld [vmem:[#allocation8 + $0xf70] sm:$0xff]
    %v1133 = vld [vmem:[#allocation8 + $0xf78] sm:$0xff]
    %v1134 = vld [vmem:[#allocation8 + $0xf80] sm:$0xff]
    %v1135 = vld [vmem:[#allocation8 + $0xf88] sm:$0xff]
    %v1136 = vld [vmem:[#allocation8 + $0xf90] sm:$0xff]
    %v1137 = vld [vmem:[#allocation8 + $0xf98] sm:$0xff]
    %v1138 = vld [vmem:[#allocation8 + $0xfa0] sm:$0xff]
    %v1139 = vld [vmem:[#allocation8 + $0xfa8] sm:$0xff]
    %v1140 = vld [vmem:[#allocation8 + $0xfb0] sm:$0xff]
    %v1141 = vld [vmem:[#allocation8 + $0xfb8] sm:$0xff]
    %v1142 = vld [vmem:[#allocation8 + $0xfc0] sm:$0xff]
    %v1143 = vld [vmem:[#allocation8 + $0xfc8] sm:$0xff]
    %v1144 = vld [vmem:[#allocation8 + $0xfd0] sm:$0xff]
    %v1145 = vld [vmem:[#allocation8 + $0xfd8] sm:$0xff]
    %v1146 = vld [vmem:[#allocation8 + $0xfe0] sm:$0xff]
    %v1147 = vld [vmem:[#allocation8 + $0xfe8] sm:$0xff]
    %v1148 = vld [vmem:[#allocation8 + $0xff0] sm:$0xff]
    %v1149 = vld [vmem:[#allocation8 + $0xff8] sm:$0xff]
    %v1150 = vld [vmem:[#allocation10] sm:$0xf]
    %v1152 = vperm.slane %v1150, 0
    %v1153 = vperm.slane %v1150, 1
    %v1154 = vperm.slane %v1150, 2
    %v1155 = vperm.slane %v1150, 3
    %v1672 = vunpack.c.l.b16 %v638
    %v1673 = vunpack.c.h.b16 %v638
    %v1674 = vunpack.c.l.b16 %v639
    %v1675 = vunpack.c.h.b16 %v639
    %v1676 = vunpack.c.l.b16 %v640
    %v1677 = vunpack.c.h.b16 %v640
    %v1678 = vunpack.c.l.b16 %v641
    %v1679 = vunpack.c.h.b16 %v641
    %v1680 = vunpack.c.l.b16 %v642
    %v1681 = vunpack.c.h.b16 %v642
    %v1682 = vunpack.c.l.b16 %v643
    %v1683 = vunpack.c.h.b16 %v643
    %v1684 = vunpack.c.l.b16 %v644
    %v1685 = vunpack.c.h.b16 %v644
    %v1686 = vunpack.c.l.b16 %v645
    %v1687 = vunpack.c.h.b16 %v645
    %v1688 = vunpack.c.l.b16 %v646
    %v1689 = vunpack.c.h.b16 %v646
    %v1690 = vunpack.c.l.b16 %v647
    %v1691 = vunpack.c.h.b16 %v647
    %v1692 = vunpack.c.l.b16 %v648
    %v1693 = vunpack.c.h.b16 %v648
    %v1694 = vunpack.c.l.b16 %v649
    %v1695 = vunpack.c.h.b16 %v649
    %v1696 = vunpack.c.l.b16 %v650
    %v1697 = vunpack.c.h.b16 %v650
    %v1698 = vunpack.c.l.b16 %v651
    %v1699 = vunpack.c.h.b16 %v651
    %v1700 = vunpack.c.l.b16 %v652
    %v1701 = vunpack.c.h.b16 %v652
    %v1702 = vunpack.c.l.b16 %v653
    %v1703 = vunpack.c.h.b16 %v653
    %v1704 = vunpack.c.l.b16 %v654
    %v1705 = vunpack.c.h.b16 %v654
    %v1706 = vunpack.c.l.b16 %v655
    %v1707 = vunpack.c.h.b16 %v655
    %v1708 = vunpack.c.l.b16 %v656
    %v1709 = vunpack.c.h.b16 %v656
    %v1710 = vunpack.c.l.b16 %v657
    %v1711 = vunpack.c.h.b16 %v657
    %v1712 = vunpack.c.l.b16 %v658
    %v1713 = vunpack.c.h.b16 %v658
    %v1714 = vunpack.c.l.b16 %v659
    %v1715 = vunpack.c.h.b16 %v659
    %v1716 = vunpack.c.l.b16 %v660
    %v1717 = vunpack.c.h.b16 %v660
    %v1718 = vunpack.c.l.b16 %v661
    %v1719 = vunpack.c.h.b16 %v661
    %v1720 = vunpack.c.l.b16 %v662
    %v1721 = vunpack.c.h.b16 %v662
    %v1722 = vunpack.c.l.b16 %v663
    %v1723 = vunpack.c.h.b16 %v663
    %v1724 = vunpack.c.l.b16 %v664
    %v1725 = vunpack.c.h.b16 %v664
    %v1726 = vunpack.c.l.b16 %v665
    %v1727 = vunpack.c.h.b16 %v665
    %v1728 = vunpack.c.l.b16 %v666
    %v1729 = vunpack.c.h.b16 %v666
    %v1730 = vunpack.c.l.b16 %v667
    %v1731 = vunpack.c.h.b16 %v667
    %v1732 = vunpack.c.l.b16 %v668
    %v1733 = vunpack.c.h.b16 %v668
    %v1734 = vunpack.c.l.b16 %v669
    %v1735 = vunpack.c.h.b16 %v669
    %v1736 = vunpack.c.l.b16 %v670
    %v1737 = vunpack.c.h.b16 %v670
    %v1738 = vunpack.c.l.b16 %v671
    %v1739 = vunpack.c.h.b16 %v671
    %v1740 = vunpack.c.l.b16 %v672
    %v1741 = vunpack.c.h.b16 %v672
    %v1742 = vunpack.c.l.b16 %v673
    %v1743 = vunpack.c.h.b16 %v673
    %v1744 = vunpack.c.l.b16 %v674
    %v1745 = vunpack.c.h.b16 %v674
    %v1746 = vunpack.c.l.b16 %v675
    %v1747 = vunpack.c.h.b16 %v675
    %v1748 = vunpack.c.l.b16 %v676
    %v1749 = vunpack.c.h.b16 %v676
    %v1750 = vunpack.c.l.b16 %v677
    %v1751 = vunpack.c.h.b16 %v677
    %v1752 = vunpack.c.l.b16 %v678
    %v1753 = vunpack.c.h.b16 %v678
    %v1754 = vunpack.c.l.b16 %v679
    %v1755 = vunpack.c.h.b16 %v679
    %v1756 = vunpack.c.l.b16 %v680
    %v1757 = vunpack.c.h.b16 %v680
    %v1758 = vunpack.c.l.b16 %v681
    %v1759 = vunpack.c.h.b16 %v681
    %v1760 = vunpack.c.l.b16 %v682
    %v1761 = vunpack.c.h.b16 %v682
    %v1762 = vunpack.c.l.b16 %v683
    %v1763 = vunpack.c.h.b16 %v683
    %v1764 = vunpack.c.l.b16 %v684
    %v1765 = vunpack.c.h.b16 %v684
    %v1766 = vunpack.c.l.b16 %v685
    %v1767 = vunpack.c.h.b16 %v685
    %v1768 = vunpack.c.l.b16 %v686
    %v1769 = vunpack.c.h.b16 %v686
    %v1770 = vunpack.c.l.b16 %v687
    %v1771 = vunpack.c.h.b16 %v687
    %v1772 = vunpack.c.l.b16 %v688
    %v1773 = vunpack.c.h.b16 %v688
    %v1774 = vunpack.c.l.b16 %v689
    %v1775 = vunpack.c.h.b16 %v689
    %v1776 = vunpack.c.l.b16 %v690
    %v1777 = vunpack.c.h.b16 %v690
    %v1778 = vunpack.c.l.b16 %v691
    %v1779 = vunpack.c.h.b16 %v691
    %v1780 = vunpack.c.l.b16 %v692
    %v1781 = vunpack.c.h.b16 %v692
    %v1782 = vunpack.c.l.b16 %v693
    %v1783 = vunpack.c.h.b16 %v693
    %v1784 = vunpack.c.l.b16 %v694
    %v1785 = vunpack.c.h.b16 %v694
    %v1786 = vunpack.c.l.b16 %v695
    %v1787 = vunpack.c.h.b16 %v695
    %v1788 = vunpack.c.l.b16 %v696
    %v1789 = vunpack.c.h.b16 %v696
    %v1790 = vunpack.c.l.b16 %v697
    %v1791 = vunpack.c.h.b16 %v697
    %v1792 = vunpack.c.l.b16 %v698
    %v1793 = vunpack.c.h.b16 %v698
    %v1794 = vunpack.c.l.b16 %v699
    %v1795 = vunpack.c.h.b16 %v699
    %v1796 = vunpack.c.l.b16 %v700
    %v1797 = vunpack.c.h.b16 %v700
    %v1798 = vunpack.c.l.b16 %v701
    %v1799 = vunpack.c.h.b16 %v701
    %v1800 = vunpack.c.l.b16 %v702
    %v1801 = vunpack.c.h.b16 %v702
    %v1802 = vunpack.c.l.b16 %v703
    %v1803 = vunpack.c.h.b16 %v703
    %v1804 = vunpack.c.l.b16 %v704
    %v1805 = vunpack.c.h.b16 %v704
    %v1806 = vunpack.c.l.b16 %v705
    %v1807 = vunpack.c.h.b16 %v705
    %v1808 = vunpack.c.l.b16 %v706
    %v1809 = vunpack.c.h.b16 %v706
    %v1810 = vunpack.c.l.b16 %v707
    %v1811 = vunpack.c.h.b16 %v707
    %v1812 = vunpack.c.l.b16 %v708
    %v1813 = vunpack.c.h.b16 %v708
    %v1814 = vunpack.c.l.b16 %v709
    %v1815 = vunpack.c.h.b16 %v709
    %v1816 = vunpack.c.l.b16 %v710
    %v1817 = vunpack.c.h.b16 %v710
    %v1818 = vunpack.c.l.b16 %v711
    %v1819 = vunpack.c.h.b16 %v711
    %v1820 = vunpack.c.l.b16 %v712
    %v1821 = vunpack.c.h.b16 %v712
    %v1822 = vunpack.c.l.b16 %v713
    %v1823 = vunpack.c.h.b16 %v713
    %v1824 = vunpack.c.l.b16 %v714
    %v1825 = vunpack.c.h.b16 %v714
    %v1826 = vunpack.c.l.b16 %v715
    %v1827 = vunpack.c.h.b16 %v715
    %v1828 = vunpack.c.l.b16 %v716
    %v1829 = vunpack.c.h.b16 %v716
    %v1830 = vunpack.c.l.b16 %v717
    %v1831 = vunpack.c.h.b16 %v717
    %v1832 = vunpack.c.l.b16 %v718
    %v1833 = vunpack.c.h.b16 %v718
    %v1834 = vunpack.c.l.b16 %v719
    %v1835 = vunpack.c.h.b16 %v719
    %v1836 = vunpack.c.l.b16 %v720
    %v1837 = vunpack.c.h.b16 %v720
    %v1838 = vunpack.c.l.b16 %v721
    %v1839 = vunpack.c.h.b16 %v721
    %v1840 = vunpack.c.l.b16 %v722
    %v1841 = vunpack.c.h.b16 %v722
    %v1842 = vunpack.c.l.b16 %v723
    %v1843 = vunpack.c.h.b16 %v723
    %v1844 = vunpack.c.l.b16 %v724
    %v1845 = vunpack.c.h.b16 %v724
    %v1846 = vunpack.c.l.b16 %v725
    %v1847 = vunpack.c.h.b16 %v725
    %v1848 = vunpack.c.l.b16 %v726
    %v1849 = vunpack.c.h.b16 %v726
    %v1850 = vunpack.c.l.b16 %v727
    %v1851 = vunpack.c.h.b16 %v727
    %v1852 = vunpack.c.l.b16 %v728
    %v1853 = vunpack.c.h.b16 %v728
    %v1854 = vunpack.c.l.b16 %v729
    %v1855 = vunpack.c.h.b16 %v729
    %v1856 = vunpack.c.l.b16 %v730
    %v1857 = vunpack.c.h.b16 %v730
    %v1858 = vunpack.c.l.b16 %v731
    %v1859 = vunpack.c.h.b16 %v731
    %v1860 = vunpack.c.l.b16 %v732
    %v1861 = vunpack.c.h.b16 %v732
    %v1862 = vunpack.c.l.b16 %v733
    %v1863 = vunpack.c.h.b16 %v733
    %v1864 = vunpack.c.l.b16 %v734
    %v1865 = vunpack.c.h.b16 %v734
    %v1866 = vunpack.c.l.b16 %v735
    %v1867 = vunpack.c.h.b16 %v735
    %v1868 = vunpack.c.l.b16 %v736
    %v1869 = vunpack.c.h.b16 %v736
    %v1870 = vunpack.c.l.b16 %v737
    %v1871 = vunpack.c.h.b16 %v737
    %v1872 = vunpack.c.l.b16 %v738
    %v1873 = vunpack.c.h.b16 %v738
    %v1874 = vunpack.c.l.b16 %v739
    %v1875 = vunpack.c.h.b16 %v739
    %v1876 = vunpack.c.l.b16 %v740
    %v1877 = vunpack.c.h.b16 %v740
    %v1878 = vunpack.c.l.b16 %v741
    %v1879 = vunpack.c.h.b16 %v741
    %v1880 = vunpack.c.l.b16 %v742
    %v1881 = vunpack.c.h.b16 %v742
    %v1882 = vunpack.c.l.b16 %v743
    %v1883 = vunpack.c.h.b16 %v743
    %v1884 = vunpack.c.l.b16 %v744
    %v1885 = vunpack.c.h.b16 %v744
    %v1886 = vunpack.c.l.b16 %v745
    %v1887 = vunpack.c.h.b16 %v745
    %v1888 = vunpack.c.l.b16 %v746
    %v1889 = vunpack.c.h.b16 %v746
    %v1890 = vunpack.c.l.b16 %v747
    %v1891 = vunpack.c.h.b16 %v747
    %v1892 = vunpack.c.l.b16 %v748
    %v1893 = vunpack.c.h.b16 %v748
    %v1894 = vunpack.c.l.b16 %v749
    %v1895 = vunpack.c.h.b16 %v749
    %v1896 = vunpack.c.l.b16 %v750
    %v1897 = vunpack.c.h.b16 %v750
    %v1898 = vunpack.c.l.b16 %v751
    %v1899 = vunpack.c.h.b16 %v751
    %v1900 = vunpack.c.l.b16 %v752
    %v1901 = vunpack.c.h.b16 %v752
    %v1902 = vunpack.c.l.b16 %v753
    %v1903 = vunpack.c.h.b16 %v753
    %v1904 = vunpack.c.l.b16 %v754
    %v1905 = vunpack.c.h.b16 %v754
    %v1906 = vunpack.c.l.b16 %v755
    %v1907 = vunpack.c.h.b16 %v755
    %v1908 = vunpack.c.l.b16 %v756
    %v1909 = vunpack.c.h.b16 %v756
    %v1910 = vunpack.c.l.b16 %v757
    %v1911 = vunpack.c.h.b16 %v757
    %v1912 = vunpack.c.l.b16 %v758
    %v1913 = vunpack.c.h.b16 %v758
    %v1914 = vunpack.c.l.b16 %v759
    %v1915 = vunpack.c.h.b16 %v759
    %v1916 = vunpack.c.l.b16 %v760
    %v1917 = vunpack.c.h.b16 %v760
    %v1918 = vunpack.c.l.b16 %v761
    %v1919 = vunpack.c.h.b16 %v761
    %v1920 = vunpack.c.l.b16 %v762
    %v1921 = vunpack.c.h.b16 %v762
    %v1922 = vunpack.c.l.b16 %v763
    %v1923 = vunpack.c.h.b16 %v763
    %v1924 = vunpack.c.l.b16 %v764
    %v1925 = vunpack.c.h.b16 %v764
    %v1926 = vunpack.c.l.b16 %v765
    %v1927 = vunpack.c.h.b16 %v765
    %v1928 = vunpack.c.l.b16 %v766
    %v1929 = vunpack.c.h.b16 %v766
    %v1930 = vunpack.c.l.b16 %v767
    %v1931 = vunpack.c.h.b16 %v767
    %v1932 = vunpack.c.l.b16 %v768
    %v1933 = vunpack.c.h.b16 %v768
    %v1934 = vunpack.c.l.b16 %v769
    %v1935 = vunpack.c.h.b16 %v769
    %v1936 = vunpack.c.l.b16 %v770
    %v1937 = vunpack.c.h.b16 %v770
    %v1938 = vunpack.c.l.b16 %v771
    %v1939 = vunpack.c.h.b16 %v771
    %v1940 = vunpack.c.l.b16 %v772
    %v1941 = vunpack.c.h.b16 %v772
    %v1942 = vunpack.c.l.b16 %v773
    %v1943 = vunpack.c.h.b16 %v773
    %v1944 = vunpack.c.l.b16 %v774
    %v1945 = vunpack.c.h.b16 %v774
    %v1946 = vunpack.c.l.b16 %v775
    %v1947 = vunpack.c.h.b16 %v775
    %v1948 = vunpack.c.l.b16 %v776
    %v1949 = vunpack.c.h.b16 %v776
    %v1950 = vunpack.c.l.b16 %v777
    %v1951 = vunpack.c.h.b16 %v777
    %v1952 = vunpack.c.l.b16 %v778
    %v1953 = vunpack.c.h.b16 %v778
    %v1954 = vunpack.c.l.b16 %v779
    %v1955 = vunpack.c.h.b16 %v779
    %v1956 = vunpack.c.l.b16 %v780
    %v1957 = vunpack.c.h.b16 %v780
    %v1958 = vunpack.c.l.b16 %v781
    %v1959 = vunpack.c.h.b16 %v781
    %v1960 = vunpack.c.l.b16 %v782
    %v1961 = vunpack.c.h.b16 %v782
    %v1962 = vunpack.c.l.b16 %v783
    %v1963 = vunpack.c.h.b16 %v783
    %v1964 = vunpack.c.l.b16 %v784
    %v1965 = vunpack.c.h.b16 %v784
    %v1966 = vunpack.c.l.b16 %v785
    %v1967 = vunpack.c.h.b16 %v785
    %v1968 = vunpack.c.l.b16 %v786
    %v1969 = vunpack.c.h.b16 %v786
    %v1970 = vunpack.c.l.b16 %v787
    %v1971 = vunpack.c.h.b16 %v787
    %v1972 = vunpack.c.l.b16 %v788
    %v1973 = vunpack.c.h.b16 %v788
    %v1974 = vunpack.c.l.b16 %v789
    %v1975 = vunpack.c.h.b16 %v789
    %v1976 = vunpack.c.l.b16 %v790
    %v1977 = vunpack.c.h.b16 %v790
    %v1978 = vunpack.c.l.b16 %v791
    %v1979 = vunpack.c.h.b16 %v791
    %v1980 = vunpack.c.l.b16 %v792
    %v1981 = vunpack.c.h.b16 %v792
    %v1982 = vunpack.c.l.b16 %v793
    %v1983 = vunpack.c.h.b16 %v793
    %v1984 = vunpack.c.l.b16 %v794
    %v1985 = vunpack.c.h.b16 %v794
    %v1986 = vunpack.c.l.b16 %v795
    %v1987 = vunpack.c.h.b16 %v795
    %v1988 = vunpack.c.l.b16 %v796
    %v1989 = vunpack.c.h.b16 %v796
    %v1990 = vunpack.c.l.b16 %v797
    %v1991 = vunpack.c.h.b16 %v797
    %v1992 = vunpack.c.l.b16 %v798
    %v1993 = vunpack.c.h.b16 %v798
    %v1994 = vunpack.c.l.b16 %v799
    %v1995 = vunpack.c.h.b16 %v799
    %v1996 = vunpack.c.l.b16 %v800
    %v1997 = vunpack.c.h.b16 %v800
    %v1998 = vunpack.c.l.b16 %v801
    %v1999 = vunpack.c.h.b16 %v801
    %v2000 = vunpack.c.l.b16 %v802
    %v2001 = vunpack.c.h.b16 %v802
    %v2002 = vunpack.c.l.b16 %v803
    %v2003 = vunpack.c.h.b16 %v803
    %v2004 = vunpack.c.l.b16 %v804
    %v2005 = vunpack.c.h.b16 %v804
    %v2006 = vunpack.c.l.b16 %v805
    %v2007 = vunpack.c.h.b16 %v805
    %v2008 = vunpack.c.l.b16 %v806
    %v2009 = vunpack.c.h.b16 %v806
    %v2010 = vunpack.c.l.b16 %v807
    %v2011 = vunpack.c.h.b16 %v807
    %v2012 = vunpack.c.l.b16 %v808
    %v2013 = vunpack.c.h.b16 %v808
    %v2014 = vunpack.c.l.b16 %v809
    %v2015 = vunpack.c.h.b16 %v809
    %v2016 = vunpack.c.l.b16 %v810
    %v2017 = vunpack.c.h.b16 %v810
    %v2018 = vunpack.c.l.b16 %v811
    %v2019 = vunpack.c.h.b16 %v811
    %v2020 = vunpack.c.l.b16 %v812
    %v2021 = vunpack.c.h.b16 %v812
    %v2022 = vunpack.c.l.b16 %v813
    %v2023 = vunpack.c.h.b16 %v813
    %v2024 = vunpack.c.l.b16 %v814
    %v2025 = vunpack.c.h.b16 %v814
    %v2026 = vunpack.c.l.b16 %v815
    %v2027 = vunpack.c.h.b16 %v815
    %v2028 = vunpack.c.l.b16 %v816
    %v2029 = vunpack.c.h.b16 %v816
    %v2030 = vunpack.c.l.b16 %v817
    %v2031 = vunpack.c.h.b16 %v817
    %v2032 = vunpack.c.l.b16 %v818
    %v2033 = vunpack.c.h.b16 %v818
    %v2034 = vunpack.c.l.b16 %v819
    %v2035 = vunpack.c.h.b16 %v819
    %v2036 = vunpack.c.l.b16 %v820
    %v2037 = vunpack.c.h.b16 %v820
    %v2038 = vunpack.c.l.b16 %v821
    %v2039 = vunpack.c.h.b16 %v821
    %v2040 = vunpack.c.l.b16 %v822
    %v2041 = vunpack.c.h.b16 %v822
    %v2042 = vunpack.c.l.b16 %v823
    %v2043 = vunpack.c.h.b16 %v823
    %v2044 = vunpack.c.l.b16 %v824
    %v2045 = vunpack.c.h.b16 %v824
    %v2046 = vunpack.c.l.b16 %v825
    %v2047 = vunpack.c.h.b16 %v825
    %v2048 = vunpack.c.l.b16 %v826
    %v2049 = vunpack.c.h.b16 %v826
    %v2050 = vunpack.c.l.b16 %v827
    %v2051 = vunpack.c.h.b16 %v827
    %v2052 = vunpack.c.l.b16 %v828
    %v2053 = vunpack.c.h.b16 %v828
    %v2054 = vunpack.c.l.b16 %v829
    %v2055 = vunpack.c.h.b16 %v829
    %v2056 = vunpack.c.l.b16 %v830
    %v2057 = vunpack.c.h.b16 %v830
    %v2058 = vunpack.c.l.b16 %v831
    %v2059 = vunpack.c.h.b16 %v831
    %v2060 = vunpack.c.l.b16 %v832
    %v2061 = vunpack.c.h.b16 %v832
    %v2062 = vunpack.c.l.b16 %v833
    %v2063 = vunpack.c.h.b16 %v833
    %v2064 = vunpack.c.l.b16 %v834
    %v2065 = vunpack.c.h.b16 %v834
    %v2066 = vunpack.c.l.b16 %v835
    %v2067 = vunpack.c.h.b16 %v835
    %v2068 = vunpack.c.l.b16 %v836
    %v2069 = vunpack.c.h.b16 %v836
    %v2070 = vunpack.c.l.b16 %v837
    %v2071 = vunpack.c.h.b16 %v837
    %v2072 = vunpack.c.l.b16 %v838
    %v2073 = vunpack.c.h.b16 %v838
    %v2074 = vunpack.c.l.b16 %v839
    %v2075 = vunpack.c.h.b16 %v839
    %v2076 = vunpack.c.l.b16 %v840
    %v2077 = vunpack.c.h.b16 %v840
    %v2078 = vunpack.c.l.b16 %v841
    %v2079 = vunpack.c.h.b16 %v841
    %v2080 = vunpack.c.l.b16 %v842
    %v2081 = vunpack.c.h.b16 %v842
    %v2082 = vunpack.c.l.b16 %v843
    %v2083 = vunpack.c.h.b16 %v843
    %v2084 = vunpack.c.l.b16 %v844
    %v2085 = vunpack.c.h.b16 %v844
    %v2086 = vunpack.c.l.b16 %v845
    %v2087 = vunpack.c.h.b16 %v845
    %v2088 = vunpack.c.l.b16 %v846
    %v2089 = vunpack.c.h.b16 %v846
    %v2090 = vunpack.c.l.b16 %v847
    %v2091 = vunpack.c.h.b16 %v847
    %v2092 = vunpack.c.l.b16 %v848
    %v2093 = vunpack.c.h.b16 %v848
    %v2094 = vunpack.c.l.b16 %v849
    %v2095 = vunpack.c.h.b16 %v849
    %v2096 = vunpack.c.l.b16 %v850
    %v2097 = vunpack.c.h.b16 %v850
    %v2098 = vunpack.c.l.b16 %v851
    %v2099 = vunpack.c.h.b16 %v851
    %v2100 = vunpack.c.l.b16 %v852
    %v2101 = vunpack.c.h.b16 %v852
    %v2102 = vunpack.c.l.b16 %v853
    %v2103 = vunpack.c.h.b16 %v853
    %v2104 = vunpack.c.l.b16 %v854
    %v2105 = vunpack.c.h.b16 %v854
    %v2106 = vunpack.c.l.b16 %v855
    %v2107 = vunpack.c.h.b16 %v855
    %v2108 = vunpack.c.l.b16 %v856
    %v2109 = vunpack.c.h.b16 %v856
    %v2110 = vunpack.c.l.b16 %v857
    %v2111 = vunpack.c.h.b16 %v857
    %v2112 = vunpack.c.l.b16 %v858
    %v2113 = vunpack.c.h.b16 %v858
    %v2114 = vunpack.c.l.b16 %v859
    %v2115 = vunpack.c.h.b16 %v859
    %v2116 = vunpack.c.l.b16 %v860
    %v2117 = vunpack.c.h.b16 %v860
    %v2118 = vunpack.c.l.b16 %v861
    %v2119 = vunpack.c.h.b16 %v861
    %v2120 = vunpack.c.l.b16 %v862
    %v2121 = vunpack.c.h.b16 %v862
    %v2122 = vunpack.c.l.b16 %v863
    %v2123 = vunpack.c.h.b16 %v863
    %v2124 = vunpack.c.l.b16 %v864
    %v2125 = vunpack.c.h.b16 %v864
    %v2126 = vunpack.c.l.b16 %v865
    %v2127 = vunpack.c.h.b16 %v865
    %v2128 = vunpack.c.l.b16 %v866
    %v2129 = vunpack.c.h.b16 %v866
    %v2130 = vunpack.c.l.b16 %v867
    %v2131 = vunpack.c.h.b16 %v867
    %v2132 = vunpack.c.l.b16 %v868
    %v2133 = vunpack.c.h.b16 %v868
    %v2134 = vunpack.c.l.b16 %v869
    %v2135 = vunpack.c.h.b16 %v869
    %v2136 = vunpack.c.l.b16 %v870
    %v2137 = vunpack.c.h.b16 %v870
    %v2138 = vunpack.c.l.b16 %v871
    %v2139 = vunpack.c.h.b16 %v871
    %v2140 = vunpack.c.l.b16 %v872
    %v2141 = vunpack.c.h.b16 %v872
    %v2142 = vunpack.c.l.b16 %v873
    %v2143 = vunpack.c.h.b16 %v873
    %v2144 = vunpack.c.l.b16 %v874
    %v2145 = vunpack.c.h.b16 %v874
    %v2146 = vunpack.c.l.b16 %v875
    %v2147 = vunpack.c.h.b16 %v875
    %v2148 = vunpack.c.l.b16 %v876
    %v2149 = vunpack.c.h.b16 %v876
    %v2150 = vunpack.c.l.b16 %v877
    %v2151 = vunpack.c.h.b16 %v877
    %v2152 = vunpack.c.l.b16 %v878
    %v2153 = vunpack.c.h.b16 %v878
    %v2154 = vunpack.c.l.b16 %v879
    %v2155 = vunpack.c.h.b16 %v879
    %v2156 = vunpack.c.l.b16 %v880
    %v2157 = vunpack.c.h.b16 %v880
    %v2158 = vunpack.c.l.b16 %v881
    %v2159 = vunpack.c.h.b16 %v881
    %v2160 = vunpack.c.l.b16 %v882
    %v2161 = vunpack.c.h.b16 %v882
    %v2162 = vunpack.c.l.b16 %v883
    %v2163 = vunpack.c.h.b16 %v883
    %v2164 = vunpack.c.l.b16 %v884
    %v2165 = vunpack.c.h.b16 %v884
    %v2166 = vunpack.c.l.b16 %v885
    %v2167 = vunpack.c.h.b16 %v885
    %v2168 = vunpack.c.l.b16 %v886
    %v2169 = vunpack.c.h.b16 %v886
    %v2170 = vunpack.c.l.b16 %v887
    %v2171 = vunpack.c.h.b16 %v887
    %v2172 = vunpack.c.l.b16 %v888
    %v2173 = vunpack.c.h.b16 %v888
    %v2174 = vunpack.c.l.b16 %v889
    %v2175 = vunpack.c.h.b16 %v889
    %v2176 = vunpack.c.l.b16 %v890
    %v2177 = vunpack.c.h.b16 %v890
    %v2178 = vunpack.c.l.b16 %v891
    %v2179 = vunpack.c.h.b16 %v891
    %v2180 = vunpack.c.l.b16 %v892
    %v2181 = vunpack.c.h.b16 %v892
    %v2182 = vunpack.c.l.b16 %v893
    %v2183 = vunpack.c.h.b16 %v893
    %v2184 = vunpack.c.l.b16 %v894
    %v2185 = vunpack.c.h.b16 %v894
    %v2186 = vunpack.c.l.b16 %v895
    %v2187 = vunpack.c.h.b16 %v895
    %v2188 = vunpack.c.l.b16 %v896
    %v2189 = vunpack.c.h.b16 %v896
    %v2190 = vunpack.c.l.b16 %v897
    %v2191 = vunpack.c.h.b16 %v897
    %v2192 = vunpack.c.l.b16 %v898
    %v2193 = vunpack.c.h.b16 %v898
    %v2194 = vunpack.c.l.b16 %v899
    %v2195 = vunpack.c.h.b16 %v899
    %v2196 = vunpack.c.l.b16 %v900
    %v2197 = vunpack.c.h.b16 %v900
    %v2198 = vunpack.c.l.b16 %v901
    %v2199 = vunpack.c.h.b16 %v901
    %v2200 = vunpack.c.l.b16 %v902
    %v2201 = vunpack.c.h.b16 %v902
    %v2202 = vunpack.c.l.b16 %v903
    %v2203 = vunpack.c.h.b16 %v903
    %v2204 = vunpack.c.l.b16 %v904
    %v2205 = vunpack.c.h.b16 %v904
    %v2206 = vunpack.c.l.b16 %v905
    %v2207 = vunpack.c.h.b16 %v905
    %v2208 = vunpack.c.l.b16 %v906
    %v2209 = vunpack.c.h.b16 %v906
    %v2210 = vunpack.c.l.b16 %v907
    %v2211 = vunpack.c.h.b16 %v907
    %v2212 = vunpack.c.l.b16 %v908
    %v2213 = vunpack.c.h.b16 %v908
    %v2214 = vunpack.c.l.b16 %v909
    %v2215 = vunpack.c.h.b16 %v909
    %v2216 = vunpack.c.l.b16 %v910
    %v2217 = vunpack.c.h.b16 %v910
    %v2218 = vunpack.c.l.b16 %v911
    %v2219 = vunpack.c.h.b16 %v911
    %v2220 = vunpack.c.l.b16 %v912
    %v2221 = vunpack.c.h.b16 %v912
    %v2222 = vunpack.c.l.b16 %v913
    %v2223 = vunpack.c.h.b16 %v913
    %v2224 = vunpack.c.l.b16 %v914
    %v2225 = vunpack.c.h.b16 %v914
    %v2226 = vunpack.c.l.b16 %v915
    %v2227 = vunpack.c.h.b16 %v915
    %v2228 = vunpack.c.l.b16 %v916
    %v2229 = vunpack.c.h.b16 %v916
    %v2230 = vunpack.c.l.b16 %v917
    %v2231 = vunpack.c.h.b16 %v917
    %v2232 = vunpack.c.l.b16 %v918
    %v2233 = vunpack.c.h.b16 %v918
    %v2234 = vunpack.c.l.b16 %v919
    %v2235 = vunpack.c.h.b16 %v919
    %v2236 = vunpack.c.l.b16 %v920
    %v2237 = vunpack.c.h.b16 %v920
    %v2238 = vunpack.c.l.b16 %v921
    %v2239 = vunpack.c.h.b16 %v921
    %v2240 = vunpack.c.l.b16 %v922
    %v2241 = vunpack.c.h.b16 %v922
    %v2242 = vunpack.c.l.b16 %v923
    %v2243 = vunpack.c.h.b16 %v923
    %v2244 = vunpack.c.l.b16 %v924
    %v2245 = vunpack.c.h.b16 %v924
    %v2246 = vunpack.c.l.b16 %v925
    %v2247 = vunpack.c.h.b16 %v925
    %v2248 = vunpack.c.l.b16 %v926
    %v2249 = vunpack.c.h.b16 %v926
    %v2250 = vunpack.c.l.b16 %v927
    %v2251 = vunpack.c.h.b16 %v927
    %v2252 = vunpack.c.l.b16 %v928
    %v2253 = vunpack.c.h.b16 %v928
    %v2254 = vunpack.c.l.b16 %v929
    %v2255 = vunpack.c.h.b16 %v929
    %v2256 = vunpack.c.l.b16 %v930
    %v2257 = vunpack.c.h.b16 %v930
    %v2258 = vunpack.c.l.b16 %v931
    %v2259 = vunpack.c.h.b16 %v931
    %v2260 = vunpack.c.l.b16 %v932
    %v2261 = vunpack.c.h.b16 %v932
    %v2262 = vunpack.c.l.b16 %v933
    %v2263 = vunpack.c.h.b16 %v933
    %v2264 = vunpack.c.l.b16 %v934
    %v2265 = vunpack.c.h.b16 %v934
    %v2266 = vunpack.c.l.b16 %v935
    %v2267 = vunpack.c.h.b16 %v935
    %v2268 = vunpack.c.l.b16 %v936
    %v2269 = vunpack.c.h.b16 %v936
    %v2270 = vunpack.c.l.b16 %v937
    %v2271 = vunpack.c.h.b16 %v937
    %v2272 = vunpack.c.l.b16 %v938
    %v2273 = vunpack.c.h.b16 %v938
    %v2274 = vunpack.c.l.b16 %v939
    %v2275 = vunpack.c.h.b16 %v939
    %v2276 = vunpack.c.l.b16 %v940
    %v2277 = vunpack.c.h.b16 %v940
    %v2278 = vunpack.c.l.b16 %v941
    %v2279 = vunpack.c.h.b16 %v941
    %v2280 = vunpack.c.l.b16 %v942
    %v2281 = vunpack.c.h.b16 %v942
    %v2282 = vunpack.c.l.b16 %v943
    %v2283 = vunpack.c.h.b16 %v943
    %v2284 = vunpack.c.l.b16 %v944
    %v2285 = vunpack.c.h.b16 %v944
    %v2286 = vunpack.c.l.b16 %v945
    %v2287 = vunpack.c.h.b16 %v945
    %v2288 = vunpack.c.l.b16 %v946
    %v2289 = vunpack.c.h.b16 %v946
    %v2290 = vunpack.c.l.b16 %v947
    %v2291 = vunpack.c.h.b16 %v947
    %v2292 = vunpack.c.l.b16 %v948
    %v2293 = vunpack.c.h.b16 %v948
    %v2294 = vunpack.c.l.b16 %v949
    %v2295 = vunpack.c.h.b16 %v949
    %v2296 = vunpack.c.l.b16 %v950
    %v2297 = vunpack.c.h.b16 %v950
    %v2298 = vunpack.c.l.b16 %v951
    %v2299 = vunpack.c.h.b16 %v951
    %v2300 = vunpack.c.l.b16 %v952
    %v2301 = vunpack.c.h.b16 %v952
    %v2302 = vunpack.c.l.b16 %v953
    %v2303 = vunpack.c.h.b16 %v953
    %v2304 = vunpack.c.l.b16 %v954
    %v2305 = vunpack.c.h.b16 %v954
    %v2306 = vunpack.c.l.b16 %v955
    %v2307 = vunpack.c.h.b16 %v955
    %v2308 = vunpack.c.l.b16 %v956
    %v2309 = vunpack.c.h.b16 %v956
    %v2310 = vunpack.c.l.b16 %v957
    %v2311 = vunpack.c.h.b16 %v957
    %v2312 = vunpack.c.l.b16 %v958
    %v2313 = vunpack.c.h.b16 %v958
    %v2314 = vunpack.c.l.b16 %v959
    %v2315 = vunpack.c.h.b16 %v959
    %v2316 = vunpack.c.l.b16 %v960
    %v2317 = vunpack.c.h.b16 %v960
    %v2318 = vunpack.c.l.b16 %v961
    %v2319 = vunpack.c.h.b16 %v961
    %v2320 = vunpack.c.l.b16 %v962
    %v2321 = vunpack.c.h.b16 %v962
    %v2322 = vunpack.c.l.b16 %v963
    %v2323 = vunpack.c.h.b16 %v963
    %v2324 = vunpack.c.l.b16 %v964
    %v2325 = vunpack.c.h.b16 %v964
    %v2326 = vunpack.c.l.b16 %v965
    %v2327 = vunpack.c.h.b16 %v965
    %v2328 = vunpack.c.l.b16 %v966
    %v2329 = vunpack.c.h.b16 %v966
    %v2330 = vunpack.c.l.b16 %v967
    %v2331 = vunpack.c.h.b16 %v967
    %v2332 = vunpack.c.l.b16 %v968
    %v2333 = vunpack.c.h.b16 %v968
    %v2334 = vunpack.c.l.b16 %v969
    %v2335 = vunpack.c.h.b16 %v969
    %v2336 = vunpack.c.l.b16 %v970
    %v2337 = vunpack.c.h.b16 %v970
    %v2338 = vunpack.c.l.b16 %v971
    %v2339 = vunpack.c.h.b16 %v971
    %v2340 = vunpack.c.l.b16 %v972
    %v2341 = vunpack.c.h.b16 %v972
    %v2342 = vunpack.c.l.b16 %v973
    %v2343 = vunpack.c.h.b16 %v973
    %v2344 = vunpack.c.l.b16 %v974
    %v2345 = vunpack.c.h.b16 %v974
    %v2346 = vunpack.c.l.b16 %v975
    %v2347 = vunpack.c.h.b16 %v975
    %v2348 = vunpack.c.l.b16 %v976
    %v2349 = vunpack.c.h.b16 %v976
    %v2350 = vunpack.c.l.b16 %v977
    %v2351 = vunpack.c.h.b16 %v977
    %v2352 = vunpack.c.l.b16 %v978
    %v2353 = vunpack.c.h.b16 %v978
    %v2354 = vunpack.c.l.b16 %v979
    %v2355 = vunpack.c.h.b16 %v979
    %v2356 = vunpack.c.l.b16 %v980
    %v2357 = vunpack.c.h.b16 %v980
    %v2358 = vunpack.c.l.b16 %v981
    %v2359 = vunpack.c.h.b16 %v981
    %v2360 = vunpack.c.l.b16 %v982
    %v2361 = vunpack.c.h.b16 %v982
    %v2362 = vunpack.c.l.b16 %v983
    %v2363 = vunpack.c.h.b16 %v983
    %v2364 = vunpack.c.l.b16 %v984
    %v2365 = vunpack.c.h.b16 %v984
    %v2366 = vunpack.c.l.b16 %v985
    %v2367 = vunpack.c.h.b16 %v985
    %v2368 = vunpack.c.l.b16 %v986
    %v2369 = vunpack.c.h.b16 %v986
    %v2370 = vunpack.c.l.b16 %v987
    %v2371 = vunpack.c.h.b16 %v987
    %v2372 = vunpack.c.l.b16 %v988
    %v2373 = vunpack.c.h.b16 %v988
    %v2374 = vunpack.c.l.b16 %v989
    %v2375 = vunpack.c.h.b16 %v989
    %v2376 = vunpack.c.l.b16 %v990
    %v2377 = vunpack.c.h.b16 %v990
    %v2378 = vunpack.c.l.b16 %v991
    %v2379 = vunpack.c.h.b16 %v991
    %v2380 = vunpack.c.l.b16 %v992
    %v2381 = vunpack.c.h.b16 %v992
    %v2382 = vunpack.c.l.b16 %v993
    %v2383 = vunpack.c.h.b16 %v993
    %v2384 = vunpack.c.l.b16 %v994
    %v2385 = vunpack.c.h.b16 %v994
    %v2386 = vunpack.c.l.b16 %v995
    %v2387 = vunpack.c.h.b16 %v995
    %v2388 = vunpack.c.l.b16 %v996
    %v2389 = vunpack.c.h.b16 %v996
    %v2390 = vunpack.c.l.b16 %v997
    %v2391 = vunpack.c.h.b16 %v997
    %v2392 = vunpack.c.l.b16 %v998
    %v2393 = vunpack.c.h.b16 %v998
    %v2394 = vunpack.c.l.b16 %v999
    %v2395 = vunpack.c.h.b16 %v999
    %v2396 = vunpack.c.l.b16 %v1000
    %v2397 = vunpack.c.h.b16 %v1000
    %v2398 = vunpack.c.l.b16 %v1001
    %v2399 = vunpack.c.h.b16 %v1001
    %v2400 = vunpack.c.l.b16 %v1002
    %v2401 = vunpack.c.h.b16 %v1002
    %v2402 = vunpack.c.l.b16 %v1003
    %v2403 = vunpack.c.h.b16 %v1003
    %v2404 = vunpack.c.l.b16 %v1004
    %v2405 = vunpack.c.h.b16 %v1004
    %v2406 = vunpack.c.l.b16 %v1005
    %v2407 = vunpack.c.h.b16 %v1005
    %v2408 = vunpack.c.l.b16 %v1006
    %v2409 = vunpack.c.h.b16 %v1006
    %v2410 = vunpack.c.l.b16 %v1007
    %v2411 = vunpack.c.h.b16 %v1007
    %v2412 = vunpack.c.l.b16 %v1008
    %v2413 = vunpack.c.h.b16 %v1008
    %v2414 = vunpack.c.l.b16 %v1009
    %v2415 = vunpack.c.h.b16 %v1009
    %v2416 = vunpack.c.l.b16 %v1010
    %v2417 = vunpack.c.h.b16 %v1010
    %v2418 = vunpack.c.l.b16 %v1011
    %v2419 = vunpack.c.h.b16 %v1011
    %v2420 = vunpack.c.l.b16 %v1012
    %v2421 = vunpack.c.h.b16 %v1012
    %v2422 = vunpack.c.l.b16 %v1013
    %v2423 = vunpack.c.h.b16 %v1013
    %v2424 = vunpack.c.l.b16 %v1014
    %v2425 = vunpack.c.h.b16 %v1014
    %v2426 = vunpack.c.l.b16 %v1015
    %v2427 = vunpack.c.h.b16 %v1015
    %v2428 = vunpack.c.l.b16 %v1016
    %v2429 = vunpack.c.h.b16 %v1016
    %v2430 = vunpack.c.l.b16 %v1017
    %v2431 = vunpack.c.h.b16 %v1017
    %v2432 = vunpack.c.l.b16 %v1018
    %v2433 = vunpack.c.h.b16 %v1018
    %v2434 = vunpack.c.l.b16 %v1019
    %v2435 = vunpack.c.h.b16 %v1019
    %v2436 = vunpack.c.l.b16 %v1020
    %v2437 = vunpack.c.h.b16 %v1020
    %v2438 = vunpack.c.l.b16 %v1021
    %v2439 = vunpack.c.h.b16 %v1021
    %v2440 = vunpack.c.l.b16 %v1022
    %v2441 = vunpack.c.h.b16 %v1022
    %v2442 = vunpack.c.l.b16 %v1023
    %v2443 = vunpack.c.h.b16 %v1023
    %v2444 = vunpack.c.l.b16 %v1024
    %v2445 = vunpack.c.h.b16 %v1024
    %v2446 = vunpack.c.l.b16 %v1025
    %v2447 = vunpack.c.h.b16 %v1025
    %v2448 = vunpack.c.l.b16 %v1026
    %v2449 = vunpack.c.h.b16 %v1026
    %v2450 = vunpack.c.l.b16 %v1027
    %v2451 = vunpack.c.h.b16 %v1027
    %v2452 = vunpack.c.l.b16 %v1028
    %v2453 = vunpack.c.h.b16 %v1028
    %v2454 = vunpack.c.l.b16 %v1029
    %v2455 = vunpack.c.h.b16 %v1029
    %v2456 = vunpack.c.l.b16 %v1030
    %v2457 = vunpack.c.h.b16 %v1030
    %v2458 = vunpack.c.l.b16 %v1031
    %v2459 = vunpack.c.h.b16 %v1031
    %v2460 = vunpack.c.l.b16 %v1032
    %v2461 = vunpack.c.h.b16 %v1032
    %v2462 = vunpack.c.l.b16 %v1033
    %v2463 = vunpack.c.h.b16 %v1033
    %v2464 = vunpack.c.l.b16 %v1034
    %v2465 = vunpack.c.h.b16 %v1034
    %v2466 = vunpack.c.l.b16 %v1035
    %v2467 = vunpack.c.h.b16 %v1035
    %v2468 = vunpack.c.l.b16 %v1036
    %v2469 = vunpack.c.h.b16 %v1036
    %v2470 = vunpack.c.l.b16 %v1037
    %v2471 = vunpack.c.h.b16 %v1037
    %v2472 = vunpack.c.l.b16 %v1038
    %v2473 = vunpack.c.h.b16 %v1038
    %v2474 = vunpack.c.l.b16 %v1039
    %v2475 = vunpack.c.h.b16 %v1039
    %v2476 = vunpack.c.l.b16 %v1040
    %v2477 = vunpack.c.h.b16 %v1040
    %v2478 = vunpack.c.l.b16 %v1041
    %v2479 = vunpack.c.h.b16 %v1041
    %v2480 = vunpack.c.l.b16 %v1042
    %v2481 = vunpack.c.h.b16 %v1042
    %v2482 = vunpack.c.l.b16 %v1043
    %v2483 = vunpack.c.h.b16 %v1043
    %v2484 = vunpack.c.l.b16 %v1044
    %v2485 = vunpack.c.h.b16 %v1044
    %v2486 = vunpack.c.l.b16 %v1045
    %v2487 = vunpack.c.h.b16 %v1045
    %v2488 = vunpack.c.l.b16 %v1046
    %v2489 = vunpack.c.h.b16 %v1046
    %v2490 = vunpack.c.l.b16 %v1047
    %v2491 = vunpack.c.h.b16 %v1047
    %v2492 = vunpack.c.l.b16 %v1048
    %v2493 = vunpack.c.h.b16 %v1048
    %v2494 = vunpack.c.l.b16 %v1049
    %v2495 = vunpack.c.h.b16 %v1049
    %v2496 = vunpack.c.l.b16 %v1050
    %v2497 = vunpack.c.h.b16 %v1050
    %v2498 = vunpack.c.l.b16 %v1051
    %v2499 = vunpack.c.h.b16 %v1051
    %v2500 = vunpack.c.l.b16 %v1052
    %v2501 = vunpack.c.h.b16 %v1052
    %v2502 = vunpack.c.l.b16 %v1053
    %v2503 = vunpack.c.h.b16 %v1053
    %v2504 = vunpack.c.l.b16 %v1054
    %v2505 = vunpack.c.h.b16 %v1054
    %v2506 = vunpack.c.l.b16 %v1055
    %v2507 = vunpack.c.h.b16 %v1055
    %v2508 = vunpack.c.l.b16 %v1056
    %v2509 = vunpack.c.h.b16 %v1056
    %v2510 = vunpack.c.l.b16 %v1057
    %v2511 = vunpack.c.h.b16 %v1057
    %v2512 = vunpack.c.l.b16 %v1058
    %v2513 = vunpack.c.h.b16 %v1058
    %v2514 = vunpack.c.l.b16 %v1059
    %v2515 = vunpack.c.h.b16 %v1059
    %v2516 = vunpack.c.l.b16 %v1060
    %v2517 = vunpack.c.h.b16 %v1060
    %v2518 = vunpack.c.l.b16 %v1061
    %v2519 = vunpack.c.h.b16 %v1061
    %v2520 = vunpack.c.l.b16 %v1062
    %v2521 = vunpack.c.h.b16 %v1062
    %v2522 = vunpack.c.l.b16 %v1063
    %v2523 = vunpack.c.h.b16 %v1063
    %v2524 = vunpack.c.l.b16 %v1064
    %v2525 = vunpack.c.h.b16 %v1064
    %v2526 = vunpack.c.l.b16 %v1065
    %v2527 = vunpack.c.h.b16 %v1065
    %v2528 = vunpack.c.l.b16 %v1066
    %v2529 = vunpack.c.h.b16 %v1066
    %v2530 = vunpack.c.l.b16 %v1067
    %v2531 = vunpack.c.h.b16 %v1067
    %v2532 = vunpack.c.l.b16 %v1068
    %v2533 = vunpack.c.h.b16 %v1068
    %v2534 = vunpack.c.l.b16 %v1069
    %v2535 = vunpack.c.h.b16 %v1069
    %v2536 = vunpack.c.l.b16 %v1070
    %v2537 = vunpack.c.h.b16 %v1070
    %v2538 = vunpack.c.l.b16 %v1071
    %v2539 = vunpack.c.h.b16 %v1071
    %v2540 = vunpack.c.l.b16 %v1072
    %v2541 = vunpack.c.h.b16 %v1072
    %v2542 = vunpack.c.l.b16 %v1073
    %v2543 = vunpack.c.h.b16 %v1073
    %v2544 = vunpack.c.l.b16 %v1074
    %v2545 = vunpack.c.h.b16 %v1074
    %v2546 = vunpack.c.l.b16 %v1075
    %v2547 = vunpack.c.h.b16 %v1075
    %v2548 = vunpack.c.l.b16 %v1076
    %v2549 = vunpack.c.h.b16 %v1076
    %v2550 = vunpack.c.l.b16 %v1077
    %v2551 = vunpack.c.h.b16 %v1077
    %v2552 = vunpack.c.l.b16 %v1078
    %v2553 = vunpack.c.h.b16 %v1078
    %v2554 = vunpack.c.l.b16 %v1079
    %v2555 = vunpack.c.h.b16 %v1079
    %v2556 = vunpack.c.l.b16 %v1080
    %v2557 = vunpack.c.h.b16 %v1080
    %v2558 = vunpack.c.l.b16 %v1081
    %v2559 = vunpack.c.h.b16 %v1081
    %v2560 = vunpack.c.l.b16 %v1082
    %v2561 = vunpack.c.h.b16 %v1082
    %v2562 = vunpack.c.l.b16 %v1083
    %v2563 = vunpack.c.h.b16 %v1083
    %v2564 = vunpack.c.l.b16 %v1084
    %v2565 = vunpack.c.h.b16 %v1084
    %v2566 = vunpack.c.l.b16 %v1085
    %v2567 = vunpack.c.h.b16 %v1085
    %v2568 = vunpack.c.l.b16 %v1086
    %v2569 = vunpack.c.h.b16 %v1086
    %v2570 = vunpack.c.l.b16 %v1087
    %v2571 = vunpack.c.h.b16 %v1087
    %v2572 = vunpack.c.l.b16 %v1088
    %v2573 = vunpack.c.h.b16 %v1088
    %v2574 = vunpack.c.l.b16 %v1089
    %v2575 = vunpack.c.h.b16 %v1089
    %v2576 = vunpack.c.l.b16 %v1090
    %v2577 = vunpack.c.h.b16 %v1090
    %v2578 = vunpack.c.l.b16 %v1091
    %v2579 = vunpack.c.h.b16 %v1091
    %v2580 = vunpack.c.l.b16 %v1092
    %v2581 = vunpack.c.h.b16 %v1092
    %v2582 = vunpack.c.l.b16 %v1093
    %v2583 = vunpack.c.h.b16 %v1093
    %v2584 = vunpack.c.l.b16 %v1094
    %v2585 = vunpack.c.h.b16 %v1094
    %v2586 = vunpack.c.l.b16 %v1095
    %v2587 = vunpack.c.h.b16 %v1095
    %v2588 = vunpack.c.l.b16 %v1096
    %v2589 = vunpack.c.h.b16 %v1096
    %v2590 = vunpack.c.l.b16 %v1097
    %v2591 = vunpack.c.h.b16 %v1097
    %v2592 = vunpack.c.l.b16 %v1098
    %v2593 = vunpack.c.h.b16 %v1098
    %v2594 = vunpack.c.l.b16 %v1099
    %v2595 = vunpack.c.h.b16 %v1099
    %v2596 = vunpack.c.l.b16 %v1100
    %v2597 = vunpack.c.h.b16 %v1100
    %v2598 = vunpack.c.l.b16 %v1101
    %v2599 = vunpack.c.h.b16 %v1101
    %v2600 = vunpack.c.l.b16 %v1102
    %v2601 = vunpack.c.h.b16 %v1102
    %v2602 = vunpack.c.l.b16 %v1103
    %v2603 = vunpack.c.h.b16 %v1103
    %v2604 = vunpack.c.l.b16 %v1104
    %v2605 = vunpack.c.h.b16 %v1104
    %v2606 = vunpack.c.l.b16 %v1105
    %v2607 = vunpack.c.h.b16 %v1105
    %v2608 = vunpack.c.l.b16 %v1106
    %v2609 = vunpack.c.h.b16 %v1106
    %v2610 = vunpack.c.l.b16 %v1107
    %v2611 = vunpack.c.h.b16 %v1107
    %v2612 = vunpack.c.l.b16 %v1108
    %v2613 = vunpack.c.h.b16 %v1108
    %v2614 = vunpack.c.l.b16 %v1109
    %v2615 = vunpack.c.h.b16 %v1109
    %v2616 = vunpack.c.l.b16 %v1110
    %v2617 = vunpack.c.h.b16 %v1110
    %v2618 = vunpack.c.l.b16 %v1111
    %v2619 = vunpack.c.h.b16 %v1111
    %v2620 = vunpack.c.l.b16 %v1112
    %v2621 = vunpack.c.h.b16 %v1112
    %v2622 = vunpack.c.l.b16 %v1113
    %v2623 = vunpack.c.h.b16 %v1113
    %v2624 = vunpack.c.l.b16 %v1114
    %v2625 = vunpack.c.h.b16 %v1114
    %v2626 = vunpack.c.l.b16 %v1115
    %v2627 = vunpack.c.h.b16 %v1115
    %v2628 = vunpack.c.l.b16 %v1116
    %v2629 = vunpack.c.h.b16 %v1116
    %v2630 = vunpack.c.l.b16 %v1117
    %v2631 = vunpack.c.h.b16 %v1117
    %v2632 = vunpack.c.l.b16 %v1118
    %v2633 = vunpack.c.h.b16 %v1118
    %v2634 = vunpack.c.l.b16 %v1119
    %v2635 = vunpack.c.h.b16 %v1119
    %v2636 = vunpack.c.l.b16 %v1120
    %v2637 = vunpack.c.h.b16 %v1120
    %v2638 = vunpack.c.l.b16 %v1121
    %v2639 = vunpack.c.h.b16 %v1121
    %v2640 = vunpack.c.l.b16 %v1122
    %v2641 = vunpack.c.h.b16 %v1122
    %v2642 = vunpack.c.l.b16 %v1123
    %v2643 = vunpack.c.h.b16 %v1123
    %v2644 = vunpack.c.l.b16 %v1124
    %v2645 = vunpack.c.h.b16 %v1124
    %v2646 = vunpack.c.l.b16 %v1125
    %v2647 = vunpack.c.h.b16 %v1125
    %v2648 = vunpack.c.l.b16 %v1126
    %v2649 = vunpack.c.h.b16 %v1126
    %v2650 = vunpack.c.l.b16 %v1127
    %v2651 = vunpack.c.h.b16 %v1127
    %v2652 = vunpack.c.l.b16 %v1128
    %v2653 = vunpack.c.h.b16 %v1128
    %v2654 = vunpack.c.l.b16 %v1129
    %v2655 = vunpack.c.h.b16 %v1129
    %v2656 = vunpack.c.l.b16 %v1130
    %v2657 = vunpack.c.h.b16 %v1130
    %v2658 = vunpack.c.l.b16 %v1131
    %v2659 = vunpack.c.h.b16 %v1131
    %v2660 = vunpack.c.l.b16 %v1132
    %v2661 = vunpack.c.h.b16 %v1132
    %v2662 = vunpack.c.l.b16 %v1133
    %v2663 = vunpack.c.h.b16 %v1133
    %v2664 = vunpack.c.l.b16 %v1134
    %v2665 = vunpack.c.h.b16 %v1134
    %v2666 = vunpack.c.l.b16 %v1135
    %v2667 = vunpack.c.h.b16 %v1135
    %v2668 = vunpack.c.l.b16 %v1136
    %v2669 = vunpack.c.h.b16 %v1136
    %v2670 = vunpack.c.l.b16 %v1137
    %v2671 = vunpack.c.h.b16 %v1137
    %v2672 = vunpack.c.l.b16 %v1138
    %v2673 = vunpack.c.h.b16 %v1138
    %v2674 = vunpack.c.l.b16 %v1139
    %v2675 = vunpack.c.h.b16 %v1139
    %v2676 = vunpack.c.l.b16 %v1140
    %v2677 = vunpack.c.h.b16 %v1140
    %v2678 = vunpack.c.l.b16 %v1141
    %v2679 = vunpack.c.h.b16 %v1141
    %v2680 = vunpack.c.l.b16 %v1142
    %v2681 = vunpack.c.h.b16 %v1142
    %v2682 = vunpack.c.l.b16 %v1143
    %v2683 = vunpack.c.h.b16 %v1143
    %v2684 = vunpack.c.l.b16 %v1144
    %v2685 = vunpack.c.h.b16 %v1144
    %v2686 = vunpack.c.l.b16 %v1145
    %v2687 = vunpack.c.h.b16 %v1145
    %v2688 = vunpack.c.l.b16 %v1146
    %v2689 = vunpack.c.h.b16 %v1146
    %v2690 = vunpack.c.l.b16 %v1147
    %v2691 = vunpack.c.h.b16 %v1147
    %v2692 = vunpack.c.l.b16 %v1148
    %v2693 = vunpack.c.h.b16 %v1148
    %v2694 = vunpack.c.l.b16 %v1149
    %v2695 = vunpack.c.h.b16 %v1149
    %v2696 = vpack.c.b16 %v1676, %v1672
    %v2697 = vpack.c.b16 %v1677, %v1673
    %v2698 = vpack.c.b16 %v1678, %v1674
    %v2699 = vpack.c.b16 %v1679, %v1675
    %v2700 = vpack.c.b16 %v1684, %v1680
    %v2701 = vpack.c.b16 %v1685, %v1681
    %v2702 = vpack.c.b16 %v1686, %v1682
    %v2703 = vpack.c.b16 %v1687, %v1683
    %v2704 = vpack.c.b16 %v1692, %v1688
    %v2705 = vpack.c.b16 %v1693, %v1689
    %v2706 = vpack.c.b16 %v1694, %v1690
    %v2707 = vpack.c.b16 %v1695, %v1691
    %v2708 = vpack.c.b16 %v1700, %v1696
    %v2709 = vpack.c.b16 %v1701, %v1697
    %v2710 = vpack.c.b16 %v1702, %v1698
    %v2711 = vpack.c.b16 %v1703, %v1699
    %v2712 = vpack.c.b16 %v1708, %v1704
    %v2713 = vpack.c.b16 %v1709, %v1705
    %v2714 = vpack.c.b16 %v1710, %v1706
    %v2715 = vpack.c.b16 %v1711, %v1707
    %v2716 = vpack.c.b16 %v1716, %v1712
    %v2717 = vpack.c.b16 %v1717, %v1713
    %v2718 = vpack.c.b16 %v1718, %v1714
    %v2719 = vpack.c.b16 %v1719, %v1715
    %v2720 = vpack.c.b16 %v1724, %v1720
    %v2721 = vpack.c.b16 %v1725, %v1721
    %v2722 = vpack.c.b16 %v1726, %v1722
    %v2723 = vpack.c.b16 %v1727, %v1723
    %v2724 = vpack.c.b16 %v1732, %v1728
    %v2725 = vpack.c.b16 %v1733, %v1729
    %v2726 = vpack.c.b16 %v1734, %v1730
    %v2727 = vpack.c.b16 %v1735, %v1731
    %v2728 = vpack.c.b16 %v1740, %v1736
    %v2729 = vpack.c.b16 %v1741, %v1737
    %v2730 = vpack.c.b16 %v1742, %v1738
    %v2731 = vpack.c.b16 %v1743, %v1739
    %v2732 = vpack.c.b16 %v1748, %v1744
    %v2733 = vpack.c.b16 %v1749, %v1745
    %v2734 = vpack.c.b16 %v1750, %v1746
    %v2735 = vpack.c.b16 %v1751, %v1747
    %v2736 = vpack.c.b16 %v1756, %v1752
    %v2737 = vpack.c.b16 %v1757, %v1753
    %v2738 = vpack.c.b16 %v1758, %v1754
    %v2739 = vpack.c.b16 %v1759, %v1755
    %v2740 = vpack.c.b16 %v1764, %v1760
    %v2741 = vpack.c.b16 %v1765, %v1761
    %v2742 = vpack.c.b16 %v1766, %v1762
    %v2743 = vpack.c.b16 %v1767, %v1763
    %v2744 = vpack.c.b16 %v1772, %v1768
    %v2745 = vpack.c.b16 %v1773, %v1769
    %v2746 = vpack.c.b16 %v1774, %v1770
    %v2747 = vpack.c.b16 %v1775, %v1771
    %v2748 = vpack.c.b16 %v1780, %v1776
    %v2749 = vpack.c.b16 %v1781, %v1777
    %v2750 = vpack.c.b16 %v1782, %v1778
    %v2751 = vpack.c.b16 %v1783, %v1779
    %v2752 = vpack.c.b16 %v1788, %v1784
    %v2753 = vpack.c.b16 %v1789, %v1785
    %v2754 = vpack.c.b16 %v1790, %v1786
    %v2755 = vpack.c.b16 %v1791, %v1787
    %v2756 = vpack.c.b16 %v1796, %v1792
    %v2757 = vpack.c.b16 %v1797, %v1793
    %v2758 = vpack.c.b16 %v1798, %v1794
    %v2759 = vpack.c.b16 %v1799, %v1795
    %v2760 = vpack.c.b16 %v1804, %v1800
    %v2761 = vpack.c.b16 %v1805, %v1801
    %v2762 = vpack.c.b16 %v1806, %v1802
    %v2763 = vpack.c.b16 %v1807, %v1803
    %v2764 = vpack.c.b16 %v1812, %v1808
    %v2765 = vpack.c.b16 %v1813, %v1809
    %v2766 = vpack.c.b16 %v1814, %v1810
    %v2767 = vpack.c.b16 %v1815, %v1811
    %v2768 = vpack.c.b16 %v1820, %v1816
    %v2769 = vpack.c.b16 %v1821, %v1817
    %v2770 = vpack.c.b16 %v1822, %v1818
    %v2771 = vpack.c.b16 %v1823, %v1819
    %v2772 = vpack.c.b16 %v1828, %v1824
    %v2773 = vpack.c.b16 %v1829, %v1825
    %v2774 = vpack.c.b16 %v1830, %v1826
    %v2775 = vpack.c.b16 %v1831, %v1827
    %v2776 = vpack.c.b16 %v1836, %v1832
    %v2777 = vpack.c.b16 %v1837, %v1833
    %v2778 = vpack.c.b16 %v1838, %v1834
    %v2779 = vpack.c.b16 %v1839, %v1835
    %v2780 = vpack.c.b16 %v1844, %v1840
    %v2781 = vpack.c.b16 %v1845, %v1841
    %v2782 = vpack.c.b16 %v1846, %v1842
    %v2783 = vpack.c.b16 %v1847, %v1843
    %v2784 = vpack.c.b16 %v1852, %v1848
    %v2785 = vpack.c.b16 %v1853, %v1849
    %v2786 = vpack.c.b16 %v1854, %v1850
    %v2787 = vpack.c.b16 %v1855, %v1851
    %v2788 = vpack.c.b16 %v1860, %v1856
    %v2789 = vpack.c.b16 %v1861, %v1857
    %v2790 = vpack.c.b16 %v1862, %v1858
    %v2791 = vpack.c.b16 %v1863, %v1859
    %v2792 = vpack.c.b16 %v1868, %v1864
    %v2793 = vpack.c.b16 %v1869, %v1865
    %v2794 = vpack.c.b16 %v1870, %v1866
    %v2795 = vpack.c.b16 %v1871, %v1867
    %v2796 = vpack.c.b16 %v1876, %v1872
    %v2797 = vpack.c.b16 %v1877, %v1873
    %v2798 = vpack.c.b16 %v1878, %v1874
    %v2799 = vpack.c.b16 %v1879, %v1875
    %v2800 = vpack.c.b16 %v1884, %v1880
    %v2801 = vpack.c.b16 %v1885, %v1881
    %v2802 = vpack.c.b16 %v1886, %v1882
    %v2803 = vpack.c.b16 %v1887, %v1883
    %v2804 = vpack.c.b16 %v1892, %v1888
    %v2805 = vpack.c.b16 %v1893, %v1889
    %v2806 = vpack.c.b16 %v1894, %v1890
    %v2807 = vpack.c.b16 %v1895, %v1891
    %v2808 = vpack.c.b16 %v1900, %v1896
    %v2809 = vpack.c.b16 %v1901, %v1897
    %v2810 = vpack.c.b16 %v1902, %v1898
    %v2811 = vpack.c.b16 %v1903, %v1899
    %v2812 = vpack.c.b16 %v1908, %v1904
    %v2813 = vpack.c.b16 %v1909, %v1905
    %v2814 = vpack.c.b16 %v1910, %v1906
    %v2815 = vpack.c.b16 %v1911, %v1907
    %v2816 = vpack.c.b16 %v1916, %v1912
    %v2817 = vpack.c.b16 %v1917, %v1913
    %v2818 = vpack.c.b16 %v1918, %v1914
    %v2819 = vpack.c.b16 %v1919, %v1915
    %v2820 = vpack.c.b16 %v1924, %v1920
    %v2821 = vpack.c.b16 %v1925, %v1921
    %v2822 = vpack.c.b16 %v1926, %v1922
    %v2823 = vpack.c.b16 %v1927, %v1923
    %v2824 = vpack.c.b16 %v1932, %v1928
    %v2825 = vpack.c.b16 %v1933, %v1929
    %v2826 = vpack.c.b16 %v1934, %v1930
    %v2827 = vpack.c.b16 %v1935, %v1931
    %v2828 = vpack.c.b16 %v1940, %v1936
    %v2829 = vpack.c.b16 %v1941, %v1937
    %v2830 = vpack.c.b16 %v1942, %v1938
    %v2831 = vpack.c.b16 %v1943, %v1939
    %v2832 = vpack.c.b16 %v1948, %v1944
    %v2833 = vpack.c.b16 %v1949, %v1945
    %v2834 = vpack.c.b16 %v1950, %v1946
    %v2835 = vpack.c.b16 %v1951, %v1947
    %v2836 = vpack.c.b16 %v1956, %v1952
    %v2837 = vpack.c.b16 %v1957, %v1953
    %v2838 = vpack.c.b16 %v1958, %v1954
    %v2839 = vpack.c.b16 %v1959, %v1955
    %v2840 = vpack.c.b16 %v1964, %v1960
    %v2841 = vpack.c.b16 %v1965, %v1961
    %v2842 = vpack.c.b16 %v1966, %v1962
    %v2843 = vpack.c.b16 %v1967, %v1963
    %v2844 = vpack.c.b16 %v1972, %v1968
    %v2845 = vpack.c.b16 %v1973, %v1969
    %v2846 = vpack.c.b16 %v1974, %v1970
    %v2847 = vpack.c.b16 %v1975, %v1971
    %v2848 = vpack.c.b16 %v1980, %v1976
    %v2849 = vpack.c.b16 %v1981, %v1977
    %v2850 = vpack.c.b16 %v1982, %v1978
    %v2851 = vpack.c.b16 %v1983, %v1979
    %v2852 = vpack.c.b16 %v1988, %v1984
    %v2853 = vpack.c.b16 %v1989, %v1985
    %v2854 = vpack.c.b16 %v1990, %v1986
    %v2855 = vpack.c.b16 %v1991, %v1987
    %v2856 = vpack.c.b16 %v1996, %v1992
    %v2857 = vpack.c.b16 %v1997, %v1993
    %v2858 = vpack.c.b16 %v1998, %v1994
    %v2859 = vpack.c.b16 %v1999, %v1995
    %v2860 = vpack.c.b16 %v2004, %v2000
    %v2861 = vpack.c.b16 %v2005, %v2001
    %v2862 = vpack.c.b16 %v2006, %v2002
    %v2863 = vpack.c.b16 %v2007, %v2003
    %v2864 = vpack.c.b16 %v2012, %v2008
    %v2865 = vpack.c.b16 %v2013, %v2009
    %v2866 = vpack.c.b16 %v2014, %v2010
    %v2867 = vpack.c.b16 %v2015, %v2011
    %v2868 = vpack.c.b16 %v2020, %v2016
    %v2869 = vpack.c.b16 %v2021, %v2017
    %v2870 = vpack.c.b16 %v2022, %v2018
    %v2871 = vpack.c.b16 %v2023, %v2019
    %v2872 = vpack.c.b16 %v2028, %v2024
    %v2873 = vpack.c.b16 %v2029, %v2025
    %v2874 = vpack.c.b16 %v2030, %v2026
    %v2875 = vpack.c.b16 %v2031, %v2027
    %v2876 = vpack.c.b16 %v2036, %v2032
    %v2877 = vpack.c.b16 %v2037, %v2033
    %v2878 = vpack.c.b16 %v2038, %v2034
    %v2879 = vpack.c.b16 %v2039, %v2035
    %v2880 = vpack.c.b16 %v2044, %v2040
    %v2881 = vpack.c.b16 %v2045, %v2041
    %v2882 = vpack.c.b16 %v2046, %v2042
    %v2883 = vpack.c.b16 %v2047, %v2043
    %v2884 = vpack.c.b16 %v2052, %v2048
    %v2885 = vpack.c.b16 %v2053, %v2049
    %v2886 = vpack.c.b16 %v2054, %v2050
    %v2887 = vpack.c.b16 %v2055, %v2051
    %v2888 = vpack.c.b16 %v2060, %v2056
    %v2889 = vpack.c.b16 %v2061, %v2057
    %v2890 = vpack.c.b16 %v2062, %v2058
    %v2891 = vpack.c.b16 %v2063, %v2059
    %v2892 = vpack.c.b16 %v2068, %v2064
    %v2893 = vpack.c.b16 %v2069, %v2065
    %v2894 = vpack.c.b16 %v2070, %v2066
    %v2895 = vpack.c.b16 %v2071, %v2067
    %v2896 = vpack.c.b16 %v2076, %v2072
    %v2897 = vpack.c.b16 %v2077, %v2073
    %v2898 = vpack.c.b16 %v2078, %v2074
    %v2899 = vpack.c.b16 %v2079, %v2075
    %v2900 = vpack.c.b16 %v2084, %v2080
    %v2901 = vpack.c.b16 %v2085, %v2081
    %v2902 = vpack.c.b16 %v2086, %v2082
    %v2903 = vpack.c.b16 %v2087, %v2083
    %v2904 = vpack.c.b16 %v2092, %v2088
    %v2905 = vpack.c.b16 %v2093, %v2089
    %v2906 = vpack.c.b16 %v2094, %v2090
    %v2907 = vpack.c.b16 %v2095, %v2091
    %v2908 = vpack.c.b16 %v2100, %v2096
    %v2909 = vpack.c.b16 %v2101, %v2097
    %v2910 = vpack.c.b16 %v2102, %v2098
    %v2911 = vpack.c.b16 %v2103, %v2099
    %v2912 = vpack.c.b16 %v2108, %v2104
    %v2913 = vpack.c.b16 %v2109, %v2105
    %v2914 = vpack.c.b16 %v2110, %v2106
    %v2915 = vpack.c.b16 %v2111, %v2107
    %v2916 = vpack.c.b16 %v2116, %v2112
    %v2917 = vpack.c.b16 %v2117, %v2113
    %v2918 = vpack.c.b16 %v2118, %v2114
    %v2919 = vpack.c.b16 %v2119, %v2115
    %v2920 = vpack.c.b16 %v2124, %v2120
    %v2921 = vpack.c.b16 %v2125, %v2121
    %v2922 = vpack.c.b16 %v2126, %v2122
    %v2923 = vpack.c.b16 %v2127, %v2123
    %v2924 = vpack.c.b16 %v2132, %v2128
    %v2925 = vpack.c.b16 %v2133, %v2129
    %v2926 = vpack.c.b16 %v2134, %v2130
    %v2927 = vpack.c.b16 %v2135, %v2131
    %v2928 = vpack.c.b16 %v2140, %v2136
    %v2929 = vpack.c.b16 %v2141, %v2137
    %v2930 = vpack.c.b16 %v2142, %v2138
    %v2931 = vpack.c.b16 %v2143, %v2139
    %v2932 = vpack.c.b16 %v2148, %v2144
    %v2933 = vpack.c.b16 %v2149, %v2145
    %v2934 = vpack.c.b16 %v2150, %v2146
    %v2935 = vpack.c.b16 %v2151, %v2147
    %v2936 = vpack.c.b16 %v2156, %v2152
    %v2937 = vpack.c.b16 %v2157, %v2153
    %v2938 = vpack.c.b16 %v2158, %v2154
    %v2939 = vpack.c.b16 %v2159, %v2155
    %v2940 = vpack.c.b16 %v2164, %v2160
    %v2941 = vpack.c.b16 %v2165, %v2161
    %v2942 = vpack.c.b16 %v2166, %v2162
    %v2943 = vpack.c.b16 %v2167, %v2163
    %v2944 = vpack.c.b16 %v2172, %v2168
    %v2945 = vpack.c.b16 %v2173, %v2169
    %v2946 = vpack.c.b16 %v2174, %v2170
    %v2947 = vpack.c.b16 %v2175, %v2171
    %v2948 = vpack.c.b16 %v2180, %v2176
    %v2949 = vpack.c.b16 %v2181, %v2177
    %v2950 = vpack.c.b16 %v2182, %v2178
    %v2951 = vpack.c.b16 %v2183, %v2179
    %v2952 = vpack.c.b16 %v2188, %v2184
    %v2953 = vpack.c.b16 %v2189, %v2185
    %v2954 = vpack.c.b16 %v2190, %v2186
    %v2955 = vpack.c.b16 %v2191, %v2187
    %v2956 = vpack.c.b16 %v2196, %v2192
    %v2957 = vpack.c.b16 %v2197, %v2193
    %v2958 = vpack.c.b16 %v2198, %v2194
    %v2959 = vpack.c.b16 %v2199, %v2195
    %v2960 = vpack.c.b16 %v2204, %v2200
    %v2961 = vpack.c.b16 %v2205, %v2201
    %v2962 = vpack.c.b16 %v2206, %v2202
    %v2963 = vpack.c.b16 %v2207, %v2203
    %v2964 = vpack.c.b16 %v2212, %v2208
    %v2965 = vpack.c.b16 %v2213, %v2209
    %v2966 = vpack.c.b16 %v2214, %v2210
    %v2967 = vpack.c.b16 %v2215, %v2211
    %v2968 = vpack.c.b16 %v2220, %v2216
    %v2969 = vpack.c.b16 %v2221, %v2217
    %v2970 = vpack.c.b16 %v2222, %v2218
    %v2971 = vpack.c.b16 %v2223, %v2219
    %v2972 = vpack.c.b16 %v2228, %v2224
    %v2973 = vpack.c.b16 %v2229, %v2225
    %v2974 = vpack.c.b16 %v2230, %v2226
    %v2975 = vpack.c.b16 %v2231, %v2227
    %v2976 = vpack.c.b16 %v2236, %v2232
    %v2977 = vpack.c.b16 %v2237, %v2233
    %v2978 = vpack.c.b16 %v2238, %v2234
    %v2979 = vpack.c.b16 %v2239, %v2235
    %v2980 = vpack.c.b16 %v2244, %v2240
    %v2981 = vpack.c.b16 %v2245, %v2241
    %v2982 = vpack.c.b16 %v2246, %v2242
    %v2983 = vpack.c.b16 %v2247, %v2243
    %v2984 = vpack.c.b16 %v2252, %v2248
    %v2985 = vpack.c.b16 %v2253, %v2249
    %v2986 = vpack.c.b16 %v2254, %v2250
    %v2987 = vpack.c.b16 %v2255, %v2251
    %v2988 = vpack.c.b16 %v2260, %v2256
    %v2989 = vpack.c.b16 %v2261, %v2257
    %v2990 = vpack.c.b16 %v2262, %v2258
    %v2991 = vpack.c.b16 %v2263, %v2259
    %v2992 = vpack.c.b16 %v2268, %v2264
    %v2993 = vpack.c.b16 %v2269, %v2265
    %v2994 = vpack.c.b16 %v2270, %v2266
    %v2995 = vpack.c.b16 %v2271, %v2267
    %v2996 = vpack.c.b16 %v2276, %v2272
    %v2997 = vpack.c.b16 %v2277, %v2273
    %v2998 = vpack.c.b16 %v2278, %v2274
    %v2999 = vpack.c.b16 %v2279, %v2275
    %v3000 = vpack.c.b16 %v2284, %v2280
    %v3001 = vpack.c.b16 %v2285, %v2281
    %v3002 = vpack.c.b16 %v2286, %v2282
    %v3003 = vpack.c.b16 %v2287, %v2283
    %v3004 = vpack.c.b16 %v2292, %v2288
    %v3005 = vpack.c.b16 %v2293, %v2289
    %v3006 = vpack.c.b16 %v2294, %v2290
    %v3007 = vpack.c.b16 %v2295, %v2291
    %v3008 = vpack.c.b16 %v2300, %v2296
    %v3009 = vpack.c.b16 %v2301, %v2297
    %v3010 = vpack.c.b16 %v2302, %v2298
    %v3011 = vpack.c.b16 %v2303, %v2299
    %v3012 = vpack.c.b16 %v2308, %v2304
    %v3013 = vpack.c.b16 %v2309, %v2305
    %v3014 = vpack.c.b16 %v2310, %v2306
    %v3015 = vpack.c.b16 %v2311, %v2307
    %v3016 = vpack.c.b16 %v2316, %v2312
    %v3017 = vpack.c.b16 %v2317, %v2313
    %v3018 = vpack.c.b16 %v2318, %v2314
    %v3019 = vpack.c.b16 %v2319, %v2315
    %v3020 = vpack.c.b16 %v2324, %v2320
    %v3021 = vpack.c.b16 %v2325, %v2321
    %v3022 = vpack.c.b16 %v2326, %v2322
    %v3023 = vpack.c.b16 %v2327, %v2323
    %v3024 = vpack.c.b16 %v2332, %v2328
    %v3025 = vpack.c.b16 %v2333, %v2329
    %v3026 = vpack.c.b16 %v2334, %v2330
    %v3027 = vpack.c.b16 %v2335, %v2331
    %v3028 = vpack.c.b16 %v2340, %v2336
    %v3029 = vpack.c.b16 %v2341, %v2337
    %v3030 = vpack.c.b16 %v2342, %v2338
    %v3031 = vpack.c.b16 %v2343, %v2339
    %v3032 = vpack.c.b16 %v2348, %v2344
    %v3033 = vpack.c.b16 %v2349, %v2345
    %v3034 = vpack.c.b16 %v2350, %v2346
    %v3035 = vpack.c.b16 %v2351, %v2347
    %v3036 = vpack.c.b16 %v2356, %v2352
    %v3037 = vpack.c.b16 %v2357, %v2353
    %v3038 = vpack.c.b16 %v2358, %v2354
    %v3039 = vpack.c.b16 %v2359, %v2355
    %v3040 = vpack.c.b16 %v2364, %v2360
    %v3041 = vpack.c.b16 %v2365, %v2361
    %v3042 = vpack.c.b16 %v2366, %v2362
    %v3043 = vpack.c.b16 %v2367, %v2363
    %v3044 = vpack.c.b16 %v2372, %v2368
    %v3045 = vpack.c.b16 %v2373, %v2369
    %v3046 = vpack.c.b16 %v2374, %v2370
    %v3047 = vpack.c.b16 %v2375, %v2371
    %v3048 = vpack.c.b16 %v2380, %v2376
    %v3049 = vpack.c.b16 %v2381, %v2377
    %v3050 = vpack.c.b16 %v2382, %v2378
    %v3051 = vpack.c.b16 %v2383, %v2379
    %v3052 = vpack.c.b16 %v2388, %v2384
    %v3053 = vpack.c.b16 %v2389, %v2385
    %v3054 = vpack.c.b16 %v2390, %v2386
    %v3055 = vpack.c.b16 %v2391, %v2387
    %v3056 = vpack.c.b16 %v2396, %v2392
    %v3057 = vpack.c.b16 %v2397, %v2393
    %v3058 = vpack.c.b16 %v2398, %v2394
    %v3059 = vpack.c.b16 %v2399, %v2395
    %v3060 = vpack.c.b16 %v2404, %v2400
    %v3061 = vpack.c.b16 %v2405, %v2401
    %v3062 = vpack.c.b16 %v2406, %v2402
    %v3063 = vpack.c.b16 %v2407, %v2403
    %v3064 = vpack.c.b16 %v2412, %v2408
    %v3065 = vpack.c.b16 %v2413, %v2409
    %v3066 = vpack.c.b16 %v2414, %v2410
    %v3067 = vpack.c.b16 %v2415, %v2411
    %v3068 = vpack.c.b16 %v2420, %v2416
    %v3069 = vpack.c.b16 %v2421, %v2417
    %v3070 = vpack.c.b16 %v2422, %v2418
    %v3071 = vpack.c.b16 %v2423, %v2419
    %v3072 = vpack.c.b16 %v2428, %v2424
    %v3073 = vpack.c.b16 %v2429, %v2425
    %v3074 = vpack.c.b16 %v2430, %v2426
    %v3075 = vpack.c.b16 %v2431, %v2427
    %v3076 = vpack.c.b16 %v2436, %v2432
    %v3077 = vpack.c.b16 %v2437, %v2433
    %v3078 = vpack.c.b16 %v2438, %v2434
    %v3079 = vpack.c.b16 %v2439, %v2435
    %v3080 = vpack.c.b16 %v2444, %v2440
    %v3081 = vpack.c.b16 %v2445, %v2441
    %v3082 = vpack.c.b16 %v2446, %v2442
    %v3083 = vpack.c.b16 %v2447, %v2443
    %v3084 = vpack.c.b16 %v2452, %v2448
    %v3085 = vpack.c.b16 %v2453, %v2449
    %v3086 = vpack.c.b16 %v2454, %v2450
    %v3087 = vpack.c.b16 %v2455, %v2451
    %v3088 = vpack.c.b16 %v2460, %v2456
    %v3089 = vpack.c.b16 %v2461, %v2457
    %v3090 = vpack.c.b16 %v2462, %v2458
    %v3091 = vpack.c.b16 %v2463, %v2459
    %v3092 = vpack.c.b16 %v2468, %v2464
    %v3093 = vpack.c.b16 %v2469, %v2465
    %v3094 = vpack.c.b16 %v2470, %v2466
    %v3095 = vpack.c.b16 %v2471, %v2467
    %v3096 = vpack.c.b16 %v2476, %v2472
    %v3097 = vpack.c.b16 %v2477, %v2473
    %v3098 = vpack.c.b16 %v2478, %v2474
    %v3099 = vpack.c.b16 %v2479, %v2475
    %v3100 = vpack.c.b16 %v2484, %v2480
    %v3101 = vpack.c.b16 %v2485, %v2481
    %v3102 = vpack.c.b16 %v2486, %v2482
    %v3103 = vpack.c.b16 %v2487, %v2483
    %v3104 = vpack.c.b16 %v2492, %v2488
    %v3105 = vpack.c.b16 %v2493, %v2489
    %v3106 = vpack.c.b16 %v2494, %v2490
    %v3107 = vpack.c.b16 %v2495, %v2491
    %v3108 = vpack.c.b16 %v2500, %v2496
    %v3109 = vpack.c.b16 %v2501, %v2497
    %v3110 = vpack.c.b16 %v2502, %v2498
    %v3111 = vpack.c.b16 %v2503, %v2499
    %v3112 = vpack.c.b16 %v2508, %v2504
    %v3113 = vpack.c.b16 %v2509, %v2505
    %v3114 = vpack.c.b16 %v2510, %v2506
    %v3115 = vpack.c.b16 %v2511, %v2507
    %v3116 = vpack.c.b16 %v2516, %v2512
    %v3117 = vpack.c.b16 %v2517, %v2513
    %v3118 = vpack.c.b16 %v2518, %v2514
    %v3119 = vpack.c.b16 %v2519, %v2515
    %v3120 = vpack.c.b16 %v2524, %v2520
    %v3121 = vpack.c.b16 %v2525, %v2521
    %v3122 = vpack.c.b16 %v2526, %v2522
    %v3123 = vpack.c.b16 %v2527, %v2523
    %v3124 = vpack.c.b16 %v2532, %v2528
    %v3125 = vpack.c.b16 %v2533, %v2529
    %v3126 = vpack.c.b16 %v2534, %v2530
    %v3127 = vpack.c.b16 %v2535, %v2531
    %v3128 = vpack.c.b16 %v2540, %v2536
    %v3129 = vpack.c.b16 %v2541, %v2537
    %v3130 = vpack.c.b16 %v2542, %v2538
    %v3131 = vpack.c.b16 %v2543, %v2539
    %v3132 = vpack.c.b16 %v2548, %v2544
    %v3133 = vpack.c.b16 %v2549, %v2545
    %v3134 = vpack.c.b16 %v2550, %v2546
    %v3135 = vpack.c.b16 %v2551, %v2547
    %v3136 = vpack.c.b16 %v2556, %v2552
    %v3137 = vpack.c.b16 %v2557, %v2553
    %v3138 = vpack.c.b16 %v2558, %v2554
    %v3139 = vpack.c.b16 %v2559, %v2555
    %v3140 = vpack.c.b16 %v2564, %v2560
    %v3141 = vpack.c.b16 %v2565, %v2561
    %v3142 = vpack.c.b16 %v2566, %v2562
    %v3143 = vpack.c.b16 %v2567, %v2563
    %v3144 = vpack.c.b16 %v2572, %v2568
    %v3145 = vpack.c.b16 %v2573, %v2569
    %v3146 = vpack.c.b16 %v2574, %v2570
    %v3147 = vpack.c.b16 %v2575, %v2571
    %v3148 = vpack.c.b16 %v2580, %v2576
    %v3149 = vpack.c.b16 %v2581, %v2577
    %v3150 = vpack.c.b16 %v2582, %v2578
    %v3151 = vpack.c.b16 %v2583, %v2579
    %v3152 = vpack.c.b16 %v2588, %v2584
    %v3153 = vpack.c.b16 %v2589, %v2585
    %v3154 = vpack.c.b16 %v2590, %v2586
    %v3155 = vpack.c.b16 %v2591, %v2587
    %v3156 = vpack.c.b16 %v2596, %v2592
    %v3157 = vpack.c.b16 %v2597, %v2593
    %v3158 = vpack.c.b16 %v2598, %v2594
    %v3159 = vpack.c.b16 %v2599, %v2595
    %v3160 = vpack.c.b16 %v2604, %v2600
    %v3161 = vpack.c.b16 %v2605, %v2601
    %v3162 = vpack.c.b16 %v2606, %v2602
    %v3163 = vpack.c.b16 %v2607, %v2603
    %v3164 = vpack.c.b16 %v2612, %v2608
    %v3165 = vpack.c.b16 %v2613, %v2609
    %v3166 = vpack.c.b16 %v2614, %v2610
    %v3167 = vpack.c.b16 %v2615, %v2611
    %v3168 = vpack.c.b16 %v2620, %v2616
    %v3169 = vpack.c.b16 %v2621, %v2617
    %v3170 = vpack.c.b16 %v2622, %v2618
    %v3171 = vpack.c.b16 %v2623, %v2619
    %v3172 = vpack.c.b16 %v2628, %v2624
    %v3173 = vpack.c.b16 %v2629, %v2625
    %v3174 = vpack.c.b16 %v2630, %v2626
    %v3175 = vpack.c.b16 %v2631, %v2627
    %v3176 = vpack.c.b16 %v2636, %v2632
    %v3177 = vpack.c.b16 %v2637, %v2633
    %v3178 = vpack.c.b16 %v2638, %v2634
    %v3179 = vpack.c.b16 %v2639, %v2635
    %v3180 = vpack.c.b16 %v2644, %v2640
    %v3181 = vpack.c.b16 %v2645, %v2641
    %v3182 = vpack.c.b16 %v2646, %v2642
    %v3183 = vpack.c.b16 %v2647, %v2643
    %v3184 = vpack.c.b16 %v2652, %v2648
    %v3185 = vpack.c.b16 %v2653, %v2649
    %v3186 = vpack.c.b16 %v2654, %v2650
    %v3187 = vpack.c.b16 %v2655, %v2651
    %v3188 = vpack.c.b16 %v2660, %v2656
    %v3189 = vpack.c.b16 %v2661, %v2657
    %v3190 = vpack.c.b16 %v2662, %v2658
    %v3191 = vpack.c.b16 %v2663, %v2659
    %v3192 = vpack.c.b16 %v2668, %v2664
    %v3193 = vpack.c.b16 %v2669, %v2665
    %v3194 = vpack.c.b16 %v2670, %v2666
    %v3195 = vpack.c.b16 %v2671, %v2667
    %v3196 = vpack.c.b16 %v2676, %v2672
    %v3197 = vpack.c.b16 %v2677, %v2673
    %v3198 = vpack.c.b16 %v2678, %v2674
    %v3199 = vpack.c.b16 %v2679, %v2675
    %v3200 = vpack.c.b16 %v2684, %v2680
    %v3201 = vpack.c.b16 %v2685, %v2681
    %v3202 = vpack.c.b16 %v2686, %v2682
    %v3203 = vpack.c.b16 %v2687, %v2683
    %v3204 = vpack.c.b16 %v2692, %v2688
    %v3205 = vpack.c.b16 %v2693, %v2689
    %v3206 = vpack.c.b16 %v2694, %v2690
    %v3207 = vpack.c.b16 %v2695, %v2691
    %3720 = vmatpush.bf16.msra.mxu0 %v2724
    %3721 = vmatpush.bf16.msra.mxu0 %v2720
    %3722 = vmatpush.bf16.msra.mxu0 %v2716
    %3723 = vmatpush.bf16.msra.mxu0 %v2712
    %3724 = vmatpush.bf16.msra.mxu0 %v2708
    %3725 = vmatpush.bf16.msra.mxu0 %v2704
    %3726 = vmatpush.bf16.msra.mxu0 %v2700
    %3727 = vmatpush.bf16.msra.mxu0 %v2696
    %3728 = vmatmul.bf16.gmra.mxu0 %v622
    %v3729 = vpop.f32.mrf.mxu0
    %v3730 = vadd.f32 %v1152, %v3729
    %v3731 = vpop.f32.mrf.mxu0
    %3732 = vdwg.mxu0
    %3733 = vmatpush.bf16.msra.mxu0 %v2756
    %3734 = vmatpush.bf16.msra.mxu0 %v2752
    %3735 = vmatpush.bf16.msra.mxu0 %v2748
    %3736 = vmatpush.bf16.msra.mxu0 %v2744
    %3737 = vmatpush.bf16.msra.mxu0 %v2740
    %3738 = vmatpush.bf16.msra.mxu0 %v2736
    %3739 = vmatpush.bf16.msra.mxu0 %v2732
    %3740 = vmatpush.bf16.msra.mxu0 %v2728
    %3741 = vmatmul.bf16.gmra.mxu0 %v623
    %v3742 = vpop.f32.mrf.mxu0
    %v3743 = vadd.f32 %v3730, %v3742
    %v3744 = vpop.f32.mrf.mxu0
    %3745 = vdwg.mxu0
    %3746 = vmatpush.bf16.msra.mxu0 %v2788
    %3747 = vmatpush.bf16.msra.mxu0 %v2784
    %3748 = vmatpush.bf16.msra.mxu0 %v2780
    %3749 = vmatpush.bf16.msra.mxu0 %v2776
    %3750 = vmatpush.bf16.msra.mxu0 %v2772
    %3751 = vmatpush.bf16.msra.mxu0 %v2768
    %3752 = vmatpush.bf16.msra.mxu0 %v2764
    %3753 = vmatpush.bf16.msra.mxu0 %v2760
    %3754 = vmatmul.bf16.gmra.mxu0 %v624
    %v3755 = vpop.f32.mrf.mxu0
    %v3756 = vadd.f32 %v3743, %v3755
    %v3757 = vpop.f32.mrf.mxu0
    %3758 = vdwg.mxu0
    %3759 = vmatpush.bf16.msra.mxu0 %v2820
    %3760 = vmatpush.bf16.msra.mxu0 %v2816
    %3761 = vmatpush.bf16.msra.mxu0 %v2812
    %3762 = vmatpush.bf16.msra.mxu0 %v2808
    %3763 = vmatpush.bf16.msra.mxu0 %v2804
    %3764 = vmatpush.bf16.msra.mxu0 %v2800
    %3765 = vmatpush.bf16.msra.mxu0 %v2796
    %3766 = vmatpush.bf16.msra.mxu0 %v2792
    %3767 = vmatmul.bf16.gmra.mxu0 %v625
    %v3768 = vpop.f32.mrf.mxu0
    %v3769 = vadd.f32 %v3756, %v3768
    %v3770 = vpop.f32.mrf.mxu0
    %3771 = vdwg.mxu0
    %3772 = vmatpush.bf16.msra.mxu0 %v2852
    %3773 = vmatpush.bf16.msra.mxu0 %v2848
    %3774 = vmatpush.bf16.msra.mxu0 %v2844
    %3775 = vmatpush.bf16.msra.mxu0 %v2840
    %3776 = vmatpush.bf16.msra.mxu0 %v2836
    %3777 = vmatpush.bf16.msra.mxu0 %v2832
    %3778 = vmatpush.bf16.msra.mxu0 %v2828
    %3779 = vmatpush.bf16.msra.mxu0 %v2824
    %3780 = vmatmul.bf16.gmra.mxu0 %v626
    %v3781 = vpop.f32.mrf.mxu0
    %v3782 = vadd.f32 %v3769, %v3781
    %v3783 = vpop.f32.mrf.mxu0
    %3784 = vdwg.mxu0
    %3785 = vmatpush.bf16.msra.mxu0 %v2884
    %3786 = vmatpush.bf16.msra.mxu0 %v2880
    %3787 = vmatpush.bf16.msra.mxu0 %v2876
    %3788 = vmatpush.bf16.msra.mxu0 %v2872
    %3789 = vmatpush.bf16.msra.mxu0 %v2868
    %3790 = vmatpush.bf16.msra.mxu0 %v2864
    %3791 = vmatpush.bf16.msra.mxu0 %v2860
    %3792 = vmatpush.bf16.msra.mxu0 %v2856
    %3793 = vmatmul.bf16.gmra.mxu0 %v627
    %v3794 = vpop.f32.mrf.mxu0
    %v3795 = vadd.f32 %v3782, %v3794
    %v3796 = vpop.f32.mrf.mxu0
    %3797 = vdwg.mxu0
    %3798 = vmatpush.bf16.msra.mxu0 %v2916
    %3799 = vmatpush.bf16.msra.mxu0 %v2912
    %3800 = vmatpush.bf16.msra.mxu0 %v2908
    %3801 = vmatpush.bf16.msra.mxu0 %v2904
    %3802 = vmatpush.bf16.msra.mxu0 %v2900
    %3803 = vmatpush.bf16.msra.mxu0 %v2896
    %3804 = vmatpush.bf16.msra.mxu0 %v2892
    %3805 = vmatpush.bf16.msra.mxu0 %v2888
    %3806 = vmatmul.bf16.gmra.mxu0 %v628
    %v3807 = vpop.f32.mrf.mxu0
    %v3808 = vadd.f32 %v3795, %v3807
    %v3809 = vpop.f32.mrf.mxu0
    %3810 = vdwg.mxu0
    %3811 = vmatpush.bf16.msra.mxu0 %v2948
    %3812 = vmatpush.bf16.msra.mxu0 %v2944
    %3813 = vmatpush.bf16.msra.mxu0 %v2940
    %3814 = vmatpush.bf16.msra.mxu0 %v2936
    %3815 = vmatpush.bf16.msra.mxu0 %v2932
    %3816 = vmatpush.bf16.msra.mxu0 %v2928
    %3817 = vmatpush.bf16.msra.mxu0 %v2924
    %3818 = vmatpush.bf16.msra.mxu0 %v2920
    %3819 = vmatmul.bf16.gmra.mxu0 %v629
    %v3820 = vpop.f32.mrf.mxu0
    %v3821 = vadd.f32 %v3808, %v3820
    %v3822 = vpop.f32.mrf.mxu0
    %3823 = vdwg.mxu0
    %3824 = vmatpush.bf16.msra.mxu0 %v2980
    %3825 = vmatpush.bf16.msra.mxu0 %v2976
    %3826 = vmatpush.bf16.msra.mxu0 %v2972
    %3827 = vmatpush.bf16.msra.mxu0 %v2968
    %3828 = vmatpush.bf16.msra.mxu0 %v2964
    %3829 = vmatpush.bf16.msra.mxu0 %v2960
    %3830 = vmatpush.bf16.msra.mxu0 %v2956
    %3831 = vmatpush.bf16.msra.mxu0 %v2952
    %3832 = vmatmul.bf16.gmra.mxu0 %v630
    %v3833 = vpop.f32.mrf.mxu0
    %v3834 = vadd.f32 %v3821, %v3833
    %v3835 = vpop.f32.mrf.mxu0
    %3836 = vdwg.mxu0
    %3837 = vmatpush.bf16.msra.mxu0 %v3012
    %3838 = vmatpush.bf16.msra.mxu0 %v3008
    %3839 = vmatpush.bf16.msra.mxu0 %v3004
    %3840 = vmatpush.bf16.msra.mxu0 %v3000
    %3841 = vmatpush.bf16.msra.mxu0 %v2996
    %3842 = vmatpush.bf16.msra.mxu0 %v2992
    %3843 = vmatpush.bf16.msra.mxu0 %v2988
    %3844 = vmatpush.bf16.msra.mxu0 %v2984
    %3845 = vmatmul.bf16.gmra.mxu0 %v631
    %v3846 = vpop.f32.mrf.mxu0
    %v3847 = vadd.f32 %v3834, %v3846
    %v3848 = vpop.f32.mrf.mxu0
    %3849 = vdwg.mxu0
    %3850 = vmatpush.bf16.msra.mxu0 %v3044
    %3851 = vmatpush.bf16.msra.mxu0 %v3040
    %3852 = vmatpush.bf16.msra.mxu0 %v3036
    %3853 = vmatpush.bf16.msra.mxu0 %v3032
    %3854 = vmatpush.bf16.msra.mxu0 %v3028
    %3855 = vmatpush.bf16.msra.mxu0 %v3024
    %3856 = vmatpush.bf16.msra.mxu0 %v3020
    %3857 = vmatpush.bf16.msra.mxu0 %v3016
    %3858 = vmatmul.bf16.gmra.mxu0 %v632
    %v3859 = vpop.f32.mrf.mxu0
    %v3860 = vadd.f32 %v3847, %v3859
    %v3861 = vpop.f32.mrf.mxu0
    %3862 = vdwg.mxu0
    %3863 = vmatpush.bf16.msra.mxu0 %v3076
    %3864 = vmatpush.bf16.msra.mxu0 %v3072
    %3865 = vmatpush.bf16.msra.mxu0 %v3068
    %3866 = vmatpush.bf16.msra.mxu0 %v3064
    %3867 = vmatpush.bf16.msra.mxu0 %v3060
    %3868 = vmatpush.bf16.msra.mxu0 %v3056
    %3869 = vmatpush.bf16.msra.mxu0 %v3052
    %3870 = vmatpush.bf16.msra.mxu0 %v3048
    %3871 = vmatmul.bf16.gmra.mxu0 %v633
    %v3872 = vpop.f32.mrf.mxu0
    %v3873 = vadd.f32 %v3860, %v3872
    %v3874 = vpop.f32.mrf.mxu0
    %3875 = vdwg.mxu0
    %3876 = vmatpush.bf16.msra.mxu0 %v3108
    %3877 = vmatpush.bf16.msra.mxu0 %v3104
    %3878 = vmatpush.bf16.msra.mxu0 %v3100
    %3879 = vmatpush.bf16.msra.mxu0 %v3096
    %3880 = vmatpush.bf16.msra.mxu0 %v3092
    %3881 = vmatpush.bf16.msra.mxu0 %v3088
    %3882 = vmatpush.bf16.msra.mxu0 %v3084
    %3883 = vmatpush.bf16.msra.mxu0 %v3080
    %3884 = vmatmul.bf16.gmra.mxu0 %v634
    %v3885 = vpop.f32.mrf.mxu0
    %v3886 = vadd.f32 %v3873, %v3885
    %v3887 = vpop.f32.mrf.mxu0
    %3888 = vdwg.mxu0
    %3889 = vmatpush.bf16.msra.mxu0 %v3140
    %3890 = vmatpush.bf16.msra.mxu0 %v3136
    %3891 = vmatpush.bf16.msra.mxu0 %v3132
    %3892 = vmatpush.bf16.msra.mxu0 %v3128
    %3893 = vmatpush.bf16.msra.mxu0 %v3124
    %3894 = vmatpush.bf16.msra.mxu0 %v3120
    %3895 = vmatpush.bf16.msra.mxu0 %v3116
    %3896 = vmatpush.bf16.msra.mxu0 %v3112
    %3897 = vmatmul.bf16.gmra.mxu0 %v635
    %v3898 = vpop.f32.mrf.mxu0
    %v3899 = vadd.f32 %v3886, %v3898
    %v3900 = vpop.f32.mrf.mxu0
    %3901 = vdwg.mxu0
    %3902 = vmatpush.bf16.msra.mxu0 %v3172
    %3903 = vmatpush.bf16.msra.mxu0 %v3168
    %3904 = vmatpush.bf16.msra.mxu0 %v3164
    %3905 = vmatpush.bf16.msra.mxu0 %v3160
    %3906 = vmatpush.bf16.msra.mxu0 %v3156
    %3907 = vmatpush.bf16.msra.mxu0 %v3152
    %3908 = vmatpush.bf16.msra.mxu0 %v3148
    %3909 = vmatpush.bf16.msra.mxu0 %v3144
    %3910 = vmatmul.bf16.gmra.mxu0 %v636
    %v3911 = vpop.f32.mrf.mxu0
    %v3912 = vadd.f32 %v3899, %v3911
    %v3913 = vpop.f32.mrf.mxu0
    %3914 = vdwg.mxu0
    %3915 = vmatpush.bf16.msra.mxu0 %v3204
    %3916 = vmatpush.bf16.msra.mxu0 %v3200
    %3917 = vmatpush.bf16.msra.mxu0 %v3196
    %3918 = vmatpush.bf16.msra.mxu0 %v3192
    %3919 = vmatpush.bf16.msra.mxu0 %v3188
    %3920 = vmatpush.bf16.msra.mxu0 %v3184
    %3921 = vmatpush.bf16.msra.mxu0 %v3180
    %3922 = vmatpush.bf16.msra.mxu0 %v3176
    %3923 = vmatmul.bf16.gmra.mxu0 %v637
    %v3924 = vpop.f32.mrf.mxu0
    %v3925 = vadd.f32 %v3912, %v3924
    %v3926 = vpop.f32.mrf.mxu0
    %3927 = vdwg.mxu0
    %3928 = vmatpush.bf16.msra.mxu0 %v2725
    %3929 = vmatpush.bf16.msra.mxu0 %v2721
    %3930 = vmatpush.bf16.msra.mxu0 %v2717
    %3931 = vmatpush.bf16.msra.mxu0 %v2713
    %3932 = vmatpush.bf16.msra.mxu0 %v2709
    %3933 = vmatpush.bf16.msra.mxu0 %v2705
    %3934 = vmatpush.bf16.msra.mxu0 %v2701
    %3935 = vmatpush.bf16.msra.mxu0 %v2697
    %3936 = vmatmul.bf16.gmra.mxu0 %v622
    %v3937 = vpop.f32.mrf.mxu0
    %v3938 = vadd.f32 %v1153, %v3937
    %v3939 = vpop.f32.mrf.mxu0
    %3940 = vdwg.mxu0
    %3941 = vmatpush.bf16.msra.mxu0 %v2757
    %3942 = vmatpush.bf16.msra.mxu0 %v2753
    %3943 = vmatpush.bf16.msra.mxu0 %v2749
    %3944 = vmatpush.bf16.msra.mxu0 %v2745
    %3945 = vmatpush.bf16.msra.mxu0 %v2741
    %3946 = vmatpush.bf16.msra.mxu0 %v2737
    %3947 = vmatpush.bf16.msra.mxu0 %v2733
    %3948 = vmatpush.bf16.msra.mxu0 %v2729
    %3949 = vmatmul.bf16.gmra.mxu0 %v623
    %v3950 = vpop.f32.mrf.mxu0
    %v3951 = vadd.f32 %v3938, %v3950
    %v3952 = vpop.f32.mrf.mxu0
    %3953 = vdwg.mxu0
    %3954 = vmatpush.bf16.msra.mxu0 %v2789
    %3955 = vmatpush.bf16.msra.mxu0 %v2785
    %3956 = vmatpush.bf16.msra.mxu0 %v2781
    %3957 = vmatpush.bf16.msra.mxu0 %v2777
    %3958 = vmatpush.bf16.msra.mxu0 %v2773
    %3959 = vmatpush.bf16.msra.mxu0 %v2769
    %3960 = vmatpush.bf16.msra.mxu0 %v2765
    %3961 = vmatpush.bf16.msra.mxu0 %v2761
    %3962 = vmatmul.bf16.gmra.mxu0 %v624
    %v3963 = vpop.f32.mrf.mxu0
    %v3964 = vadd.f32 %v3951, %v3963
    %v3965 = vpop.f32.mrf.mxu0
    %3966 = vdwg.mxu0
    %3967 = vmatpush.bf16.msra.mxu0 %v2821
    %3968 = vmatpush.bf16.msra.mxu0 %v2817
    %3969 = vmatpush.bf16.msra.mxu0 %v2813
    %3970 = vmatpush.bf16.msra.mxu0 %v2809
    %3971 = vmatpush.bf16.msra.mxu0 %v2805
    %3972 = vmatpush.bf16.msra.mxu0 %v2801
    %3973 = vmatpush.bf16.msra.mxu0 %v2797
    %3974 = vmatpush.bf16.msra.mxu0 %v2793
    %3975 = vmatmul.bf16.gmra.mxu0 %v625
    %v3976 = vpop.f32.mrf.mxu0
    %v3977 = vadd.f32 %v3964, %v3976
    %v3978 = vpop.f32.mrf.mxu0
    %3979 = vdwg.mxu0
    %3980 = vmatpush.bf16.msra.mxu0 %v2853
    %3981 = vmatpush.bf16.msra.mxu0 %v2849
    %3982 = vmatpush.bf16.msra.mxu0 %v2845
    %3983 = vmatpush.bf16.msra.mxu0 %v2841
    %3984 = vmatpush.bf16.msra.mxu0 %v2837
    %3985 = vmatpush.bf16.msra.mxu0 %v2833
    %3986 = vmatpush.bf16.msra.mxu0 %v2829
    %3987 = vmatpush.bf16.msra.mxu0 %v2825
    %3988 = vmatmul.bf16.gmra.mxu0 %v626
    %v3989 = vpop.f32.mrf.mxu0
    %v3990 = vadd.f32 %v3977, %v3989
    %v3991 = vpop.f32.mrf.mxu0
    %3992 = vdwg.mxu0
    %3993 = vmatpush.bf16.msra.mxu0 %v2885
    %3994 = vmatpush.bf16.msra.mxu0 %v2881
    %3995 = vmatpush.bf16.msra.mxu0 %v2877
    %3996 = vmatpush.bf16.msra.mxu0 %v2873
    %3997 = vmatpush.bf16.msra.mxu0 %v2869
    %3998 = vmatpush.bf16.msra.mxu0 %v2865
    %3999 = vmatpush.bf16.msra.mxu0 %v2861
    %4000 = vmatpush.bf16.msra.mxu0 %v2857
    %4001 = vmatmul.bf16.gmra.mxu0 %v627
    %v4002 = vpop.f32.mrf.mxu0
    %v4003 = vadd.f32 %v3990, %v4002
    %v4004 = vpop.f32.mrf.mxu0
    %4005 = vdwg.mxu0
    %4006 = vmatpush.bf16.msra.mxu0 %v2917
    %4007 = vmatpush.bf16.msra.mxu0 %v2913
    %4008 = vmatpush.bf16.msra.mxu0 %v2909
    %4009 = vmatpush.bf16.msra.mxu0 %v2905
    %4010 = vmatpush.bf16.msra.mxu0 %v2901
    %4011 = vmatpush.bf16.msra.mxu0 %v2897
    %4012 = vmatpush.bf16.msra.mxu0 %v2893
    %4013 = vmatpush.bf16.msra.mxu0 %v2889
    %4014 = vmatmul.bf16.gmra.mxu0 %v628
    %v4015 = vpop.f32.mrf.mxu0
    %v4016 = vadd.f32 %v4003, %v4015
    %v4017 = vpop.f32.mrf.mxu0
    %4018 = vdwg.mxu0
    %4019 = vmatpush.bf16.msra.mxu0 %v2949
    %4020 = vmatpush.bf16.msra.mxu0 %v2945
    %4021 = vmatpush.bf16.msra.mxu0 %v2941
    %4022 = vmatpush.bf16.msra.mxu0 %v2937
    %4023 = vmatpush.bf16.msra.mxu0 %v2933
    %4024 = vmatpush.bf16.msra.mxu0 %v2929
    %4025 = vmatpush.bf16.msra.mxu0 %v2925
    %4026 = vmatpush.bf16.msra.mxu0 %v2921
    %4027 = vmatmul.bf16.gmra.mxu0 %v629
    %v4028 = vpop.f32.mrf.mxu0
    %v4029 = vadd.f32 %v4016, %v4028
    %v4030 = vpop.f32.mrf.mxu0
    %4031 = vdwg.mxu0
    %4032 = vmatpush.bf16.msra.mxu0 %v2981
    %4033 = vmatpush.bf16.msra.mxu0 %v2977
    %4034 = vmatpush.bf16.msra.mxu0 %v2973
    %4035 = vmatpush.bf16.msra.mxu0 %v2969
    %4036 = vmatpush.bf16.msra.mxu0 %v2965
    %4037 = vmatpush.bf16.msra.mxu0 %v2961
    %4038 = vmatpush.bf16.msra.mxu0 %v2957
    %4039 = vmatpush.bf16.msra.mxu0 %v2953
    %4040 = vmatmul.bf16.gmra.mxu0 %v630
    %v4041 = vpop.f32.mrf.mxu0
    %v4042 = vadd.f32 %v4029, %v4041
    %v4043 = vpop.f32.mrf.mxu0
    %4044 = vdwg.mxu0
    %4045 = vmatpush.bf16.msra.mxu0 %v3013
    %4046 = vmatpush.bf16.msra.mxu0 %v3009
    %4047 = vmatpush.bf16.msra.mxu0 %v3005
    %4048 = vmatpush.bf16.msra.mxu0 %v3001
    %4049 = vmatpush.bf16.msra.mxu0 %v2997
    %4050 = vmatpush.bf16.msra.mxu0 %v2993
    %4051 = vmatpush.bf16.msra.mxu0 %v2989
    %4052 = vmatpush.bf16.msra.mxu0 %v2985
    %4053 = vmatmul.bf16.gmra.mxu0 %v631
    %v4054 = vpop.f32.mrf.mxu0
    %v4055 = vadd.f32 %v4042, %v4054
    %v4056 = vpop.f32.mrf.mxu0
    %4057 = vdwg.mxu0
    %4058 = vmatpush.bf16.msra.mxu0 %v3045
    %4059 = vmatpush.bf16.msra.mxu0 %v3041
    %4060 = vmatpush.bf16.msra.mxu0 %v3037
    %4061 = vmatpush.bf16.msra.mxu0 %v3033
    %4062 = vmatpush.bf16.msra.mxu0 %v3029
    %4063 = vmatpush.bf16.msra.mxu0 %v3025
    %4064 = vmatpush.bf16.msra.mxu0 %v3021
    %4065 = vmatpush.bf16.msra.mxu0 %v3017
    %4066 = vmatmul.bf16.gmra.mxu0 %v632
    %v4067 = vpop.f32.mrf.mxu0
    %v4068 = vadd.f32 %v4055, %v4067
    %v4069 = vpop.f32.mrf.mxu0
    %4070 = vdwg.mxu0
    %4071 = vmatpush.bf16.msra.mxu0 %v3077
    %4072 = vmatpush.bf16.msra.mxu0 %v3073
    %4073 = vmatpush.bf16.msra.mxu0 %v3069
    %4074 = vmatpush.bf16.msra.mxu0 %v3065
    %4075 = vmatpush.bf16.msra.mxu0 %v3061
    %4076 = vmatpush.bf16.msra.mxu0 %v3057
    %4077 = vmatpush.bf16.msra.mxu0 %v3053
    %4078 = vmatpush.bf16.msra.mxu0 %v3049
    %4079 = vmatmul.bf16.gmra.mxu0 %v633
    %v4080 = vpop.f32.mrf.mxu0
    %v4081 = vadd.f32 %v4068, %v4080
    %v4082 = vpop.f32.mrf.mxu0
    %4083 = vdwg.mxu0
    %4084 = vmatpush.bf16.msra.mxu0 %v3109
    %4085 = vmatpush.bf16.msra.mxu0 %v3105
    %4086 = vmatpush.bf16.msra.mxu0 %v3101
    %4087 = vmatpush.bf16.msra.mxu0 %v3097
    %4088 = vmatpush.bf16.msra.mxu0 %v3093
    %4089 = vmatpush.bf16.msra.mxu0 %v3089
    %4090 = vmatpush.bf16.msra.mxu0 %v3085
    %4091 = vmatpush.bf16.msra.mxu0 %v3081
    %4092 = vmatmul.bf16.gmra.mxu0 %v634
    %v4093 = vpop.f32.mrf.mxu0
    %v4094 = vadd.f32 %v4081, %v4093
    %v4095 = vpop.f32.mrf.mxu0
    %4096 = vdwg.mxu0
    %4097 = vmatpush.bf16.msra.mxu0 %v3141
    %4098 = vmatpush.bf16.msra.mxu0 %v3137
    %4099 = vmatpush.bf16.msra.mxu0 %v3133
    %4100 = vmatpush.bf16.msra.mxu0 %v3129
    %4101 = vmatpush.bf16.msra.mxu0 %v3125
    %4102 = vmatpush.bf16.msra.mxu0 %v3121
    %4103 = vmatpush.bf16.msra.mxu0 %v3117
    %4104 = vmatpush.bf16.msra.mxu0 %v3113
    %4105 = vmatmul.bf16.gmra.mxu0 %v635
    %v4106 = vpop.f32.mrf.mxu0
    %v4107 = vadd.f32 %v4094, %v4106
    %v4108 = vpop.f32.mrf.mxu0
    %4109 = vdwg.mxu0
    %4110 = vmatpush.bf16.msra.mxu0 %v3173
    %4111 = vmatpush.bf16.msra.mxu0 %v3169
    %4112 = vmatpush.bf16.msra.mxu0 %v3165
    %4113 = vmatpush.bf16.msra.mxu0 %v3161
    %4114 = vmatpush.bf16.msra.mxu0 %v3157
    %4115 = vmatpush.bf16.msra.mxu0 %v3153
    %4116 = vmatpush.bf16.msra.mxu0 %v3149
    %4117 = vmatpush.bf16.msra.mxu0 %v3145
    %4118 = vmatmul.bf16.gmra.mxu0 %v636
    %v4119 = vpop.f32.mrf.mxu0
    %v4120 = vadd.f32 %v4107, %v4119
    %v4121 = vpop.f32.mrf.mxu0
    %4122 = vdwg.mxu0
    %4123 = vmatpush.bf16.msra.mxu0 %v3205
    %4124 = vmatpush.bf16.msra.mxu0 %v3201
    %4125 = vmatpush.bf16.msra.mxu0 %v3197
    %4126 = vmatpush.bf16.msra.mxu0 %v3193
    %4127 = vmatpush.bf16.msra.mxu0 %v3189
    %4128 = vmatpush.bf16.msra.mxu0 %v3185
    %4129 = vmatpush.bf16.msra.mxu0 %v3181
    %4130 = vmatpush.bf16.msra.mxu0 %v3177
    %4131 = vmatmul.bf16.gmra.mxu0 %v637
    %v4132 = vpop.f32.mrf.mxu0
    %v4133 = vadd.f32 %v4120, %v4132
    %v4134 = vpop.f32.mrf.mxu0
    %4135 = vdwg.mxu0
    %4136 = vmatpush.bf16.msra.mxu0 %v2726
    %4137 = vmatpush.bf16.msra.mxu0 %v2722
    %4138 = vmatpush.bf16.msra.mxu0 %v2718
    %4139 = vmatpush.bf16.msra.mxu0 %v2714
    %4140 = vmatpush.bf16.msra.mxu0 %v2710
    %4141 = vmatpush.bf16.msra.mxu0 %v2706
    %4142 = vmatpush.bf16.msra.mxu0 %v2702
    %4143 = vmatpush.bf16.msra.mxu0 %v2698
    %4144 = vmatmul.bf16.gmra.mxu0 %v622
    %v4145 = vpop.f32.mrf.mxu0
    %v4146 = vadd.f32 %v1154, %v4145
    %v4147 = vpop.f32.mrf.mxu0
    %4148 = vdwg.mxu0
    %4149 = vmatpush.bf16.msra.mxu0 %v2758
    %4150 = vmatpush.bf16.msra.mxu0 %v2754
    %4151 = vmatpush.bf16.msra.mxu0 %v2750
    %4152 = vmatpush.bf16.msra.mxu0 %v2746
    %4153 = vmatpush.bf16.msra.mxu0 %v2742
    %4154 = vmatpush.bf16.msra.mxu0 %v2738
    %4155 = vmatpush.bf16.msra.mxu0 %v2734
    %4156 = vmatpush.bf16.msra.mxu0 %v2730
    %4157 = vmatmul.bf16.gmra.mxu0 %v623
    %v4158 = vpop.f32.mrf.mxu0
    %v4159 = vadd.f32 %v4146, %v4158
    %v4160 = vpop.f32.mrf.mxu0
    %4161 = vdwg.mxu0
    %4162 = vmatpush.bf16.msra.mxu0 %v2790
    %4163 = vmatpush.bf16.msra.mxu0 %v2786
    %4164 = vmatpush.bf16.msra.mxu0 %v2782
    %4165 = vmatpush.bf16.msra.mxu0 %v2778
    %4166 = vmatpush.bf16.msra.mxu0 %v2774
    %4167 = vmatpush.bf16.msra.mxu0 %v2770
    %4168 = vmatpush.bf16.msra.mxu0 %v2766
    %4169 = vmatpush.bf16.msra.mxu0 %v2762
    %4170 = vmatmul.bf16.gmra.mxu0 %v624
    %v4171 = vpop.f32.mrf.mxu0
    %v4172 = vadd.f32 %v4159, %v4171
    %v4173 = vpop.f32.mrf.mxu0
    %4174 = vdwg.mxu0
    %4175 = vmatpush.bf16.msra.mxu0 %v2822
    %4176 = vmatpush.bf16.msra.mxu0 %v2818
    %4177 = vmatpush.bf16.msra.mxu0 %v2814
    %4178 = vmatpush.bf16.msra.mxu0 %v2810
    %4179 = vmatpush.bf16.msra.mxu0 %v2806
    %4180 = vmatpush.bf16.msra.mxu0 %v2802
    %4181 = vmatpush.bf16.msra.mxu0 %v2798
    %4182 = vmatpush.bf16.msra.mxu0 %v2794
    %4183 = vmatmul.bf16.gmra.mxu0 %v625
    %v4184 = vpop.f32.mrf.mxu0
    %v4185 = vadd.f32 %v4172, %v4184
    %v4186 = vpop.f32.mrf.mxu0
    %4187 = vdwg.mxu0
    %4188 = vmatpush.bf16.msra.mxu0 %v2854
    %4189 = vmatpush.bf16.msra.mxu0 %v2850
    %4190 = vmatpush.bf16.msra.mxu0 %v2846
    %4191 = vmatpush.bf16.msra.mxu0 %v2842
    %4192 = vmatpush.bf16.msra.mxu0 %v2838
    %4193 = vmatpush.bf16.msra.mxu0 %v2834
    %4194 = vmatpush.bf16.msra.mxu0 %v2830
    %4195 = vmatpush.bf16.msra.mxu0 %v2826
    %4196 = vmatmul.bf16.gmra.mxu0 %v626
    %v4197 = vpop.f32.mrf.mxu0
    %v4198 = vadd.f32 %v4185, %v4197
    %v4199 = vpop.f32.mrf.mxu0
    %4200 = vdwg.mxu0
    %4201 = vmatpush.bf16.msra.mxu0 %v2886
    %4202 = vmatpush.bf16.msra.mxu0 %v2882
    %4203 = vmatpush.bf16.msra.mxu0 %v2878
    %4204 = vmatpush.bf16.msra.mxu0 %v2874
    %4205 = vmatpush.bf16.msra.mxu0 %v2870
    %4206 = vmatpush.bf16.msra.mxu0 %v2866
    %4207 = vmatpush.bf16.msra.mxu0 %v2862
    %4208 = vmatpush.bf16.msra.mxu0 %v2858
    %4209 = vmatmul.bf16.gmra.mxu0 %v627
    %v4210 = vpop.f32.mrf.mxu0
    %v4211 = vadd.f32 %v4198, %v4210
    %v4212 = vpop.f32.mrf.mxu0
    %4213 = vdwg.mxu0
    %4214 = vmatpush.bf16.msra.mxu0 %v2918
    %4215 = vmatpush.bf16.msra.mxu0 %v2914
    %4216 = vmatpush.bf16.msra.mxu0 %v2910
    %4217 = vmatpush.bf16.msra.mxu0 %v2906
    %4218 = vmatpush.bf16.msra.mxu0 %v2902
    %4219 = vmatpush.bf16.msra.mxu0 %v2898
    %4220 = vmatpush.bf16.msra.mxu0 %v2894
    %4221 = vmatpush.bf16.msra.mxu0 %v2890
    %4222 = vmatmul.bf16.gmra.mxu0 %v628
    %v4223 = vpop.f32.mrf.mxu0
    %v4224 = vadd.f32 %v4211, %v4223
    %v4225 = vpop.f32.mrf.mxu0
    %4226 = vdwg.mxu0
    %4227 = vmatpush.bf16.msra.mxu0 %v2950
    %4228 = vmatpush.bf16.msra.mxu0 %v2946
    %4229 = vmatpush.bf16.msra.mxu0 %v2942
    %4230 = vmatpush.bf16.msra.mxu0 %v2938
    %4231 = vmatpush.bf16.msra.mxu0 %v2934
    %4232 = vmatpush.bf16.msra.mxu0 %v2930
    %4233 = vmatpush.bf16.msra.mxu0 %v2926
    %4234 = vmatpush.bf16.msra.mxu0 %v2922
    %4235 = vmatmul.bf16.gmra.mxu0 %v629
    %v4236 = vpop.f32.mrf.mxu0
    %v4237 = vadd.f32 %v4224, %v4236
    %v4238 = vpop.f32.mrf.mxu0
    %4239 = vdwg.mxu0
    %4240 = vmatpush.bf16.msra.mxu0 %v2982
    %4241 = vmatpush.bf16.msra.mxu0 %v2978
    %4242 = vmatpush.bf16.msra.mxu0 %v2974
    %4243 = vmatpush.bf16.msra.mxu0 %v2970
    %4244 = vmatpush.bf16.msra.mxu0 %v2966
    %4245 = vmatpush.bf16.msra.mxu0 %v2962
    %4246 = vmatpush.bf16.msra.mxu0 %v2958
    %4247 = vmatpush.bf16.msra.mxu0 %v2954
    %4248 = vmatmul.bf16.gmra.mxu0 %v630
    %v4249 = vpop.f32.mrf.mxu0
    %v4250 = vadd.f32 %v4237, %v4249
    %v4251 = vpop.f32.mrf.mxu0
    %4252 = vdwg.mxu0
    %4253 = vmatpush.bf16.msra.mxu0 %v3014
    %4254 = vmatpush.bf16.msra.mxu0 %v3010
    %4255 = vmatpush.bf16.msra.mxu0 %v3006
    %4256 = vmatpush.bf16.msra.mxu0 %v3002
    %4257 = vmatpush.bf16.msra.mxu0 %v2998
    %4258 = vmatpush.bf16.msra.mxu0 %v2994
    %4259 = vmatpush.bf16.msra.mxu0 %v2990
    %4260 = vmatpush.bf16.msra.mxu0 %v2986
    %4261 = vmatmul.bf16.gmra.mxu0 %v631
    %v4262 = vpop.f32.mrf.mxu0
    %v4263 = vadd.f32 %v4250, %v4262
    %v4264 = vpop.f32.mrf.mxu0
    %4265 = vdwg.mxu0
    %4266 = vmatpush.bf16.msra.mxu0 %v3046
    %4267 = vmatpush.bf16.msra.mxu0 %v3042
    %4268 = vmatpush.bf16.msra.mxu0 %v3038
    %4269 = vmatpush.bf16.msra.mxu0 %v3034
    %4270 = vmatpush.bf16.msra.mxu0 %v3030
    %4271 = vmatpush.bf16.msra.mxu0 %v3026
    %4272 = vmatpush.bf16.msra.mxu0 %v3022
    %4273 = vmatpush.bf16.msra.mxu0 %v3018
    %4274 = vmatmul.bf16.gmra.mxu0 %v632
    %v4275 = vpop.f32.mrf.mxu0
    %v4276 = vadd.f32 %v4263, %v4275
    %v4277 = vpop.f32.mrf.mxu0
    %4278 = vdwg.mxu0
    %4279 = vmatpush.bf16.msra.mxu0 %v3078
    %4280 = vmatpush.bf16.msra.mxu0 %v3074
    %4281 = vmatpush.bf16.msra.mxu0 %v3070
    %4282 = vmatpush.bf16.msra.mxu0 %v3066
    %4283 = vmatpush.bf16.msra.mxu0 %v3062
    %4284 = vmatpush.bf16.msra.mxu0 %v3058
    %4285 = vmatpush.bf16.msra.mxu0 %v3054
    %4286 = vmatpush.bf16.msra.mxu0 %v3050
    %4287 = vmatmul.bf16.gmra.mxu0 %v633
    %v4288 = vpop.f32.mrf.mxu0
    %v4289 = vadd.f32 %v4276, %v4288
    %v4290 = vpop.f32.mrf.mxu0
    %4291 = vdwg.mxu0
    %4292 = vmatpush.bf16.msra.mxu0 %v3110
    %4293 = vmatpush.bf16.msra.mxu0 %v3106
    %4294 = vmatpush.bf16.msra.mxu0 %v3102
    %4295 = vmatpush.bf16.msra.mxu0 %v3098
    %4296 = vmatpush.bf16.msra.mxu0 %v3094
    %4297 = vmatpush.bf16.msra.mxu0 %v3090
    %4298 = vmatpush.bf16.msra.mxu0 %v3086
    %4299 = vmatpush.bf16.msra.mxu0 %v3082
    %4300 = vmatmul.bf16.gmra.mxu0 %v634
    %v4301 = vpop.f32.mrf.mxu0
    %v4302 = vadd.f32 %v4289, %v4301
    %v4303 = vpop.f32.mrf.mxu0
    %4304 = vdwg.mxu0
    %4305 = vmatpush.bf16.msra.mxu0 %v3142
    %4306 = vmatpush.bf16.msra.mxu0 %v3138
    %4307 = vmatpush.bf16.msra.mxu0 %v3134
    %4308 = vmatpush.bf16.msra.mxu0 %v3130
    %4309 = vmatpush.bf16.msra.mxu0 %v3126
    %4310 = vmatpush.bf16.msra.mxu0 %v3122
    %4311 = vmatpush.bf16.msra.mxu0 %v3118
    %4312 = vmatpush.bf16.msra.mxu0 %v3114
    %4313 = vmatmul.bf16.gmra.mxu0 %v635
    %v4314 = vpop.f32.mrf.mxu0
    %v4315 = vadd.f32 %v4302, %v4314
    %v4316 = vpop.f32.mrf.mxu0
    %4317 = vdwg.mxu0
    %4318 = vmatpush.bf16.msra.mxu0 %v3174
    %4319 = vmatpush.bf16.msra.mxu0 %v3170
    %4320 = vmatpush.bf16.msra.mxu0 %v3166
    %4321 = vmatpush.bf16.msra.mxu0 %v3162
    %4322 = vmatpush.bf16.msra.mxu0 %v3158
    %4323 = vmatpush.bf16.msra.mxu0 %v3154
    %4324 = vmatpush.bf16.msra.mxu0 %v3150
    %4325 = vmatpush.bf16.msra.mxu0 %v3146
    %4326 = vmatmul.bf16.gmra.mxu0 %v636
    %v4327 = vpop.f32.mrf.mxu0
    %v4328 = vadd.f32 %v4315, %v4327
    %v4329 = vpop.f32.mrf.mxu0
    %4330 = vdwg.mxu0
    %4331 = vmatpush.bf16.msra.mxu0 %v3206
    %4332 = vmatpush.bf16.msra.mxu0 %v3202
    %4333 = vmatpush.bf16.msra.mxu0 %v3198
    %4334 = vmatpush.bf16.msra.mxu0 %v3194
    %4335 = vmatpush.bf16.msra.mxu0 %v3190
    %4336 = vmatpush.bf16.msra.mxu0 %v3186
    %4337 = vmatpush.bf16.msra.mxu0 %v3182
    %4338 = vmatpush.bf16.msra.mxu0 %v3178
    %4339 = vmatmul.bf16.gmra.mxu0 %v637
    %v4340 = vpop.f32.mrf.mxu0
    %v4341 = vadd.f32 %v4328, %v4340
    %v4342 = vpop.f32.mrf.mxu0
    %4343 = vdwg.mxu0
    %4344 = vmatpush.bf16.msra.mxu0 %v2727
    %4345 = vmatpush.bf16.msra.mxu0 %v2723
    %4346 = vmatpush.bf16.msra.mxu0 %v2719
    %4347 = vmatpush.bf16.msra.mxu0 %v2715
    %4348 = vmatpush.bf16.msra.mxu0 %v2711
    %4349 = vmatpush.bf16.msra.mxu0 %v2707
    %4350 = vmatpush.bf16.msra.mxu0 %v2703
    %4351 = vmatpush.bf16.msra.mxu0 %v2699
    %4352 = vmatmul.bf16.gmra.mxu0 %v622
    %v4353 = vpop.f32.mrf.mxu0
    %v4354 = vadd.f32 %v1155, %v4353
    %v4355 = vpop.f32.mrf.mxu0
    %4356 = vdwg.mxu0
    %4357 = vmatpush.bf16.msra.mxu0 %v2759
    %4358 = vmatpush.bf16.msra.mxu0 %v2755
    %4359 = vmatpush.bf16.msra.mxu0 %v2751
    %4360 = vmatpush.bf16.msra.mxu0 %v2747
    %4361 = vmatpush.bf16.msra.mxu0 %v2743
    %4362 = vmatpush.bf16.msra.mxu0 %v2739
    %4363 = vmatpush.bf16.msra.mxu0 %v2735
    %4364 = vmatpush.bf16.msra.mxu0 %v2731
    %4365 = vmatmul.bf16.gmra.mxu0 %v623
    %v4366 = vpop.f32.mrf.mxu0
    %v4367 = vadd.f32 %v4354, %v4366
    %v4368 = vpop.f32.mrf.mxu0
    %4369 = vdwg.mxu0
    %4370 = vmatpush.bf16.msra.mxu0 %v2791
    %4371 = vmatpush.bf16.msra.mxu0 %v2787
    %4372 = vmatpush.bf16.msra.mxu0 %v2783
    %4373 = vmatpush.bf16.msra.mxu0 %v2779
    %4374 = vmatpush.bf16.msra.mxu0 %v2775
    %4375 = vmatpush.bf16.msra.mxu0 %v2771
    %4376 = vmatpush.bf16.msra.mxu0 %v2767
    %4377 = vmatpush.bf16.msra.mxu0 %v2763
    %4378 = vmatmul.bf16.gmra.mxu0 %v624
    %v4379 = vpop.f32.mrf.mxu0
    %v4380 = vadd.f32 %v4367, %v4379
    %v4381 = vpop.f32.mrf.mxu0
    %4382 = vdwg.mxu0
    %4383 = vmatpush.bf16.msra.mxu0 %v2823
    %4384 = vmatpush.bf16.msra.mxu0 %v2819
    %4385 = vmatpush.bf16.msra.mxu0 %v2815
    %4386 = vmatpush.bf16.msra.mxu0 %v2811
    %4387 = vmatpush.bf16.msra.mxu0 %v2807
    %4388 = vmatpush.bf16.msra.mxu0 %v2803
    %4389 = vmatpush.bf16.msra.mxu0 %v2799
    %4390 = vmatpush.bf16.msra.mxu0 %v2795
    %4391 = vmatmul.bf16.gmra.mxu0 %v625
    %v4392 = vpop.f32.mrf.mxu0
    %v4393 = vadd.f32 %v4380, %v4392
    %v4394 = vpop.f32.mrf.mxu0
    %4395 = vdwg.mxu0
    %4396 = vmatpush.bf16.msra.mxu0 %v2855
    %4397 = vmatpush.bf16.msra.mxu0 %v2851
    %4398 = vmatpush.bf16.msra.mxu0 %v2847
    %4399 = vmatpush.bf16.msra.mxu0 %v2843
    %4400 = vmatpush.bf16.msra.mxu0 %v2839
    %4401 = vmatpush.bf16.msra.mxu0 %v2835
    %4402 = vmatpush.bf16.msra.mxu0 %v2831
    %4403 = vmatpush.bf16.msra.mxu0 %v2827
    %4404 = vmatmul.bf16.gmra.mxu0 %v626
    %v4405 = vpop.f32.mrf.mxu0
    %v4406 = vadd.f32 %v4393, %v4405
    %v4407 = vpop.f32.mrf.mxu0
    %4408 = vdwg.mxu0
    %4409 = vmatpush.bf16.msra.mxu0 %v2887
    %4410 = vmatpush.bf16.msra.mxu0 %v2883
    %4411 = vmatpush.bf16.msra.mxu0 %v2879
    %4412 = vmatpush.bf16.msra.mxu0 %v2875
    %4413 = vmatpush.bf16.msra.mxu0 %v2871
    %4414 = vmatpush.bf16.msra.mxu0 %v2867
    %4415 = vmatpush.bf16.msra.mxu0 %v2863
    %4416 = vmatpush.bf16.msra.mxu0 %v2859
    %4417 = vmatmul.bf16.gmra.mxu0 %v627
    %v4418 = vpop.f32.mrf.mxu0
    %v4419 = vadd.f32 %v4406, %v4418
    %v4420 = vpop.f32.mrf.mxu0
    %4421 = vdwg.mxu0
    %4422 = vmatpush.bf16.msra.mxu0 %v2919
    %4423 = vmatpush.bf16.msra.mxu0 %v2915
    %4424 = vmatpush.bf16.msra.mxu0 %v2911
    %4425 = vmatpush.bf16.msra.mxu0 %v2907
    %4426 = vmatpush.bf16.msra.mxu0 %v2903
    %4427 = vmatpush.bf16.msra.mxu0 %v2899
    %4428 = vmatpush.bf16.msra.mxu0 %v2895
    %4429 = vmatpush.bf16.msra.mxu0 %v2891
    %4430 = vmatmul.bf16.gmra.mxu0 %v628
    %v4431 = vpop.f32.mrf.mxu0
    %v4432 = vadd.f32 %v4419, %v4431
    %v4433 = vpop.f32.mrf.mxu0
    %4434 = vdwg.mxu0
    %4435 = vmatpush.bf16.msra.mxu0 %v2951
    %4436 = vmatpush.bf16.msra.mxu0 %v2947
    %4437 = vmatpush.bf16.msra.mxu0 %v2943
    %4438 = vmatpush.bf16.msra.mxu0 %v2939
    %4439 = vmatpush.bf16.msra.mxu0 %v2935
    %4440 = vmatpush.bf16.msra.mxu0 %v2931
    %4441 = vmatpush.bf16.msra.mxu0 %v2927
    %4442 = vmatpush.bf16.msra.mxu0 %v2923
    %4443 = vmatmul.bf16.gmra.mxu0 %v629
    %v4444 = vpop.f32.mrf.mxu0
    %v4445 = vadd.f32 %v4432, %v4444
    %v4446 = vpop.f32.mrf.mxu0
    %4447 = vdwg.mxu0
    %4448 = vmatpush.bf16.msra.mxu0 %v2983
    %4449 = vmatpush.bf16.msra.mxu0 %v2979
    %4450 = vmatpush.bf16.msra.mxu0 %v2975
    %4451 = vmatpush.bf16.msra.mxu0 %v2971
    %4452 = vmatpush.bf16.msra.mxu0 %v2967
    %4453 = vmatpush.bf16.msra.mxu0 %v2963
    %4454 = vmatpush.bf16.msra.mxu0 %v2959
    %4455 = vmatpush.bf16.msra.mxu0 %v2955
    %4456 = vmatmul.bf16.gmra.mxu0 %v630
    %v4457 = vpop.f32.mrf.mxu0
    %v4458 = vadd.f32 %v4445, %v4457
    %v4459 = vpop.f32.mrf.mxu0
    %4460 = vdwg.mxu0
    %4461 = vmatpush.bf16.msra.mxu0 %v3015
    %4462 = vmatpush.bf16.msra.mxu0 %v3011
    %4463 = vmatpush.bf16.msra.mxu0 %v3007
    %4464 = vmatpush.bf16.msra.mxu0 %v3003
    %4465 = vmatpush.bf16.msra.mxu0 %v2999
    %4466 = vmatpush.bf16.msra.mxu0 %v2995
    %4467 = vmatpush.bf16.msra.mxu0 %v2991
    %4468 = vmatpush.bf16.msra.mxu0 %v2987
    %4469 = vmatmul.bf16.gmra.mxu0 %v631
    %v4470 = vpop.f32.mrf.mxu0
    %v4471 = vadd.f32 %v4458, %v4470
    %v4472 = vpop.f32.mrf.mxu0
    %4473 = vdwg.mxu0
    %4474 = vmatpush.bf16.msra.mxu0 %v3047
    %4475 = vmatpush.bf16.msra.mxu0 %v3043
    %4476 = vmatpush.bf16.msra.mxu0 %v3039
    %4477 = vmatpush.bf16.msra.mxu0 %v3035
    %4478 = vmatpush.bf16.msra.mxu0 %v3031
    %4479 = vmatpush.bf16.msra.mxu0 %v3027
    %4480 = vmatpush.bf16.msra.mxu0 %v3023
    %4481 = vmatpush.bf16.msra.mxu0 %v3019
    %4482 = vmatmul.bf16.gmra.mxu0 %v632
    %v4483 = vpop.f32.mrf.mxu0
    %v4484 = vadd.f32 %v4471, %v4483
    %v4485 = vpop.f32.mrf.mxu0
    %4486 = vdwg.mxu0
    %4487 = vmatpush.bf16.msra.mxu0 %v3079
    %4488 = vmatpush.bf16.msra.mxu0 %v3075
    %4489 = vmatpush.bf16.msra.mxu0 %v3071
    %4490 = vmatpush.bf16.msra.mxu0 %v3067
    %4491 = vmatpush.bf16.msra.mxu0 %v3063
    %4492 = vmatpush.bf16.msra.mxu0 %v3059
    %4493 = vmatpush.bf16.msra.mxu0 %v3055
    %4494 = vmatpush.bf16.msra.mxu0 %v3051
    %4495 = vmatmul.bf16.gmra.mxu0 %v633
    %v4496 = vpop.f32.mrf.mxu0
    %v4497 = vadd.f32 %v4484, %v4496
    %v4498 = vpop.f32.mrf.mxu0
    %4499 = vdwg.mxu0
    %4500 = vmatpush.bf16.msra.mxu0 %v3111
    %4501 = vmatpush.bf16.msra.mxu0 %v3107
    %4502 = vmatpush.bf16.msra.mxu0 %v3103
    %4503 = vmatpush.bf16.msra.mxu0 %v3099
    %4504 = vmatpush.bf16.msra.mxu0 %v3095
    %4505 = vmatpush.bf16.msra.mxu0 %v3091
    %4506 = vmatpush.bf16.msra.mxu0 %v3087
    %4507 = vmatpush.bf16.msra.mxu0 %v3083
    %4508 = vmatmul.bf16.gmra.mxu0 %v634
    %v4509 = vpop.f32.mrf.mxu0
    %v4510 = vadd.f32 %v4497, %v4509
    %v4511 = vpop.f32.mrf.mxu0
    %4512 = vdwg.mxu0
    %4513 = vmatpush.bf16.msra.mxu0 %v3143
    %4514 = vmatpush.bf16.msra.mxu0 %v3139
    %4515 = vmatpush.bf16.msra.mxu0 %v3135
    %4516 = vmatpush.bf16.msra.mxu0 %v3131
    %4517 = vmatpush.bf16.msra.mxu0 %v3127
    %4518 = vmatpush.bf16.msra.mxu0 %v3123
    %4519 = vmatpush.bf16.msra.mxu0 %v3119
    %4520 = vmatpush.bf16.msra.mxu0 %v3115
    %4521 = vmatmul.bf16.gmra.mxu0 %v635
    %v4522 = vpop.f32.mrf.mxu0
    %v4523 = vadd.f32 %v4510, %v4522
    %v4524 = vpop.f32.mrf.mxu0
    %4525 = vdwg.mxu0
    %4526 = vmatpush.bf16.msra.mxu0 %v3175
    %4527 = vmatpush.bf16.msra.mxu0 %v3171
    %4528 = vmatpush.bf16.msra.mxu0 %v3167
    %4529 = vmatpush.bf16.msra.mxu0 %v3163
    %4530 = vmatpush.bf16.msra.mxu0 %v3159
    %4531 = vmatpush.bf16.msra.mxu0 %v3155
    %4532 = vmatpush.bf16.msra.mxu0 %v3151
    %4533 = vmatpush.bf16.msra.mxu0 %v3147
    %4534 = vmatmul.bf16.gmra.mxu0 %v636
    %v4535 = vpop.f32.mrf.mxu0
    %v4536 = vadd.f32 %v4523, %v4535
    %v4537 = vpop.f32.mrf.mxu0
    %4538 = vdwg.mxu0
    %4539 = vmatpush.bf16.msra.mxu0 %v3207
    %4540 = vmatpush.bf16.msra.mxu0 %v3203
    %4541 = vmatpush.bf16.msra.mxu0 %v3199
    %4542 = vmatpush.bf16.msra.mxu0 %v3195
    %4543 = vmatpush.bf16.msra.mxu0 %v3191
    %4544 = vmatpush.bf16.msra.mxu0 %v3187
    %4545 = vmatpush.bf16.msra.mxu0 %v3183
    %4546 = vmatpush.bf16.msra.mxu0 %v3179
    %4547 = vmatmul.bf16.gmra.mxu0 %v637
    %v4548 = vpop.f32.mrf.mxu0
    %v4549 = vadd.f32 %v4536, %v4548
    %v4550 = vpop.f32.mrf.mxu0
    %4551 = vdwg.mxu0
    %v4552 = vmax.f32 %v3925, 0.0
    %v4553 = vmax.f32 %v4133, 0.0
    %v4554 = vmax.f32 %v4341, 0.0
    %v4555 = vmax.f32 %v4549, 0.0
    %v4556 = vpack.c.bf16 %v4552, %v4552
    %v4557 = vpack.c.bf16 %v4553, %v4553
    %v4558 = vpack.c.bf16 %v4554, %v4554
    %v4559 = vpack.c.bf16 %v4555, %v4555
    %v4560 = vld [vmem:[#allocation11] sm:$0xff]
    %v4561 = vld [vmem:[#allocation11 + $0x8] sm:$0xff]
    %v4562 = vld [vmem:[#allocation11 + $0x10] sm:$0xff]
    %v4563 = vld [vmem:[#allocation11 + $0x18] sm:$0xff]
    %v4564 = vld [vmem:[#allocation11 + $0x20] sm:$0xff]
    %v4565 = vld [vmem:[#allocation11 + $0x28] sm:$0xff]
    %v4566 = vld [vmem:[#allocation11 + $0x30] sm:$0xff]
    %v4567 = vld [vmem:[#allocation11 + $0x38] sm:$0xff]
    %v4568 = vld [vmem:[#allocation11 + $0x40] sm:$0xff]
    %v4569 = vld [vmem:[#allocation11 + $0x48] sm:$0xff]
    %v4570 = vld [vmem:[#allocation11 + $0x50] sm:$0xff]
    %v4571 = vld [vmem:[#allocation11 + $0x58] sm:$0xff]
    %v4572 = vld [vmem:[#allocation11 + $0x60] sm:$0xff]
    %v4573 = vld [vmem:[#allocation11 + $0x68] sm:$0xff]
    %v4574 = vld [vmem:[#allocation11 + $0x70] sm:$0xff]
    %v4575 = vld [vmem:[#allocation11 + $0x78] sm:$0xff]
    %v4576 = vld [vmem:[#allocation11 + $0x80] sm:$0xff]
    %v4577 = vld [vmem:[#allocation11 + $0x88] sm:$0xff]
    %v4578 = vld [vmem:[#allocation11 + $0x90] sm:$0xff]
    %v4579 = vld [vmem:[#allocation11 + $0x98] sm:$0xff]
    %v4580 = vld [vmem:[#allocation11 + $0xa0] sm:$0xff]
    %v4581 = vld [vmem:[#allocation11 + $0xa8] sm:$0xff]
    %v4582 = vld [vmem:[#allocation11 + $0xb0] sm:$0xff]
    %v4583 = vld [vmem:[#allocation11 + $0xb8] sm:$0xff]
    %v4584 = vld [vmem:[#allocation11 + $0xc0] sm:$0xff]
    %v4585 = vld [vmem:[#allocation11 + $0xc8] sm:$0xff]
    %v4586 = vld [vmem:[#allocation11 + $0xd0] sm:$0xff]
    %v4587 = vld [vmem:[#allocation11 + $0xd8] sm:$0xff]
    %v4588 = vld [vmem:[#allocation11 + $0xe0] sm:$0xff]
    %v4589 = vld [vmem:[#allocation11 + $0xe8] sm:$0xff]
    %v4590 = vld [vmem:[#allocation11 + $0xf0] sm:$0xff]
    %v4591 = vld [vmem:[#allocation11 + $0xf8] sm:$0xff]
    %v4592 = vld [vmem:[#allocation11 + $0x100] sm:$0xff]
    %v4593 = vld [vmem:[#allocation11 + $0x108] sm:$0xff]
    %v4594 = vld [vmem:[#allocation11 + $0x110] sm:$0xff]
    %v4595 = vld [vmem:[#allocation11 + $0x118] sm:$0xff]
    %v4596 = vld [vmem:[#allocation11 + $0x120] sm:$0xff]
    %v4597 = vld [vmem:[#allocation11 + $0x128] sm:$0xff]
    %v4598 = vld [vmem:[#allocation11 + $0x130] sm:$0xff]
    %v4599 = vld [vmem:[#allocation11 + $0x138] sm:$0xff]
    %v4600 = vld [vmem:[#allocation11 + $0x140] sm:$0xff]
    %v4601 = vld [vmem:[#allocation11 + $0x148] sm:$0xff]
    %v4602 = vld [vmem:[#allocation11 + $0x150] sm:$0xff]
    %v4603 = vld [vmem:[#allocation11 + $0x158] sm:$0xff]
    %v4604 = vld [vmem:[#allocation11 + $0x160] sm:$0xff]
    %v4605 = vld [vmem:[#allocation11 + $0x168] sm:$0xff]
    %v4606 = vld [vmem:[#allocation11 + $0x170] sm:$0xff]
    %v4607 = vld [vmem:[#allocation11 + $0x178] sm:$0xff]
    %v4608 = vld [vmem:[#allocation11 + $0x180] sm:$0xff]
    %v4609 = vld [vmem:[#allocation11 + $0x188] sm:$0xff]
    %v4610 = vld [vmem:[#allocation11 + $0x190] sm:$0xff]
    %v4611 = vld [vmem:[#allocation11 + $0x198] sm:$0xff]
    %v4612 = vld [vmem:[#allocation11 + $0x1a0] sm:$0xff]
    %v4613 = vld [vmem:[#allocation11 + $0x1a8] sm:$0xff]
    %v4614 = vld [vmem:[#allocation11 + $0x1b0] sm:$0xff]
    %v4615 = vld [vmem:[#allocation11 + $0x1b8] sm:$0xff]
    %v4616 = vld [vmem:[#allocation11 + $0x1c0] sm:$0xff]
    %v4617 = vld [vmem:[#allocation11 + $0x1c8] sm:$0xff]
    %v4618 = vld [vmem:[#allocation11 + $0x1d0] sm:$0xff]
    %v4619 = vld [vmem:[#allocation11 + $0x1d8] sm:$0xff]
    %v4620 = vld [vmem:[#allocation11 + $0x1e0] sm:$0xff]
    %v4621 = vld [vmem:[#allocation11 + $0x1e8] sm:$0xff]
    %v4622 = vld [vmem:[#allocation11 + $0x1f0] sm:$0xff]
    %v4623 = vld [vmem:[#allocation11 + $0x1f8] sm:$0xff]
    %v4624 = vld [vmem:[#allocation13] sm:$0x3]
    %v4626 = vperm.slane %v4624, 0
    %v4627 = vperm.slane %v4624, 1
    %v4694 = vunpack.c.l.b16 %v4560
    %v4695 = vunpack.c.h.b16 %v4560
    %v4696 = vunpack.c.l.b16 %v4561
    %v4697 = vunpack.c.h.b16 %v4561
    %v4698 = vunpack.c.l.b16 %v4562
    %v4699 = vunpack.c.h.b16 %v4562
    %v4700 = vunpack.c.l.b16 %v4563
    %v4701 = vunpack.c.h.b16 %v4563
    %v4702 = vunpack.c.l.b16 %v4564
    %v4703 = vunpack.c.h.b16 %v4564
    %v4704 = vunpack.c.l.b16 %v4565
    %v4705 = vunpack.c.h.b16 %v4565
    %v4706 = vunpack.c.l.b16 %v4566
    %v4707 = vunpack.c.h.b16 %v4566
    %v4708 = vunpack.c.l.b16 %v4567
    %v4709 = vunpack.c.h.b16 %v4567
    %v4710 = vunpack.c.l.b16 %v4568
    %v4711 = vunpack.c.h.b16 %v4568
    %v4712 = vunpack.c.l.b16 %v4569
    %v4713 = vunpack.c.h.b16 %v4569
    %v4714 = vunpack.c.l.b16 %v4570
    %v4715 = vunpack.c.h.b16 %v4570
    %v4716 = vunpack.c.l.b16 %v4571
    %v4717 = vunpack.c.h.b16 %v4571
    %v4718 = vunpack.c.l.b16 %v4572
    %v4719 = vunpack.c.h.b16 %v4572
    %v4720 = vunpack.c.l.b16 %v4573
    %v4721 = vunpack.c.h.b16 %v4573
    %v4722 = vunpack.c.l.b16 %v4574
    %v4723 = vunpack.c.h.b16 %v4574
    %v4724 = vunpack.c.l.b16 %v4575
    %v4725 = vunpack.c.h.b16 %v4575
    %v4726 = vunpack.c.l.b16 %v4576
    %v4727 = vunpack.c.h.b16 %v4576
    %v4728 = vunpack.c.l.b16 %v4577
    %v4729 = vunpack.c.h.b16 %v4577
    %v4730 = vunpack.c.l.b16 %v4578
    %v4731 = vunpack.c.h.b16 %v4578
    %v4732 = vunpack.c.l.b16 %v4579
    %v4733 = vunpack.c.h.b16 %v4579
    %v4734 = vunpack.c.l.b16 %v4580
    %v4735 = vunpack.c.h.b16 %v4580
    %v4736 = vunpack.c.l.b16 %v4581
    %v4737 = vunpack.c.h.b16 %v4581
    %v4738 = vunpack.c.l.b16 %v4582
    %v4739 = vunpack.c.h.b16 %v4582
    %v4740 = vunpack.c.l.b16 %v4583
    %v4741 = vunpack.c.h.b16 %v4583
    %v4742 = vunpack.c.l.b16 %v4584
    %v4743 = vunpack.c.h.b16 %v4584
    %v4744 = vunpack.c.l.b16 %v4585
    %v4745 = vunpack.c.h.b16 %v4585
    %v4746 = vunpack.c.l.b16 %v4586
    %v4747 = vunpack.c.h.b16 %v4586
    %v4748 = vunpack.c.l.b16 %v4587
    %v4749 = vunpack.c.h.b16 %v4587
    %v4750 = vunpack.c.l.b16 %v4588
    %v4751 = vunpack.c.h.b16 %v4588
    %v4752 = vunpack.c.l.b16 %v4589
    %v4753 = vunpack.c.h.b16 %v4589
    %v4754 = vunpack.c.l.b16 %v4590
    %v4755 = vunpack.c.h.b16 %v4590
    %v4756 = vunpack.c.l.b16 %v4591
    %v4757 = vunpack.c.h.b16 %v4591
    %v4758 = vunpack.c.l.b16 %v4592
    %v4759 = vunpack.c.h.b16 %v4592
    %v4760 = vunpack.c.l.b16 %v4593
    %v4761 = vunpack.c.h.b16 %v4593
    %v4762 = vunpack.c.l.b16 %v4594
    %v4763 = vunpack.c.h.b16 %v4594
    %v4764 = vunpack.c.l.b16 %v4595
    %v4765 = vunpack.c.h.b16 %v4595
    %v4766 = vunpack.c.l.b16 %v4596
    %v4767 = vunpack.c.h.b16 %v4596
    %v4768 = vunpack.c.l.b16 %v4597
    %v4769 = vunpack.c.h.b16 %v4597
    %v4770 = vunpack.c.l.b16 %v4598
    %v4771 = vunpack.c.h.b16 %v4598
    %v4772 = vunpack.c.l.b16 %v4599
    %v4773 = vunpack.c.h.b16 %v4599
    %v4774 = vunpack.c.l.b16 %v4600
    %v4775 = vunpack.c.h.b16 %v4600
    %v4776 = vunpack.c.l.b16 %v4601
    %v4777 = vunpack.c.h.b16 %v4601
    %v4778 = vunpack.c.l.b16 %v4602
    %v4779 = vunpack.c.h.b16 %v4602
    %v4780 = vunpack.c.l.b16 %v4603
    %v4781 = vunpack.c.h.b16 %v4603
    %v4782 = vunpack.c.l.b16 %v4604
    %v4783 = vunpack.c.h.b16 %v4604
    %v4784 = vunpack.c.l.b16 %v4605
    %v4785 = vunpack.c.h.b16 %v4605
    %v4786 = vunpack.c.l.b16 %v4606
    %v4787 = vunpack.c.h.b16 %v4606
    %v4788 = vunpack.c.l.b16 %v4607
    %v4789 = vunpack.c.h.b16 %v4607
    %v4790 = vunpack.c.l.b16 %v4608
    %v4791 = vunpack.c.h.b16 %v4608
    %v4792 = vunpack.c.l.b16 %v4609
    %v4793 = vunpack.c.h.b16 %v4609
    %v4794 = vunpack.c.l.b16 %v4610
    %v4795 = vunpack.c.h.b16 %v4610
    %v4796 = vunpack.c.l.b16 %v4611
    %v4797 = vunpack.c.h.b16 %v4611
    %v4798 = vunpack.c.l.b16 %v4612
    %v4799 = vunpack.c.h.b16 %v4612
    %v4800 = vunpack.c.l.b16 %v4613
    %v4801 = vunpack.c.h.b16 %v4613
    %v4802 = vunpack.c.l.b16 %v4614
    %v4803 = vunpack.c.h.b16 %v4614
    %v4804 = vunpack.c.l.b16 %v4615
    %v4805 = vunpack.c.h.b16 %v4615
    %v4806 = vunpack.c.l.b16 %v4616
    %v4807 = vunpack.c.h.b16 %v4616
    %v4808 = vunpack.c.l.b16 %v4617
    %v4809 = vunpack.c.h.b16 %v4617
    %v4810 = vunpack.c.l.b16 %v4618
    %v4811 = vunpack.c.h.b16 %v4618
    %v4812 = vunpack.c.l.b16 %v4619
    %v4813 = vunpack.c.h.b16 %v4619
    %v4814 = vunpack.c.l.b16 %v4620
    %v4815 = vunpack.c.h.b16 %v4620
    %v4816 = vunpack.c.l.b16 %v4621
    %v4817 = vunpack.c.h.b16 %v4621
    %v4818 = vunpack.c.l.b16 %v4622
    %v4819 = vunpack.c.h.b16 %v4622
    %v4820 = vunpack.c.l.b16 %v4623
    %v4821 = vunpack.c.h.b16 %v4623
    %v4822 = vpack.c.b16 %v4696, %v4694
    %v4823 = vpack.c.b16 %v4697, %v4695
    %v4824 = vpack.c.b16 %v4700, %v4698
    %v4825 = vpack.c.b16 %v4701, %v4699
    %v4826 = vpack.c.b16 %v4704, %v4702
    %v4827 = vpack.c.b16 %v4705, %v4703
    %v4828 = vpack.c.b16 %v4708, %v4706
    %v4829 = vpack.c.b16 %v4709, %v4707
    %v4830 = vpack.c.b16 %v4712, %v4710
    %v4831 = vpack.c.b16 %v4713, %v4711
    %v4832 = vpack.c.b16 %v4716, %v4714
    %v4833 = vpack.c.b16 %v4717, %v4715
    %v4834 = vpack.c.b16 %v4720, %v4718
    %v4835 = vpack.c.b16 %v4721, %v4719
    %v4836 = vpack.c.b16 %v4724, %v4722
    %v4837 = vpack.c.b16 %v4725, %v4723
    %v4838 = vpack.c.b16 %v4728, %v4726
    %v4839 = vpack.c.b16 %v4729, %v4727
    %v4840 = vpack.c.b16 %v4732, %v4730
    %v4841 = vpack.c.b16 %v4733, %v4731
    %v4842 = vpack.c.b16 %v4736, %v4734
    %v4843 = vpack.c.b16 %v4737, %v4735
    %v4844 = vpack.c.b16 %v4740, %v4738
    %v4845 = vpack.c.b16 %v4741, %v4739
    %v4846 = vpack.c.b16 %v4744, %v4742
    %v4847 = vpack.c.b16 %v4745, %v4743
    %v4848 = vpack.c.b16 %v4748, %v4746
    %v4849 = vpack.c.b16 %v4749, %v4747
    %v4850 = vpack.c.b16 %v4752, %v4750
    %v4851 = vpack.c.b16 %v4753, %v4751
    %v4852 = vpack.c.b16 %v4756, %v4754
    %v4853 = vpack.c.b16 %v4757, %v4755
    %v4854 = vpack.c.b16 %v4760, %v4758
    %v4855 = vpack.c.b16 %v4761, %v4759
    %v4856 = vpack.c.b16 %v4764, %v4762
    %v4857 = vpack.c.b16 %v4765, %v4763
    %v4858 = vpack.c.b16 %v4768, %v4766
    %v4859 = vpack.c.b16 %v4769, %v4767
    %v4860 = vpack.c.b16 %v4772, %v4770
    %v4861 = vpack.c.b16 %v4773, %v4771
    %v4862 = vpack.c.b16 %v4776, %v4774
    %v4863 = vpack.c.b16 %v4777, %v4775
    %v4864 = vpack.c.b16 %v4780, %v4778
    %v4865 = vpack.c.b16 %v4781, %v4779
    %v4866 = vpack.c.b16 %v4784, %v4782
    %v4867 = vpack.c.b16 %v4785, %v4783
    %v4868 = vpack.c.b16 %v4788, %v4786
    %v4869 = vpack.c.b16 %v4789, %v4787
    %v4870 = vpack.c.b16 %v4792, %v4790
    %v4871 = vpack.c.b16 %v4793, %v4791
    %v4872 = vpack.c.b16 %v4796, %v4794
    %v4873 = vpack.c.b16 %v4797, %v4795
    %v4874 = vpack.c.b16 %v4800, %v4798
    %v4875 = vpack.c.b16 %v4801, %v4799
    %v4876 = vpack.c.b16 %v4804, %v4802
    %v4877 = vpack.c.b16 %v4805, %v4803
    %v4878 = vpack.c.b16 %v4808, %v4806
    %v4879 = vpack.c.b16 %v4809, %v4807
    %v4880 = vpack.c.b16 %v4812, %v4810
    %v4881 = vpack.c.b16 %v4813, %v4811
    %v4882 = vpack.c.b16 %v4816, %v4814
    %v4883 = vpack.c.b16 %v4817, %v4815
    %v4884 = vpack.c.b16 %v4820, %v4818
    %v4885 = vpack.c.b16 %v4821, %v4819
    %4950 = vmatpush.bf16.msra.mxu0 %v4836
    %4951 = vmatpush.bf16.msra.mxu0 %v4834
    %4952 = vmatpush.bf16.msra.mxu0 %v4832
    %4953 = vmatpush.bf16.msra.mxu0 %v4830
    %4954 = vmatpush.bf16.msra.mxu0 %v4828
    %4955 = vmatpush.bf16.msra.mxu0 %v4826
    %4956 = vmatpush.bf16.msra.mxu0 %v4824
    %4957 = vmatpush.bf16.msra.mxu0 %v4822
    %4958 = vmatmul.bf16.gmra.mxu0 %v4556
    %v4959 = vpop.f32.mrf.mxu0
    %v4960 = vadd.f32 %v4626, %v4959
    %v4961 = vpop.f32.mrf.mxu0
    %4962 = vdwg.mxu0
    %4963 = vmatpush.bf16.msra.mxu0 %v4852
    %4964 = vmatpush.bf16.msra.mxu0 %v4850
    %4965 = vmatpush.bf16.msra.mxu0 %v4848
    %4966 = vmatpush.bf16.msra.mxu0 %v4846
    %4967 = vmatpush.bf16.msra.mxu0 %v4844
    %4968 = vmatpush.bf16.msra.mxu0 %v4842
    %4969 = vmatpush.bf16.msra.mxu0 %v4840
    %4970 = vmatpush.bf16.msra.mxu0 %v4838
    %4971 = vmatmul.bf16.gmra.mxu0 %v4557
    %v4972 = vpop.f32.mrf.mxu0
    %v4973 = vadd.f32 %v4960, %v4972
    %v4974 = vpop.f32.mrf.mxu0
    %4975 = vdwg.mxu0
    %4976 = vmatpush.bf16.msra.mxu0 %v4868
    %4977 = vmatpush.bf16.msra.mxu0 %v4866
    %4978 = vmatpush.bf16.msra.mxu0 %v4864
    %4979 = vmatpush.bf16.msra.mxu0 %v4862
    %4980 = vmatpush.bf16.msra.mxu0 %v4860
    %4981 = vmatpush.bf16.msra.mxu0 %v4858
    %4982 = vmatpush.bf16.msra.mxu0 %v4856
    %4983 = vmatpush.bf16.msra.mxu0 %v4854
    %4984 = vmatmul.bf16.gmra.mxu0 %v4558
    %v4985 = vpop.f32.mrf.mxu0
    %v4986 = vadd.f32 %v4973, %v4985
    %v4987 = vpop.f32.mrf.mxu0
    %4988 = vdwg.mxu0
    %4989 = vmatpush.bf16.msra.mxu0 %v4884
    %4990 = vmatpush.bf16.msra.mxu0 %v4882
    %4991 = vmatpush.bf16.msra.mxu0 %v4880
    %4992 = vmatpush.bf16.msra.mxu0 %v4878
    %4993 = vmatpush.bf16.msra.mxu0 %v4876
    %4994 = vmatpush.bf16.msra.mxu0 %v4874
    %4995 = vmatpush.bf16.msra.mxu0 %v4872
    %4996 = vmatpush.bf16.msra.mxu0 %v4870
    %4997 = vmatmul.bf16.gmra.mxu0 %v4559
    %v4998 = vpop.f32.mrf.mxu0
    %v4999 = vadd.f32 %v4986, %v4998
    %v5000 = vpop.f32.mrf.mxu0
    %5001 = vdwg.mxu0
    %5002 = vmatpush.bf16.msra.mxu0 %v4837
    %5003 = vmatpush.bf16.msra.mxu0 %v4835
    %5004 = vmatpush.bf16.msra.mxu0 %v4833
    %5005 = vmatpush.bf16.msra.mxu0 %v4831
    %5006 = vmatpush.bf16.msra.mxu0 %v4829
    %5007 = vmatpush.bf16.msra.mxu0 %v4827
    %5008 = vmatpush.bf16.msra.mxu0 %v4825
    %5009 = vmatpush.bf16.msra.mxu0 %v4823
    %5010 = vmatmul.bf16.gmra.mxu0 %v4556
    %v5011 = vpop.f32.mrf.mxu0
    %v5012 = vadd.f32 %v4627, %v5011
    %v5013 = vpop.f32.mrf.mxu0
    %5014 = vdwg.mxu0
    %5015 = vmatpush.bf16.msra.mxu0 %v4853
    %5016 = vmatpush.bf16.msra.mxu0 %v4851
    %5017 = vmatpush.bf16.msra.mxu0 %v4849
    %5018 = vmatpush.bf16.msra.mxu0 %v4847
    %5019 = vmatpush.bf16.msra.mxu0 %v4845
    %5020 = vmatpush.bf16.msra.mxu0 %v4843
    %5021 = vmatpush.bf16.msra.mxu0 %v4841
    %5022 = vmatpush.bf16.msra.mxu0 %v4839
    %5023 = vmatmul.bf16.gmra.mxu0 %v4557
    %v5024 = vpop.f32.mrf.mxu0
    %v5025 = vadd.f32 %v5012, %v5024
    %v5026 = vpop.f32.mrf.mxu0
    %5027 = vdwg.mxu0
    %5028 = vmatpush.bf16.msra.mxu0 %v4869
    %5029 = vmatpush.bf16.msra.mxu0 %v4867
    %5030 = vmatpush.bf16.msra.mxu0 %v4865
    %5031 = vmatpush.bf16.msra.mxu0 %v4863
    %5032 = vmatpush.bf16.msra.mxu0 %v4861
    %5033 = vmatpush.bf16.msra.mxu0 %v4859
    %5034 = vmatpush.bf16.msra.mxu0 %v4857
    %5035 = vmatpush.bf16.msra.mxu0 %v4855
    %5036 = vmatmul.bf16.gmra.mxu0 %v4558
    %v5037 = vpop.f32.mrf.mxu0
    %v5038 = vadd.f32 %v5025, %v5037
    %v5039 = vpop.f32.mrf.mxu0
    %5040 = vdwg.mxu0
    %5041 = vmatpush.bf16.msra.mxu0 %v4885
    %5042 = vmatpush.bf16.msra.mxu0 %v4883
    %5043 = vmatpush.bf16.msra.mxu0 %v4881
    %5044 = vmatpush.bf16.msra.mxu0 %v4879
    %5045 = vmatpush.bf16.msra.mxu0 %v4877
    %5046 = vmatpush.bf16.msra.mxu0 %v4875
    %5047 = vmatpush.bf16.msra.mxu0 %v4873
    %5048 = vmatpush.bf16.msra.mxu0 %v4871
    %5049 = vmatmul.bf16.gmra.mxu0 %v4559
    %v5050 = vpop.f32.mrf.mxu0
    %v5051 = vadd.f32 %v5038, %v5050
    %v5052 = vpop.f32.mrf.mxu0
    %5053 = vdwg.mxu0
    %v5054 = vmax.f32 %v4999, 0.0
    %v5055 = vmax.f32 %v5051, 0.0
    %v5056 = vpack.c.bf16 %v5054, %v5054
    %v5057 = vpack.c.bf16 %v5055, %v5055
    %v5058 = vld [vmem:[#allocation14] sm:$0xf]
    %v5059 = vld [vmem:[#allocation14 + $0x4] sm:$0xf]
    %v5060 = vld [vmem:[#allocation14 + $0x8] sm:$0xf]
    %v5061 = vld [vmem:[#allocation14 + $0xc] sm:$0xf]
    %v5062 = vld [vmem:[#allocation14 + $0x10] sm:$0xf]
    %v5063 = vld [vmem:[#allocation14 + $0x14] sm:$0xf]
    %v5064 = vld [vmem:[#allocation14 + $0x18] sm:$0xf]
    %v5065 = vld [vmem:[#allocation14 + $0x1c] sm:$0xf]
    %v5066 = vld [vmem:[#allocation14 + $0x20] sm:$0xf]
    %v5067 = vld [vmem:[#allocation14 + $0x24] sm:$0xf]
    %v5068 = vld [vmem:[#allocation14 + $0x28] sm:$0xf]
    %v5069 = vld [vmem:[#allocation14 + $0x2c] sm:$0xf]
    %v5070 = vld [vmem:[#allocation14 + $0x30] sm:$0xf]
    %v5071 = vld [vmem:[#allocation14 + $0x34] sm:$0xf]
    %v5072 = vld [vmem:[#allocation14 + $0x38] sm:$0xf]
    %v5073 = vld [vmem:[#allocation14 + $0x3c] sm:$0xf]
    %v5074 = vld [vmem:[#allocation14 + $0x40] sm:$0xf]
    %v5075 = vld [vmem:[#allocation14 + $0x44] sm:$0xf]
    %v5076 = vld [vmem:[#allocation14 + $0x48] sm:$0xf]
    %v5077 = vld [vmem:[#allocation14 + $0x4c] sm:$0xf]
    %v5078 = vld [vmem:[#allocation14 + $0x50] sm:$0xf]
    %v5079 = vld [vmem:[#allocation14 + $0x54] sm:$0xf]
    %v5080 = vld [vmem:[#allocation14 + $0x58] sm:$0xf]
    %v5081 = vld [vmem:[#allocation14 + $0x5c] sm:$0xf]
    %v5082 = vld [vmem:[#allocation14 + $0x60] sm:$0xf]
    %v5083 = vld [vmem:[#allocation14 + $0x64] sm:$0xf]
    %v5084 = vld [vmem:[#allocation14 + $0x68] sm:$0xf]
    %v5085 = vld [vmem:[#allocation14 + $0x6c] sm:$0xf]
    %v5086 = vld [vmem:[#allocation14 + $0x70] sm:$0xf]
    %v5087 = vld [vmem:[#allocation14 + $0x74] sm:$0xf]
    %v5088 = vld [vmem:[#allocation14 + $0x78] sm:$0xf]
    %v5089 = vld [vmem:[#allocation14 + $0x7c] sm:$0xf]
    %v5090 = vld [vmem:[#allocation16] sm:$0x1]
    %v5092 = vperm.slane %v5090, 0
    %v5126 = vunpack.c.l.b16 %v5058
    %v5127 = vunpack.c.l.b16 %v5059
    %v5128 = vunpack.c.l.b16 %v5060
    %v5129 = vunpack.c.l.b16 %v5061
    %v5130 = vunpack.c.l.b16 %v5062
    %v5131 = vunpack.c.l.b16 %v5063
    %v5132 = vunpack.c.l.b16 %v5064
    %v5133 = vunpack.c.l.b16 %v5065
    %v5134 = vunpack.c.l.b16 %v5066
    %v5135 = vunpack.c.l.b16 %v5067
    %v5136 = vunpack.c.l.b16 %v5068
    %v5137 = vunpack.c.l.b16 %v5069
    %v5138 = vunpack.c.l.b16 %v5070
    %v5139 = vunpack.c.l.b16 %v5071
    %v5140 = vunpack.c.l.b16 %v5072
    %v5141 = vunpack.c.l.b16 %v5073
    %v5142 = vunpack.c.l.b16 %v5074
    %v5143 = vunpack.c.l.b16 %v5075
    %v5144 = vunpack.c.l.b16 %v5076
    %v5145 = vunpack.c.l.b16 %v5077
    %v5146 = vunpack.c.l.b16 %v5078
    %v5147 = vunpack.c.l.b16 %v5079
    %v5148 = vunpack.c.l.b16 %v5080
    %v5149 = vunpack.c.l.b16 %v5081
    %v5150 = vunpack.c.l.b16 %v5082
    %v5151 = vunpack.c.l.b16 %v5083
    %v5152 = vunpack.c.l.b16 %v5084
    %v5153 = vunpack.c.l.b16 %v5085
    %v5154 = vunpack.c.l.b16 %v5086
    %v5155 = vunpack.c.l.b16 %v5087
    %v5156 = vunpack.c.l.b16 %v5088
    %v5157 = vunpack.c.l.b16 %v5089
    %v5158 = vpack.c.b16 %v5127, %v5126
    %v5159 = vpack.c.b16 %v5129, %v5128
    %v5160 = vpack.c.b16 %v5131, %v5130
    %v5161 = vpack.c.b16 %v5133, %v5132
    %v5162 = vpack.c.b16 %v5135, %v5134
    %v5163 = vpack.c.b16 %v5137, %v5136
    %v5164 = vpack.c.b16 %v5139, %v5138
    %v5165 = vpack.c.b16 %v5141, %v5140
    %v5166 = vpack.c.b16 %v5143, %v5142
    %v5167 = vpack.c.b16 %v5145, %v5144
    %v5168 = vpack.c.b16 %v5147, %v5146
    %v5169 = vpack.c.b16 %v5149, %v5148
    %v5170 = vpack.c.b16 %v5151, %v5150
    %v5171 = vpack.c.b16 %v5153, %v5152
    %v5172 = vpack.c.b16 %v5155, %v5154
    %v5173 = vpack.c.b16 %v5157, %v5156
    %5190 = vmatpush.bf16.msra.mxu0 %v5165
    %5191 = vmatpush.bf16.msra.mxu0 %v5164
    %5192 = vmatpush.bf16.msra.mxu0 %v5163
    %5193 = vmatpush.bf16.msra.mxu0 %v5162
    %5194 = vmatpush.bf16.msra.mxu0 %v5161
    %5195 = vmatpush.bf16.msra.mxu0 %v5160
    %5196 = vmatpush.bf16.msra.mxu0 %v5159
    %5197 = vmatpush.bf16.msra.mxu0 %v5158
    %5198 = vmatmul.bf16.gmra.mxu0 %v5056
    %v5199 = vpop.f32.mrf.mxu0
    %v5200 = vadd.f32 %v5092, %v5199
    %v5201 = vpop.f32.mrf.mxu0
    %5202 = vdwg.mxu0
    %5203 = vmatpush.bf16.msra.mxu0 %v5173
    %5204 = vmatpush.bf16.msra.mxu0 %v5172
    %5205 = vmatpush.bf16.msra.mxu0 %v5171
    %5206 = vmatpush.bf16.msra.mxu0 %v5170
    %5207 = vmatpush.bf16.msra.mxu0 %v5169
    %5208 = vmatpush.bf16.msra.mxu0 %v5168
    %5209 = vmatpush.bf16.msra.mxu0 %v5167
    %5210 = vmatpush.bf16.msra.mxu0 %v5166
    %5211 = vmatmul.bf16.gmra.mxu0 %v5057
    %v5212 = vpop.f32.mrf.mxu0
    %v5213 = vadd.f32 %v5200, %v5212
    %v5214 = vpop.f32.mrf.mxu0
    %5215 = vdwg.mxu0
    %5216 = vst [vmem:[#allocation17] sm:$0xff] %v5213
    // Predicated region
    $region74: #{tpu_custom_call.1} parent=1 // pred_check
      _
    $region75: #{tpu_custom_call.1} parent=1 // pred_check_branch
      %5218 = sbr.rel (0) target = $region77
    $region76: #{tpu_custom_call.1} parent=1 // pred_region
      %5220 = vsyncadd [#allocation4], 0
      %s5222 = sshll.u32 [#allocation17], 4
      %s5223 = int_to_ptr.vmem [resolvable:$true] %s5222
      %s5224 = sshll.u32 %s9, 4
      %s5225 = int_to_ptr.hbm [resolvable:$true] %s5224
      %5227 = dma.vmem_to_hbm [thread:$0]  %s5223, 128, %s5225, [#allocation4]
    $region77: #{tpu_custom_call.1} parent=1 // pred_fallthru
      _
    // Predicated region
    $region78: #{tpu_custom_call.1} parent=1 // pred_check
      _
    $region79: #{tpu_custom_call.1} parent=1 // pred_check_branch
      %5229 = sbr.rel (0) target = $region81
    $region80: #{tpu_custom_call.1} parent=1 // pred_region
      %5231 = dma.done [#allocation4], 128
    $region81: #{tpu_custom_call.1} parent=1 // pred_fallthru
      _
    %5232 = vsyncpa [#allocation3], 1
    %5233 = vsyncpa [#allocation6], 1
    %5234 = vsyncpa [#allocation9], 1
    %5235 = vsyncpa [#allocation12], 1
    %5236 = vsyncpa [#allocation15], 1
    %5237 = vsyncpa [#allocation4], 1

// kernel: tpu_custom_call.1
$region0: #{tpu_custom_call.1}
  #allocation0 [shape = 'u32[]', space=smem, size = 0x4, offset = 0x4, fixed_abs, tag = 'smem constant byte address 0x4 - core index']
  #allocation1 [shape = 'u32[72,128]{1,0:T(1,128)}', space=vmem, size = 0x9000, scoped, tag = 'internal scratch']
  %s0 = inlined_call_operand.hbm [shape: f32[8,32], index: 0, kind: input, shape index: {}]
  %s1 = inlined_call_operand.hbm [shape: bf16[32,2048], index: 1, kind: input, shape index: {}]
  %s2 = inlined_call_operand.hbm [shape: f32[1,2048], index: 2, kind: input, shape index: {}]
  %s3 = inlined_call_operand.hbm [shape: bf16[2048,512], index: 3, kind: input, shape index: {}]
  %s4 = inlined_call_operand.hbm [shape: f32[1,512], index: 4, kind: input, shape index: {}]
  %s5 = inlined_call_operand.hbm [shape: bf16[512,256], index: 5, kind: input, shape index: {}]
  %s6 = inlined_call_operand.hbm [shape: f32[1,256], index: 6, kind: input, shape index: {}]
  %s7 = inlined_call_operand.hbm [shape: bf16[256,128], index: 7, kind: input, shape index: {}]
  %s8 = inlined_call_operand.hbm [shape: f32[1,128], index: 8, kind: input, shape index: {}]
  %s9 = inlined_call_operand.hbm [shape: f32[8,128], index: 9, kind: output, shape index: {}]
  %s10 = sld [smem:[#allocation0]]
  $region82: #{tpu_custom_call.1} parent=0
    _
  %s12 = ssub.s32 1, %s10
  %s13 = scalar_select 0, %s12, %s10
  $region1: #{tpu_custom_call.1} parent=0
    #allocation2 [shape = 'u8[4096]{0}', space=vmem, size = 0x1000, scoped, tag = 'input window, operand 0, single buffered']
    #allocation3 [shape = 's32[1]{0}', space=sflag, size = 0x4, scoped, tag = 'scoped memory for tpu_custom_call.1']
    #allocation4 [shape = 's32[1]{0}', space=sflag, size = 0x4, scoped, tag = 'scoped memory for tpu_custom_call.1']
    #allocation5 [shape = 'u8[131072]{0}', space=vmem, size = 0x20000, scoped, tag = 'input window, operand 1, single buffered']
    #allocation6 [shape = 's32[1]{0}', space=sflag, size = 0x4, scoped, tag = 'scoped memory for tpu_custom_call.1']
    #allocation7 [shape = 'u8[8192]{0}', space=vmem, size = 0x2000, scoped, tag = 'input window, operand 2, single buffered']
    #allocation8 [shape = 'u8[2097152]{0}', space=vmem, size = 0x200000, scoped, tag = 'input window, operand 3, single buffered']
    #allocation9 [shape = 's32[1]{0}', space=sflag, size = 0x4, scoped, tag = 'scoped memory for tpu_custom_call.1']
    #allocation10 [shape = 'u8[2048]{0}', space=vmem, size = 0x800, scoped, tag = 'input window, operand 4, single buffered']
    #allocation11 [shape = 'u8[262144]{0}', space=vmem, size = 0x40000, scoped, tag = 'input window, operand 5, single buffered']
    #allocation12 [shape = 's32[1]{0}', space=sflag, size = 0x4, scoped, tag = 'scoped memory for tpu_custom_call.1']
    #allocation13 [shape = 'u8[1024]{0}', space=vmem, size = 0x400, scoped, tag = 'input window, operand 6, single buffered']
    #allocation14 [shape = 'u8[65536]{0}', space=vmem, size = 0x10000, scoped, tag = 'input window, operand 7, single buffered']
    #allocation15 [shape = 's32[1]{0}', space=sflag, size = 0x4, scoped, tag = 'scoped memory for tpu_custom_call.1']
    #allocation16 [shape = 'u8[512]{0}', space=vmem, size = 0x400, scoped, tag = 'input window, operand 8, single buffered']
    #allocation17 [shape = 'u8[4096]{0}', space=vmem, size = 0x1000, scoped, tag = 'output window, operand 0, single buffered']
    %14 = vsyncpa [#allocation3], 0
    %15 = vsyncpa [#allocation6], 0
    %16 = vsyncpa [#allocation9], 0
    %17 = vsyncpa [#allocation12], 0
    %18 = vsyncpa [#allocation15], 0
    %19 = vsyncpa [#allocation4], 0
    // Predicated region
    $region2: #{tpu_custom_call.1} parent=1 // pred_check
      _
    $region3: #{tpu_custom_call.1} parent=1 // pred_check_branch
      %21 = sbr.rel (0) target = $region5
    $region4: #{tpu_custom_call.1} parent=1 // pred_region
      %23 = vsyncadd [#allocation3], 0
      %s25 = sshll.u32 %s0, 4
      %s26 = int_to_ptr.hbm [resolvable:$true] %s25
      %s27 = sshll.u32 [#allocation2], 4
      %s28 = int_to_ptr.vmem [resolvable:$true] %s27
      %30 = dma.hbm_to_vmem [thread:$0]  %s26, 128, %s28, [#allocation3]
    $region5: #{tpu_custom_call.1} parent=1 // pred_fallthru
      _
    // Predicated region
    $region6: #{tpu_custom_call.1} parent=1 // pred_check
      _
    $region7: #{tpu_custom_call.1} parent=1 // pred_check_branch
      %32 = sbr.rel (0) target = $region9
    $region8: #{tpu_custom_call.1} parent=1 // pred_region
      %34 = vsyncadd [#allocation6], 0
      %s35 = sshll.u32 %s1, 4
      %s36 = int_to_ptr.hbm [resolvable:$true] %s35
      %s37 = sshll.u32 [#allocation5], 4
      %s38 = int_to_ptr.vmem [resolvable:$true] %s37
      %43 = dma.hbm_to_vmem [thread:$0]  %s36, 4096, %s38, [#allocation6], 1024, 1024, 64
    $region9: #{tpu_custom_call.1} parent=1 // pred_fallthru
      _
    // Predicated region
    $region10: #{tpu_custom_call.1} parent=1 // pred_check
      _
    $region11: #{tpu_custom_call.1} parent=1 // pred_check_branch
      %45 = sbr.rel (0) target = $region13
    $region12: #{tpu_custom_call.1} parent=1 // pred_region
      %47 = vsyncadd [#allocation6], 0
      %s49 = sshll.u32 %s2, 4
      %s50 = int_to_ptr.hbm [resolvable:$true] %s49
      %s51 = sshll.u32 [#allocation7], 4
      %s52 = int_to_ptr.vmem [resolvable:$true] %s51
      %54 = dma.hbm_to_vmem [thread:$0]  %s50, 256, %s52, [#allocation6]
    $region13: #{tpu_custom_call.1} parent=1 // pred_fallthru
      _
    // Predicated region
    $region14: #{tpu_custom_call.1} parent=1 // pred_check
      _
    $region15: #{tpu_custom_call.1} parent=1 // pred_check_branch
      %56 = sbr.rel (0) target = $region17
    $region16: #{tpu_custom_call.1} parent=1 // pred_region
      %58 = vsyncadd [#allocation9], 0
      %s59 = sshll.u32 %s3, 4
      %s60 = int_to_ptr.hbm [resolvable:$true] %s59
      %s61 = sshll.u32 [#allocation8], 4
      %s62 = int_to_ptr.vmem [resolvable:$true] %s61
      %67 = dma.hbm_to_vmem [thread:$0]  %s60, 65536, %s62, [#allocation9], 256, 256, 16
    $region17: #{tpu_custom_call.1} parent=1 // pred_fallthru
      _
    // Predicated region
    $region18: #{tpu_custom_call.1} parent=1 // pred_check
      _
    $region19: #{tpu_custom_call.1} parent=1 // pred_check_branch
      %69 = sbr.rel (0) target = $region21
    $region20: #{tpu_custom_call.1} parent=1 // pred_region
      %71 = vsyncadd [#allocation9], 0
      %s73 = sshll.u32 %s4, 4
      %s74 = int_to_ptr.hbm [resolvable:$true] %s73
      %s75 = sshll.u32 [#allocation10], 4
      %s76 = int_to_ptr.vmem [resolvable:$true] %s75
      %78 = dma.hbm_to_vmem [thread:$0]  %s74, 64, %s76, [#allocation9]
    $region21: #{tpu_custom_call.1} parent=1 // pred_fallthru
      _
    // Predicated region
    $region22: #{tpu_custom_call.1} parent=1 // pred_check
      _
    $region23: #{tpu_custom_call.1} parent=1 // pred_check_branch
      %80 = sbr.rel (0) target = $region25
    $region24: #{tpu_custom_call.1} parent=1 // pred_region
      %82 = vsyncadd [#allocation12], 0
      %s83 = sshll.u32 %s5, 4
      %s84 = int_to_ptr.hbm [resolvable:$true] %s83
      %s85 = sshll.u32 [#allocation11], 4
      %s86 = int_to_ptr.vmem [resolvable:$true] %s85
      %91 = dma.hbm_to_vmem [thread:$0]  %s84, 8192, %s86, [#allocation12], 128, 128, 8
    $region25: #{tpu_custom_call.1} parent=1 // pred_fallthru
      _
    // Predicated region
    $region26: #{tpu_custom_call.1} parent=1 // pred_check
      _
    $region27: #{tpu_custom_call.1} parent=1 // pred_check_branch
      %93 = sbr.rel (0) target = $region29
    $region28: #{tpu_custom_call.1} parent=1 // pred_region
      %95 = vsyncadd [#allocation12], 0
      %s97 = sshll.u32 %s6, 4
      %s98 = int_to_ptr.hbm [resolvable:$true] %s97
      %s99 = sshll.u32 [#allocation13], 4
      %s100 = int_to_ptr.vmem [resolvable:$true] %s99
      %102 = dma.hbm_to_vmem [thread:$0]  %s98, 32, %s100, [#allocation12]
    $region29: #{tpu_custom_call.1} parent=1 // pred_fallthru
      _
    // Predicated region
    $region30: #{tpu_custom_call.1} parent=1 // pred_check
      _
    $region31: #{tpu_custom_call.1} parent=1 // pred_check_branch
      %104 = sbr.rel (0) target = $region33
    $region32: #{tpu_custom_call.1} parent=1 // pred_region
      %106 = vsyncadd [#allocation15], 0
      %s107 = sshll.u32 %s7, 4
      %s108 = int_to_ptr.hbm [resolvable:$true] %s107
      %s109 = sshll.u32 [#allocation14], 4
      %s110 = int_to_ptr.vmem [resolvable:$true] %s109
      %115 = dma.hbm_to_vmem [thread:$0]  %s108, 2048, %s110, [#allocation15], 64, 64, 4
    $region33: #{tpu_custom_call.1} parent=1 // pred_fallthru
      _
    // Predicated region
    $region34: #{tpu_custom_call.1} parent=1 // pred_check
      _
    $region35: #{tpu_custom_call.1} parent=1 // pred_check_branch
      %117 = sbr.rel (0) target = $region37
    $region36: #{tpu_custom_call.1} parent=1 // pred_region
      %119 = vsyncadd [#allocation15], 0
      %s121 = sshll.u32 %s8, 4
      %s122 = int_to_ptr.hbm [resolvable:$true] %s121
      %s123 = sshll.u32 [#allocation16], 4
      %s124 = int_to_ptr.vmem [resolvable:$true] %s123
      %126 = dma.hbm_to_vmem [thread:$0]  %s122, 16, %s124, [#allocation15]
    $region37: #{tpu_custom_call.1} parent=1 // pred_fallthru
      _
    // Predicated region
    $region38: #{tpu_custom_call.1} parent=1 // pred_check
      _
    $region39: #{tpu_custom_call.1} parent=1 // pred_check_branch
      %128 = sbr.rel (0) target = $region41
    $region40: #{tpu_custom_call.1} parent=1 // pred_region
      %130 = dma.done [#allocation3], 128
    $region41: #{tpu_custom_call.1} parent=1 // pred_fallthru
      _
    // Predicated region
    $region42: #{tpu_custom_call.1} parent=1 // pred_check
      _
    $region43: #{tpu_custom_call.1} parent=1 // pred_check_branch
      %132 = sbr.rel (0) target = $region45
    $region44: #{tpu_custom_call.1} parent=1 // pred_region
      %134 = dma.done [#allocation6], 4096
    $region45: #{tpu_custom_call.1} parent=1 // pred_fallthru
      _
    // Predicated region
    $region46: #{tpu_custom_call.1} parent=1 // pred_check
      _
    $region47: #{tpu_custom_call.1} parent=1 // pred_check_branch
      %136 = sbr.rel (0) target = $region49
    $region48: #{tpu_custom_call.1} parent=1 // pred_region
      %138 = dma.done [#allocation6], 256
    $region49: #{tpu_custom_call.1} parent=1 // pred_fallthru
      _
    // Predicated region
    $region50: #{tpu_custom_call.1} parent=1 // pred_check
      _
    $region51: #{tpu_custom_call.1} parent=1 // pred_check_branch
      %140 = sbr.rel (0) target = $region53
    $region52: #{tpu_custom_call.1} parent=1 // pred_region
      %142 = dma.done [#allocation9], 65536
    $region53: #{tpu_custom_call.1} parent=1 // pred_fallthru
      _
    // Predicated region
    $region54: #{tpu_custom_call.1} parent=1 // pred_check
      _
    $region55: #{tpu_custom_call.1} parent=1 // pred_check_branch
      %144 = sbr.rel (0) target = $region57
    $region56: #{tpu_custom_call.1} parent=1 // pred_region
      %146 = dma.done [#allocation9], 64
    $region57: #{tpu_custom_call.1} parent=1 // pred_fallthru
      _
    // Predicated region
    $region58: #{tpu_custom_call.1} parent=1 // pred_check
      _
    $region59: #{tpu_custom_call.1} parent=1 // pred_check_branch
      %148 = sbr.rel (0) target = $region61
    $region60: #{tpu_custom_call.1} parent=1 // pred_region
      %150 = dma.done [#allocation12], 8192
    $region61: #{tpu_custom_call.1} parent=1 // pred_fallthru
      _
    // Predicated region
    $region62: #{tpu_custom_call.1} parent=1 // pred_check
      _
    $region63: #{tpu_custom_call.1} parent=1 // pred_check_branch
      %152 = sbr.rel (0) target = $region65
    $region64: #{tpu_custom_call.1} parent=1 // pred_region
      %154 = dma.done [#allocation12], 32
    $region65: #{tpu_custom_call.1} parent=1 // pred_fallthru
      _
    // Predicated region
    $region66: #{tpu_custom_call.1} parent=1 // pred_check
      _
    $region67: #{tpu_custom_call.1} parent=1 // pred_check_branch
      %156 = sbr.rel (0) target = $region69
    $region68: #{tpu_custom_call.1} parent=1 // pred_region
      %158 = dma.done [#allocation15], 2048
    $region69: #{tpu_custom_call.1} parent=1 // pred_fallthru
      _
    // Predicated region
    $region70: #{tpu_custom_call.1} parent=1 // pred_check
      _
    $region71: #{tpu_custom_call.1} parent=1 // pred_check_branch
      %160 = sbr.rel (0) target = $region73
    $region72: #{tpu_custom_call.1} parent=1 // pred_region
      %162 = dma.done [#allocation15], 16
    $region73: #{tpu_custom_call.1} parent=1 // pred_fallthru
      _
    %v164 = vld [vmem:[#allocation2] sm:$0xff]
    %v165 = vpack.c.bf16 %v164, %v164
    %v166 = vld [vmem:[#allocation5] sm:$0xff]
    %v167 = vld [vmem:[#allocation5 + $0x8] sm:$0xff]
    %v168 = vld [vmem:[#allocation5 + $0x10] sm:$0xff]
    %v169 = vld [vmem:[#allocation5 + $0x18] sm:$0xff]
    %v170 = vld [vmem:[#allocation5 + $0x20] sm:$0xff]
    %v171 = vld [vmem:[#allocation5 + $0x28] sm:$0xff]
    %v172 = vld [vmem:[#allocation5 + $0x30] sm:$0xff]
    %v173 = vld [vmem:[#allocation5 + $0x38] sm:$0xff]
    %v174 = vld [vmem:[#allocation5 + $0x40] sm:$0xff]
    %v175 = vld [vmem:[#allocation5 + $0x48] sm:$0xff]
    %v176 = vld [vmem:[#allocation5 + $0x50] sm:$0xff]
    %v177 = vld [vmem:[#allocation5 + $0x58] sm:$0xff]
    %v178 = vld [vmem:[#allocation5 + $0x60] sm:$0xff]
    %v179 = vld [vmem:[#allocation5 + $0x68] sm:$0xff]
    %v180 = vld [vmem:[#allocation5 + $0x70] sm:$0xff]
    %v181 = vld [vmem:[#allocation5 + $0x78] sm:$0xff]
    %v182 = vld [vmem:[#allocation5 + $0x80] sm:$0xff]
    %v183 = vld [vmem:[#allocation5 + $0x88] sm:$0xff]
    %v184 = vld [vmem:[#allocation5 + $0x90] sm:$0xff]
    %v185 = vld [vmem:[#allocation5 + $0x98] sm:$0xff]
    %v186 = vld [vmem:[#allocation5 + $0xa0] sm:$0xff]
    %v187 = vld [vmem:[#allocation5 + $0xa8] sm:$0xff]
    %v188 = vld [vmem:[#allocation5 + $0xb0] sm:$0xff]
    %v189 = vld [vmem:[#allocation5 + $0xb8] sm:$0xff]
    %v190 = vld [vmem:[#allocation5 + $0xc0] sm:$0xff]
    %v191 = vld [vmem:[#allocation5 + $0xc8] sm:$0xff]
    %v192 = vld [vmem:[#allocation5 + $0xd0] sm:$0xff]
    %v193 = vld [vmem:[#allocation5 + $0xd8] sm:$0xff]
    %v194 = vld [vmem:[#allocation5 + $0xe0] sm:$0xff]
    %v195 = vld [vmem:[#allocation5 + $0xe8] sm:$0xff]
    %v196 = vld [vmem:[#allocation5 + $0xf0] sm:$0xff]
    %v197 = vld [vmem:[#allocation5 + $0xf8] sm:$0xff]
    %v198 = vld [vmem:[#allocation7] sm:$0xff]
    %v199 = vld [vmem:[#allocation7 + $0x8] sm:$0xff]
    %v202 = vperm.slane %v198, 0
    %v203 = vperm.slane %v198, 1
    %v204 = vperm.slane %v198, 2
    %v205 = vperm.slane %v198, 3
    %v206 = vperm.slane %v198, 4
    %v207 = vperm.slane %v198, 5
    %v208 = vperm.slane %v198, 6
    %v209 = vperm.slane %v198, 7
    %v210 = vperm.slane %v199, 0
    %v211 = vperm.slane %v199, 1
    %v212 = vperm.slane %v199, 2
    %v213 = vperm.slane %v199, 3
    %v214 = vperm.slane %v199, 4
    %v215 = vperm.slane %v199, 5
    %v216 = vperm.slane %v199, 6
    %v217 = vperm.slane %v199, 7
    %v266 = vunpack.c.l.b16 %v166
    %v267 = vunpack.c.h.b16 %v166
    %v268 = vunpack.c.l.b16 %v167
    %v269 = vunpack.c.h.b16 %v167
    %v270 = vunpack.c.l.b16 %v168
    %v271 = vunpack.c.h.b16 %v168
    %v272 = vunpack.c.l.b16 %v169
    %v273 = vunpack.c.h.b16 %v169
    %v274 = vunpack.c.l.b16 %v170
    %v275 = vunpack.c.h.b16 %v170
    %v276 = vunpack.c.l.b16 %v171
    %v277 = vunpack.c.h.b16 %v171
    %v278 = vunpack.c.l.b16 %v172
    %v279 = vunpack.c.h.b16 %v172
    %v280 = vunpack.c.l.b16 %v173
    %v281 = vunpack.c.h.b16 %v173
    %v282 = vunpack.c.l.b16 %v174
    %v283 = vunpack.c.h.b16 %v174
    %v284 = vunpack.c.l.b16 %v175
    %v285 = vunpack.c.h.b16 %v175
    %v286 = vunpack.c.l.b16 %v176
    %v287 = vunpack.c.h.b16 %v176
    %v288 = vunpack.c.l.b16 %v177
    %v289 = vunpack.c.h.b16 %v177
    %v290 = vunpack.c.l.b16 %v178
    %v291 = vunpack.c.h.b16 %v178
    %v292 = vunpack.c.l.b16 %v179
    %v293 = vunpack.c.h.b16 %v179
    %v294 = vunpack.c.l.b16 %v180
    %v295 = vunpack.c.h.b16 %v180
    %v296 = vunpack.c.l.b16 %v181
    %v297 = vunpack.c.h.b16 %v181
    %v298 = vunpack.c.l.b16 %v182
    %v299 = vunpack.c.h.b16 %v182
    %v300 = vunpack.c.l.b16 %v183
    %v301 = vunpack.c.h.b16 %v183
    %v302 = vunpack.c.l.b16 %v184
    %v303 = vunpack.c.h.b16 %v184
    %v304 = vunpack.c.l.b16 %v185
    %v305 = vunpack.c.h.b16 %v185
    %v306 = vunpack.c.l.b16 %v186
    %v307 = vunpack.c.h.b16 %v186
    %v308 = vunpack.c.l.b16 %v187
    %v309 = vunpack.c.h.b16 %v187
    %v310 = vunpack.c.l.b16 %v188
    %v311 = vunpack.c.h.b16 %v188
    %v312 = vunpack.c.l.b16 %v189
    %v313 = vunpack.c.h.b16 %v189
    %v314 = vunpack.c.l.b16 %v190
    %v315 = vunpack.c.h.b16 %v190
    %v316 = vunpack.c.l.b16 %v191
    %v317 = vunpack.c.h.b16 %v191
    %v318 = vunpack.c.l.b16 %v192
    %v319 = vunpack.c.h.b16 %v192
    %v320 = vunpack.c.l.b16 %v193
    %v321 = vunpack.c.h.b16 %v193
    %v322 = vunpack.c.l.b16 %v194
    %v323 = vunpack.c.h.b16 %v194
    %v324 = vunpack.c.l.b16 %v195
    %v325 = vunpack.c.h.b16 %v195
    %v326 = vunpack.c.l.b16 %v196
    %v327 = vunpack.c.h.b16 %v196
    %v328 = vunpack.c.l.b16 %v197
    %v329 = vunpack.c.h.b16 %v197
    %v330 = vpack.c.b16 %v282, %v266
    %v331 = vpack.c.b16 %v283, %v267
    %v332 = vpack.c.b16 %v284, %v268
    %v333 = vpack.c.b16 %v285, %v269
    %v334 = vpack.c.b16 %v286, %v270
    %v335 = vpack.c.b16 %v287, %v271
    %v336 = vpack.c.b16 %v288, %v272
    %v337 = vpack.c.b16 %v289, %v273
    %v338 = vpack.c.b16 %v290, %v274
    %v339 = vpack.c.b16 %v291, %v275
    %v340 = vpack.c.b16 %v292, %v276
    %v341 = vpack.c.b16 %v293, %v277
    %v342 = vpack.c.b16 %v294, %v278
    %v343 = vpack.c.b16 %v295, %v279
    %v344 = vpack.c.b16 %v296, %v280
    %v345 = vpack.c.b16 %v297, %v281
    %v346 = vpack.c.b16 %v314, %v298
    %v347 = vpack.c.b16 %v315, %v299
    %v348 = vpack.c.b16 %v316, %v300
    %v349 = vpack.c.b16 %v317, %v301
    %v350 = vpack.c.b16 %v318, %v302
    %v351 = vpack.c.b16 %v319, %v303
    %v352 = vpack.c.b16 %v320, %v304
    %v353 = vpack.c.b16 %v321, %v305
    %v354 = vpack.c.b16 %v322, %v306
    %v355 = vpack.c.b16 %v323, %v307
    %v356 = vpack.c.b16 %v324, %v308
    %v357 = vpack.c.b16 %v325, %v309
    %v358 = vpack.c.b16 %v326, %v310
    %v359 = vpack.c.b16 %v327, %v311
    %v360 = vpack.c.b16 %v328, %v312
    %v361 = vpack.c.b16 %v329, %v313
    %vm394 = vcmask 261120
    %v396 = vsel %vm394, %v165, 0
    %398 = vmatpush.bf16.msra.mxu0 0
    %399 = vmatpush.bf16.msra.mxu0 0
    %400 = vmatpush.bf16.msra.mxu0 0
    %401 = vmatpush.bf16.msra.mxu0 0
    %402 = vmatpush.bf16.msra.mxu0 0
    %403 = vmatpush.bf16.msra.mxu0 0
    %404 = vmatpush.bf16.msra.mxu0 %v346
    %405 = vmatpush.bf16.msra.mxu0 %v330
    %406 = vmatmul.bf16.gmra.mxu0 %v396
    %v407 = vpop.f32.mrf.mxu0
    %v408 = vadd.f32 %v202, %v407
    %v409 = vpop.f32.mrf.mxu0
    %410 = vdwg.mxu0
    %411 = vmatpush.bf16.msra.mxu0 0
    %412 = vmatpush.bf16.msra.mxu0 0
    %413 = vmatpush.bf16.msra.mxu0 0
    %414 = vmatpush.bf16.msra.mxu0 0
    %415 = vmatpush.bf16.msra.mxu0 0
    %416 = vmatpush.bf16.msra.mxu0 0
    %417 = vmatpush.bf16.msra.mxu0 %v347
    %418 = vmatpush.bf16.msra.mxu0 %v331
    %419 = vmatmul.bf16.gmra.mxu0 %v396
    %v420 = vpop.f32.mrf.mxu0
    %v421 = vadd.f32 %v203, %v420
    %v422 = vpop.f32.mrf.mxu0
    %423 = vdwg.mxu0
    %424 = vmatpush.bf16.msra.mxu0 0
    %425 = vmatpush.bf16.msra.mxu0 0
    %426 = vmatpush.bf16.msra.mxu0 0
    %427 = vmatpush.bf16.msra.mxu0 0
    %428 = vmatpush.bf16.msra.mxu0 0
    %429 = vmatpush.bf16.msra.mxu0 0
    %430 = vmatpush.bf16.msra.mxu0 %v348
    %431 = vmatpush.bf16.msra.mxu0 %v332
    %432 = vmatmul.bf16.gmra.mxu0 %v396
    %v433 = vpop.f32.mrf.mxu0
    %v434 = vadd.f32 %v204, %v433
    %v435 = vpop.f32.mrf.mxu0
    %436 = vdwg.mxu0
    %437 = vmatpush.bf16.msra.mxu0 0
    %438 = vmatpush.bf16.msra.mxu0 0
    %439 = vmatpush.bf16.msra.mxu0 0
    %440 = vmatpush.bf16.msra.mxu0 0
    %441 = vmatpush.bf16.msra.mxu0 0
    %442 = vmatpush.bf16.msra.mxu0 0
    %443 = vmatpush.bf16.msra.mxu0 %v349
    %444 = vmatpush.bf16.msra.mxu0 %v333
    %445 = vmatmul.bf16.gmra.mxu0 %v396
    %v446 = vpop.f32.mrf.mxu0
    %v447 = vadd.f32 %v205, %v446
    %v448 = vpop.f32.mrf.mxu0
    %449 = vdwg.mxu0
    %450 = vmatpush.bf16.msra.mxu0 0
    %451 = vmatpush.bf16.msra.mxu0 0
    %452 = vmatpush.bf16.msra.mxu0 0
    %453 = vmatpush.bf16.msra.mxu0 0
    %454 = vmatpush.bf16.msra.mxu0 0
    %455 = vmatpush.bf16.msra.mxu0 0
    %456 = vmatpush.bf16.msra.mxu0 %v350
    %457 = vmatpush.bf16.msra.mxu0 %v334
    %458 = vmatmul.bf16.gmra.mxu0 %v396
    %v459 = vpop.f32.mrf.mxu0
    %v460 = vadd.f32 %v206, %v459
    %v461 = vpop.f32.mrf.mxu0
    %462 = vdwg.mxu0
    %463 = vmatpush.bf16.msra.mxu0 0
    %464 = vmatpush.bf16.msra.mxu0 0
    %465 = vmatpush.bf16.msra.mxu0 0
    %466 = vmatpush.bf16.msra.mxu0 0
    %467 = vmatpush.bf16.msra.mxu0 0
    %468 = vmatpush.bf16.msra.mxu0 0
    %469 = vmatpush.bf16.msra.mxu0 %v351
    %470 = vmatpush.bf16.msra.mxu0 %v335
    %471 = vmatmul.bf16.gmra.mxu0 %v396
    %v472 = vpop.f32.mrf.mxu0
    %v473 = vadd.f32 %v207, %v472
    %v474 = vpop.f32.mrf.mxu0
    %475 = vdwg.mxu0
    %476 = vmatpush.bf16.msra.mxu0 0
    %477 = vmatpush.bf16.msra.mxu0 0
    %478 = vmatpush.bf16.msra.mxu0 0
    %479 = vmatpush.bf16.msra.mxu0 0
    %480 = vmatpush.bf16.msra.mxu0 0
    %481 = vmatpush.bf16.msra.mxu0 0
    %482 = vmatpush.bf16.msra.mxu0 %v352
    %483 = vmatpush.bf16.msra.mxu0 %v336
    %484 = vmatmul.bf16.gmra.mxu0 %v396
    %v485 = vpop.f32.mrf.mxu0
    %v486 = vadd.f32 %v208, %v485
    %v487 = vpop.f32.mrf.mxu0
    %488 = vdwg.mxu0
    %489 = vmatpush.bf16.msra.mxu0 0
    %490 = vmatpush.bf16.msra.mxu0 0
    %491 = vmatpush.bf16.msra.mxu0 0
    %492 = vmatpush.bf16.msra.mxu0 0
    %493 = vmatpush.bf16.msra.mxu0 0
    %494 = vmatpush.bf16.msra.mxu0 0
    %495 = vmatpush.bf16.msra.mxu0 %v353
    %496 = vmatpush.bf16.msra.mxu0 %v337
    %497 = vmatmul.bf16.gmra.mxu0 %v396
    %v498 = vpop.f32.mrf.mxu0
    %v499 = vadd.f32 %v209, %v498
    %v500 = vpop.f32.mrf.mxu0
    %501 = vdwg.mxu0
    %502 = vmatpush.bf16.msra.mxu0 0
    %503 = vmatpush.bf16.msra.mxu0 0
    %504 = vmatpush.bf16.msra.mxu0 0
    %505 = vmatpush.bf16.msra.mxu0 0
    %506 = vmatpush.bf16.msra.mxu0 0
    %507 = vmatpush.bf16.msra.mxu0 0
    %508 = vmatpush.bf16.msra.mxu0 %v354
    %509 = vmatpush.bf16.msra.mxu0 %v338
    %510 = vmatmul.bf16.gmra.mxu0 %v396
    %v511 = vpop.f32.mrf.mxu0
    %v512 = vadd.f32 %v210, %v511
    %v513 = vpop.f32.mrf.mxu0
    %514 = vdwg.mxu0
    %515 = vmatpush.bf16.msra.mxu0 0
    %516 = vmatpush.bf16.msra.mxu0 0
    %517 = vmatpush.bf16.msra.mxu0 0
    %518 = vmatpush.bf16.msra.mxu0 0
    %519 = vmatpush.bf16.msra.mxu0 0
    %520 = vmatpush.bf16.msra.mxu0 0
    %521 = vmatpush.bf16.msra.mxu0 %v355
    %522 = vmatpush.bf16.msra.mxu0 %v339
    %523 = vmatmul.bf16.gmra.mxu0 %v396
    %v524 = vpop.f32.mrf.mxu0
    %v525 = vadd.f32 %v211, %v524
    %v526 = vpop.f32.mrf.mxu0
    %527 = vdwg.mxu0
    %528 = vmatpush.bf16.msra.mxu0 0
    %529 = vmatpush.bf16.msra.mxu0 0
    %530 = vmatpush.bf16.msra.mxu0 0
    %531 = vmatpush.bf16.msra.mxu0 0
    %532 = vmatpush.bf16.msra.mxu0 0
    %533 = vmatpush.bf16.msra.mxu0 0
    %534 = vmatpush.bf16.msra.mxu0 %v356
    %535 = vmatpush.bf16.msra.mxu0 %v340
    %536 = vmatmul.bf16.gmra.mxu0 %v396
    %v537 = vpop.f32.mrf.mxu0
    %v538 = vadd.f32 %v212, %v537
    %v539 = vpop.f32.mrf.mxu0
    %540 = vdwg.mxu0
    %541 = vmatpush.bf16.msra.mxu0 0
    %542 = vmatpush.bf16.msra.mxu0 0
    %543 = vmatpush.bf16.msra.mxu0 0
    %544 = vmatpush.bf16.msra.mxu0 0
    %545 = vmatpush.bf16.msra.mxu0 0
    %546 = vmatpush.bf16.msra.mxu0 0
    %547 = vmatpush.bf16.msra.mxu0 %v357
    %548 = vmatpush.bf16.msra.mxu0 %v341
    %549 = vmatmul.bf16.gmra.mxu0 %v396
    %v550 = vpop.f32.mrf.mxu0
    %v551 = vadd.f32 %v213, %v550
    %v552 = vpop.f32.mrf.mxu0
    %553 = vdwg.mxu0
    %554 = vmatpush.bf16.msra.mxu0 0
    %555 = vmatpush.bf16.msra.mxu0 0
    %556 = vmatpush.bf16.msra.mxu0 0
    %557 = vmatpush.bf16.msra.mxu0 0
    %558 = vmatpush.bf16.msra.mxu0 0
    %559 = vmatpush.bf16.msra.mxu0 0
    %560 = vmatpush.bf16.msra.mxu0 %v358
    %561 = vmatpush.bf16.msra.mxu0 %v342
    %562 = vmatmul.bf16.gmra.mxu0 %v396
    %v563 = vpop.f32.mrf.mxu0
    %v564 = vadd.f32 %v214, %v563
    %v565 = vpop.f32.mrf.mxu0
    %566 = vdwg.mxu0
    %567 = vmatpush.bf16.msra.mxu0 0
    %568 = vmatpush.bf16.msra.mxu0 0
    %569 = vmatpush.bf16.msra.mxu0 0
    %570 = vmatpush.bf16.msra.mxu0 0
    %571 = vmatpush.bf16.msra.mxu0 0
    %572 = vmatpush.bf16.msra.mxu0 0
    %573 = vmatpush.bf16.msra.mxu0 %v359
    %574 = vmatpush.bf16.msra.mxu0 %v343
    %575 = vmatmul.bf16.gmra.mxu0 %v396
    %v576 = vpop.f32.mrf.mxu0
    %v577 = vadd.f32 %v215, %v576
    %v578 = vpop.f32.mrf.mxu0
    %579 = vdwg.mxu0
    %580 = vmatpush.bf16.msra.mxu0 0
    %581 = vmatpush.bf16.msra.mxu0 0
    %582 = vmatpush.bf16.msra.mxu0 0
    %583 = vmatpush.bf16.msra.mxu0 0
    %584 = vmatpush.bf16.msra.mxu0 0
    %585 = vmatpush.bf16.msra.mxu0 0
    %586 = vmatpush.bf16.msra.mxu0 %v360
    %587 = vmatpush.bf16.msra.mxu0 %v344
    %588 = vmatmul.bf16.gmra.mxu0 %v396
    %v589 = vpop.f32.mrf.mxu0
    %v590 = vadd.f32 %v216, %v589
    %v591 = vpop.f32.mrf.mxu0
    %592 = vdwg.mxu0
    %593 = vmatpush.bf16.msra.mxu0 0
    %594 = vmatpush.bf16.msra.mxu0 0
    %595 = vmatpush.bf16.msra.mxu0 0
    %596 = vmatpush.bf16.msra.mxu0 0
    %597 = vmatpush.bf16.msra.mxu0 0
    %598 = vmatpush.bf16.msra.mxu0 0
    %599 = vmatpush.bf16.msra.mxu0 %v361
    %600 = vmatpush.bf16.msra.mxu0 %v345
    %601 = vmatmul.bf16.gmra.mxu0 %v396
    %v602 = vpop.f32.mrf.mxu0
    %v603 = vadd.f32 %v217, %v602
    %v604 = vpop.f32.mrf.mxu0
    %605 = vdwg.mxu0
    %v606 = vmax.f32 %v408, 0.0
    %v607 = vmax.f32 %v421, 0.0
    %v608 = vmax.f32 %v434, 0.0
    %v609 = vmax.f32 %v447, 0.0
    %v610 = vmax.f32 %v460, 0.0
    %v611 = vmax.f32 %v473, 0.0
    %v612 = vmax.f32 %v486, 0.0
    %v613 = vmax.f32 %v499, 0.0
    %v614 = vmax.f32 %v512, 0.0
    %v615 = vmax.f32 %v525, 0.0
    %v616 = vmax.f32 %v538, 0.0
    %v617 = vmax.f32 %v551, 0.0
    %v618 = vmax.f32 %v564, 0.0
    %v619 = vmax.f32 %v577, 0.0
    %v620 = vmax.f32 %v590, 0.0
    %v621 = vmax.f32 %v603, 0.0
    %v622 = vpack.c.bf16 %v606, %v606
    %v623 = vpack.c.bf16 %v607, %v607
    %v624 = vpack.c.bf16 %v608, %v608
    %v625 = vpack.c.bf16 %v609, %v609
    %v626 = vpack.c.bf16 %v610, %v610
    %v627 = vpack.c.bf16 %v611, %v611
    %v628 = vpack.c.bf16 %v612, %v612
    %v629 = vpack.c.bf16 %v613, %v613
    %v630 = vpack.c.bf16 %v614, %v614
    %v631 = vpack.c.bf16 %v615, %v615
    %v632 = vpack.c.bf16 %v616, %v616
    %v633 = vpack.c.bf16 %v617, %v617
    %v634 = vpack.c.bf16 %v618, %v618
    %v635 = vpack.c.bf16 %v619, %v619
    %v636 = vpack.c.bf16 %v620, %v620
    %v637 = vpack.c.bf16 %v621, %v621
    %v638 = vld [vmem:[#allocation8] sm:$0xff]
    %v639 = vld [vmem:[#allocation8 + $0x8] sm:$0xff]
    %v640 = vld [vmem:[#allocation8 + $0x10] sm:$0xff]
    %v641 = vld [vmem:[#allocation8 + $0x18] sm:$0xff]
    %v642 = vld [vmem:[#allocation8 + $0x20] sm:$0xff]
    %v643 = vld [vmem:[#allocation8 + $0x28] sm:$0xff]
    %v644 = vld [vmem:[#allocation8 + $0x30] sm:$0xff]
    %v645 = vld [vmem:[#allocation8 + $0x38] sm:$0xff]
    %v646 = vld [vmem:[#allocation8 + $0x40] sm:$0xff]
    %v647 = vld [vmem:[#allocation8 + $0x48] sm:$0xff]
    %v648 = vld [vmem:[#allocation8 + $0x50] sm:$0xff]
    %v649 = vld [vmem:[#allocation8 + $0x58] sm:$0xff]
    %v650 = vld [vmem:[#allocation8 + $0x60] sm:$0xff]
    %v651 = vld [vmem:[#allocation8 + $0x68] sm:$0xff]
    %v652 = vld [vmem:[#allocation8 + $0x70] sm:$0xff]
    %v653 = vld [vmem:[#allocation8 + $0x78] sm:$0xff]
    %v654 = vld [vmem:[#allocation8 + $0x80] sm:$0xff]
    %v655 = vld [vmem:[#allocation8 + $0x88] sm:$0xff]
    %v656 = vld [vmem:[#allocation8 + $0x90] sm:$0xff]
    %v657 = vld [vmem:[#allocation8 + $0x98] sm:$0xff]
    %v658 = vld [vmem:[#allocation8 + $0xa0] sm:$0xff]
    %v659 = vld [vmem:[#allocation8 + $0xa8] sm:$0xff]
    %v660 = vld [vmem:[#allocation8 + $0xb0] sm:$0xff]
    %v661 = vld [vmem:[#allocation8 + $0xb8] sm:$0xff]
    %v662 = vld [vmem:[#allocation8 + $0xc0] sm:$0xff]
    %v663 = vld [vmem:[#allocation8 + $0xc8] sm:$0xff]
    %v664 = vld [vmem:[#allocation8 + $0xd0] sm:$0xff]
    %v665 = vld [vmem:[#allocation8 + $0xd8] sm:$0xff]
    %v666 = vld [vmem:[#allocation8 + $0xe0] sm:$0xff]
    %v667 = vld [vmem:[#allocation8 + $0xe8] sm:$0xff]
    %v668 = vld [vmem:[#allocation8 + $0xf0] sm:$0xff]
    %v669 = vld [vmem:[#allocation8 + $0xf8] sm:$0xff]
    %v670 = vld [vmem:[#allocation8 + $0x100] sm:$0xff]
    %v671 = vld [vmem:[#allocation8 + $0x108] sm:$0xff]
    %v672 = vld [vmem:[#allocation8 + $0x110] sm:$0xff]
    %v673 = vld [vmem:[#allocation8 + $0x118] sm:$0xff]
    %v674 = vld [vmem:[#allocation8 + $0x120] sm:$0xff]
    %v675 = vld [vmem:[#allocation8 + $0x128] sm:$0xff]
    %v676 = vld [vmem:[#allocation8 + $0x130] sm:$0xff]
    %v677 = vld [vmem:[#allocation8 + $0x138] sm:$0xff]
    %v678 = vld [vmem:[#allocation8 + $0x140] sm:$0xff]
    %v679 = vld [vmem:[#allocation8 + $0x148] sm:$0xff]
    %v680 = vld [vmem:[#allocation8 + $0x150] sm:$0xff]
    %v681 = vld [vmem:[#allocation8 + $0x158] sm:$0xff]
    %v682 = vld [vmem:[#allocation8 + $0x160] sm:$0xff]
    %v683 = vld [vmem:[#allocation8 + $0x168] sm:$0xff]
    %v684 = vld [vmem:[#allocation8 + $0x170] sm:$0xff]
    %v685 = vld [vmem:[#allocation8 + $0x178] sm:$0xff]
    %v686 = vld [vmem:[#allocation8 + $0x180] sm:$0xff]
    %v687 = vld [vmem:[#allocation8 + $0x188] sm:$0xff]
    %v688 = vld [vmem:[#allocation8 + $0x190] sm:$0xff]
    %v689 = vld [vmem:[#allocation8 + $0x198] sm:$0xff]
    %v690 = vld [vmem:[#allocation8 + $0x1a0] sm:$0xff]
    %v691 = vld [vmem:[#allocation8 + $0x1a8] sm:$0xff]
    %v692 = vld [vmem:[#allocation8 + $0x1b0] sm:$0xff]
    %v693 = vld [vmem:[#allocation8 + $0x1b8] sm:$0xff]
    %v694 = vld [vmem:[#allocation8 + $0x1c0] sm:$0xff]
    %v695 = vld [vmem:[#allocation8 + $0x1c8] sm:$0xff]
    %v696 = vld [vmem:[#allocation8 + $0x1d0] sm:$0xff]
    %v697 = vld [vmem:[#allocation8 + $0x1d8] sm:$0xff]
    %v698 = vld [vmem:[#allocation8 + $0x1e0] sm:$0xff]
    %v699 = vld [vmem:[#allocation8 + $0x1e8] sm:$0xff]
    %v700 = vld [vmem:[#allocation8 + $0x1f0] sm:$0xff]
    %v701 = vld [vmem:[#allocation8 + $0x1f8] sm:$0xff]
    %v702 = vld [vmem:[#allocation8 + $0x200] sm:$0xff]
    %v703 = vld [vmem:[#allocation8 + $0x208] sm:$0xff]
    %v704 = vld [vmem:[#allocation8 + $0x210] sm:$0xff]
    %v705 = vld [vmem:[#allocation8 + $0x218] sm:$0xff]
    %v706 = vld [vmem:[#allocation8 + $0x220] sm:$0xff]
    %v707 = vld [vmem:[#allocation8 + $0x228] sm:$0xff]
    %v708 = vld [vmem:[#allocation8 + $0x230] sm:$0xff]
    %v709 = vld [vmem:[#allocation8 + $0x238] sm:$0xff]
    %v710 = vld [vmem:[#allocation8 + $0x240] sm:$0xff]
    %v711 = vld [vmem:[#allocation8 + $0x248] sm:$0xff]
    %v712 = vld [vmem:[#allocation8 + $0x250] sm:$0xff]
    %v713 = vld [vmem:[#allocation8 + $0x258] sm:$0xff]
    %v714 = vld [vmem:[#allocation8 + $0x260] sm:$0xff]
    %v715 = vld [vmem:[#allocation8 + $0x268] sm:$0xff]
    %v716 = vld [vmem:[#allocation8 + $0x270] sm:$0xff]
    %v717 = vld [vmem:[#allocation8 + $0x278] sm:$0xff]
    %v718 = vld [vmem:[#allocation8 + $0x280] sm:$0xff]
    %v719 = vld [vmem:[#allocation8 + $0x288] sm:$0xff]
    %v720 = vld [vmem:[#allocation8 + $0x290] sm:$0xff]
    %v721 = vld [vmem:[#allocation8 + $0x298] sm:$0xff]
    %v722 = vld [vmem:[#allocation8 + $0x2a0] sm:$0xff]
    %v723 = vld [vmem:[#allocation8 + $0x2a8] sm:$0xff]
    %v724 = vld [vmem:[#allocation8 + $0x2b0] sm:$0xff]
    %v725 = vld [vmem:[#allocation8 + $0x2b8] sm:$0xff]
    %v726 = vld [vmem:[#allocation8 + $0x2c0] sm:$0xff]
    %v727 = vld [vmem:[#allocation8 + $0x2c8] sm:$0xff]
    %v728 = vld [vmem:[#allocation8 + $0x2d0] sm:$0xff]
    %v729 = vld [vmem:[#allocation8 + $0x2d8] sm:$0xff]
    %v730 = vld [vmem:[#allocation8 + $0x2e0] sm:$0xff]
    %v731 = vld [vmem:[#allocation8 + $0x2e8] sm:$0xff]
    %v732 = vld [vmem:[#allocation8 + $0x2f0] sm:$0xff]
    %v733 = vld [vmem:[#allocation8 + $0x2f8] sm:$0xff]
    %v734 = vld [vmem:[#allocation8 + $0x300] sm:$0xff]
    %v735 = vld [vmem:[#allocation8 + $0x308] sm:$0xff]
    %v736 = vld [vmem:[#allocation8 + $0x310] sm:$0xff]
    %v737 = vld [vmem:[#allocation8 + $0x318] sm:$0xff]
    %v738 = vld [vmem:[#allocation8 + $0x320] sm:$0xff]
    %v739 = vld [vmem:[#allocation8 + $0x328] sm:$0xff]
    %v740 = vld [vmem:[#allocation8 + $0x330] sm:$0xff]
    %v741 = vld [vmem:[#allocation8 + $0x338] sm:$0xff]
    %v742 = vld [vmem:[#allocation8 + $0x340] sm:$0xff]
    %v743 = vld [vmem:[#allocation8 + $0x348] sm:$0xff]
    %v744 = vld [vmem:[#allocation8 + $0x350] sm:$0xff]
    %v745 = vld [vmem:[#allocation8 + $0x358] sm:$0xff]
    %v746 = vld [vmem:[#allocation8 + $0x360] sm:$0xff]
    %v747 = vld [vmem:[#allocation8 + $0x368] sm:$0xff]
    %v748 = vld [vmem:[#allocation8 + $0x370] sm:$0xff]
    %v749 = vld [vmem:[#allocation8 + $0x378] sm:$0xff]
    %v750 = vld [vmem:[#allocation8 + $0x380] sm:$0xff]
    %v751 = vld [vmem:[#allocation8 + $0x388] sm:$0xff]
    %v752 = vld [vmem:[#allocation8 + $0x390] sm:$0xff]
    %v753 = vld [vmem:[#allocation8 + $0x398] sm:$0xff]
    %v754 = vld [vmem:[#allocation8 + $0x3a0] sm:$0xff]
    %v755 = vld [vmem:[#allocation8 + $0x3a8] sm:$0xff]
    %v756 = vld [vmem:[#allocation8 + $0x3b0] sm:$0xff]
    %v757 = vld [vmem:[#allocation8 + $0x3b8] sm:$0xff]
    %v758 = vld [vmem:[#allocation8 + $0x3c0] sm:$0xff]
    %v759 = vld [vmem:[#allocation8 + $0x3c8] sm:$0xff]
    %v760 = vld [vmem:[#allocation8 + $0x3d0] sm:$0xff]
    %v761 = vld [vmem:[#allocation8 + $0x3d8] sm:$0xff]
    %v762 = vld [vmem:[#allocation8 + $0x3e0] sm:$0xff]
    %v763 = vld [vmem:[#allocation8 + $0x3e8] sm:$0xff]
    %v764 = vld [vmem:[#allocation8 + $0x3f0] sm:$0xff]
    %v765 = vld [vmem:[#allocation8 + $0x3f8] sm:$0xff]
    %v766 = vld [vmem:[#allocation8 + $0x400] sm:$0xff]
    %v767 = vld [vmem:[#allocation8 + $0x408] sm:$0xff]
    %v768 = vld [vmem:[#allocation8 + $0x410] sm:$0xff]
    %v769 = vld [vmem:[#allocation8 + $0x418] sm:$0xff]
    %v770 = vld [vmem:[#allocation8 + $0x420] sm:$0xff]
    %v771 = vld [vmem:[#allocation8 + $0x428] sm:$0xff]
    %v772 = vld [vmem:[#allocation8 + $0x430] sm:$0xff]
    %v773 = vld [vmem:[#allocation8 + $0x438] sm:$0xff]
    %v774 = vld [vmem:[#allocation8 + $0x440] sm:$0xff]
    %v775 = vld [vmem:[#allocation8 + $0x448] sm:$0xff]
    %v776 = vld [vmem:[#allocation8 + $0x450] sm:$0xff]
    %v777 = vld [vmem:[#allocation8 + $0x458] sm:$0xff]
    %v778 = vld [vmem:[#allocation8 + $0x460] sm:$0xff]
    %v779 = vld [vmem:[#allocation8 + $0x468] sm:$0xff]
    %v780 = vld [vmem:[#allocation8 + $0x470] sm:$0xff]
    %v781 = vld [vmem:[#allocation8 + $0x478] sm:$0xff]
    %v782 = vld [vmem:[#allocation8 + $0x480] sm:$0xff]
    %v783 = vld [vmem:[#allocation8 + $0x488] sm:$0xff]
    %v784 = vld [vmem:[#allocation8 + $0x490] sm:$0xff]
    %v785 = vld [vmem:[#allocation8 + $0x498] sm:$0xff]
    %v786 = vld [vmem:[#allocation8 + $0x4a0] sm:$0xff]
    %v787 = vld [vmem:[#allocation8 + $0x4a8] sm:$0xff]
    %v788 = vld [vmem:[#allocation8 + $0x4b0] sm:$0xff]
    %v789 = vld [vmem:[#allocation8 + $0x4b8] sm:$0xff]
    %v790 = vld [vmem:[#allocation8 + $0x4c0] sm:$0xff]
    %v791 = vld [vmem:[#allocation8 + $0x4c8] sm:$0xff]
    %v792 = vld [vmem:[#allocation8 + $0x4d0] sm:$0xff]
    %v793 = vld [vmem:[#allocation8 + $0x4d8] sm:$0xff]
    %v794 = vld [vmem:[#allocation8 + $0x4e0] sm:$0xff]
    %v795 = vld [vmem:[#allocation8 + $0x4e8] sm:$0xff]
    %v796 = vld [vmem:[#allocation8 + $0x4f0] sm:$0xff]
    %v797 = vld [vmem:[#allocation8 + $0x4f8] sm:$0xff]
    %v798 = vld [vmem:[#allocation8 + $0x500] sm:$0xff]
    %v799 = vld [vmem:[#allocation8 + $0x508] sm:$0xff]
    %v800 = vld [vmem:[#allocation8 + $0x510] sm:$0xff]
    %v801 = vld [vmem:[#allocation8 + $0x518] sm:$0xff]
    %v802 = vld [vmem:[#allocation8 + $0x520] sm:$0xff]
    %v803 = vld [vmem:[#allocation8 + $0x528] sm:$0xff]
    %v804 = vld [vmem:[#allocation8 + $0x530] sm:$0xff]
    %v805 = vld [vmem:[#allocation8 + $0x538] sm:$0xff]
    %v806 = vld [vmem:[#allocation8 + $0x540] sm:$0xff]
    %v807 = vld [vmem:[#allocation8 + $0x548] sm:$0xff]
    %v808 = vld [vmem:[#allocation8 + $0x550] sm:$0xff]
    %v809 = vld [vmem:[#allocation8 + $0x558] sm:$0xff]
    %v810 = vld [vmem:[#allocation8 + $0x560] sm:$0xff]
    %v811 = vld [vmem:[#allocation8 + $0x568] sm:$0xff]
    %v812 = vld [vmem:[#allocation8 + $0x570] sm:$0xff]
    %v813 = vld [vmem:[#allocation8 + $0x578] sm:$0xff]
    %v814 = vld [vmem:[#allocation8 + $0x580] sm:$0xff]
    %v815 = vld [vmem:[#allocation8 + $0x588] sm:$0xff]
    %v816 = vld [vmem:[#allocation8 + $0x590] sm:$0xff]
    %v817 = vld [vmem:[#allocation8 + $0x598] sm:$0xff]
    %v818 = vld [vmem:[#allocation8 + $0x5a0] sm:$0xff]
    %v819 = vld [vmem:[#allocation8 + $0x5a8] sm:$0xff]
    %v820 = vld [vmem:[#allocation8 + $0x5b0] sm:$0xff]
    %v821 = vld [vmem:[#allocation8 + $0x5b8] sm:$0xff]
    %v822 = vld [vmem:[#allocation8 + $0x5c0] sm:$0xff]
    %v823 = vld [vmem:[#allocation8 + $0x5c8] sm:$0xff]
    %v824 = vld [vmem:[#allocation8 + $0x5d0] sm:$0xff]
    %v825 = vld [vmem:[#allocation8 + $0x5d8] sm:$0xff]
    %v826 = vld [vmem:[#allocation8 + $0x5e0] sm:$0xff]
    %v827 = vld [vmem:[#allocation8 + $0x5e8] sm:$0xff]
    %v828 = vld [vmem:[#allocation8 + $0x5f0] sm:$0xff]
    %v829 = vld [vmem:[#allocation8 + $0x5f8] sm:$0xff]
    %v830 = vld [vmem:[#allocation8 + $0x600] sm:$0xff]
    %v831 = vld [vmem:[#allocation8 + $0x608] sm:$0xff]
    %v832 = vld [vmem:[#allocation8 + $0x610] sm:$0xff]
    %v833 = vld [vmem:[#allocation8 + $0x618] sm:$0xff]
    %v834 = vld [vmem:[#allocation8 + $0x620] sm:$0xff]
    %v835 = vld [vmem:[#allocation8 + $0x628] sm:$0xff]
    %v836 = vld [vmem:[#allocation8 + $0x630] sm:$0xff]
    %v837 = vld [vmem:[#allocation8 + $0x638] sm:$0xff]
    %v838 = vld [vmem:[#allocation8 + $0x640] sm:$0xff]
    %v839 = vld [vmem:[#allocation8 + $0x648] sm:$0xff]
    %v840 = vld [vmem:[#allocation8 + $0x650] sm:$0xff]
    %v841 = vld [vmem:[#allocation8 + $0x658] sm:$0xff]
    %v842 = vld [vmem:[#allocation8 + $0x660] sm:$0xff]
    %v843 = vld [vmem:[#allocation8 + $0x668] sm:$0xff]
    %v844 = vld [vmem:[#allocation8 + $0x670] sm:$0xff]
    %v845 = vld [vmem:[#allocation8 + $0x678] sm:$0xff]
    %v846 = vld [vmem:[#allocation8 + $0x680] sm:$0xff]
    %v847 = vld [vmem:[#allocation8 + $0x688] sm:$0xff]
    %v848 = vld [vmem:[#allocation8 + $0x690] sm:$0xff]
    %v849 = vld [vmem:[#allocation8 + $0x698] sm:$0xff]
    %v850 = vld [vmem:[#allocation8 + $0x6a0] sm:$0xff]
    %v851 = vld [vmem:[#allocation8 + $0x6a8] sm:$0xff]
    %v852 = vld [vmem:[#allocation8 + $0x6b0] sm:$0xff]
    %v853 = vld [vmem:[#allocation8 + $0x6b8] sm:$0xff]
    %v854 = vld [vmem:[#allocation8 + $0x6c0] sm:$0xff]
    %v855 = vld [vmem:[#allocation8 + $0x6c8] sm:$0xff]
    %v856 = vld [vmem:[#allocation8 + $0x6d0] sm:$0xff]
    %v857 = vld [vmem:[#allocation8 + $0x6d8] sm:$0xff]
    %v858 = vld [vmem:[#allocation8 + $0x6e0] sm:$0xff]
    %v859 = vld [vmem:[#allocation8 + $0x6e8] sm:$0xff]
    %v860 = vld [vmem:[#allocation8 + $0x6f0] sm:$0xff]
    %v861 = vld [vmem:[#allocation8 + $0x6f8] sm:$0xff]
    %v862 = vld [vmem:[#allocation8 + $0x700] sm:$0xff]
    %v863 = vld [vmem:[#allocation8 + $0x708] sm:$0xff]
    %v864 = vld [vmem:[#allocation8 + $0x710] sm:$0xff]
    %v865 = vld [vmem:[#allocation8 + $0x718] sm:$0xff]
    %v866 = vld [vmem:[#allocation8 + $0x720] sm:$0xff]
    %v867 = vld [vmem:[#allocation8 + $0x728] sm:$0xff]
    %v868 = vld [vmem:[#allocation8 + $0x730] sm:$0xff]
    %v869 = vld [vmem:[#allocation8 + $0x738] sm:$0xff]
    %v870 = vld [vmem:[#allocation8 + $0x740] sm:$0xff]
    %v871 = vld [vmem:[#allocation8 + $0x748] sm:$0xff]
    %v872 = vld [vmem:[#allocation8 + $0x750] sm:$0xff]
    %v873 = vld [vmem:[#allocation8 + $0x758] sm:$0xff]
    %v874 = vld [vmem:[#allocation8 + $0x760] sm:$0xff]
    %v875 = vld [vmem:[#allocation8 + $0x768] sm:$0xff]
    %v876 = vld [vmem:[#allocation8 + $0x770] sm:$0xff]
    %v877 = vld [vmem:[#allocation8 + $0x778] sm:$0xff]
    %v878 = vld [vmem:[#allocation8 + $0x780] sm:$0xff]
    %v879 = vld [vmem:[#allocation8 + $0x788] sm:$0xff]
    %v880 = vld [vmem:[#allocation8 + $0x790] sm:$0xff]
    %v881 = vld [vmem:[#allocation8 + $0x798] sm:$0xff]
    %v882 = vld [vmem:[#allocation8 + $0x7a0] sm:$0xff]
    %v883 = vld [vmem:[#allocation8 + $0x7a8] sm:$0xff]
    %v884 = vld [vmem:[#allocation8 + $0x7b0] sm:$0xff]
    %v885 = vld [vmem:[#allocation8 + $0x7b8] sm:$0xff]
    %v886 = vld [vmem:[#allocation8 + $0x7c0] sm:$0xff]
    %v887 = vld [vmem:[#allocation8 + $0x7c8] sm:$0xff]
    %v888 = vld [vmem:[#allocation8 + $0x7d0] sm:$0xff]
    %v889 = vld [vmem:[#allocation8 + $0x7d8] sm:$0xff]
    %v890 = vld [vmem:[#allocation8 + $0x7e0] sm:$0xff]
    %v891 = vld [vmem:[#allocation8 + $0x7e8] sm:$0xff]
    %v892 = vld [vmem:[#allocation8 + $0x7f0] sm:$0xff]
    %v893 = vld [vmem:[#allocation8 + $0x7f8] sm:$0xff]
    %v894 = vld [vmem:[#allocation8 + $0x800] sm:$0xff]
    %v895 = vld [vmem:[#allocation8 + $0x808] sm:$0xff]
    %v896 = vld [vmem:[#allocation8 + $0x810] sm:$0xff]
    %v897 = vld [vmem:[#allocation8 + $0x818] sm:$0xff]
    %v898 = vld [vmem:[#allocation8 + $0x820] sm:$0xff]
    %v899 = vld [vmem:[#allocation8 + $0x828] sm:$0xff]
    %v900 = vld [vmem:[#allocation8 + $0x830] sm:$0xff]
    %v901 = vld [vmem:[#allocation8 + $0x838] sm:$0xff]
    %v902 = vld [vmem:[#allocation8 + $0x840] sm:$0xff]
    %v903 = vld [vmem:[#allocation8 + $0x848] sm:$0xff]
    %v904 = vld [vmem:[#allocation8 + $0x850] sm:$0xff]
    %v905 = vld [vmem:[#allocation8 + $0x858] sm:$0xff]
    %v906 = vld [vmem:[#allocation8 + $0x860] sm:$0xff]
    %v907 = vld [vmem:[#allocation8 + $0x868] sm:$0xff]
    %v908 = vld [vmem:[#allocation8 + $0x870] sm:$0xff]
    %v909 = vld [vmem:[#allocation8 + $0x878] sm:$0xff]
    %v910 = vld [vmem:[#allocation8 + $0x880] sm:$0xff]
    %v911 = vld [vmem:[#allocation8 + $0x888] sm:$0xff]
    %v912 = vld [vmem:[#allocation8 + $0x890] sm:$0xff]
    %v913 = vld [vmem:[#allocation8 + $0x898] sm:$0xff]
    %v914 = vld [vmem:[#allocation8 + $0x8a0] sm:$0xff]
    %v915 = vld [vmem:[#allocation8 + $0x8a8] sm:$0xff]
    %v916 = vld [vmem:[#allocation8 + $0x8b0] sm:$0xff]
    %v917 = vld [vmem:[#allocation8 + $0x8b8] sm:$0xff]
    %v918 = vld [vmem:[#allocation8 + $0x8c0] sm:$0xff]
    %v919 = vld [vmem:[#allocation8 + $0x8c8] sm:$0xff]
    %v920 = vld [vmem:[#allocation8 + $0x8d0] sm:$0xff]
    %v921 = vld [vmem:[#allocation8 + $0x8d8] sm:$0xff]
    %v922 = vld [vmem:[#allocation8 + $0x8e0] sm:$0xff]
    %v923 = vld [vmem:[#allocation8 + $0x8e8] sm:$0xff]
    %v924 = vld [vmem:[#allocation8 + $0x8f0] sm:$0xff]
    %v925 = vld [vmem:[#allocation8 + $0x8f8] sm:$0xff]
    %v926 = vld [vmem:[#allocation8 + $0x900] sm:$0xff]
    %v927 = vld [vmem:[#allocation8 + $0x908] sm:$0xff]
    %v928 = vld [vmem:[#allocation8 + $0x910] sm:$0xff]
    %v929 = vld [vmem:[#allocation8 + $0x918] sm:$0xff]
    %v930 = vld [vmem:[#allocation8 + $0x920] sm:$0xff]
    %v931 = vld [vmem:[#allocation8 + $0x928] sm:$0xff]
    %v932 = vld [vmem:[#allocation8 + $0x930] sm:$0xff]
    %v933 = vld [vmem:[#allocation8 + $0x938] sm:$0xff]
    %v934 = vld [vmem:[#allocation8 + $0x940] sm:$0xff]
    %v935 = vld [vmem:[#allocation8 + $0x948] sm:$0xff]
    %v936 = vld [vmem:[#allocation8 + $0x950] sm:$0xff]
    %v937 = vld [vmem:[#allocation8 + $0x958] sm:$0xff]
    %v938 = vld [vmem:[#allocation8 + $0x960] sm:$0xff]
    %v939 = vld [vmem:[#allocation8 + $0x968] sm:$0xff]
    %v940 = vld [vmem:[#allocation8 + $0x970] sm:$0xff]
    %v941 = vld [vmem:[#allocation8 + $0x978] sm:$0xff]
    %v942 = vld [vmem:[#allocation8 + $0x980] sm:$0xff]
    %v943 = vld [vmem:[#allocation8 + $0x988] sm:$0xff]
    %v944 = vld [vmem:[#allocation8 + $0x990] sm:$0xff]
    %v945 = vld [vmem:[#allocation8 + $0x998] sm:$0xff]
    %v946 = vld [vmem:[#allocation8 + $0x9a0] sm:$0xff]
    %v947 = vld [vmem:[#allocation8 + $0x9a8] sm:$0xff]
    %v948 = vld [vmem:[#allocation8 + $0x9b0] sm:$0xff]
    %v949 = vld [vmem:[#allocation8 + $0x9b8] sm:$0xff]
    %v950 = vld [vmem:[#allocation8 + $0x9c0] sm:$0xff]
    %v951 = vld [vmem:[#allocation8 + $0x9c8] sm:$0xff]
    %v952 = vld [vmem:[#allocation8 + $0x9d0] sm:$0xff]
    %v953 = vld [vmem:[#allocation8 + $0x9d8] sm:$0xff]
    %v954 = vld [vmem:[#allocation8 + $0x9e0] sm:$0xff]
    %v955 = vld [vmem:[#allocation8 + $0x9e8] sm:$0xff]
    %v956 = vld [vmem:[#allocation8 + $0x9f0] sm:$0xff]
    %v957 = vld [vmem:[#allocation8 + $0x9f8] sm:$0xff]
    %v958 = vld [vmem:[#allocation8 + $0xa00] sm:$0xff]
    %v959 = vld [vmem:[#allocation8 + $0xa08] sm:$0xff]
    %v960 = vld [vmem:[#allocation8 + $0xa10] sm:$0xff]
    %v961 = vld [vmem:[#allocation8 + $0xa18] sm:$0xff]
    %v962 = vld [vmem:[#allocation8 + $0xa20] sm:$0xff]
    %v963 = vld [vmem:[#allocation8 + $0xa28] sm:$0xff]
    %v964 = vld [vmem:[#allocation8 + $0xa30] sm:$0xff]
    %v965 = vld [vmem:[#allocation8 + $0xa38] sm:$0xff]
    %v966 = vld [vmem:[#allocation8 + $0xa40] sm:$0xff]
    %v967 = vld [vmem:[#allocation8 + $0xa48] sm:$0xff]
    %v968 = vld [vmem:[#allocation8 + $0xa50] sm:$0xff]
    %v969 = vld [vmem:[#allocation8 + $0xa58] sm:$0xff]
    %v970 = vld [vmem:[#allocation8 + $0xa60] sm:$0xff]
    %v971 = vld [vmem:[#allocation8 + $0xa68] sm:$0xff]
    %v972 = vld [vmem:[#allocation8 + $0xa70] sm:$0xff]
    %v973 = vld [vmem:[#allocation8 + $0xa78] sm:$0xff]
    %v974 = vld [vmem:[#allocation8 + $0xa80] sm:$0xff]
    %v975 = vld [vmem:[#allocation8 + $0xa88] sm:$0xff]
    %v976 = vld [vmem:[#allocation8 + $0xa90] sm:$0xff]
    %v977 = vld [vmem:[#allocation8 + $0xa98] sm:$0xff]
    %v978 = vld [vmem:[#allocation8 + $0xaa0] sm:$0xff]
    %v979 = vld [vmem:[#allocation8 + $0xaa8] sm:$0xff]
    %v980 = vld [vmem:[#allocation8 + $0xab0] sm:$0xff]
    %v981 = vld [vmem:[#allocation8 + $0xab8] sm:$0xff]
    %v982 = vld [vmem:[#allocation8 + $0xac0] sm:$0xff]
    %v983 = vld [vmem:[#allocation8 + $0xac8] sm:$0xff]
    %v984 = vld [vmem:[#allocation8 + $0xad0] sm:$0xff]
    %v985 = vld [vmem:[#allocation8 + $0xad8] sm:$0xff]
    %v986 = vld [vmem:[#allocation8 + $0xae0] sm:$0xff]
    %v987 = vld [vmem:[#allocation8 + $0xae8] sm:$0xff]
    %v988 = vld [vmem:[#allocation8 + $0xaf0] sm:$0xff]
    %v989 = vld [vmem:[#allocation8 + $0xaf8] sm:$0xff]
    %v990 = vld [vmem:[#allocation8 + $0xb00] sm:$0xff]
    %v991 = vld [vmem:[#allocation8 + $0xb08] sm:$0xff]
    %v992 = vld [vmem:[#allocation8 + $0xb10] sm:$0xff]
    %v993 = vld [vmem:[#allocation8 + $0xb18] sm:$0xff]
    %v994 = vld [vmem:[#allocation8 + $0xb20] sm:$0xff]
    %v995 = vld [vmem:[#allocation8 + $0xb28] sm:$0xff]
    %v996 = vld [vmem:[#allocation8 + $0xb30] sm:$0xff]
    %v997 = vld [vmem:[#allocation8 + $0xb38] sm:$0xff]
    %v998 = vld [vmem:[#allocation8 + $0xb40] sm:$0xff]
    %v999 = vld [vmem:[#allocation8 + $0xb48] sm:$0xff]
    %v1000 = vld [vmem:[#allocation8 + $0xb50] sm:$0xff]
    %v1001 = vld [vmem:[#allocation8 + $0xb58] sm:$0xff]
    %v1002 = vld [vmem:[#allocation8 + $0xb60] sm:$0xff]
    %v1003 = vld [vmem:[#allocation8 + $0xb68] sm:$0xff]
    %v1004 = vld [vmem:[#allocation8 + $0xb70] sm:$0xff]
    %v1005 = vld [vmem:[#allocation8 + $0xb78] sm:$0xff]
    %v1006 = vld [vmem:[#allocation8 + $0xb80] sm:$0xff]
    %v1007 = vld [vmem:[#allocation8 + $0xb88] sm:$0xff]
    %v1008 = vld [vmem:[#allocation8 + $0xb90] sm:$0xff]
    %v1009 = vld [vmem:[#allocation8 + $0xb98] sm:$0xff]
    %v1010 = vld [vmem:[#allocation8 + $0xba0] sm:$0xff]
    %v1011 = vld [vmem:[#allocation8 + $0xba8] sm:$0xff]
    %v1012 = vld [vmem:[#allocation8 + $0xbb0] sm:$0xff]
    %v1013 = vld [vmem:[#allocation8 + $0xbb8] sm:$0xff]
    %v1014 = vld [vmem:[#allocation8 + $0xbc0] sm:$0xff]
    %v1015 = vld [vmem:[#allocation8 + $0xbc8] sm:$0xff]
    %v1016 = vld [vmem:[#allocation8 + $0xbd0] sm:$0xff]
    %v1017 = vld [vmem:[#allocation8 + $0xbd8] sm:$0xff]
    %v1018 = vld [vmem:[#allocation8 + $0xbe0] sm:$0xff]
    %v1019 = vld [vmem:[#allocation8 + $0xbe8] sm:$0xff]
    %v1020 = vld [vmem:[#allocation8 + $0xbf0] sm:$0xff]
    %v1021 = vld [vmem:[#allocation8 + $0xbf8] sm:$0xff]
    %v1022 = vld [vmem:[#allocation8 + $0xc00] sm:$0xff]
    %v1023 = vld [vmem:[#allocation8 + $0xc08] sm:$0xff]
    %v1024 = vld [vmem:[#allocation8 + $0xc10] sm:$0xff]
    %v1025 = vld [vmem:[#allocation8 + $0xc18] sm:$0xff]
    %v1026 = vld [vmem:[#allocation8 + $0xc20] sm:$0xff]
    %v1027 = vld [vmem:[#allocation8 + $0xc28] sm:$0xff]
    %v1028 = vld [vmem:[#allocation8 + $0xc30] sm:$0xff]
    %v1029 = vld [vmem:[#allocation8 + $0xc38] sm:$0xff]
    %v1030 = vld [vmem:[#allocation8 + $0xc40] sm:$0xff]
    %v1031 = vld [vmem:[#allocation8 + $0xc48] sm:$0xff]
    %v1032 = vld [vmem:[#allocation8 + $0xc50] sm:$0xff]
    %v1033 = vld [vmem:[#allocation8 + $0xc58] sm:$0xff]
    %v1034 = vld [vmem:[#allocation8 + $0xc60] sm:$0xff]
    %v1035 = vld [vmem:[#allocation8 + $0xc68] sm:$0xff]
    %v1036 = vld [vmem:[#allocation8 + $0xc70] sm:$0xff]
    %v1037 = vld [vmem:[#allocation8 + $0xc78] sm:$0xff]
    %v1038 = vld [vmem:[#allocation8 + $0xc80] sm:$0xff]
    %v1039 = vld [vmem:[#allocation8 + $0xc88] sm:$0xff]
    %v1040 = vld [vmem:[#allocation8 + $0xc90] sm:$0xff]
    %v1041 = vld [vmem:[#allocation8 + $0xc98] sm:$0xff]
    %v1042 = vld [vmem:[#allocation8 + $0xca0] sm:$0xff]
    %v1043 = vld [vmem:[#allocation8 + $0xca8] sm:$0xff]
    %v1044 = vld [vmem:[#allocation8 + $0xcb0] sm:$0xff]
    %v1045 = vld [vmem:[#allocation8 + $0xcb8] sm:$0xff]
    %v1046 = vld [vmem:[#allocation8 + $0xcc0] sm:$0xff]
    %v1047 = vld [vmem:[#allocation8 + $0xcc8] sm:$0xff]
    %v1048 = vld [vmem:[#allocation8 + $0xcd0] sm:$0xff]
    %v1049 = vld [vmem:[#allocation8 + $0xcd8] sm:$0xff]
    %v1050 = vld [vmem:[#allocation8 + $0xce0] sm:$0xff]
    %v1051 = vld [vmem:[#allocation8 + $0xce8] sm:$0xff]
    %v1052 = vld [vmem:[#allocation8 + $0xcf0] sm:$0xff]
    %v1053 = vld [vmem:[#allocation8 + $0xcf8] sm:$0xff]
    %v1054 = vld [vmem:[#allocation8 + $0xd00] sm:$0xff]
    %v1055 = vld [vmem:[#allocation8 + $0xd08] sm:$0xff]
    %v1056 = vld [vmem:[#allocation8 + $0xd10] sm:$0xff]
    %v1057 = vld [vmem:[#allocation8 + $0xd18] sm:$0xff]
    %v1058 = vld [vmem:[#allocation8 + $0xd20] sm:$0xff]
    %v1059 = vld [vmem:[#allocation8 + $0xd28] sm:$0xff]
    %v1060 = vld [vmem:[#allocation8 + $0xd30] sm:$0xff]
    %v1061 = vld [vmem:[#allocation8 + $0xd38] sm:$0xff]
    %v1062 = vld [vmem:[#allocation8 + $0xd40] sm:$0xff]
    %v1063 = vld [vmem:[#allocation8 + $0xd48] sm:$0xff]
    %v1064 = vld [vmem:[#allocation8 + $0xd50] sm:$0xff]
    %v1065 = vld [vmem:[#allocation8 + $0xd58] sm:$0xff]
    %v1066 = vld [vmem:[#allocation8 + $0xd60] sm:$0xff]
    %v1067 = vld [vmem:[#allocation8 + $0xd68] sm:$0xff]
    %v1068 = vld [vmem:[#allocation8 + $0xd70] sm:$0xff]
    %v1069 = vld [vmem:[#allocation8 + $0xd78] sm:$0xff]
    %v1070 = vld [vmem:[#allocation8 + $0xd80] sm:$0xff]
    %v1071 = vld [vmem:[#allocation8 + $0xd88] sm:$0xff]
    %v1072 = vld [vmem:[#allocation8 + $0xd90] sm:$0xff]
    %v1073 = vld [vmem:[#allocation8 + $0xd98] sm:$0xff]
    %v1074 = vld [vmem:[#allocation8 + $0xda0] sm:$0xff]
    %v1075 = vld [vmem:[#allocation8 + $0xda8] sm:$0xff]
    %v1076 = vld [vmem:[#allocation8 + $0xdb0] sm:$0xff]
    %v1077 = vld [vmem:[#allocation8 + $0xdb8] sm:$0xff]
    %v1078 = vld [vmem:[#allocation8 + $0xdc0] sm:$0xff]
    %v1079 = vld [vmem:[#allocation8 + $0xdc8] sm:$0xff]
    %v1080 = vld [vmem:[#allocation8 + $0xdd0] sm:$0xff]
    %v1081 = vld [vmem:[#allocation8 + $0xdd8] sm:$0xff]
    %v1082 = vld [vmem:[#allocation8 + $0xde0] sm:$0xff]
    %v1083 = vld [vmem:[#allocation8 + $0xde8] sm:$0xff]
    %v1084 = vld [vmem:[#allocation8 + $0xdf0] sm:$0xff]
    %v1085 = vld [vmem:[#allocation8 + $0xdf8] sm:$0xff]
    %v1086 = vld [vmem:[#allocation8 + $0xe00] sm:$0xff]
    %v1087 = vld [vmem:[#allocation8 + $0xe08] sm:$0xff]
    %v1088 = vld [vmem:[#allocation8 + $0xe10] sm:$0xff]
    %v1089 = vld [vmem:[#allocation8 + $0xe18] sm:$0xff]
    %v1090 = vld [vmem:[#allocation8 + $0xe20] sm:$0xff]
    %v1091 = vld [vmem:[#allocation8 + $0xe28] sm:$0xff]
    %v1092 = vld [vmem:[#allocation8 + $0xe30] sm:$0xff]
    %v1093 = vld [vmem:[#allocation8 + $0xe38] sm:$0xff]
    %v1094 = vld [vmem:[#allocation8 + $0xe40] sm:$0xff]
    %v1095 = vld [vmem:[#allocation8 + $0xe48] sm:$0xff]
    %v1096 = vld [vmem:[#allocation8 + $0xe50] sm:$0xff]
    %v1097 = vld [vmem:[#allocation8 + $0xe58] sm:$0xff]
    %v1098 = vld [vmem:[#allocation8 + $0xe60] sm:$0xff]
    %v1099 = vld [vmem:[#allocation8 + $0xe68] sm:$0xff]
    %v1100 = vld [vmem:[#allocation8 + $0xe70] sm:$0xff]
    %v1101 = vld [vmem:[#allocation8 + $0xe78] sm:$0xff]
    %v1102 = vld [vmem:[#allocation8 + $0xe80] sm:$0xff]
    %v1103 = vld [vmem:[#allocation8 + $0xe88] sm:$0xff]
    %v1104 = vld [vmem:[#allocation8 + $0xe90] sm:$0xff]
    %v1105 = vld [vmem:[#allocation8 + $0xe98] sm:$0xff]
    %v1106 = vld [vmem:[#allocation8 + $0xea0] sm:$0xff]
    %v1107 = vld [vmem:[#allocation8 + $0xea8] sm:$0xff]
    %v1108 = vld [vmem:[#allocation8 + $0xeb0] sm:$0xff]
    %v1109 = vld [vmem:[#allocation8 + $0xeb8] sm:$0xff]
    %v1110 = vld [vmem:[#allocation8 + $0xec0] sm:$0xff]
    %v1111 = vld [vmem:[#allocation8 + $0xec8] sm:$0xff]
    %v1112 = vld [vmem:[#allocation8 + $0xed0] sm:$0xff]
    %v1113 = vld [vmem:[#allocation8 + $0xed8] sm:$0xff]
    %v1114 = vld [vmem:[#allocation8 + $0xee0] sm:$0xff]
    %v1115 = vld [vmem:[#allocation8 + $0xee8] sm:$0xff]
    %v1116 = vld [vmem:[#allocation8 + $0xef0] sm:$0xff]
    %v1117 = vld [vmem:[#allocation8 + $0xef8] sm:$0xff]
    %v1118 = vld [vmem:[#allocation8 + $0xf00] sm:$0xff]
    %v1119 = vld [vmem:[#allocation8 + $0xf08] sm:$0xff]
    %v1120 = vld [vmem:[#allocation8 + $0xf10] sm:$0xff]
    %v1121 = vld [vmem:[#allocation8 + $0xf18] sm:$0xff]
    %v1122 = vld [vmem:[#allocation8 + $0xf20] sm:$0xff]
    %v1123 = vld [vmem:[#allocation8 + $0xf28] sm:$0xff]
    %v1124 = vld [vmem:[#allocation8 + $0xf30] sm:$0xff]
    %v1125 = vld [vmem:[#allocation8 + $0xf38] sm:$0xff]
    %v1126 = vld [vmem:[#allocation8 + $0xf40] sm:$0xff]
    %v1127 = vld [vmem:[#allocation8 + $0xf48] sm:$0xff]
    %v1128 = vld [vmem:[#allocation8 + $0xf50] sm:$0xff]
    %v1129 = vld [vmem:[#allocation8 + $0xf58] sm:$0xff]
    %v1130 = vld [vmem:[#allocation8 + $0xf60] sm:$0xff]
    %v1131 = vld [vmem:[#allocation8 + $0xf68] sm:$0xff]
    %v1132 = vld [vmem:[#allocation8 + $0xf70] sm:$0xff]
    %v1133 = vld [vmem:[#allocation8 + $0xf78] sm:$0xff]
    %v1134 = vld [vmem:[#allocation8 + $0xf80] sm:$0xff]
    %v1135 = vld [vmem:[#allocation8 + $0xf88] sm:$0xff]
    %v1136 = vld [vmem:[#allocation8 + $0xf90] sm:$0xff]
    %v1137 = vld [vmem:[#allocation8 + $0xf98] sm:$0xff]
    %v1138 = vld [vmem:[#allocation8 + $0xfa0] sm:$0xff]
    %v1139 = vld [vmem:[#allocation8 + $0xfa8] sm:$0xff]
    %v1140 = vld [vmem:[#allocation8 + $0xfb0] sm:$0xff]
    %v1141 = vld [vmem:[#allocation8 + $0xfb8] sm:$0xff]
    %v1142 = vld [vmem:[#allocation8 + $0xfc0] sm:$0xff]
    %v1143 = vld [vmem:[#allocation8 + $0xfc8] sm:$0xff]
    %v1144 = vld [vmem:[#allocation8 + $0xfd0] sm:$0xff]
    %v1145 = vld [vmem:[#allocation8 + $0xfd8] sm:$0xff]
    %v1146 = vld [vmem:[#allocation8 + $0xfe0] sm:$0xff]
    %v1147 = vld [vmem:[#allocation8 + $0xfe8] sm:$0xff]
    %v1148 = vld [vmem:[#allocation8 + $0xff0] sm:$0xff]
    %v1149 = vld [vmem:[#allocation8 + $0xff8] sm:$0xff]
    %v1150 = vld [vmem:[#allocation10] sm:$0xf]
    %v1152 = vperm.slane %v1150, 0
    %v1153 = vperm.slane %v1150, 1
    %v1154 = vperm.slane %v1150, 2
    %v1155 = vperm.slane %v1150, 3
    %v1672 = vunpack.c.l.b16 %v638
    %v1673 = vunpack.c.h.b16 %v638
    %v1674 = vunpack.c.l.b16 %v639
    %v1675 = vunpack.c.h.b16 %v639
    %v1676 = vunpack.c.l.b16 %v640
    %v1677 = vunpack.c.h.b16 %v640
    %v1678 = vunpack.c.l.b16 %v641
    %v1679 = vunpack.c.h.b16 %v641
    %v1680 = vunpack.c.l.b16 %v642
    %v1681 = vunpack.c.h.b16 %v642
    %v1682 = vunpack.c.l.b16 %v643
    %v1683 = vunpack.c.h.b16 %v643
    %v1684 = vunpack.c.l.b16 %v644
    %v1685 = vunpack.c.h.b16 %v644
    %v1686 = vunpack.c.l.b16 %v645
    %v1687 = vunpack.c.h.b16 %v645
    %v1688 = vunpack.c.l.b16 %v646
    %v1689 = vunpack.c.h.b16 %v646
    %v1690 = vunpack.c.l.b16 %v647
    %v1691 = vunpack.c.h.b16 %v647
    %v1692 = vunpack.c.l.b16 %v648
    %v1693 = vunpack.c.h.b16 %v648
    %v1694 = vunpack.c.l.b16 %v649
    %v1695 = vunpack.c.h.b16 %v649
    %v1696 = vunpack.c.l.b16 %v650
    %v1697 = vunpack.c.h.b16 %v650
    %v1698 = vunpack.c.l.b16 %v651
    %v1699 = vunpack.c.h.b16 %v651
    %v1700 = vunpack.c.l.b16 %v652
    %v1701 = vunpack.c.h.b16 %v652
    %v1702 = vunpack.c.l.b16 %v653
    %v1703 = vunpack.c.h.b16 %v653
    %v1704 = vunpack.c.l.b16 %v654
    %v1705 = vunpack.c.h.b16 %v654
    %v1706 = vunpack.c.l.b16 %v655
    %v1707 = vunpack.c.h.b16 %v655
    %v1708 = vunpack.c.l.b16 %v656
    %v1709 = vunpack.c.h.b16 %v656
    %v1710 = vunpack.c.l.b16 %v657
    %v1711 = vunpack.c.h.b16 %v657
    %v1712 = vunpack.c.l.b16 %v658
    %v1713 = vunpack.c.h.b16 %v658
    %v1714 = vunpack.c.l.b16 %v659
    %v1715 = vunpack.c.h.b16 %v659
    %v1716 = vunpack.c.l.b16 %v660
    %v1717 = vunpack.c.h.b16 %v660
    %v1718 = vunpack.c.l.b16 %v661
    %v1719 = vunpack.c.h.b16 %v661
    %v1720 = vunpack.c.l.b16 %v662
    %v1721 = vunpack.c.h.b16 %v662
    %v1722 = vunpack.c.l.b16 %v663
    %v1723 = vunpack.c.h.b16 %v663
    %v1724 = vunpack.c.l.b16 %v664
    %v1725 = vunpack.c.h.b16 %v664
    %v1726 = vunpack.c.l.b16 %v665
    %v1727 = vunpack.c.h.b16 %v665
    %v1728 = vunpack.c.l.b16 %v666
    %v1729 = vunpack.c.h.b16 %v666
    %v1730 = vunpack.c.l.b16 %v667
    %v1731 = vunpack.c.h.b16 %v667
    %v1732 = vunpack.c.l.b16 %v668
    %v1733 = vunpack.c.h.b16 %v668
    %v1734 = vunpack.c.l.b16 %v669
    %v1735 = vunpack.c.h.b16 %v669
    %v1736 = vunpack.c.l.b16 %v670
    %v1737 = vunpack.c.h.b16 %v670
    %v1738 = vunpack.c.l.b16 %v671
    %v1739 = vunpack.c.h.b16 %v671
    %v1740 = vunpack.c.l.b16 %v672
    %v1741 = vunpack.c.h.b16 %v672
    %v1742 = vunpack.c.l.b16 %v673
    %v1743 = vunpack.c.h.b16 %v673
    %v1744 = vunpack.c.l.b16 %v674
    %v1745 = vunpack.c.h.b16 %v674
    %v1746 = vunpack.c.l.b16 %v675
    %v1747 = vunpack.c.h.b16 %v675
    %v1748 = vunpack.c.l.b16 %v676
    %v1749 = vunpack.c.h.b16 %v676
    %v1750 = vunpack.c.l.b16 %v677
    %v1751 = vunpack.c.h.b16 %v677
    %v1752 = vunpack.c.l.b16 %v678
    %v1753 = vunpack.c.h.b16 %v678
    %v1754 = vunpack.c.l.b16 %v679
    %v1755 = vunpack.c.h.b16 %v679
    %v1756 = vunpack.c.l.b16 %v680
    %v1757 = vunpack.c.h.b16 %v680
    %v1758 = vunpack.c.l.b16 %v681
    %v1759 = vunpack.c.h.b16 %v681
    %v1760 = vunpack.c.l.b16 %v682
    %v1761 = vunpack.c.h.b16 %v682
    %v1762 = vunpack.c.l.b16 %v683
    %v1763 = vunpack.c.h.b16 %v683
    %v1764 = vunpack.c.l.b16 %v684
    %v1765 = vunpack.c.h.b16 %v684
    %v1766 = vunpack.c.l.b16 %v685
    %v1767 = vunpack.c.h.b16 %v685
    %v1768 = vunpack.c.l.b16 %v686
    %v1769 = vunpack.c.h.b16 %v686
    %v1770 = vunpack.c.l.b16 %v687
    %v1771 = vunpack.c.h.b16 %v687
    %v1772 = vunpack.c.l.b16 %v688
    %v1773 = vunpack.c.h.b16 %v688
    %v1774 = vunpack.c.l.b16 %v689
    %v1775 = vunpack.c.h.b16 %v689
    %v1776 = vunpack.c.l.b16 %v690
    %v1777 = vunpack.c.h.b16 %v690
    %v1778 = vunpack.c.l.b16 %v691
    %v1779 = vunpack.c.h.b16 %v691
    %v1780 = vunpack.c.l.b16 %v692
    %v1781 = vunpack.c.h.b16 %v692
    %v1782 = vunpack.c.l.b16 %v693
    %v1783 = vunpack.c.h.b16 %v693
    %v1784 = vunpack.c.l.b16 %v694
    %v1785 = vunpack.c.h.b16 %v694
    %v1786 = vunpack.c.l.b16 %v695
    %v1787 = vunpack.c.h.b16 %v695
    %v1788 = vunpack.c.l.b16 %v696
    %v1789 = vunpack.c.h.b16 %v696
    %v1790 = vunpack.c.l.b16 %v697
    %v1791 = vunpack.c.h.b16 %v697
    %v1792 = vunpack.c.l.b16 %v698
    %v1793 = vunpack.c.h.b16 %v698
    %v1794 = vunpack.c.l.b16 %v699
    %v1795 = vunpack.c.h.b16 %v699
    %v1796 = vunpack.c.l.b16 %v700
    %v1797 = vunpack.c.h.b16 %v700
    %v1798 = vunpack.c.l.b16 %v701
    %v1799 = vunpack.c.h.b16 %v701
    %v1800 = vunpack.c.l.b16 %v702
    %v1801 = vunpack.c.h.b16 %v702
    %v1802 = vunpack.c.l.b16 %v703
    %v1803 = vunpack.c.h.b16 %v703
    %v1804 = vunpack.c.l.b16 %v704
    %v1805 = vunpack.c.h.b16 %v704
    %v1806 = vunpack.c.l.b16 %v705
    %v1807 = vunpack.c.h.b16 %v705
    %v1808 = vunpack.c.l.b16 %v706
    %v1809 = vunpack.c.h.b16 %v706
    %v1810 = vunpack.c.l.b16 %v707
    %v1811 = vunpack.c.h.b16 %v707
    %v1812 = vunpack.c.l.b16 %v708
    %v1813 = vunpack.c.h.b16 %v708
    %v1814 = vunpack.c.l.b16 %v709
    %v1815 = vunpack.c.h.b16 %v709
    %v1816 = vunpack.c.l.b16 %v710
    %v1817 = vunpack.c.h.b16 %v710
    %v1818 = vunpack.c.l.b16 %v711
    %v1819 = vunpack.c.h.b16 %v711
    %v1820 = vunpack.c.l.b16 %v712
    %v1821 = vunpack.c.h.b16 %v712
    %v1822 = vunpack.c.l.b16 %v713
    %v1823 = vunpack.c.h.b16 %v713
    %v1824 = vunpack.c.l.b16 %v714
    %v1825 = vunpack.c.h.b16 %v714
    %v1826 = vunpack.c.l.b16 %v715
    %v1827 = vunpack.c.h.b16 %v715
    %v1828 = vunpack.c.l.b16 %v716
    %v1829 = vunpack.c.h.b16 %v716
    %v1830 = vunpack.c.l.b16 %v717
    %v1831 = vunpack.c.h.b16 %v717
    %v1832 = vunpack.c.l.b16 %v718
    %v1833 = vunpack.c.h.b16 %v718
    %v1834 = vunpack.c.l.b16 %v719
    %v1835 = vunpack.c.h.b16 %v719
    %v1836 = vunpack.c.l.b16 %v720
    %v1837 = vunpack.c.h.b16 %v720
    %v1838 = vunpack.c.l.b16 %v721
    %v1839 = vunpack.c.h.b16 %v721
    %v1840 = vunpack.c.l.b16 %v722
    %v1841 = vunpack.c.h.b16 %v722
    %v1842 = vunpack.c.l.b16 %v723
    %v1843 = vunpack.c.h.b16 %v723
    %v1844 = vunpack.c.l.b16 %v724
    %v1845 = vunpack.c.h.b16 %v724
    %v1846 = vunpack.c.l.b16 %v725
    %v1847 = vunpack.c.h.b16 %v725
    %v1848 = vunpack.c.l.b16 %v726
    %v1849 = vunpack.c.h.b16 %v726
    %v1850 = vunpack.c.l.b16 %v727
    %v1851 = vunpack.c.h.b16 %v727
    %v1852 = vunpack.c.l.b16 %v728
    %v1853 = vunpack.c.h.b16 %v728
    %v1854 = vunpack.c.l.b16 %v729
    %v1855 = vunpack.c.h.b16 %v729
    %v1856 = vunpack.c.l.b16 %v730
    %v1857 = vunpack.c.h.b16 %v730
    %v1858 = vunpack.c.l.b16 %v731
    %v1859 = vunpack.c.h.b16 %v731
    %v1860 = vunpack.c.l.b16 %v732
    %v1861 = vunpack.c.h.b16 %v732
    %v1862 = vunpack.c.l.b16 %v733
    %v1863 = vunpack.c.h.b16 %v733
    %v1864 = vunpack.c.l.b16 %v734
    %v1865 = vunpack.c.h.b16 %v734
    %v1866 = vunpack.c.l.b16 %v735
    %v1867 = vunpack.c.h.b16 %v735
    %v1868 = vunpack.c.l.b16 %v736
    %v1869 = vunpack.c.h.b16 %v736
    %v1870 = vunpack.c.l.b16 %v737
    %v1871 = vunpack.c.h.b16 %v737
    %v1872 = vunpack.c.l.b16 %v738
    %v1873 = vunpack.c.h.b16 %v738
    %v1874 = vunpack.c.l.b16 %v739
    %v1875 = vunpack.c.h.b16 %v739
    %v1876 = vunpack.c.l.b16 %v740
    %v1877 = vunpack.c.h.b16 %v740
    %v1878 = vunpack.c.l.b16 %v741
    %v1879 = vunpack.c.h.b16 %v741
    %v1880 = vunpack.c.l.b16 %v742
    %v1881 = vunpack.c.h.b16 %v742
    %v1882 = vunpack.c.l.b16 %v743
    %v1883 = vunpack.c.h.b16 %v743
    %v1884 = vunpack.c.l.b16 %v744
    %v1885 = vunpack.c.h.b16 %v744
    %v1886 = vunpack.c.l.b16 %v745
    %v1887 = vunpack.c.h.b16 %v745
    %v1888 = vunpack.c.l.b16 %v746
    %v1889 = vunpack.c.h.b16 %v746
    %v1890 = vunpack.c.l.b16 %v747
    %v1891 = vunpack.c.h.b16 %v747
    %v1892 = vunpack.c.l.b16 %v748
    %v1893 = vunpack.c.h.b16 %v748
    %v1894 = vunpack.c.l.b16 %v749
    %v1895 = vunpack.c.h.b16 %v749
    %v1896 = vunpack.c.l.b16 %v750
    %v1897 = vunpack.c.h.b16 %v750
    %v1898 = vunpack.c.l.b16 %v751
    %v1899 = vunpack.c.h.b16 %v751
    %v1900 = vunpack.c.l.b16 %v752
    %v1901 = vunpack.c.h.b16 %v752
    %v1902 = vunpack.c.l.b16 %v753
    %v1903 = vunpack.c.h.b16 %v753
    %v1904 = vunpack.c.l.b16 %v754
    %v1905 = vunpack.c.h.b16 %v754
    %v1906 = vunpack.c.l.b16 %v755
    %v1907 = vunpack.c.h.b16 %v755
    %v1908 = vunpack.c.l.b16 %v756
    %v1909 = vunpack.c.h.b16 %v756
    %v1910 = vunpack.c.l.b16 %v757
    %v1911 = vunpack.c.h.b16 %v757
    %v1912 = vunpack.c.l.b16 %v758
    %v1913 = vunpack.c.h.b16 %v758
    %v1914 = vunpack.c.l.b16 %v759
    %v1915 = vunpack.c.h.b16 %v759
    %v1916 = vunpack.c.l.b16 %v760
    %v1917 = vunpack.c.h.b16 %v760
    %v1918 = vunpack.c.l.b16 %v761
    %v1919 = vunpack.c.h.b16 %v761
    %v1920 = vunpack.c.l.b16 %v762
    %v1921 = vunpack.c.h.b16 %v762
    %v1922 = vunpack.c.l.b16 %v763
    %v1923 = vunpack.c.h.b16 %v763
    %v1924 = vunpack.c.l.b16 %v764
    %v1925 = vunpack.c.h.b16 %v764
    %v1926 = vunpack.c.l.b16 %v765
    %v1927 = vunpack.c.h.b16 %v765
    %v1928 = vunpack.c.l.b16 %v766
    %v1929 = vunpack.c.h.b16 %v766
    %v1930 = vunpack.c.l.b16 %v767
    %v1931 = vunpack.c.h.b16 %v767
    %v1932 = vunpack.c.l.b16 %v768
    %v1933 = vunpack.c.h.b16 %v768
    %v1934 = vunpack.c.l.b16 %v769
    %v1935 = vunpack.c.h.b16 %v769
    %v1936 = vunpack.c.l.b16 %v770
    %v1937 = vunpack.c.h.b16 %v770
    %v1938 = vunpack.c.l.b16 %v771
    %v1939 = vunpack.c.h.b16 %v771
    %v1940 = vunpack.c.l.b16 %v772
    %v1941 = vunpack.c.h.b16 %v772
    %v1942 = vunpack.c.l.b16 %v773
    %v1943 = vunpack.c.h.b16 %v773
    %v1944 = vunpack.c.l.b16 %v774
    %v1945 = vunpack.c.h.b16 %v774
    %v1946 = vunpack.c.l.b16 %v775
    %v1947 = vunpack.c.h.b16 %v775
    %v1948 = vunpack.c.l.b16 %v776
    %v1949 = vunpack.c.h.b16 %v776
    %v1950 = vunpack.c.l.b16 %v777
    %v1951 = vunpack.c.h.b16 %v777
    %v1952 = vunpack.c.l.b16 %v778
    %v1953 = vunpack.c.h.b16 %v778
    %v1954 = vunpack.c.l.b16 %v779
    %v1955 = vunpack.c.h.b16 %v779
    %v1956 = vunpack.c.l.b16 %v780
    %v1957 = vunpack.c.h.b16 %v780
    %v1958 = vunpack.c.l.b16 %v781
    %v1959 = vunpack.c.h.b16 %v781
    %v1960 = vunpack.c.l.b16 %v782
    %v1961 = vunpack.c.h.b16 %v782
    %v1962 = vunpack.c.l.b16 %v783
    %v1963 = vunpack.c.h.b16 %v783
    %v1964 = vunpack.c.l.b16 %v784
    %v1965 = vunpack.c.h.b16 %v784
    %v1966 = vunpack.c.l.b16 %v785
    %v1967 = vunpack.c.h.b16 %v785
    %v1968 = vunpack.c.l.b16 %v786
    %v1969 = vunpack.c.h.b16 %v786
    %v1970 = vunpack.c.l.b16 %v787
    %v1971 = vunpack.c.h.b16 %v787
    %v1972 = vunpack.c.l.b16 %v788
    %v1973 = vunpack.c.h.b16 %v788
    %v1974 = vunpack.c.l.b16 %v789
    %v1975 = vunpack.c.h.b16 %v789
    %v1976 = vunpack.c.l.b16 %v790
    %v1977 = vunpack.c.h.b16 %v790
    %v1978 = vunpack.c.l.b16 %v791
    %v1979 = vunpack.c.h.b16 %v791
    %v1980 = vunpack.c.l.b16 %v792
    %v1981 = vunpack.c.h.b16 %v792
    %v1982 = vunpack.c.l.b16 %v793
    %v1983 = vunpack.c.h.b16 %v793
    %v1984 = vunpack.c.l.b16 %v794
    %v1985 = vunpack.c.h.b16 %v794
    %v1986 = vunpack.c.l.b16 %v795
    %v1987 = vunpack.c.h.b16 %v795
    %v1988 = vunpack.c.l.b16 %v796
    %v1989 = vunpack.c.h.b16 %v796
    %v1990 = vunpack.c.l.b16 %v797
    %v1991 = vunpack.c.h.b16 %v797
    %v1992 = vunpack.c.l.b16 %v798
    %v1993 = vunpack.c.h.b16 %v798
    %v1994 = vunpack.c.l.b16 %v799
    %v1995 = vunpack.c.h.b16 %v799
    %v1996 = vunpack.c.l.b16 %v800
    %v1997 = vunpack.c.h.b16 %v800
    %v1998 = vunpack.c.l.b16 %v801
    %v1999 = vunpack.c.h.b16 %v801
    %v2000 = vunpack.c.l.b16 %v802
    %v2001 = vunpack.c.h.b16 %v802
    %v2002 = vunpack.c.l.b16 %v803
    %v2003 = vunpack.c.h.b16 %v803
    %v2004 = vunpack.c.l.b16 %v804
    %v2005 = vunpack.c.h.b16 %v804
    %v2006 = vunpack.c.l.b16 %v805
    %v2007 = vunpack.c.h.b16 %v805
    %v2008 = vunpack.c.l.b16 %v806
    %v2009 = vunpack.c.h.b16 %v806
    %v2010 = vunpack.c.l.b16 %v807
    %v2011 = vunpack.c.h.b16 %v807
    %v2012 = vunpack.c.l.b16 %v808
    %v2013 = vunpack.c.h.b16 %v808
    %v2014 = vunpack.c.l.b16 %v809
    %v2015 = vunpack.c.h.b16 %v809
    %v2016 = vunpack.c.l.b16 %v810
    %v2017 = vunpack.c.h.b16 %v810
    %v2018 = vunpack.c.l.b16 %v811
    %v2019 = vunpack.c.h.b16 %v811
    %v2020 = vunpack.c.l.b16 %v812
    %v2021 = vunpack.c.h.b16 %v812
    %v2022 = vunpack.c.l.b16 %v813
    %v2023 = vunpack.c.h.b16 %v813
    %v2024 = vunpack.c.l.b16 %v814
    %v2025 = vunpack.c.h.b16 %v814
    %v2026 = vunpack.c.l.b16 %v815
    %v2027 = vunpack.c.h.b16 %v815
    %v2028 = vunpack.c.l.b16 %v816
    %v2029 = vunpack.c.h.b16 %v816
    %v2030 = vunpack.c.l.b16 %v817
    %v2031 = vunpack.c.h.b16 %v817
    %v2032 = vunpack.c.l.b16 %v818
    %v2033 = vunpack.c.h.b16 %v818
    %v2034 = vunpack.c.l.b16 %v819
    %v2035 = vunpack.c.h.b16 %v819
    %v2036 = vunpack.c.l.b16 %v820
    %v2037 = vunpack.c.h.b16 %v820
    %v2038 = vunpack.c.l.b16 %v821
    %v2039 = vunpack.c.h.b16 %v821
    %v2040 = vunpack.c.l.b16 %v822
    %v2041 = vunpack.c.h.b16 %v822
    %v2042 = vunpack.c.l.b16 %v823
    %v2043 = vunpack.c.h.b16 %v823
    %v2044 = vunpack.c.l.b16 %v824
    %v2045 = vunpack.c.h.b16 %v824
    %v2046 = vunpack.c.l.b16 %v825
    %v2047 = vunpack.c.h.b16 %v825
    %v2048 = vunpack.c.l.b16 %v826
    %v2049 = vunpack.c.h.b16 %v826
    %v2050 = vunpack.c.l.b16 %v827
    %v2051 = vunpack.c.h.b16 %v827
    %v2052 = vunpack.c.l.b16 %v828
    %v2053 = vunpack.c.h.b16 %v828
    %v2054 = vunpack.c.l.b16 %v829
    %v2055 = vunpack.c.h.b16 %v829
    %v2056 = vunpack.c.l.b16 %v830
    %v2057 = vunpack.c.h.b16 %v830
    %v2058 = vunpack.c.l.b16 %v831
    %v2059 = vunpack.c.h.b16 %v831
    %v2060 = vunpack.c.l.b16 %v832
    %v2061 = vunpack.c.h.b16 %v832
    %v2062 = vunpack.c.l.b16 %v833
    %v2063 = vunpack.c.h.b16 %v833
    %v2064 = vunpack.c.l.b16 %v834
    %v2065 = vunpack.c.h.b16 %v834
    %v2066 = vunpack.c.l.b16 %v835
    %v2067 = vunpack.c.h.b16 %v835
    %v2068 = vunpack.c.l.b16 %v836
    %v2069 = vunpack.c.h.b16 %v836
    %v2070 = vunpack.c.l.b16 %v837
    %v2071 = vunpack.c.h.b16 %v837
    %v2072 = vunpack.c.l.b16 %v838
    %v2073 = vunpack.c.h.b16 %v838
    %v2074 = vunpack.c.l.b16 %v839
    %v2075 = vunpack.c.h.b16 %v839
    %v2076 = vunpack.c.l.b16 %v840
    %v2077 = vunpack.c.h.b16 %v840
    %v2078 = vunpack.c.l.b16 %v841
    %v2079 = vunpack.c.h.b16 %v841
    %v2080 = vunpack.c.l.b16 %v842
    %v2081 = vunpack.c.h.b16 %v842
    %v2082 = vunpack.c.l.b16 %v843
    %v2083 = vunpack.c.h.b16 %v843
    %v2084 = vunpack.c.l.b16 %v844
    %v2085 = vunpack.c.h.b16 %v844
    %v2086 = vunpack.c.l.b16 %v845
    %v2087 = vunpack.c.h.b16 %v845
    %v2088 = vunpack.c.l.b16 %v846
    %v2089 = vunpack.c.h.b16 %v846
    %v2090 = vunpack.c.l.b16 %v847
    %v2091 = vunpack.c.h.b16 %v847
    %v2092 = vunpack.c.l.b16 %v848
    %v2093 = vunpack.c.h.b16 %v848
    %v2094 = vunpack.c.l.b16 %v849
    %v2095 = vunpack.c.h.b16 %v849
    %v2096 = vunpack.c.l.b16 %v850
    %v2097 = vunpack.c.h.b16 %v850
    %v2098 = vunpack.c.l.b16 %v851
    %v2099 = vunpack.c.h.b16 %v851
    %v2100 = vunpack.c.l.b16 %v852
    %v2101 = vunpack.c.h.b16 %v852
    %v2102 = vunpack.c.l.b16 %v853
    %v2103 = vunpack.c.h.b16 %v853
    %v2104 = vunpack.c.l.b16 %v854
    %v2105 = vunpack.c.h.b16 %v854
    %v2106 = vunpack.c.l.b16 %v855
    %v2107 = vunpack.c.h.b16 %v855
    %v2108 = vunpack.c.l.b16 %v856
    %v2109 = vunpack.c.h.b16 %v856
    %v2110 = vunpack.c.l.b16 %v857
    %v2111 = vunpack.c.h.b16 %v857
    %v2112 = vunpack.c.l.b16 %v858
    %v2113 = vunpack.c.h.b16 %v858
    %v2114 = vunpack.c.l.b16 %v859
    %v2115 = vunpack.c.h.b16 %v859
    %v2116 = vunpack.c.l.b16 %v860
    %v2117 = vunpack.c.h.b16 %v860
    %v2118 = vunpack.c.l.b16 %v861
    %v2119 = vunpack.c.h.b16 %v861
    %v2120 = vunpack.c.l.b16 %v862
    %v2121 = vunpack.c.h.b16 %v862
    %v2122 = vunpack.c.l.b16 %v863
    %v2123 = vunpack.c.h.b16 %v863
    %v2124 = vunpack.c.l.b16 %v864
    %v2125 = vunpack.c.h.b16 %v864
    %v2126 = vunpack.c.l.b16 %v865
    %v2127 = vunpack.c.h.b16 %v865
    %v2128 = vunpack.c.l.b16 %v866
    %v2129 = vunpack.c.h.b16 %v866
    %v2130 = vunpack.c.l.b16 %v867
    %v2131 = vunpack.c.h.b16 %v867
    %v2132 = vunpack.c.l.b16 %v868
    %v2133 = vunpack.c.h.b16 %v868
    %v2134 = vunpack.c.l.b16 %v869
    %v2135 = vunpack.c.h.b16 %v869
    %v2136 = vunpack.c.l.b16 %v870
    %v2137 = vunpack.c.h.b16 %v870
    %v2138 = vunpack.c.l.b16 %v871
    %v2139 = vunpack.c.h.b16 %v871
    %v2140 = vunpack.c.l.b16 %v872
    %v2141 = vunpack.c.h.b16 %v872
    %v2142 = vunpack.c.l.b16 %v873
    %v2143 = vunpack.c.h.b16 %v873
    %v2144 = vunpack.c.l.b16 %v874
    %v2145 = vunpack.c.h.b16 %v874
    %v2146 = vunpack.c.l.b16 %v875
    %v2147 = vunpack.c.h.b16 %v875
    %v2148 = vunpack.c.l.b16 %v876
    %v2149 = vunpack.c.h.b16 %v876
    %v2150 = vunpack.c.l.b16 %v877
    %v2151 = vunpack.c.h.b16 %v877
    %v2152 = vunpack.c.l.b16 %v878
    %v2153 = vunpack.c.h.b16 %v878
    %v2154 = vunpack.c.l.b16 %v879
    %v2155 = vunpack.c.h.b16 %v879
    %v2156 = vunpack.c.l.b16 %v880
    %v2157 = vunpack.c.h.b16 %v880
    %v2158 = vunpack.c.l.b16 %v881
    %v2159 = vunpack.c.h.b16 %v881
    %v2160 = vunpack.c.l.b16 %v882
    %v2161 = vunpack.c.h.b16 %v882
    %v2162 = vunpack.c.l.b16 %v883
    %v2163 = vunpack.c.h.b16 %v883
    %v2164 = vunpack.c.l.b16 %v884
    %v2165 = vunpack.c.h.b16 %v884
    %v2166 = vunpack.c.l.b16 %v885
    %v2167 = vunpack.c.h.b16 %v885
    %v2168 = vunpack.c.l.b16 %v886
    %v2169 = vunpack.c.h.b16 %v886
    %v2170 = vunpack.c.l.b16 %v887
    %v2171 = vunpack.c.h.b16 %v887
    %v2172 = vunpack.c.l.b16 %v888
    %v2173 = vunpack.c.h.b16 %v888
    %v2174 = vunpack.c.l.b16 %v889
    %v2175 = vunpack.c.h.b16 %v889
    %v2176 = vunpack.c.l.b16 %v890
    %v2177 = vunpack.c.h.b16 %v890
    %v2178 = vunpack.c.l.b16 %v891
    %v2179 = vunpack.c.h.b16 %v891
    %v2180 = vunpack.c.l.b16 %v892
    %v2181 = vunpack.c.h.b16 %v892
    %v2182 = vunpack.c.l.b16 %v893
    %v2183 = vunpack.c.h.b16 %v893
    %v2184 = vunpack.c.l.b16 %v894
    %v2185 = vunpack.c.h.b16 %v894
    %v2186 = vunpack.c.l.b16 %v895
    %v2187 = vunpack.c.h.b16 %v895
    %v2188 = vunpack.c.l.b16 %v896
    %v2189 = vunpack.c.h.b16 %v896
    %v2190 = vunpack.c.l.b16 %v897
    %v2191 = vunpack.c.h.b16 %v897
    %v2192 = vunpack.c.l.b16 %v898
    %v2193 = vunpack.c.h.b16 %v898
    %v2194 = vunpack.c.l.b16 %v899
    %v2195 = vunpack.c.h.b16 %v899
    %v2196 = vunpack.c.l.b16 %v900
    %v2197 = vunpack.c.h.b16 %v900
    %v2198 = vunpack.c.l.b16 %v901
    %v2199 = vunpack.c.h.b16 %v901
    %v2200 = vunpack.c.l.b16 %v902
    %v2201 = vunpack.c.h.b16 %v902
    %v2202 = vunpack.c.l.b16 %v903
    %v2203 = vunpack.c.h.b16 %v903
    %v2204 = vunpack.c.l.b16 %v904
    %v2205 = vunpack.c.h.b16 %v904
    %v2206 = vunpack.c.l.b16 %v905
    %v2207 = vunpack.c.h.b16 %v905
    %v2208 = vunpack.c.l.b16 %v906
    %v2209 = vunpack.c.h.b16 %v906
    %v2210 = vunpack.c.l.b16 %v907
    %v2211 = vunpack.c.h.b16 %v907
    %v2212 = vunpack.c.l.b16 %v908
    %v2213 = vunpack.c.h.b16 %v908
    %v2214 = vunpack.c.l.b16 %v909
    %v2215 = vunpack.c.h.b16 %v909
    %v2216 = vunpack.c.l.b16 %v910
    %v2217 = vunpack.c.h.b16 %v910
    %v2218 = vunpack.c.l.b16 %v911
    %v2219 = vunpack.c.h.b16 %v911
    %v2220 = vunpack.c.l.b16 %v912
    %v2221 = vunpack.c.h.b16 %v912
    %v2222 = vunpack.c.l.b16 %v913
    %v2223 = vunpack.c.h.b16 %v913
    %v2224 = vunpack.c.l.b16 %v914
    %v2225 = vunpack.c.h.b16 %v914
    %v2226 = vunpack.c.l.b16 %v915
    %v2227 = vunpack.c.h.b16 %v915
    %v2228 = vunpack.c.l.b16 %v916
    %v2229 = vunpack.c.h.b16 %v916
    %v2230 = vunpack.c.l.b16 %v917
    %v2231 = vunpack.c.h.b16 %v917
    %v2232 = vunpack.c.l.b16 %v918
    %v2233 = vunpack.c.h.b16 %v918
    %v2234 = vunpack.c.l.b16 %v919
    %v2235 = vunpack.c.h.b16 %v919
    %v2236 = vunpack.c.l.b16 %v920
    %v2237 = vunpack.c.h.b16 %v920
    %v2238 = vunpack.c.l.b16 %v921
    %v2239 = vunpack.c.h.b16 %v921
    %v2240 = vunpack.c.l.b16 %v922
    %v2241 = vunpack.c.h.b16 %v922
    %v2242 = vunpack.c.l.b16 %v923
    %v2243 = vunpack.c.h.b16 %v923
    %v2244 = vunpack.c.l.b16 %v924
    %v2245 = vunpack.c.h.b16 %v924
    %v2246 = vunpack.c.l.b16 %v925
    %v2247 = vunpack.c.h.b16 %v925
    %v2248 = vunpack.c.l.b16 %v926
    %v2249 = vunpack.c.h.b16 %v926
    %v2250 = vunpack.c.l.b16 %v927
    %v2251 = vunpack.c.h.b16 %v927
    %v2252 = vunpack.c.l.b16 %v928
    %v2253 = vunpack.c.h.b16 %v928
    %v2254 = vunpack.c.l.b16 %v929
    %v2255 = vunpack.c.h.b16 %v929
    %v2256 = vunpack.c.l.b16 %v930
    %v2257 = vunpack.c.h.b16 %v930
    %v2258 = vunpack.c.l.b16 %v931
    %v2259 = vunpack.c.h.b16 %v931
    %v2260 = vunpack.c.l.b16 %v932
    %v2261 = vunpack.c.h.b16 %v932
    %v2262 = vunpack.c.l.b16 %v933
    %v2263 = vunpack.c.h.b16 %v933
    %v2264 = vunpack.c.l.b16 %v934
    %v2265 = vunpack.c.h.b16 %v934
    %v2266 = vunpack.c.l.b16 %v935
    %v2267 = vunpack.c.h.b16 %v935
    %v2268 = vunpack.c.l.b16 %v936
    %v2269 = vunpack.c.h.b16 %v936
    %v2270 = vunpack.c.l.b16 %v937
    %v2271 = vunpack.c.h.b16 %v937
    %v2272 = vunpack.c.l.b16 %v938
    %v2273 = vunpack.c.h.b16 %v938
    %v2274 = vunpack.c.l.b16 %v939
    %v2275 = vunpack.c.h.b16 %v939
    %v2276 = vunpack.c.l.b16 %v940
    %v2277 = vunpack.c.h.b16 %v940
    %v2278 = vunpack.c.l.b16 %v941
    %v2279 = vunpack.c.h.b16 %v941
    %v2280 = vunpack.c.l.b16 %v942
    %v2281 = vunpack.c.h.b16 %v942
    %v2282 = vunpack.c.l.b16 %v943
    %v2283 = vunpack.c.h.b16 %v943
    %v2284 = vunpack.c.l.b16 %v944
    %v2285 = vunpack.c.h.b16 %v944
    %v2286 = vunpack.c.l.b16 %v945
    %v2287 = vunpack.c.h.b16 %v945
    %v2288 = vunpack.c.l.b16 %v946
    %v2289 = vunpack.c.h.b16 %v946
    %v2290 = vunpack.c.l.b16 %v947
    %v2291 = vunpack.c.h.b16 %v947
    %v2292 = vunpack.c.l.b16 %v948
    %v2293 = vunpack.c.h.b16 %v948
    %v2294 = vunpack.c.l.b16 %v949
    %v2295 = vunpack.c.h.b16 %v949
    %v2296 = vunpack.c.l.b16 %v950
    %v2297 = vunpack.c.h.b16 %v950
    %v2298 = vunpack.c.l.b16 %v951
    %v2299 = vunpack.c.h.b16 %v951
    %v2300 = vunpack.c.l.b16 %v952
    %v2301 = vunpack.c.h.b16 %v952
    %v2302 = vunpack.c.l.b16 %v953
    %v2303 = vunpack.c.h.b16 %v953
    %v2304 = vunpack.c.l.b16 %v954
    %v2305 = vunpack.c.h.b16 %v954
    %v2306 = vunpack.c.l.b16 %v955
    %v2307 = vunpack.c.h.b16 %v955
    %v2308 = vunpack.c.l.b16 %v956
    %v2309 = vunpack.c.h.b16 %v956
    %v2310 = vunpack.c.l.b16 %v957
    %v2311 = vunpack.c.h.b16 %v957
    %v2312 = vunpack.c.l.b16 %v958
    %v2313 = vunpack.c.h.b16 %v958
    %v2314 = vunpack.c.l.b16 %v959
    %v2315 = vunpack.c.h.b16 %v959
    %v2316 = vunpack.c.l.b16 %v960
    %v2317 = vunpack.c.h.b16 %v960
    %v2318 = vunpack.c.l.b16 %v961
    %v2319 = vunpack.c.h.b16 %v961
    %v2320 = vunpack.c.l.b16 %v962
    %v2321 = vunpack.c.h.b16 %v962
    %v2322 = vunpack.c.l.b16 %v963
    %v2323 = vunpack.c.h.b16 %v963
    %v2324 = vunpack.c.l.b16 %v964
    %v2325 = vunpack.c.h.b16 %v964
    %v2326 = vunpack.c.l.b16 %v965
    %v2327 = vunpack.c.h.b16 %v965
    %v2328 = vunpack.c.l.b16 %v966
    %v2329 = vunpack.c.h.b16 %v966
    %v2330 = vunpack.c.l.b16 %v967
    %v2331 = vunpack.c.h.b16 %v967
    %v2332 = vunpack.c.l.b16 %v968
    %v2333 = vunpack.c.h.b16 %v968
    %v2334 = vunpack.c.l.b16 %v969
    %v2335 = vunpack.c.h.b16 %v969
    %v2336 = vunpack.c.l.b16 %v970
    %v2337 = vunpack.c.h.b16 %v970
    %v2338 = vunpack.c.l.b16 %v971
    %v2339 = vunpack.c.h.b16 %v971
    %v2340 = vunpack.c.l.b16 %v972
    %v2341 = vunpack.c.h.b16 %v972
    %v2342 = vunpack.c.l.b16 %v973
    %v2343 = vunpack.c.h.b16 %v973
    %v2344 = vunpack.c.l.b16 %v974
    %v2345 = vunpack.c.h.b16 %v974
    %v2346 = vunpack.c.l.b16 %v975
    %v2347 = vunpack.c.h.b16 %v975
    %v2348 = vunpack.c.l.b16 %v976
    %v2349 = vunpack.c.h.b16 %v976
    %v2350 = vunpack.c.l.b16 %v977
    %v2351 = vunpack.c.h.b16 %v977
    %v2352 = vunpack.c.l.b16 %v978
    %v2353 = vunpack.c.h.b16 %v978
    %v2354 = vunpack.c.l.b16 %v979
    %v2355 = vunpack.c.h.b16 %v979
    %v2356 = vunpack.c.l.b16 %v980
    %v2357 = vunpack.c.h.b16 %v980
    %v2358 = vunpack.c.l.b16 %v981
    %v2359 = vunpack.c.h.b16 %v981
    %v2360 = vunpack.c.l.b16 %v982
    %v2361 = vunpack.c.h.b16 %v982
    %v2362 = vunpack.c.l.b16 %v983
    %v2363 = vunpack.c.h.b16 %v983
    %v2364 = vunpack.c.l.b16 %v984
    %v2365 = vunpack.c.h.b16 %v984
    %v2366 = vunpack.c.l.b16 %v985
    %v2367 = vunpack.c.h.b16 %v985
    %v2368 = vunpack.c.l.b16 %v986
    %v2369 = vunpack.c.h.b16 %v986
    %v2370 = vunpack.c.l.b16 %v987
    %v2371 = vunpack.c.h.b16 %v987
    %v2372 = vunpack.c.l.b16 %v988
    %v2373 = vunpack.c.h.b16 %v988
    %v2374 = vunpack.c.l.b16 %v989
    %v2375 = vunpack.c.h.b16 %v989
    %v2376 = vunpack.c.l.b16 %v990
    %v2377 = vunpack.c.h.b16 %v990
    %v2378 = vunpack.c.l.b16 %v991
    %v2379 = vunpack.c.h.b16 %v991
    %v2380 = vunpack.c.l.b16 %v992
    %v2381 = vunpack.c.h.b16 %v992
    %v2382 = vunpack.c.l.b16 %v993
    %v2383 = vunpack.c.h.b16 %v993
    %v2384 = vunpack.c.l.b16 %v994
    %v2385 = vunpack.c.h.b16 %v994
    %v2386 = vunpack.c.l.b16 %v995
    %v2387 = vunpack.c.h.b16 %v995
    %v2388 = vunpack.c.l.b16 %v996
    %v2389 = vunpack.c.h.b16 %v996
    %v2390 = vunpack.c.l.b16 %v997
    %v2391 = vunpack.c.h.b16 %v997
    %v2392 = vunpack.c.l.b16 %v998
    %v2393 = vunpack.c.h.b16 %v998
    %v2394 = vunpack.c.l.b16 %v999
    %v2395 = vunpack.c.h.b16 %v999
    %v2396 = vunpack.c.l.b16 %v1000
    %v2397 = vunpack.c.h.b16 %v1000
    %v2398 = vunpack.c.l.b16 %v1001
    %v2399 = vunpack.c.h.b16 %v1001
    %v2400 = vunpack.c.l.b16 %v1002
    %v2401 = vunpack.c.h.b16 %v1002
    %v2402 = vunpack.c.l.b16 %v1003
    %v2403 = vunpack.c.h.b16 %v1003
    %v2404 = vunpack.c.l.b16 %v1004
    %v2405 = vunpack.c.h.b16 %v1004
    %v2406 = vunpack.c.l.b16 %v1005
    %v2407 = vunpack.c.h.b16 %v1005
    %v2408 = vunpack.c.l.b16 %v1006
    %v2409 = vunpack.c.h.b16 %v1006
    %v2410 = vunpack.c.l.b16 %v1007
    %v2411 = vunpack.c.h.b16 %v1007
    %v2412 = vunpack.c.l.b16 %v1008
    %v2413 = vunpack.c.h.b16 %v1008
    %v2414 = vunpack.c.l.b16 %v1009
    %v2415 = vunpack.c.h.b16 %v1009
    %v2416 = vunpack.c.l.b16 %v1010
    %v2417 = vunpack.c.h.b16 %v1010
    %v2418 = vunpack.c.l.b16 %v1011
    %v2419 = vunpack.c.h.b16 %v1011
    %v2420 = vunpack.c.l.b16 %v1012
    %v2421 = vunpack.c.h.b16 %v1012
    %v2422 = vunpack.c.l.b16 %v1013
    %v2423 = vunpack.c.h.b16 %v1013
    %v2424 = vunpack.c.l.b16 %v1014
    %v2425 = vunpack.c.h.b16 %v1014
    %v2426 = vunpack.c.l.b16 %v1015
    %v2427 = vunpack.c.h.b16 %v1015
    %v2428 = vunpack.c.l.b16 %v1016
    %v2429 = vunpack.c.h.b16 %v1016
    %v2430 = vunpack.c.l.b16 %v1017
    %v2431 = vunpack.c.h.b16 %v1017
    %v2432 = vunpack.c.l.b16 %v1018
    %v2433 = vunpack.c.h.b16 %v1018
    %v2434 = vunpack.c.l.b16 %v1019
    %v2435 = vunpack.c.h.b16 %v1019
    %v2436 = vunpack.c.l.b16 %v1020
    %v2437 = vunpack.c.h.b16 %v1020
    %v2438 = vunpack.c.l.b16 %v1021
    %v2439 = vunpack.c.h.b16 %v1021
    %v2440 = vunpack.c.l.b16 %v1022
    %v2441 = vunpack.c.h.b16 %v1022
    %v2442 = vunpack.c.l.b16 %v1023
    %v2443 = vunpack.c.h.b16 %v1023
    %v2444 = vunpack.c.l.b16 %v1024
    %v2445 = vunpack.c.h.b16 %v1024
    %v2446 = vunpack.c.l.b16 %v1025
    %v2447 = vunpack.c.h.b16 %v1025
    %v2448 = vunpack.c.l.b16 %v1026
    %v2449 = vunpack.c.h.b16 %v1026
    %v2450 = vunpack.c.l.b16 %v1027
    %v2451 = vunpack.c.h.b16 %v1027
    %v2452 = vunpack.c.l.b16 %v1028
    %v2453 = vunpack.c.h.b16 %v1028
    %v2454 = vunpack.c.l.b16 %v1029
    %v2455 = vunpack.c.h.b16 %v1029
    %v2456 = vunpack.c.l.b16 %v1030
    %v2457 = vunpack.c.h.b16 %v1030
    %v2458 = vunpack.c.l.b16 %v1031
    %v2459 = vunpack.c.h.b16 %v1031
    %v2460 = vunpack.c.l.b16 %v1032
    %v2461 = vunpack.c.h.b16 %v1032
    %v2462 = vunpack.c.l.b16 %v1033
    %v2463 = vunpack.c.h.b16 %v1033
    %v2464 = vunpack.c.l.b16 %v1034
    %v2465 = vunpack.c.h.b16 %v1034
    %v2466 = vunpack.c.l.b16 %v1035
    %v2467 = vunpack.c.h.b16 %v1035
    %v2468 = vunpack.c.l.b16 %v1036
    %v2469 = vunpack.c.h.b16 %v1036
    %v2470 = vunpack.c.l.b16 %v1037
    %v2471 = vunpack.c.h.b16 %v1037
    %v2472 = vunpack.c.l.b16 %v1038
    %v2473 = vunpack.c.h.b16 %v1038
    %v2474 = vunpack.c.l.b16 %v1039
    %v2475 = vunpack.c.h.b16 %v1039
    %v2476 = vunpack.c.l.b16 %v1040
    %v2477 = vunpack.c.h.b16 %v1040
    %v2478 = vunpack.c.l.b16 %v1041
    %v2479 = vunpack.c.h.b16 %v1041
    %v2480 = vunpack.c.l.b16 %v1042
    %v2481 = vunpack.c.h.b16 %v1042
    %v2482 = vunpack.c.l.b16 %v1043
    %v2483 = vunpack.c.h.b16 %v1043
    %v2484 = vunpack.c.l.b16 %v1044
    %v2485 = vunpack.c.h.b16 %v1044
    %v2486 = vunpack.c.l.b16 %v1045
    %v2487 = vunpack.c.h.b16 %v1045
    %v2488 = vunpack.c.l.b16 %v1046
    %v2489 = vunpack.c.h.b16 %v1046
    %v2490 = vunpack.c.l.b16 %v1047
    %v2491 = vunpack.c.h.b16 %v1047
    %v2492 = vunpack.c.l.b16 %v1048
    %v2493 = vunpack.c.h.b16 %v1048
    %v2494 = vunpack.c.l.b16 %v1049
    %v2495 = vunpack.c.h.b16 %v1049
    %v2496 = vunpack.c.l.b16 %v1050
    %v2497 = vunpack.c.h.b16 %v1050
    %v2498 = vunpack.c.l.b16 %v1051
    %v2499 = vunpack.c.h.b16 %v1051
    %v2500 = vunpack.c.l.b16 %v1052
    %v2501 = vunpack.c.h.b16 %v1052
    %v2502 = vunpack.c.l.b16 %v1053
    %v2503 = vunpack.c.h.b16 %v1053
    %v2504 = vunpack.c.l.b16 %v1054
    %v2505 = vunpack.c.h.b16 %v1054
    %v2506 = vunpack.c.l.b16 %v1055
    %v2507 = vunpack.c.h.b16 %v1055
    %v2508 = vunpack.c.l.b16 %v1056
    %v2509 = vunpack.c.h.b16 %v1056
    %v2510 = vunpack.c.l.b16 %v1057
    %v2511 = vunpack.c.h.b16 %v1057
    %v2512 = vunpack.c.l.b16 %v1058
    %v2513 = vunpack.c.h.b16 %v1058
    %v2514 = vunpack.c.l.b16 %v1059
    %v2515 = vunpack.c.h.b16 %v1059
    %v2516 = vunpack.c.l.b16 %v1060
    %v2517 = vunpack.c.h.b16 %v1060
    %v2518 = vunpack.c.l.b16 %v1061
    %v2519 = vunpack.c.h.b16 %v1061
    %v2520 = vunpack.c.l.b16 %v1062
    %v2521 = vunpack.c.h.b16 %v1062
    %v2522 = vunpack.c.l.b16 %v1063
    %v2523 = vunpack.c.h.b16 %v1063
    %v2524 = vunpack.c.l.b16 %v1064
    %v2525 = vunpack.c.h.b16 %v1064
    %v2526 = vunpack.c.l.b16 %v1065
    %v2527 = vunpack.c.h.b16 %v1065
    %v2528 = vunpack.c.l.b16 %v1066
    %v2529 = vunpack.c.h.b16 %v1066
    %v2530 = vunpack.c.l.b16 %v1067
    %v2531 = vunpack.c.h.b16 %v1067
    %v2532 = vunpack.c.l.b16 %v1068
    %v2533 = vunpack.c.h.b16 %v1068
    %v2534 = vunpack.c.l.b16 %v1069
    %v2535 = vunpack.c.h.b16 %v1069
    %v2536 = vunpack.c.l.b16 %v1070
    %v2537 = vunpack.c.h.b16 %v1070
    %v2538 = vunpack.c.l.b16 %v1071
    %v2539 = vunpack.c.h.b16 %v1071
    %v2540 = vunpack.c.l.b16 %v1072
    %v2541 = vunpack.c.h.b16 %v1072
    %v2542 = vunpack.c.l.b16 %v1073
    %v2543 = vunpack.c.h.b16 %v1073
    %v2544 = vunpack.c.l.b16 %v1074
    %v2545 = vunpack.c.h.b16 %v1074
    %v2546 = vunpack.c.l.b16 %v1075
    %v2547 = vunpack.c.h.b16 %v1075
    %v2548 = vunpack.c.l.b16 %v1076
    %v2549 = vunpack.c.h.b16 %v1076
    %v2550 = vunpack.c.l.b16 %v1077
    %v2551 = vunpack.c.h.b16 %v1077
    %v2552 = vunpack.c.l.b16 %v1078
    %v2553 = vunpack.c.h.b16 %v1078
    %v2554 = vunpack.c.l.b16 %v1079
    %v2555 = vunpack.c.h.b16 %v1079
    %v2556 = vunpack.c.l.b16 %v1080
    %v2557 = vunpack.c.h.b16 %v1080
    %v2558 = vunpack.c.l.b16 %v1081
    %v2559 = vunpack.c.h.b16 %v1081
    %v2560 = vunpack.c.l.b16 %v1082
    %v2561 = vunpack.c.h.b16 %v1082
    %v2562 = vunpack.c.l.b16 %v1083
    %v2563 = vunpack.c.h.b16 %v1083
    %v2564 = vunpack.c.l.b16 %v1084
    %v2565 = vunpack.c.h.b16 %v1084
    %v2566 = vunpack.c.l.b16 %v1085
    %v2567 = vunpack.c.h.b16 %v1085
    %v2568 = vunpack.c.l.b16 %v1086
    %v2569 = vunpack.c.h.b16 %v1086
    %v2570 = vunpack.c.l.b16 %v1087
    %v2571 = vunpack.c.h.b16 %v1087
    %v2572 = vunpack.c.l.b16 %v1088
    %v2573 = vunpack.c.h.b16 %v1088
    %v2574 = vunpack.c.l.b16 %v1089
    %v2575 = vunpack.c.h.b16 %v1089
    %v2576 = vunpack.c.l.b16 %v1090
    %v2577 = vunpack.c.h.b16 %v1090
    %v2578 = vunpack.c.l.b16 %v1091
    %v2579 = vunpack.c.h.b16 %v1091
    %v2580 = vunpack.c.l.b16 %v1092
    %v2581 = vunpack.c.h.b16 %v1092
    %v2582 = vunpack.c.l.b16 %v1093
    %v2583 = vunpack.c.h.b16 %v1093
    %v2584 = vunpack.c.l.b16 %v1094
    %v2585 = vunpack.c.h.b16 %v1094
    %v2586 = vunpack.c.l.b16 %v1095
    %v2587 = vunpack.c.h.b16 %v1095
    %v2588 = vunpack.c.l.b16 %v1096
    %v2589 = vunpack.c.h.b16 %v1096
    %v2590 = vunpack.c.l.b16 %v1097
    %v2591 = vunpack.c.h.b16 %v1097
    %v2592 = vunpack.c.l.b16 %v1098
    %v2593 = vunpack.c.h.b16 %v1098
    %v2594 = vunpack.c.l.b16 %v1099
    %v2595 = vunpack.c.h.b16 %v1099
    %v2596 = vunpack.c.l.b16 %v1100
    %v2597 = vunpack.c.h.b16 %v1100
    %v2598 = vunpack.c.l.b16 %v1101
    %v2599 = vunpack.c.h.b16 %v1101
    %v2600 = vunpack.c.l.b16 %v1102
    %v2601 = vunpack.c.h.b16 %v1102
    %v2602 = vunpack.c.l.b16 %v1103
    %v2603 = vunpack.c.h.b16 %v1103
    %v2604 = vunpack.c.l.b16 %v1104
    %v2605 = vunpack.c.h.b16 %v1104
    %v2606 = vunpack.c.l.b16 %v1105
    %v2607 = vunpack.c.h.b16 %v1105
    %v2608 = vunpack.c.l.b16 %v1106
    %v2609 = vunpack.c.h.b16 %v1106
    %v2610 = vunpack.c.l.b16 %v1107
    %v2611 = vunpack.c.h.b16 %v1107
    %v2612 = vunpack.c.l.b16 %v1108
    %v2613 = vunpack.c.h.b16 %v1108
    %v2614 = vunpack.c.l.b16 %v1109
    %v2615 = vunpack.c.h.b16 %v1109
    %v2616 = vunpack.c.l.b16 %v1110
    %v2617 = vunpack.c.h.b16 %v1110
    %v2618 = vunpack.c.l.b16 %v1111
    %v2619 = vunpack.c.h.b16 %v1111
    %v2620 = vunpack.c.l.b16 %v1112
    %v2621 = vunpack.c.h.b16 %v1112
    %v2622 = vunpack.c.l.b16 %v1113
    %v2623 = vunpack.c.h.b16 %v1113
    %v2624 = vunpack.c.l.b16 %v1114
    %v2625 = vunpack.c.h.b16 %v1114
    %v2626 = vunpack.c.l.b16 %v1115
    %v2627 = vunpack.c.h.b16 %v1115
    %v2628 = vunpack.c.l.b16 %v1116
    %v2629 = vunpack.c.h.b16 %v1116
    %v2630 = vunpack.c.l.b16 %v1117
    %v2631 = vunpack.c.h.b16 %v1117
    %v2632 = vunpack.c.l.b16 %v1118
    %v2633 = vunpack.c.h.b16 %v1118
    %v2634 = vunpack.c.l.b16 %v1119
    %v2635 = vunpack.c.h.b16 %v1119
    %v2636 = vunpack.c.l.b16 %v1120
    %v2637 = vunpack.c.h.b16 %v1120
    %v2638 = vunpack.c.l.b16 %v1121
    %v2639 = vunpack.c.h.b16 %v1121
    %v2640 = vunpack.c.l.b16 %v1122
    %v2641 = vunpack.c.h.b16 %v1122
    %v2642 = vunpack.c.l.b16 %v1123
    %v2643 = vunpack.c.h.b16 %v1123
    %v2644 = vunpack.c.l.b16 %v1124
    %v2645 = vunpack.c.h.b16 %v1124
    %v2646 = vunpack.c.l.b16 %v1125
    %v2647 = vunpack.c.h.b16 %v1125
    %v2648 = vunpack.c.l.b16 %v1126
    %v2649 = vunpack.c.h.b16 %v1126
    %v2650 = vunpack.c.l.b16 %v1127
    %v2651 = vunpack.c.h.b16 %v1127
    %v2652 = vunpack.c.l.b16 %v1128
    %v2653 = vunpack.c.h.b16 %v1128
    %v2654 = vunpack.c.l.b16 %v1129
    %v2655 = vunpack.c.h.b16 %v1129
    %v2656 = vunpack.c.l.b16 %v1130
    %v2657 = vunpack.c.h.b16 %v1130
    %v2658 = vunpack.c.l.b16 %v1131
    %v2659 = vunpack.c.h.b16 %v1131
    %v2660 = vunpack.c.l.b16 %v1132
    %v2661 = vunpack.c.h.b16 %v1132
    %v2662 = vunpack.c.l.b16 %v1133
    %v2663 = vunpack.c.h.b16 %v1133
    %v2664 = vunpack.c.l.b16 %v1134
    %v2665 = vunpack.c.h.b16 %v1134
    %v2666 = vunpack.c.l.b16 %v1135
    %v2667 = vunpack.c.h.b16 %v1135
    %v2668 = vunpack.c.l.b16 %v1136
    %v2669 = vunpack.c.h.b16 %v1136
    %v2670 = vunpack.c.l.b16 %v1137
    %v2671 = vunpack.c.h.b16 %v1137
    %v2672 = vunpack.c.l.b16 %v1138
    %v2673 = vunpack.c.h.b16 %v1138
    %v2674 = vunpack.c.l.b16 %v1139
    %v2675 = vunpack.c.h.b16 %v1139
    %v2676 = vunpack.c.l.b16 %v1140
    %v2677 = vunpack.c.h.b16 %v1140
    %v2678 = vunpack.c.l.b16 %v1141
    %v2679 = vunpack.c.h.b16 %v1141
    %v2680 = vunpack.c.l.b16 %v1142
    %v2681 = vunpack.c.h.b16 %v1142
    %v2682 = vunpack.c.l.b16 %v1143
    %v2683 = vunpack.c.h.b16 %v1143
    %v2684 = vunpack.c.l.b16 %v1144
    %v2685 = vunpack.c.h.b16 %v1144
    %v2686 = vunpack.c.l.b16 %v1145
    %v2687 = vunpack.c.h.b16 %v1145
    %v2688 = vunpack.c.l.b16 %v1146
    %v2689 = vunpack.c.h.b16 %v1146
    %v2690 = vunpack.c.l.b16 %v1147
    %v2691 = vunpack.c.h.b16 %v1147
    %v2692 = vunpack.c.l.b16 %v1148
    %v2693 = vunpack.c.h.b16 %v1148
    %v2694 = vunpack.c.l.b16 %v1149
    %v2695 = vunpack.c.h.b16 %v1149
    %v2696 = vpack.c.b16 %v1676, %v1672
    %v2697 = vpack.c.b16 %v1677, %v1673
    %v2698 = vpack.c.b16 %v1678, %v1674
    %v2699 = vpack.c.b16 %v1679, %v1675
    %v2700 = vpack.c.b16 %v1684, %v1680
    %v2701 = vpack.c.b16 %v1685, %v1681
    %v2702 = vpack.c.b16 %v1686, %v1682
    %v2703 = vpack.c.b16 %v1687, %v1683
    %v2704 = vpack.c.b16 %v1692, %v1688
    %v2705 = vpack.c.b16 %v1693, %v1689
    %v2706 = vpack.c.b16 %v1694, %v1690
    %v2707 = vpack.c.b16 %v1695, %v1691
    %v2708 = vpack.c.b16 %v1700, %v1696
    %v2709 = vpack.c.b16 %v1701, %v1697
    %v2710 = vpack.c.b16 %v1702, %v1698
    %v2711 = vpack.c.b16 %v1703, %v1699
    %v2712 = vpack.c.b16 %v1708, %v1704
    %v2713 = vpack.c.b16 %v1709, %v1705
    %v2714 = vpack.c.b16 %v1710, %v1706
    %v2715 = vpack.c.b16 %v1711, %v1707
    %v2716 = vpack.c.b16 %v1716, %v1712
    %v2717 = vpack.c.b16 %v1717, %v1713
    %v2718 = vpack.c.b16 %v1718, %v1714
    %v2719 = vpack.c.b16 %v1719, %v1715
    %v2720 = vpack.c.b16 %v1724, %v1720
    %v2721 = vpack.c.b16 %v1725, %v1721
    %v2722 = vpack.c.b16 %v1726, %v1722
    %v2723 = vpack.c.b16 %v1727, %v1723
    %v2724 = vpack.c.b16 %v1732, %v1728
    %v2725 = vpack.c.b16 %v1733, %v1729
    %v2726 = vpack.c.b16 %v1734, %v1730
    %v2727 = vpack.c.b16 %v1735, %v1731
    %v2728 = vpack.c.b16 %v1740, %v1736
    %v2729 = vpack.c.b16 %v1741, %v1737
    %v2730 = vpack.c.b16 %v1742, %v1738
    %v2731 = vpack.c.b16 %v1743, %v1739
    %v2732 = vpack.c.b16 %v1748, %v1744
    %v2733 = vpack.c.b16 %v1749, %v1745
    %v2734 = vpack.c.b16 %v1750, %v1746
    %v2735 = vpack.c.b16 %v1751, %v1747
    %v2736 = vpack.c.b16 %v1756, %v1752
    %v2737 = vpack.c.b16 %v1757, %v1753
    %v2738 = vpack.c.b16 %v1758, %v1754
    %v2739 = vpack.c.b16 %v1759, %v1755
    %v2740 = vpack.c.b16 %v1764, %v1760
    %v2741 = vpack.c.b16 %v1765, %v1761
    %v2742 = vpack.c.b16 %v1766, %v1762
    %v2743 = vpack.c.b16 %v1767, %v1763
    %v2744 = vpack.c.b16 %v1772, %v1768
    %v2745 = vpack.c.b16 %v1773, %v1769
    %v2746 = vpack.c.b16 %v1774, %v1770
    %v2747 = vpack.c.b16 %v1775, %v1771
    %v2748 = vpack.c.b16 %v1780, %v1776
    %v2749 = vpack.c.b16 %v1781, %v1777
    %v2750 = vpack.c.b16 %v1782, %v1778
    %v2751 = vpack.c.b16 %v1783, %v1779
    %v2752 = vpack.c.b16 %v1788, %v1784
    %v2753 = vpack.c.b16 %v1789, %v1785
    %v2754 = vpack.c.b16 %v1790, %v1786
    %v2755 = vpack.c.b16 %v1791, %v1787
    %v2756 = vpack.c.b16 %v1796, %v1792
    %v2757 = vpack.c.b16 %v1797, %v1793
    %v2758 = vpack.c.b16 %v1798, %v1794
    %v2759 = vpack.c.b16 %v1799, %v1795
    %v2760 = vpack.c.b16 %v1804, %v1800
    %v2761 = vpack.c.b16 %v1805, %v1801
    %v2762 = vpack.c.b16 %v1806, %v1802
    %v2763 = vpack.c.b16 %v1807, %v1803
    %v2764 = vpack.c.b16 %v1812, %v1808
    %v2765 = vpack.c.b16 %v1813, %v1809
    %v2766 = vpack.c.b16 %v1814, %v1810
    %v2767 = vpack.c.b16 %v1815, %v1811
    %v2768 = vpack.c.b16 %v1820, %v1816
    %v2769 = vpack.c.b16 %v1821, %v1817
    %v2770 = vpack.c.b16 %v1822, %v1818
    %v2771 = vpack.c.b16 %v1823, %v1819
    %v2772 = vpack.c.b16 %v1828, %v1824
    %v2773 = vpack.c.b16 %v1829, %v1825
    %v2774 = vpack.c.b16 %v1830, %v1826
    %v2775 = vpack.c.b16 %v1831, %v1827
    %v2776 = vpack.c.b16 %v1836, %v1832
    %v2777 = vpack.c.b16 %v1837, %v1833
    %v2778 = vpack.c.b16 %v1838, %v1834
    %v2779 = vpack.c.b16 %v1839, %v1835
    %v2780 = vpack.c.b16 %v1844, %v1840
    %v2781 = vpack.c.b16 %v1845, %v1841
    %v2782 = vpack.c.b16 %v1846, %v1842
    %v2783 = vpack.c.b16 %v1847, %v1843
    %v2784 = vpack.c.b16 %v1852, %v1848
    %v2785 = vpack.c.b16 %v1853, %v1849
    %v2786 = vpack.c.b16 %v1854, %v1850
    %v2787 = vpack.c.b16 %v1855, %v1851
    %v2788 = vpack.c.b16 %v1860, %v1856
    %v2789 = vpack.c.b16 %v1861, %v1857
    %v2790 = vpack.c.b16 %v1862, %v1858
    %v2791 = vpack.c.b16 %v1863, %v1859
    %v2792 = vpack.c.b16 %v1868, %v1864
    %v2793 = vpack.c.b16 %v1869, %v1865
    %v2794 = vpack.c.b16 %v1870, %v1866
    %v2795 = vpack.c.b16 %v1871, %v1867
    %v2796 = vpack.c.b16 %v1876, %v1872
    %v2797 = vpack.c.b16 %v1877, %v1873
    %v2798 = vpack.c.b16 %v1878, %v1874
    %v2799 = vpack.c.b16 %v1879, %v1875
    %v2800 = vpack.c.b16 %v1884, %v1880
    %v2801 = vpack.c.b16 %v1885, %v1881
    %v2802 = vpack.c.b16 %v1886, %v1882
    %v2803 = vpack.c.b16 %v1887, %v1883
    %v2804 = vpack.c.b16 %v1892, %v1888
    %v2805 = vpack.c.b16 %v1893, %v1889
    %v2806 = vpack.c.b16 %v1894, %v1890
    %v2807 = vpack.c.b16 %v1895, %v1891
    %v2808 = vpack.c.b16 %v1900, %v1896
    %v2809 = vpack.c.b16 %v1901, %v1897
    %v2810 = vpack.c.b16 %v1902, %v1898
    %v2811 = vpack.c.b16 %v1903, %v1899
    %v2812 = vpack.c.b16 %v1908, %v1904
    %v2813 = vpack.c.b16 %v1909, %v1905
    %v2814 = vpack.c.b16 %v1910, %v1906
    %v2815 = vpack.c.b16 %v1911, %v1907
    %v2816 = vpack.c.b16 %v1916, %v1912
    %v2817 = vpack.c.b16 %v1917, %v1913
    %v2818 = vpack.c.b16 %v1918, %v1914
    %v2819 = vpack.c.b16 %v1919, %v1915
    %v2820 = vpack.c.b16 %v1924, %v1920
    %v2821 = vpack.c.b16 %v1925, %v1921
    %v2822 = vpack.c.b16 %v1926, %v1922
    %v2823 = vpack.c.b16 %v1927, %v1923
    %v2824 = vpack.c.b16 %v1932, %v1928
    %v2825 = vpack.c.b16 %v1933, %v1929
    %v2826 = vpack.c.b16 %v1934, %v1930
    %v2827 = vpack.c.b16 %v1935, %v1931
    %v2828 = vpack.c.b16 %v1940, %v1936
    %v2829 = vpack.c.b16 %v1941, %v1937
    %v2830 = vpack.c.b16 %v1942, %v1938
    %v2831 = vpack.c.b16 %v1943, %v1939
    %v2832 = vpack.c.b16 %v1948, %v1944
    %v2833 = vpack.c.b16 %v1949, %v1945
    %v2834 = vpack.c.b16 %v1950, %v1946
    %v2835 = vpack.c.b16 %v1951, %v1947
    %v2836 = vpack.c.b16 %v1956, %v1952
    %v2837 = vpack.c.b16 %v1957, %v1953
    %v2838 = vpack.c.b16 %v1958, %v1954
    %v2839 = vpack.c.b16 %v1959, %v1955
    %v2840 = vpack.c.b16 %v1964, %v1960
    %v2841 = vpack.c.b16 %v1965, %v1961
    %v2842 = vpack.c.b16 %v1966, %v1962
    %v2843 = vpack.c.b16 %v1967, %v1963
    %v2844 = vpack.c.b16 %v1972, %v1968
    %v2845 = vpack.c.b16 %v1973, %v1969
    %v2846 = vpack.c.b16 %v1974, %v1970
    %v2847 = vpack.c.b16 %v1975, %v1971
    %v2848 = vpack.c.b16 %v1980, %v1976
    %v2849 = vpack.c.b16 %v1981, %v1977
    %v2850 = vpack.c.b16 %v1982, %v1978
    %v2851 = vpack.c.b16 %v1983, %v1979
    %v2852 = vpack.c.b16 %v1988, %v1984
    %v2853 = vpack.c.b16 %v1989, %v1985
    %v2854 = vpack.c.b16 %v1990, %v1986
    %v2855 = vpack.c.b16 %v1991, %v1987
    %v2856 = vpack.c.b16 %v1996, %v1992
    %v2857 = vpack.c.b16 %v1997, %v1993
    %v2858 = vpack.c.b16 %v1998, %v1994
    %v2859 = vpack.c.b16 %v1999, %v1995
    %v2860 = vpack.c.b16 %v2004, %v2000
    %v2861 = vpack.c.b16 %v2005, %v2001
    %v2862 = vpack.c.b16 %v2006, %v2002
    %v2863 = vpack.c.b16 %v2007, %v2003
    %v2864 = vpack.c.b16 %v2012, %v2008
    %v2865 = vpack.c.b16 %v2013, %v2009
    %v2866 = vpack.c.b16 %v2014, %v2010
    %v2867 = vpack.c.b16 %v2015, %v2011
    %v2868 = vpack.c.b16 %v2020, %v2016
    %v2869 = vpack.c.b16 %v2021, %v2017
    %v2870 = vpack.c.b16 %v2022, %v2018
    %v2871 = vpack.c.b16 %v2023, %v2019
    %v2872 = vpack.c.b16 %v2028, %v2024
    %v2873 = vpack.c.b16 %v2029, %v2025
    %v2874 = vpack.c.b16 %v2030, %v2026
    %v2875 = vpack.c.b16 %v2031, %v2027
    %v2876 = vpack.c.b16 %v2036, %v2032
    %v2877 = vpack.c.b16 %v2037, %v2033
    %v2878 = vpack.c.b16 %v2038, %v2034
    %v2879 = vpack.c.b16 %v2039, %v2035
    %v2880 = vpack.c.b16 %v2044, %v2040
    %v2881 = vpack.c.b16 %v2045, %v2041
    %v2882 = vpack.c.b16 %v2046, %v2042
    %v2883 = vpack.c.b16 %v2047, %v2043
    %v2884 = vpack.c.b16 %v2052, %v2048
    %v2885 = vpack.c.b16 %v2053, %v2049
    %v2886 = vpack.c.b16 %v2054, %v2050
    %v2887 = vpack.c.b16 %v2055, %v2051
    %v2888 = vpack.c.b16 %v2060, %v2056
    %v2889 = vpack.c.b16 %v2061, %v2057
    %v2890 = vpack.c.b16 %v2062, %v2058
    %v2891 = vpack.c.b16 %v2063, %v2059
    %v2892 = vpack.c.b16 %v2068, %v2064
    %v2893 = vpack.c.b16 %v2069, %v2065
    %v2894 = vpack.c.b16 %v2070, %v2066
    %v2895 = vpack.c.b16 %v2071, %v2067
    %v2896 = vpack.c.b16 %v2076, %v2072
    %v2897 = vpack.c.b16 %v2077, %v2073
    %v2898 = vpack.c.b16 %v2078, %v2074
    %v2899 = vpack.c.b16 %v2079, %v2075
    %v2900 = vpack.c.b16 %v2084, %v2080
    %v2901 = vpack.c.b16 %v2085, %v2081
    %v2902 = vpack.c.b16 %v2086, %v2082
    %v2903 = vpack.c.b16 %v2087, %v2083
    %v2904 = vpack.c.b16 %v2092, %v2088
    %v2905 = vpack.c.b16 %v2093, %v2089
    %v2906 = vpack.c.b16 %v2094, %v2090
    %v2907 = vpack.c.b16 %v2095, %v2091
    %v2908 = vpack.c.b16 %v2100, %v2096
    %v2909 = vpack.c.b16 %v2101, %v2097
    %v2910 = vpack.c.b16 %v2102, %v2098
    %v2911 = vpack.c.b16 %v2103, %v2099
    %v2912 = vpack.c.b16 %v2108, %v2104
    %v2913 = vpack.c.b16 %v2109, %v2105
    %v2914 = vpack.c.b16 %v2110, %v2106
    %v2915 = vpack.c.b16 %v2111, %v2107
    %v2916 = vpack.c.b16 %v2116, %v2112
    %v2917 = vpack.c.b16 %v2117, %v2113
    %v2918 = vpack.c.b16 %v2118, %v2114
    %v2919 = vpack.c.b16 %v2119, %v2115
    %v2920 = vpack.c.b16 %v2124, %v2120
    %v2921 = vpack.c.b16 %v2125, %v2121
    %v2922 = vpack.c.b16 %v2126, %v2122
    %v2923 = vpack.c.b16 %v2127, %v2123
    %v2924 = vpack.c.b16 %v2132, %v2128
    %v2925 = vpack.c.b16 %v2133, %v2129
    %v2926 = vpack.c.b16 %v2134, %v2130
    %v2927 = vpack.c.b16 %v2135, %v2131
    %v2928 = vpack.c.b16 %v2140, %v2136
    %v2929 = vpack.c.b16 %v2141, %v2137
    %v2930 = vpack.c.b16 %v2142, %v2138
    %v2931 = vpack.c.b16 %v2143, %v2139
    %v2932 = vpack.c.b16 %v2148, %v2144
    %v2933 = vpack.c.b16 %v2149, %v2145
    %v2934 = vpack.c.b16 %v2150, %v2146
    %v2935 = vpack.c.b16 %v2151, %v2147
    %v2936 = vpack.c.b16 %v2156, %v2152
    %v2937 = vpack.c.b16 %v2157, %v2153
    %v2938 = vpack.c.b16 %v2158, %v2154
    %v2939 = vpack.c.b16 %v2159, %v2155
    %v2940 = vpack.c.b16 %v2164, %v2160
    %v2941 = vpack.c.b16 %v2165, %v2161
    %v2942 = vpack.c.b16 %v2166, %v2162
    %v2943 = vpack.c.b16 %v2167, %v2163
    %v2944 = vpack.c.b16 %v2172, %v2168
    %v2945 = vpack.c.b16 %v2173, %v2169
    %v2946 = vpack.c.b16 %v2174, %v2170
    %v2947 = vpack.c.b16 %v2175, %v2171
    %v2948 = vpack.c.b16 %v2180, %v2176
    %v2949 = vpack.c.b16 %v2181, %v2177
    %v2950 = vpack.c.b16 %v2182, %v2178
    %v2951 = vpack.c.b16 %v2183, %v2179
    %v2952 = vpack.c.b16 %v2188, %v2184
    %v2953 = vpack.c.b16 %v2189, %v2185
    %v2954 = vpack.c.b16 %v2190, %v2186
    %v2955 = vpack.c.b16 %v2191, %v2187
    %v2956 = vpack.c.b16 %v2196, %v2192
    %v2957 = vpack.c.b16 %v2197, %v2193
    %v2958 = vpack.c.b16 %v2198, %v2194
    %v2959 = vpack.c.b16 %v2199, %v2195
    %v2960 = vpack.c.b16 %v2204, %v2200
    %v2961 = vpack.c.b16 %v2205, %v2201
    %v2962 = vpack.c.b16 %v2206, %v2202
    %v2963 = vpack.c.b16 %v2207, %v2203
    %v2964 = vpack.c.b16 %v2212, %v2208
    %v2965 = vpack.c.b16 %v2213, %v2209
    %v2966 = vpack.c.b16 %v2214, %v2210
    %v2967 = vpack.c.b16 %v2215, %v2211
    %v2968 = vpack.c.b16 %v2220, %v2216
    %v2969 = vpack.c.b16 %v2221, %v2217
    %v2970 = vpack.c.b16 %v2222, %v2218
    %v2971 = vpack.c.b16 %v2223, %v2219
    %v2972 = vpack.c.b16 %v2228, %v2224
    %v2973 = vpack.c.b16 %v2229, %v2225
    %v2974 = vpack.c.b16 %v2230, %v2226
    %v2975 = vpack.c.b16 %v2231, %v2227
    %v2976 = vpack.c.b16 %v2236, %v2232
    %v2977 = vpack.c.b16 %v2237, %v2233
    %v2978 = vpack.c.b16 %v2238, %v2234
    %v2979 = vpack.c.b16 %v2239, %v2235
    %v2980 = vpack.c.b16 %v2244, %v2240
    %v2981 = vpack.c.b16 %v2245, %v2241
    %v2982 = vpack.c.b16 %v2246, %v2242
    %v2983 = vpack.c.b16 %v2247, %v2243
    %v2984 = vpack.c.b16 %v2252, %v2248
    %v2985 = vpack.c.b16 %v2253, %v2249
    %v2986 = vpack.c.b16 %v2254, %v2250
    %v2987 = vpack.c.b16 %v2255, %v2251
    %v2988 = vpack.c.b16 %v2260, %v2256
    %v2989 = vpack.c.b16 %v2261, %v2257
    %v2990 = vpack.c.b16 %v2262, %v2258
    %v2991 = vpack.c.b16 %v2263, %v2259
    %v2992 = vpack.c.b16 %v2268, %v2264
    %v2993 = vpack.c.b16 %v2269, %v2265
    %v2994 = vpack.c.b16 %v2270, %v2266
    %v2995 = vpack.c.b16 %v2271, %v2267
    %v2996 = vpack.c.b16 %v2276, %v2272
    %v2997 = vpack.c.b16 %v2277, %v2273
    %v2998 = vpack.c.b16 %v2278, %v2274
    %v2999 = vpack.c.b16 %v2279, %v2275
    %v3000 = vpack.c.b16 %v2284, %v2280
    %v3001 = vpack.c.b16 %v2285, %v2281
    %v3002 = vpack.c.b16 %v2286, %v2282
    %v3003 = vpack.c.b16 %v2287, %v2283
    %v3004 = vpack.c.b16 %v2292, %v2288
    %v3005 = vpack.c.b16 %v2293, %v2289
    %v3006 = vpack.c.b16 %v2294, %v2290
    %v3007 = vpack.c.b16 %v2295, %v2291
    %v3008 = vpack.c.b16 %v2300, %v2296
    %v3009 = vpack.c.b16 %v2301, %v2297
    %v3010 = vpack.c.b16 %v2302, %v2298
    %v3011 = vpack.c.b16 %v2303, %v2299
    %v3012 = vpack.c.b16 %v2308, %v2304
    %v3013 = vpack.c.b16 %v2309, %v2305
    %v3014 = vpack.c.b16 %v2310, %v2306
    %v3015 = vpack.c.b16 %v2311, %v2307
    %v3016 = vpack.c.b16 %v2316, %v2312
    %v3017 = vpack.c.b16 %v2317, %v2313
    %v3018 = vpack.c.b16 %v2318, %v2314
    %v3019 = vpack.c.b16 %v2319, %v2315
    %v3020 = vpack.c.b16 %v2324, %v2320
    %v3021 = vpack.c.b16 %v2325, %v2321
    %v3022 = vpack.c.b16 %v2326, %v2322
    %v3023 = vpack.c.b16 %v2327, %v2323
    %v3024 = vpack.c.b16 %v2332, %v2328
    %v3025 = vpack.c.b16 %v2333, %v2329
    %v3026 = vpack.c.b16 %v2334, %v2330
    %v3027 = vpack.c.b16 %v2335, %v2331
    %v3028 = vpack.c.b16 %v2340, %v2336
    %v3029 = vpack.c.b16 %v2341, %v2337
    %v3030 = vpack.c.b16 %v2342, %v2338
    %v3031 = vpack.c.b16 %v2343, %v2339
    %v3032 = vpack.c.b16 %v2348, %v2344
    %v3033 = vpack.c.b16 %v2349, %v2345
    %v3034 = vpack.c.b16 %v2350, %v2346
    %v3035 = vpack.c.b16 %v2351, %v2347
    %v3036 = vpack.c.b16 %v2356, %v2352
    %v3037 = vpack.c.b16 %v2357, %v2353
    %v3038 = vpack.c.b16 %v2358, %v2354
    %v3039 = vpack.c.b16 %v2359, %v2355
    %v3040 = vpack.c.b16 %v2364, %v2360
    %v3041 = vpack.c.b16 %v2365, %v2361
    %v3042 = vpack.c.b16 %v2366, %v2362
    %v3043 = vpack.c.b16 %v2367, %v2363
    %v3044 = vpack.c.b16 %v2372, %v2368
    %v3045 = vpack.c.b16 %v2373, %v2369
    %v3046 = vpack.c.b16 %v2374, %v2370
    %v3047 = vpack.c.b16 %v2375, %v2371
    %v3048 = vpack.c.b16 %v2380, %v2376
    %v3049 = vpack.c.b16 %v2381, %v2377
    %v3050 = vpack.c.b16 %v2382, %v2378
    %v3051 = vpack.c.b16 %v2383, %v2379
    %v3052 = vpack.c.b16 %v2388, %v2384
    %v3053 = vpack.c.b16 %v2389, %v2385
    %v3054 = vpack.c.b16 %v2390, %v2386
    %v3055 = vpack.c.b16 %v2391, %v2387
    %v3056 = vpack.c.b16 %v2396, %v2392
    %v3057 = vpack.c.b16 %v2397, %v2393
    %v3058 = vpack.c.b16 %v2398, %v2394
    %v3059 = vpack.c.b16 %v2399, %v2395
    %v3060 = vpack.c.b16 %v2404, %v2400
    %v3061 = vpack.c.b16 %v2405, %v2401
    %v3062 = vpack.c.b16 %v2406, %v2402
    %v3063 = vpack.c.b16 %v2407, %v2403
    %v3064 = vpack.c.b16 %v2412, %v2408
    %v3065 = vpack.c.b16 %v2413, %v2409
    %v3066 = vpack.c.b16 %v2414, %v2410
    %v3067 = vpack.c.b16 %v2415, %v2411
    %v3068 = vpack.c.b16 %v2420, %v2416
    %v3069 = vpack.c.b16 %v2421, %v2417
    %v3070 = vpack.c.b16 %v2422, %v2418
    %v3071 = vpack.c.b16 %v2423, %v2419
    %v3072 = vpack.c.b16 %v2428, %v2424
    %v3073 = vpack.c.b16 %v2429, %v2425
    %v3074 = vpack.c.b16 %v2430, %v2426
    %v3075 = vpack.c.b16 %v2431, %v2427
    %v3076 = vpack.c.b16 %v2436, %v2432
    %v3077 = vpack.c.b16 %v2437, %v2433
    %v3078 = vpack.c.b16 %v2438, %v2434
    %v3079 = vpack.c.b16 %v2439, %v2435
    %v3080 = vpack.c.b16 %v2444, %v2440
    %v3081 = vpack.c.b16 %v2445, %v2441
    %v3082 = vpack.c.b16 %v2446, %v2442
    %v3083 = vpack.c.b16 %v2447, %v2443
    %v3084 = vpack.c.b16 %v2452, %v2448
    %v3085 = vpack.c.b16 %v2453, %v2449
    %v3086 = vpack.c.b16 %v2454, %v2450
    %v3087 = vpack.c.b16 %v2455, %v2451
    %v3088 = vpack.c.b16 %v2460, %v2456
    %v3089 = vpack.c.b16 %v2461, %v2457
    %v3090 = vpack.c.b16 %v2462, %v2458
    %v3091 = vpack.c.b16 %v2463, %v2459
    %v3092 = vpack.c.b16 %v2468, %v2464
    %v3093 = vpack.c.b16 %v2469, %v2465
    %v3094 = vpack.c.b16 %v2470, %v2466
    %v3095 = vpack.c.b16 %v2471, %v2467
    %v3096 = vpack.c.b16 %v2476, %v2472
    %v3097 = vpack.c.b16 %v2477, %v2473
    %v3098 = vpack.c.b16 %v2478, %v2474
    %v3099 = vpack.c.b16 %v2479, %v2475
    %v3100 = vpack.c.b16 %v2484, %v2480
    %v3101 = vpack.c.b16 %v2485, %v2481
    %v3102 = vpack.c.b16 %v2486, %v2482
    %v3103 = vpack.c.b16 %v2487, %v2483
    %v3104 = vpack.c.b16 %v2492, %v2488
    %v3105 = vpack.c.b16 %v2493, %v2489
    %v3106 = vpack.c.b16 %v2494, %v2490
    %v3107 = vpack.c.b16 %v2495, %v2491
    %v3108 = vpack.c.b16 %v2500, %v2496
    %v3109 = vpack.c.b16 %v2501, %v2497
    %v3110 = vpack.c.b16 %v2502, %v2498
    %v3111 = vpack.c.b16 %v2503, %v2499
    %v3112 = vpack.c.b16 %v2508, %v2504
    %v3113 = vpack.c.b16 %v2509, %v2505
    %v3114 = vpack.c.b16 %v2510, %v2506
    %v3115 = vpack.c.b16 %v2511, %v2507
    %v3116 = vpack.c.b16 %v2516, %v2512
    %v3117 = vpack.c.b16 %v2517, %v2513
    %v3118 = vpack.c.b16 %v2518, %v2514
    %v3119 = vpack.c.b16 %v2519, %v2515
    %v3120 = vpack.c.b16 %v2524, %v2520
    %v3121 = vpack.c.b16 %v2525, %v2521
    %v3122 = vpack.c.b16 %v2526, %v2522
    %v3123 = vpack.c.b16 %v2527, %v2523
    %v3124 = vpack.c.b16 %v2532, %v2528
    %v3125 = vpack.c.b16 %v2533, %v2529
    %v3126 = vpack.c.b16 %v2534, %v2530
    %v3127 = vpack.c.b16 %v2535, %v2531
    %v3128 = vpack.c.b16 %v2540, %v2536
    %v3129 = vpack.c.b16 %v2541, %v2537
    %v3130 = vpack.c.b16 %v2542, %v2538
    %v3131 = vpack.c.b16 %v2543, %v2539
    %v3132 = vpack.c.b16 %v2548, %v2544
    %v3133 = vpack.c.b16 %v2549, %v2545
    %v3134 = vpack.c.b16 %v2550, %v2546
    %v3135 = vpack.c.b16 %v2551, %v2547
    %v3136 = vpack.c.b16 %v2556, %v2552
    %v3137 = vpack.c.b16 %v2557, %v2553
    %v3138 = vpack.c.b16 %v2558, %v2554
    %v3139 = vpack.c.b16 %v2559, %v2555
    %v3140 = vpack.c.b16 %v2564, %v2560
    %v3141 = vpack.c.b16 %v2565, %v2561
    %v3142 = vpack.c.b16 %v2566, %v2562
    %v3143 = vpack.c.b16 %v2567, %v2563
    %v3144 = vpack.c.b16 %v2572, %v2568
    %v3145 = vpack.c.b16 %v2573, %v2569
    %v3146 = vpack.c.b16 %v2574, %v2570
    %v3147 = vpack.c.b16 %v2575, %v2571
    %v3148 = vpack.c.b16 %v2580, %v2576
    %v3149 = vpack.c.b16 %v2581, %v2577
    %v3150 = vpack.c.b16 %v2582, %v2578
    %v3151 = vpack.c.b16 %v2583, %v2579
    %v3152 = vpack.c.b16 %v2588, %v2584
    %v3153 = vpack.c.b16 %v2589, %v2585
    %v3154 = vpack.c.b16 %v2590, %v2586
    %v3155 = vpack.c.b16 %v2591, %v2587
    %v3156 = vpack.c.b16 %v2596, %v2592
    %v3157 = vpack.c.b16 %v2597, %v2593
    %v3158 = vpack.c.b16 %v2598, %v2594
    %v3159 = vpack.c.b16 %v2599, %v2595
    %v3160 = vpack.c.b16 %v2604, %v2600
    %v3161 = vpack.c.b16 %v2605, %v2601
    %v3162 = vpack.c.b16 %v2606, %v2602
    %v3163 = vpack.c.b16 %v2607, %v2603
    %v3164 = vpack.c.b16 %v2612, %v2608
    %v3165 = vpack.c.b16 %v2613, %v2609
    %v3166 = vpack.c.b16 %v2614, %v2610
    %v3167 = vpack.c.b16 %v2615, %v2611
    %v3168 = vpack.c.b16 %v2620, %v2616
    %v3169 = vpack.c.b16 %v2621, %v2617
    %v3170 = vpack.c.b16 %v2622, %v2618
    %v3171 = vpack.c.b16 %v2623, %v2619
    %v3172 = vpack.c.b16 %v2628, %v2624
    %v3173 = vpack.c.b16 %v2629, %v2625
    %v3174 = vpack.c.b16 %v2630, %v2626
    %v3175 = vpack.c.b16 %v2631, %v2627
    %v3176 = vpack.c.b16 %v2636, %v2632
    %v3177 = vpack.c.b16 %v2637, %v2633
    %v3178 = vpack.c.b16 %v2638, %v2634
    %v3179 = vpack.c.b16 %v2639, %v2635
    %v3180 = vpack.c.b16 %v2644, %v2640
    %v3181 = vpack.c.b16 %v2645, %v2641
    %v3182 = vpack.c.b16 %v2646, %v2642
    %v3183 = vpack.c.b16 %v2647, %v2643
    %v3184 = vpack.c.b16 %v2652, %v2648
    %v3185 = vpack.c.b16 %v2653, %v2649
    %v3186 = vpack.c.b16 %v2654, %v2650
    %v3187 = vpack.c.b16 %v2655, %v2651
    %v3188 = vpack.c.b16 %v2660, %v2656
    %v3189 = vpack.c.b16 %v2661, %v2657
    %v3190 = vpack.c.b16 %v2662, %v2658
    %v3191 = vpack.c.b16 %v2663, %v2659
    %v3192 = vpack.c.b16 %v2668, %v2664
    %v3193 = vpack.c.b16 %v2669, %v2665
    %v3194 = vpack.c.b16 %v2670, %v2666
    %v3195 = vpack.c.b16 %v2671, %v2667
    %v3196 = vpack.c.b16 %v2676, %v2672
    %v3197 = vpack.c.b16 %v2677, %v2673
    %v3198 = vpack.c.b16 %v2678, %v2674
    %v3199 = vpack.c.b16 %v2679, %v2675
    %v3200 = vpack.c.b16 %v2684, %v2680
    %v3201 = vpack.c.b16 %v2685, %v2681
    %v3202 = vpack.c.b16 %v2686, %v2682
    %v3203 = vpack.c.b16 %v2687, %v2683
    %v3204 = vpack.c.b16 %v2692, %v2688
    %v3205 = vpack.c.b16 %v2693, %v2689
    %v3206 = vpack.c.b16 %v2694, %v2690
    %v3207 = vpack.c.b16 %v2695, %v2691
    %3720 = vmatpush.bf16.msra.mxu0 %v2724
    %3721 = vmatpush.bf16.msra.mxu0 %v2720
    %3722 = vmatpush.bf16.msra.mxu0 %v2716
    %3723 = vmatpush.bf16.msra.mxu0 %v2712
    %3724 = vmatpush.bf16.msra.mxu0 %v2708
    %3725 = vmatpush.bf16.msra.mxu0 %v2704
    %3726 = vmatpush.bf16.msra.mxu0 %v2700
    %3727 = vmatpush.bf16.msra.mxu0 %v2696
    %3728 = vmatmul.bf16.gmra.mxu0 %v622
    %v3729 = vpop.f32.mrf.mxu0
    %v3730 = vadd.f32 %v1152, %v3729
    %v3731 = vpop.f32.mrf.mxu0
    %3732 = vdwg.mxu0
    %3733 = vmatpush.bf16.msra.mxu0 %v2756
    %3734 = vmatpush.bf16.msra.mxu0 %v2752
    %3735 = vmatpush.bf16.msra.mxu0 %v2748
    %3736 = vmatpush.bf16.msra.mxu0 %v2744
    %3737 = vmatpush.bf16.msra.mxu0 %v2740
    %3738 = vmatpush.bf16.msra.mxu0 %v2736
    %3739 = vmatpush.bf16.msra.mxu0 %v2732
    %3740 = vmatpush.bf16.msra.mxu0 %v2728
    %3741 = vmatmul.bf16.gmra.mxu0 %v623
    %v3742 = vpop.f32.mrf.mxu0
    %v3743 = vadd.f32 %v3730, %v3742
    %v3744 = vpop.f32.mrf.mxu0
    %3745 = vdwg.mxu0
    %3746 = vmatpush.bf16.msra.mxu0 %v2788
    %3747 = vmatpush.bf16.msra.mxu0 %v2784
    %3748 = vmatpush.bf16.msra.mxu0 %v2780
    %3749 = vmatpush.bf16.msra.mxu0 %v2776
    %3750 = vmatpush.bf16.msra.mxu0 %v2772
    %3751 = vmatpush.bf16.msra.mxu0 %v2768
    %3752 = vmatpush.bf16.msra.mxu0 %v2764
    %3753 = vmatpush.bf16.msra.mxu0 %v2760
    %3754 = vmatmul.bf16.gmra.mxu0 %v624
    %v3755 = vpop.f32.mrf.mxu0
    %v3756 = vadd.f32 %v3743, %v3755
    %v3757 = vpop.f32.mrf.mxu0
    %3758 = vdwg.mxu0
    %3759 = vmatpush.bf16.msra.mxu0 %v2820
    %3760 = vmatpush.bf16.msra.mxu0 %v2816
    %3761 = vmatpush.bf16.msra.mxu0 %v2812
    %3762 = vmatpush.bf16.msra.mxu0 %v2808
    %3763 = vmatpush.bf16.msra.mxu0 %v2804
    %3764 = vmatpush.bf16.msra.mxu0 %v2800
    %3765 = vmatpush.bf16.msra.mxu0 %v2796
    %3766 = vmatpush.bf16.msra.mxu0 %v2792
    %3767 = vmatmul.bf16.gmra.mxu0 %v625
    %v3768 = vpop.f32.mrf.mxu0
    %v3769 = vadd.f32 %v3756, %v3768
    %v3770 = vpop.f32.mrf.mxu0
    %3771 = vdwg.mxu0
    %3772 = vmatpush.bf16.msra.mxu0 %v2852
    %3773 = vmatpush.bf16.msra.mxu0 %v2848
    %3774 = vmatpush.bf16.msra.mxu0 %v2844
    %3775 = vmatpush.bf16.msra.mxu0 %v2840
    %3776 = vmatpush.bf16.msra.mxu0 %v2836
    %3777 = vmatpush.bf16.msra.mxu0 %v2832
    %3778 = vmatpush.bf16.msra.mxu0 %v2828
    %3779 = vmatpush.bf16.msra.mxu0 %v2824
    %3780 = vmatmul.bf16.gmra.mxu0 %v626
    %v3781 = vpop.f32.mrf.mxu0
    %v3782 = vadd.f32 %v3769, %v3781
    %v3783 = vpop.f32.mrf.mxu0
    %3784 = vdwg.mxu0
    %3785 = vmatpush.bf16.msra.mxu0 %v2884
    %3786 = vmatpush.bf16.msra.mxu0 %v2880
    %3787 = vmatpush.bf16.msra.mxu0 %v2876
    %3788 = vmatpush.bf16.msra.mxu0 %v2872
    %3789 = vmatpush.bf16.msra.mxu0 %v2868
    %3790 = vmatpush.bf16.msra.mxu0 %v2864
    %3791 = vmatpush.bf16.msra.mxu0 %v2860
    %3792 = vmatpush.bf16.msra.mxu0 %v2856
    %3793 = vmatmul.bf16.gmra.mxu0 %v627
    %v3794 = vpop.f32.mrf.mxu0
    %v3795 = vadd.f32 %v3782, %v3794
    %v3796 = vpop.f32.mrf.mxu0
    %3797 = vdwg.mxu0
    %3798 = vmatpush.bf16.msra.mxu0 %v2916
    %3799 = vmatpush.bf16.msra.mxu0 %v2912
    %3800 = vmatpush.bf16.msra.mxu0 %v2908
    %3801 = vmatpush.bf16.msra.mxu0 %v2904
    %3802 = vmatpush.bf16.msra.mxu0 %v2900
    %3803 = vmatpush.bf16.msra.mxu0 %v2896
    %3804 = vmatpush.bf16.msra.mxu0 %v2892
    %3805 = vmatpush.bf16.msra.mxu0 %v2888
    %3806 = vmatmul.bf16.gmra.mxu0 %v628
    %v3807 = vpop.f32.mrf.mxu0
    %v3808 = vadd.f32 %v3795, %v3807
    %v3809 = vpop.f32.mrf.mxu0
    %3810 = vdwg.mxu0
    %3811 = vmatpush.bf16.msra.mxu0 %v2948
    %3812 = vmatpush.bf16.msra.mxu0 %v2944
    %3813 = vmatpush.bf16.msra.mxu0 %v2940
    %3814 = vmatpush.bf16.msra.mxu0 %v2936
    %3815 = vmatpush.bf16.msra.mxu0 %v2932
    %3816 = vmatpush.bf16.msra.mxu0 %v2928
    %3817 = vmatpush.bf16.msra.mxu0 %v2924
    %3818 = vmatpush.bf16.msra.mxu0 %v2920
    %3819 = vmatmul.bf16.gmra.mxu0 %v629
    %v3820 = vpop.f32.mrf.mxu0
    %v3821 = vadd.f32 %v3808, %v3820
    %v3822 = vpop.f32.mrf.mxu0
    %3823 = vdwg.mxu0
    %3824 = vmatpush.bf16.msra.mxu0 %v2980
    %3825 = vmatpush.bf16.msra.mxu0 %v2976
    %3826 = vmatpush.bf16.msra.mxu0 %v2972
    %3827 = vmatpush.bf16.msra.mxu0 %v2968
    %3828 = vmatpush.bf16.msra.mxu0 %v2964
    %3829 = vmatpush.bf16.msra.mxu0 %v2960
    %3830 = vmatpush.bf16.msra.mxu0 %v2956
    %3831 = vmatpush.bf16.msra.mxu0 %v2952
    %3832 = vmatmul.bf16.gmra.mxu0 %v630
    %v3833 = vpop.f32.mrf.mxu0
    %v3834 = vadd.f32 %v3821, %v3833
    %v3835 = vpop.f32.mrf.mxu0
    %3836 = vdwg.mxu0
    %3837 = vmatpush.bf16.msra.mxu0 %v3012
    %3838 = vmatpush.bf16.msra.mxu0 %v3008
    %3839 = vmatpush.bf16.msra.mxu0 %v3004
    %3840 = vmatpush.bf16.msra.mxu0 %v3000
    %3841 = vmatpush.bf16.msra.mxu0 %v2996
    %3842 = vmatpush.bf16.msra.mxu0 %v2992
    %3843 = vmatpush.bf16.msra.mxu0 %v2988
    %3844 = vmatpush.bf16.msra.mxu0 %v2984
    %3845 = vmatmul.bf16.gmra.mxu0 %v631
    %v3846 = vpop.f32.mrf.mxu0
    %v3847 = vadd.f32 %v3834, %v3846
    %v3848 = vpop.f32.mrf.mxu0
    %3849 = vdwg.mxu0
    %3850 = vmatpush.bf16.msra.mxu0 %v3044
    %3851 = vmatpush.bf16.msra.mxu0 %v3040
    %3852 = vmatpush.bf16.msra.mxu0 %v3036
    %3853 = vmatpush.bf16.msra.mxu0 %v3032
    %3854 = vmatpush.bf16.msra.mxu0 %v3028
    %3855 = vmatpush.bf16.msra.mxu0 %v3024
    %3856 = vmatpush.bf16.msra.mxu0 %v3020
    %3857 = vmatpush.bf16.msra.mxu0 %v3016
    %3858 = vmatmul.bf16.gmra.mxu0 %v632
    %v3859 = vpop.f32.mrf.mxu0
    %v3860 = vadd.f32 %v3847, %v3859
    %v3861 = vpop.f32.mrf.mxu0
    %3862 = vdwg.mxu0
    %3863 = vmatpush.bf16.msra.mxu0 %v3076
    %3864 = vmatpush.bf16.msra.mxu0 %v3072
    %3865 = vmatpush.bf16.msra.mxu0 %v3068
    %3866 = vmatpush.bf16.msra.mxu0 %v3064
    %3867 = vmatpush.bf16.msra.mxu0 %v3060
    %3868 = vmatpush.bf16.msra.mxu0 %v3056
    %3869 = vmatpush.bf16.msra.mxu0 %v3052
    %3870 = vmatpush.bf16.msra.mxu0 %v3048
    %3871 = vmatmul.bf16.gmra.mxu0 %v633
    %v3872 = vpop.f32.mrf.mxu0
    %v3873 = vadd.f32 %v3860, %v3872
    %v3874 = vpop.f32.mrf.mxu0
    %3875 = vdwg.mxu0
    %3876 = vmatpush.bf16.msra.mxu0 %v3108
    %3877 = vmatpush.bf16.msra.mxu0 %v3104
    %3878 = vmatpush.bf16.msra.mxu0 %v3100
    %3879 = vmatpush.bf16.msra.mxu0 %v3096
    %3880 = vmatpush.bf16.msra.mxu0 %v3092
    %3881 = vmatpush.bf16.msra.mxu0 %v3088
    %3882 = vmatpush.bf16.msra.mxu0 %v3084
    %3883 = vmatpush.bf16.msra.mxu0 %v3080
    %3884 = vmatmul.bf16.gmra.mxu0 %v634
    %v3885 = vpop.f32.mrf.mxu0
    %v3886 = vadd.f32 %v3873, %v3885
    %v3887 = vpop.f32.mrf.mxu0
    %3888 = vdwg.mxu0
    %3889 = vmatpush.bf16.msra.mxu0 %v3140
    %3890 = vmatpush.bf16.msra.mxu0 %v3136
    %3891 = vmatpush.bf16.msra.mxu0 %v3132
    %3892 = vmatpush.bf16.msra.mxu0 %v3128
    %3893 = vmatpush.bf16.msra.mxu0 %v3124
    %3894 = vmatpush.bf16.msra.mxu0 %v3120
    %3895 = vmatpush.bf16.msra.mxu0 %v3116
    %3896 = vmatpush.bf16.msra.mxu0 %v3112
    %3897 = vmatmul.bf16.gmra.mxu0 %v635
    %v3898 = vpop.f32.mrf.mxu0
    %v3899 = vadd.f32 %v3886, %v3898
    %v3900 = vpop.f32.mrf.mxu0
    %3901 = vdwg.mxu0
    %3902 = vmatpush.bf16.msra.mxu0 %v3172
    %3903 = vmatpush.bf16.msra.mxu0 %v3168
    %3904 = vmatpush.bf16.msra.mxu0 %v3164
    %3905 = vmatpush.bf16.msra.mxu0 %v3160
    %3906 = vmatpush.bf16.msra.mxu0 %v3156
    %3907 = vmatpush.bf16.msra.mxu0 %v3152
    %3908 = vmatpush.bf16.msra.mxu0 %v3148
    %3909 = vmatpush.bf16.msra.mxu0 %v3144
    %3910 = vmatmul.bf16.gmra.mxu0 %v636
    %v3911 = vpop.f32.mrf.mxu0
    %v3912 = vadd.f32 %v3899, %v3911
    %v3913 = vpop.f32.mrf.mxu0
    %3914 = vdwg.mxu0
    %3915 = vmatpush.bf16.msra.mxu0 %v3204
    %3916 = vmatpush.bf16.msra.mxu0 %v3200
    %3917 = vmatpush.bf16.msra.mxu0 %v3196
    %3918 = vmatpush.bf16.msra.mxu0 %v3192
    %3919 = vmatpush.bf16.msra.mxu0 %v3188
    %3920 = vmatpush.bf16.msra.mxu0 %v3184
    %3921 = vmatpush.bf16.msra.mxu0 %v3180
    %3922 = vmatpush.bf16.msra.mxu0 %v3176
    %3923 = vmatmul.bf16.gmra.mxu0 %v637
    %v3924 = vpop.f32.mrf.mxu0
    %v3925 = vadd.f32 %v3912, %v3924
    %v3926 = vpop.f32.mrf.mxu0
    %3927 = vdwg.mxu0
    %3928 = vmatpush.bf16.msra.mxu0 %v2725
    %3929 = vmatpush.bf16.msra.mxu0 %v2721
    %3930 = vmatpush.bf16.msra.mxu0 %v2717
    %3931 = vmatpush.bf16.msra.mxu0 %v2713
    %3932 = vmatpush.bf16.msra.mxu0 %v2709
    %3933 = vmatpush.bf16.msra.mxu0 %v2705
    %3934 = vmatpush.bf16.msra.mxu0 %v2701
    %3935 = vmatpush.bf16.msra.mxu0 %v2697
    %3936 = vmatmul.bf16.gmra.mxu0 %v622
    %v3937 = vpop.f32.mrf.mxu0
    %v3938 = vadd.f32 %v1153, %v3937
    %v3939 = vpop.f32.mrf.mxu0
    %3940 = vdwg.mxu0
    %3941 = vmatpush.bf16.msra.mxu0 %v2757
    %3942 = vmatpush.bf16.msra.mxu0 %v2753
    %3943 = vmatpush.bf16.msra.mxu0 %v2749
    %3944 = vmatpush.bf16.msra.mxu0 %v2745
    %3945 = vmatpush.bf16.msra.mxu0 %v2741
    %3946 = vmatpush.bf16.msra.mxu0 %v2737
    %3947 = vmatpush.bf16.msra.mxu0 %v2733
    %3948 = vmatpush.bf16.msra.mxu0 %v2729
    %3949 = vmatmul.bf16.gmra.mxu0 %v623
    %v3950 = vpop.f32.mrf.mxu0
    %v3951 = vadd.f32 %v3938, %v3950
    %v3952 = vpop.f32.mrf.mxu0
    %3953 = vdwg.mxu0
    %3954 = vmatpush.bf16.msra.mxu0 %v2789
    %3955 = vmatpush.bf16.msra.mxu0 %v2785
    %3956 = vmatpush.bf16.msra.mxu0 %v2781
    %3957 = vmatpush.bf16.msra.mxu0 %v2777
    %3958 = vmatpush.bf16.msra.mxu0 %v2773
    %3959 = vmatpush.bf16.msra.mxu0 %v2769
    %3960 = vmatpush.bf16.msra.mxu0 %v2765
    %3961 = vmatpush.bf16.msra.mxu0 %v2761
    %3962 = vmatmul.bf16.gmra.mxu0 %v624
    %v3963 = vpop.f32.mrf.mxu0
    %v3964 = vadd.f32 %v3951, %v3963
    %v3965 = vpop.f32.mrf.mxu0
    %3966 = vdwg.mxu0
    %3967 = vmatpush.bf16.msra.mxu0 %v2821
    %3968 = vmatpush.bf16.msra.mxu0 %v2817
    %3969 = vmatpush.bf16.msra.mxu0 %v2813
    %3970 = vmatpush.bf16.msra.mxu0 %v2809
    %3971 = vmatpush.bf16.msra.mxu0 %v2805
    %3972 = vmatpush.bf16.msra.mxu0 %v2801
    %3973 = vmatpush.bf16.msra.mxu0 %v2797
    %3974 = vmatpush.bf16.msra.mxu0 %v2793
    %3975 = vmatmul.bf16.gmra.mxu0 %v625
    %v3976 = vpop.f32.mrf.mxu0
    %v3977 = vadd.f32 %v3964, %v3976
    %v3978 = vpop.f32.mrf.mxu0
    %3979 = vdwg.mxu0
    %3980 = vmatpush.bf16.msra.mxu0 %v2853
    %3981 = vmatpush.bf16.msra.mxu0 %v2849
    %3982 = vmatpush.bf16.msra.mxu0 %v2845
    %3983 = vmatpush.bf16.msra.mxu0 %v2841
    %3984 = vmatpush.bf16.msra.mxu0 %v2837
    %3985 = vmatpush.bf16.msra.mxu0 %v2833
    %3986 = vmatpush.bf16.msra.mxu0 %v2829
    %3987 = vmatpush.bf16.msra.mxu0 %v2825
    %3988 = vmatmul.bf16.gmra.mxu0 %v626
    %v3989 = vpop.f32.mrf.mxu0
    %v3990 = vadd.f32 %v3977, %v3989
    %v3991 = vpop.f32.mrf.mxu0
    %3992 = vdwg.mxu0
    %3993 = vmatpush.bf16.msra.mxu0 %v2885
    %3994 = vmatpush.bf16.msra.mxu0 %v2881
    %3995 = vmatpush.bf16.msra.mxu0 %v2877
    %3996 = vmatpush.bf16.msra.mxu0 %v2873
    %3997 = vmatpush.bf16.msra.mxu0 %v2869
    %3998 = vmatpush.bf16.msra.mxu0 %v2865
    %3999 = vmatpush.bf16.msra.mxu0 %v2861
    %4000 = vmatpush.bf16.msra.mxu0 %v2857
    %4001 = vmatmul.bf16.gmra.mxu0 %v627
    %v4002 = vpop.f32.mrf.mxu0
    %v4003 = vadd.f32 %v3990, %v4002
    %v4004 = vpop.f32.mrf.mxu0
    %4005 = vdwg.mxu0
    %4006 = vmatpush.bf16.msra.mxu0 %v2917
    %4007 = vmatpush.bf16.msra.mxu0 %v2913
    %4008 = vmatpush.bf16.msra.mxu0 %v2909
    %4009 = vmatpush.bf16.msra.mxu0 %v2905
    %4010 = vmatpush.bf16.msra.mxu0 %v2901
    %4011 = vmatpush.bf16.msra.mxu0 %v2897
    %4012 = vmatpush.bf16.msra.mxu0 %v2893
    %4013 = vmatpush.bf16.msra.mxu0 %v2889
    %4014 = vmatmul.bf16.gmra.mxu0 %v628
    %v4015 = vpop.f32.mrf.mxu0
    %v4016 = vadd.f32 %v4003, %v4015
    %v4017 = vpop.f32.mrf.mxu0
    %4018 = vdwg.mxu0
    %4019 = vmatpush.bf16.msra.mxu0 %v2949
    %4020 = vmatpush.bf16.msra.mxu0 %v2945
    %4021 = vmatpush.bf16.msra.mxu0 %v2941
    %4022 = vmatpush.bf16.msra.mxu0 %v2937
    %4023 = vmatpush.bf16.msra.mxu0 %v2933
    %4024 = vmatpush.bf16.msra.mxu0 %v2929
    %4025 = vmatpush.bf16.msra.mxu0 %v2925
    %4026 = vmatpush.bf16.msra.mxu0 %v2921
    %4027 = vmatmul.bf16.gmra.mxu0 %v629
    %v4028 = vpop.f32.mrf.mxu0
    %v4029 = vadd.f32 %v4016, %v4028
    %v4030 = vpop.f32.mrf.mxu0
    %4031 = vdwg.mxu0
    %4032 = vmatpush.bf16.msra.mxu0 %v2981
    %4033 = vmatpush.bf16.msra.mxu0 %v2977
    %4034 = vmatpush.bf16.msra.mxu0 %v2973
    %4035 = vmatpush.bf16.msra.mxu0 %v2969
    %4036 = vmatpush.bf16.msra.mxu0 %v2965
    %4037 = vmatpush.bf16.msra.mxu0 %v2961
    %4038 = vmatpush.bf16.msra.mxu0 %v2957
    %4039 = vmatpush.bf16.msra.mxu0 %v2953
    %4040 = vmatmul.bf16.gmra.mxu0 %v630
    %v4041 = vpop.f32.mrf.mxu0
    %v4042 = vadd.f32 %v4029, %v4041
    %v4043 = vpop.f32.mrf.mxu0
    %4044 = vdwg.mxu0
    %4045 = vmatpush.bf16.msra.mxu0 %v3013
    %4046 = vmatpush.bf16.msra.mxu0 %v3009
    %4047 = vmatpush.bf16.msra.mxu0 %v3005
    %4048 = vmatpush.bf16.msra.mxu0 %v3001
    %4049 = vmatpush.bf16.msra.mxu0 %v2997
    %4050 = vmatpush.bf16.msra.mxu0 %v2993
    %4051 = vmatpush.bf16.msra.mxu0 %v2989
    %4052 = vmatpush.bf16.msra.mxu0 %v2985
    %4053 = vmatmul.bf16.gmra.mxu0 %v631
    %v4054 = vpop.f32.mrf.mxu0
    %v4055 = vadd.f32 %v4042, %v4054
    %v4056 = vpop.f32.mrf.mxu0
    %4057 = vdwg.mxu0
    %4058 = vmatpush.bf16.msra.mxu0 %v3045
    %4059 = vmatpush.bf16.msra.mxu0 %v3041
    %4060 = vmatpush.bf16.msra.mxu0 %v3037
    %4061 = vmatpush.bf16.msra.mxu0 %v3033
    %4062 = vmatpush.bf16.msra.mxu0 %v3029
    %4063 = vmatpush.bf16.msra.mxu0 %v3025
    %4064 = vmatpush.bf16.msra.mxu0 %v3021
    %4065 = vmatpush.bf16.msra.mxu0 %v3017
    %4066 = vmatmul.bf16.gmra.mxu0 %v632
    %v4067 = vpop.f32.mrf.mxu0
    %v4068 = vadd.f32 %v4055, %v4067
    %v4069 = vpop.f32.mrf.mxu0
    %4070 = vdwg.mxu0
    %4071 = vmatpush.bf16.msra.mxu0 %v3077
    %4072 = vmatpush.bf16.msra.mxu0 %v3073
    %4073 = vmatpush.bf16.msra.mxu0 %v3069
    %4074 = vmatpush.bf16.msra.mxu0 %v3065
    %4075 = vmatpush.bf16.msra.mxu0 %v3061
    %4076 = vmatpush.bf16.msra.mxu0 %v3057
    %4077 = vmatpush.bf16.msra.mxu0 %v3053
    %4078 = vmatpush.bf16.msra.mxu0 %v3049
    %4079 = vmatmul.bf16.gmra.mxu0 %v633
    %v4080 = vpop.f32.mrf.mxu0
    %v4081 = vadd.f32 %v4068, %v4080
    %v4082 = vpop.f32.mrf.mxu0
    %4083 = vdwg.mxu0
    %4084 = vmatpush.bf16.msra.mxu0 %v3109
    %4085 = vmatpush.bf16.msra.mxu0 %v3105
    %4086 = vmatpush.bf16.msra.mxu0 %v3101
    %4087 = vmatpush.bf16.msra.mxu0 %v3097
    %4088 = vmatpush.bf16.msra.mxu0 %v3093
    %4089 = vmatpush.bf16.msra.mxu0 %v3089
    %4090 = vmatpush.bf16.msra.mxu0 %v3085
    %4091 = vmatpush.bf16.msra.mxu0 %v3081
    %4092 = vmatmul.bf16.gmra.mxu0 %v634
    %v4093 = vpop.f32.mrf.mxu0
    %v4094 = vadd.f32 %v4081, %v4093
    %v4095 = vpop.f32.mrf.mxu0
    %4096 = vdwg.mxu0
    %4097 = vmatpush.bf16.msra.mxu0 %v3141
    %4098 = vmatpush.bf16.msra.mxu0 %v3137
    %4099 = vmatpush.bf16.msra.mxu0 %v3133
    %4100 = vmatpush.bf16.msra.mxu0 %v3129
    %4101 = vmatpush.bf16.msra.mxu0 %v3125
    %4102 = vmatpush.bf16.msra.mxu0 %v3121
    %4103 = vmatpush.bf16.msra.mxu0 %v3117
    %4104 = vmatpush.bf16.msra.mxu0 %v3113
    %4105 = vmatmul.bf16.gmra.mxu0 %v635
    %v4106 = vpop.f32.mrf.mxu0
    %v4107 = vadd.f32 %v4094, %v4106
    %v4108 = vpop.f32.mrf.mxu0
    %4109 = vdwg.mxu0
    %4110 = vmatpush.bf16.msra.mxu0 %v3173
    %4111 = vmatpush.bf16.msra.mxu0 %v3169
    %4112 = vmatpush.bf16.msra.mxu0 %v3165
    %4113 = vmatpush.bf16.msra.mxu0 %v3161
    %4114 = vmatpush.bf16.msra.mxu0 %v3157
    %4115 = vmatpush.bf16.msra.mxu0 %v3153
    %4116 = vmatpush.bf16.msra.mxu0 %v3149
    %4117 = vmatpush.bf16.msra.mxu0 %v3145
    %4118 = vmatmul.bf16.gmra.mxu0 %v636
    %v4119 = vpop.f32.mrf.mxu0
    %v4120 = vadd.f32 %v4107, %v4119
    %v4121 = vpop.f32.mrf.mxu0
    %4122 = vdwg.mxu0
    %4123 = vmatpush.bf16.msra.mxu0 %v3205
    %4124 = vmatpush.bf16.msra.mxu0 %v3201
    %4125 = vmatpush.bf16.msra.mxu0 %v3197
    %4126 = vmatpush.bf16.msra.mxu0 %v3193
    %4127 = vmatpush.bf16.msra.mxu0 %v3189
    %4128 = vmatpush.bf16.msra.mxu0 %v3185
    %4129 = vmatpush.bf16.msra.mxu0 %v3181
    %4130 = vmatpush.bf16.msra.mxu0 %v3177
    %4131 = vmatmul.bf16.gmra.mxu0 %v637
    %v4132 = vpop.f32.mrf.mxu0
    %v4133 = vadd.f32 %v4120, %v4132
    %v4134 = vpop.f32.mrf.mxu0
    %4135 = vdwg.mxu0
    %4136 = vmatpush.bf16.msra.mxu0 %v2726
    %4137 = vmatpush.bf16.msra.mxu0 %v2722
    %4138 = vmatpush.bf16.msra.mxu0 %v2718
    %4139 = vmatpush.bf16.msra.mxu0 %v2714
    %4140 = vmatpush.bf16.msra.mxu0 %v2710
    %4141 = vmatpush.bf16.msra.mxu0 %v2706
    %4142 = vmatpush.bf16.msra.mxu0 %v2702
    %4143 = vmatpush.bf16.msra.mxu0 %v2698
    %4144 = vmatmul.bf16.gmra.mxu0 %v622
    %v4145 = vpop.f32.mrf.mxu0
    %v4146 = vadd.f32 %v1154, %v4145
    %v4147 = vpop.f32.mrf.mxu0
    %4148 = vdwg.mxu0
    %4149 = vmatpush.bf16.msra.mxu0 %v2758
    %4150 = vmatpush.bf16.msra.mxu0 %v2754
    %4151 = vmatpush.bf16.msra.mxu0 %v2750
    %4152 = vmatpush.bf16.msra.mxu0 %v2746
    %4153 = vmatpush.bf16.msra.mxu0 %v2742
    %4154 = vmatpush.bf16.msra.mxu0 %v2738
    %4155 = vmatpush.bf16.msra.mxu0 %v2734
    %4156 = vmatpush.bf16.msra.mxu0 %v2730
    %4157 = vmatmul.bf16.gmra.mxu0 %v623
    %v4158 = vpop.f32.mrf.mxu0
    %v4159 = vadd.f32 %v4146, %v4158
    %v4160 = vpop.f32.mrf.mxu0
    %4161 = vdwg.mxu0
    %4162 = vmatpush.bf16.msra.mxu0 %v2790
    %4163 = vmatpush.bf16.msra.mxu0 %v2786
    %4164 = vmatpush.bf16.msra.mxu0 %v2782
    %4165 = vmatpush.bf16.msra.mxu0 %v2778
    %4166 = vmatpush.bf16.msra.mxu0 %v2774
    %4167 = vmatpush.bf16.msra.mxu0 %v2770
    %4168 = vmatpush.bf16.msra.mxu0 %v2766
    %4169 = vmatpush.bf16.msra.mxu0 %v2762
    %4170 = vmatmul.bf16.gmra.mxu0 %v624
    %v4171 = vpop.f32.mrf.mxu0
    %v4172 = vadd.f32 %v4159, %v4171
    %v4173 = vpop.f32.mrf.mxu0
    %4174 = vdwg.mxu0
    %4175 = vmatpush.bf16.msra.mxu0 %v2822
    %4176 = vmatpush.bf16.msra.mxu0 %v2818
    %4177 = vmatpush.bf16.msra.mxu0 %v2814
    %4178 = vmatpush.bf16.msra.mxu0 %v2810
    %4179 = vmatpush.bf16.msra.mxu0 %v2806
    %4180 = vmatpush.bf16.msra.mxu0 %v2802
    %4181 = vmatpush.bf16.msra.mxu0 %v2798
    %4182 = vmatpush.bf16.msra.mxu0 %v2794
    %4183 = vmatmul.bf16.gmra.mxu0 %v625
    %v4184 = vpop.f32.mrf.mxu0
    %v4185 = vadd.f32 %v4172, %v4184
    %v4186 = vpop.f32.mrf.mxu0
    %4187 = vdwg.mxu0
    %4188 = vmatpush.bf16.msra.mxu0 %v2854
    %4189 = vmatpush.bf16.msra.mxu0 %v2850
    %4190 = vmatpush.bf16.msra.mxu0 %v2846
    %4191 = vmatpush.bf16.msra.mxu0 %v2842
    %4192 = vmatpush.bf16.msra.mxu0 %v2838
    %4193 = vmatpush.bf16.msra.mxu0 %v2834
    %4194 = vmatpush.bf16.msra.mxu0 %v2830
    %4195 = vmatpush.bf16.msra.mxu0 %v2826
    %4196 = vmatmul.bf16.gmra.mxu0 %v626
    %v4197 = vpop.f32.mrf.mxu0
    %v4198 = vadd.f32 %v4185, %v4197
    %v4199 = vpop.f32.mrf.mxu0
    %4200 = vdwg.mxu0
    %4201 = vmatpush.bf16.msra.mxu0 %v2886
    %4202 = vmatpush.bf16.msra.mxu0 %v2882
    %4203 = vmatpush.bf16.msra.mxu0 %v2878
    %4204 = vmatpush.bf16.msra.mxu0 %v2874
    %4205 = vmatpush.bf16.msra.mxu0 %v2870
    %4206 = vmatpush.bf16.msra.mxu0 %v2866
    %4207 = vmatpush.bf16.msra.mxu0 %v2862
    %4208 = vmatpush.bf16.msra.mxu0 %v2858
    %4209 = vmatmul.bf16.gmra.mxu0 %v627
    %v4210 = vpop.f32.mrf.mxu0
    %v4211 = vadd.f32 %v4198, %v4210
    %v4212 = vpop.f32.mrf.mxu0
    %4213 = vdwg.mxu0
    %4214 = vmatpush.bf16.msra.mxu0 %v2918
    %4215 = vmatpush.bf16.msra.mxu0 %v2914
    %4216 = vmatpush.bf16.msra.mxu0 %v2910
    %4217 = vmatpush.bf16.msra.mxu0 %v2906
    %4218 = vmatpush.bf16.msra.mxu0 %v2902
    %4219 = vmatpush.bf16.msra.mxu0 %v2898
    %4220 = vmatpush.bf16.msra.mxu0 %v2894
    %4221 = vmatpush.bf16.msra.mxu0 %v2890
    %4222 = vmatmul.bf16.gmra.mxu0 %v628
    %v4223 = vpop.f32.mrf.mxu0
    %v4224 = vadd.f32 %v4211, %v4223
    %v4225 = vpop.f32.mrf.mxu0
    %4226 = vdwg.mxu0
    %4227 = vmatpush.bf16.msra.mxu0 %v2950
    %4228 = vmatpush.bf16.msra.mxu0 %v2946
    %4229 = vmatpush.bf16.msra.mxu0 %v2942
    %4230 = vmatpush.bf16.msra.mxu0 %v2938
    %4231 = vmatpush.bf16.msra.mxu0 %v2934
    %4232 = vmatpush.bf16.msra.mxu0 %v2930
    %4233 = vmatpush.bf16.msra.mxu0 %v2926
    %4234 = vmatpush.bf16.msra.mxu0 %v2922
    %4235 = vmatmul.bf16.gmra.mxu0 %v629
    %v4236 = vpop.f32.mrf.mxu0
    %v4237 = vadd.f32 %v4224, %v4236
    %v4238 = vpop.f32.mrf.mxu0
    %4239 = vdwg.mxu0
    %4240 = vmatpush.bf16.msra.mxu0 %v2982
    %4241 = vmatpush.bf16.msra.mxu0 %v2978
    %4242 = vmatpush.bf16.msra.mxu0 %v2974
    %4243 = vmatpush.bf16.msra.mxu0 %v2970
    %4244 = vmatpush.bf16.msra.mxu0 %v2966
    %4245 = vmatpush.bf16.msra.mxu0 %v2962
    %4246 = vmatpush.bf16.msra.mxu0 %v2958
    %4247 = vmatpush.bf16.msra.mxu0 %v2954
    %4248 = vmatmul.bf16.gmra.mxu0 %v630
    %v4249 = vpop.f32.mrf.mxu0
    %v4250 = vadd.f32 %v4237, %v4249
    %v4251 = vpop.f32.mrf.mxu0
    %4252 = vdwg.mxu0
    %4253 = vmatpush.bf16.msra.mxu0 %v3014
    %4254 = vmatpush.bf16.msra.mxu0 %v3010
    %4255 = vmatpush.bf16.msra.mxu0 %v3006
    %4256 = vmatpush.bf16.msra.mxu0 %v3002
    %4257 = vmatpush.bf16.msra.mxu0 %v2998
    %4258 = vmatpush.bf16.msra.mxu0 %v2994
    %4259 = vmatpush.bf16.msra.mxu0 %v2990
    %4260 = vmatpush.bf16.msra.mxu0 %v2986
    %4261 = vmatmul.bf16.gmra.mxu0 %v631
    %v4262 = vpop.f32.mrf.mxu0
    %v4263 = vadd.f32 %v4250, %v4262
    %v4264 = vpop.f32.mrf.mxu0
    %4265 = vdwg.mxu0
    %4266 = vmatpush.bf16.msra.mxu0 %v3046
    %4267 = vmatpush.bf16.msra.mxu0 %v3042
    %4268 = vmatpush.bf16.msra.mxu0 %v3038
    %4269 = vmatpush.bf16.msra.mxu0 %v3034
    %4270 = vmatpush.bf16.msra.mxu0 %v3030
    %4271 = vmatpush.bf16.msra.mxu0 %v3026
    %4272 = vmatpush.bf16.msra.mxu0 %v3022
    %4273 = vmatpush.bf16.msra.mxu0 %v3018
    %4274 = vmatmul.bf16.gmra.mxu0 %v632
    %v4275 = vpop.f32.mrf.mxu0
    %v4276 = vadd.f32 %v4263, %v4275
    %v4277 = vpop.f32.mrf.mxu0
    %4278 = vdwg.mxu0
    %4279 = vmatpush.bf16.msra.mxu0 %v3078
    %4280 = vmatpush.bf16.msra.mxu0 %v3074
    %4281 = vmatpush.bf16.msra.mxu0 %v3070
    %4282 = vmatpush.bf16.msra.mxu0 %v3066
    %4283 = vmatpush.bf16.msra.mxu0 %v3062
    %4284 = vmatpush.bf16.msra.mxu0 %v3058
    %4285 = vmatpush.bf16.msra.mxu0 %v3054
    %4286 = vmatpush.bf16.msra.mxu0 %v3050
    %4287 = vmatmul.bf16.gmra.mxu0 %v633
    %v4288 = vpop.f32.mrf.mxu0
    %v4289 = vadd.f32 %v4276, %v4288
    %v4290 = vpop.f32.mrf.mxu0
    %4291 = vdwg.mxu0
    %4292 = vmatpush.bf16.msra.mxu0 %v3110
    %4293 = vmatpush.bf16.msra.mxu0 %v3106
    %4294 = vmatpush.bf16.msra.mxu0 %v3102
    %4295 = vmatpush.bf16.msra.mxu0 %v3098
    %4296 = vmatpush.bf16.msra.mxu0 %v3094
    %4297 = vmatpush.bf16.msra.mxu0 %v3090
    %4298 = vmatpush.bf16.msra.mxu0 %v3086
    %4299 = vmatpush.bf16.msra.mxu0 %v3082
    %4300 = vmatmul.bf16.gmra.mxu0 %v634
    %v4301 = vpop.f32.mrf.mxu0
    %v4302 = vadd.f32 %v4289, %v4301
    %v4303 = vpop.f32.mrf.mxu0
    %4304 = vdwg.mxu0
    %4305 = vmatpush.bf16.msra.mxu0 %v3142
    %4306 = vmatpush.bf16.msra.mxu0 %v3138
    %4307 = vmatpush.bf16.msra.mxu0 %v3134
    %4308 = vmatpush.bf16.msra.mxu0 %v3130
    %4309 = vmatpush.bf16.msra.mxu0 %v3126
    %4310 = vmatpush.bf16.msra.mxu0 %v3122
    %4311 = vmatpush.bf16.msra.mxu0 %v3118
    %4312 = vmatpush.bf16.msra.mxu0 %v3114
    %4313 = vmatmul.bf16.gmra.mxu0 %v635
    %v4314 = vpop.f32.mrf.mxu0
    %v4315 = vadd.f32 %v4302, %v4314
    %v4316 = vpop.f32.mrf.mxu0
    %4317 = vdwg.mxu0
    %4318 = vmatpush.bf16.msra.mxu0 %v3174
    %4319 = vmatpush.bf16.msra.mxu0 %v3170
    %4320 = vmatpush.bf16.msra.mxu0 %v3166
    %4321 = vmatpush.bf16.msra.mxu0 %v3162
    %4322 = vmatpush.bf16.msra.mxu0 %v3158
    %4323 = vmatpush.bf16.msra.mxu0 %v3154
    %4324 = vmatpush.bf16.msra.mxu0 %v3150
    %4325 = vmatpush.bf16.msra.mxu0 %v3146
    %4326 = vmatmul.bf16.gmra.mxu0 %v636
    %v4327 = vpop.f32.mrf.mxu0
    %v4328 = vadd.f32 %v4315, %v4327
    %v4329 = vpop.f32.mrf.mxu0
    %4330 = vdwg.mxu0
    %4331 = vmatpush.bf16.msra.mxu0 %v3206
    %4332 = vmatpush.bf16.msra.mxu0 %v3202
    %4333 = vmatpush.bf16.msra.mxu0 %v3198
    %4334 = vmatpush.bf16.msra.mxu0 %v3194
    %4335 = vmatpush.bf16.msra.mxu0 %v3190
    %4336 = vmatpush.bf16.msra.mxu0 %v3186
    %4337 = vmatpush.bf16.msra.mxu0 %v3182
    %4338 = vmatpush.bf16.msra.mxu0 %v3178
    %4339 = vmatmul.bf16.gmra.mxu0 %v637
    %v4340 = vpop.f32.mrf.mxu0
    %v4341 = vadd.f32 %v4328, %v4340
    %v4342 = vpop.f32.mrf.mxu0
    %4343 = vdwg.mxu0
    %4344 = vmatpush.bf16.msra.mxu0 %v2727
    %4345 = vmatpush.bf16.msra.mxu0 %v2723
    %4346 = vmatpush.bf16.msra.mxu0 %v2719
    %4347 = vmatpush.bf16.msra.mxu0 %v2715
    %4348 = vmatpush.bf16.msra.mxu0 %v2711
    %4349 = vmatpush.bf16.msra.mxu0 %v2707
    %4350 = vmatpush.bf16.msra.mxu0 %v2703
    %4351 = vmatpush.bf16.msra.mxu0 %v2699
    %4352 = vmatmul.bf16.gmra.mxu0 %v622
    %v4353 = vpop.f32.mrf.mxu0
    %v4354 = vadd.f32 %v1155, %v4353
    %v4355 = vpop.f32.mrf.mxu0
    %4356 = vdwg.mxu0
    %4357 = vmatpush.bf16.msra.mxu0 %v2759
    %4358 = vmatpush.bf16.msra.mxu0 %v2755
    %4359 = vmatpush.bf16.msra.mxu0 %v2751
    %4360 = vmatpush.bf16.msra.mxu0 %v2747
    %4361 = vmatpush.bf16.msra.mxu0 %v2743
    %4362 = vmatpush.bf16.msra.mxu0 %v2739
    %4363 = vmatpush.bf16.msra.mxu0 %v2735
    %4364 = vmatpush.bf16.msra.mxu0 %v2731
    %4365 = vmatmul.bf16.gmra.mxu0 %v623
    %v4366 = vpop.f32.mrf.mxu0
    %v4367 = vadd.f32 %v4354, %v4366
    %v4368 = vpop.f32.mrf.mxu0
    %4369 = vdwg.mxu0
    %4370 = vmatpush.bf16.msra.mxu0 %v2791
    %4371 = vmatpush.bf16.msra.mxu0 %v2787
    %4372 = vmatpush.bf16.msra.mxu0 %v2783
    %4373 = vmatpush.bf16.msra.mxu0 %v2779
    %4374 = vmatpush.bf16.msra.mxu0 %v2775
    %4375 = vmatpush.bf16.msra.mxu0 %v2771
    %4376 = vmatpush.bf16.msra.mxu0 %v2767
    %4377 = vmatpush.bf16.msra.mxu0 %v2763
    %4378 = vmatmul.bf16.gmra.mxu0 %v624
    %v4379 = vpop.f32.mrf.mxu0
    %v4380 = vadd.f32 %v4367, %v4379
    %v4381 = vpop.f32.mrf.mxu0
    %4382 = vdwg.mxu0
    %4383 = vmatpush.bf16.msra.mxu0 %v2823
    %4384 = vmatpush.bf16.msra.mxu0 %v2819
    %4385 = vmatpush.bf16.msra.mxu0 %v2815
    %4386 = vmatpush.bf16.msra.mxu0 %v2811
    %4387 = vmatpush.bf16.msra.mxu0 %v2807
    %4388 = vmatpush.bf16.msra.mxu0 %v2803
    %4389 = vmatpush.bf16.msra.mxu0 %v2799
    %4390 = vmatpush.bf16.msra.mxu0 %v2795
    %4391 = vmatmul.bf16.gmra.mxu0 %v625
    %v4392 = vpop.f32.mrf.mxu0
    %v4393 = vadd.f32 %v4380, %v4392
    %v4394 = vpop.f32.mrf.mxu0
    %4395 = vdwg.mxu0
    %4396 = vmatpush.bf16.msra.mxu0 %v2855
    %4397 = vmatpush.bf16.msra.mxu0 %v2851
    %4398 = vmatpush.bf16.msra.mxu0 %v2847
    %4399 = vmatpush.bf16.msra.mxu0 %v2843
    %4400 = vmatpush.bf16.msra.mxu0 %v2839
    %4401 = vmatpush.bf16.msra.mxu0 %v2835
    %4402 = vmatpush.bf16.msra.mxu0 %v2831
    %4403 = vmatpush.bf16.msra.mxu0 %v2827
    %4404 = vmatmul.bf16.gmra.mxu0 %v626
    %v4405 = vpop.f32.mrf.mxu0
    %v4406 = vadd.f32 %v4393, %v4405
    %v4407 = vpop.f32.mrf.mxu0
    %4408 = vdwg.mxu0
    %4409 = vmatpush.bf16.msra.mxu0 %v2887
    %4410 = vmatpush.bf16.msra.mxu0 %v2883
    %4411 = vmatpush.bf16.msra.mxu0 %v2879
    %4412 = vmatpush.bf16.msra.mxu0 %v2875
    %4413 = vmatpush.bf16.msra.mxu0 %v2871
    %4414 = vmatpush.bf16.msra.mxu0 %v2867
    %4415 = vmatpush.bf16.msra.mxu0 %v2863
    %4416 = vmatpush.bf16.msra.mxu0 %v2859
    %4417 = vmatmul.bf16.gmra.mxu0 %v627
    %v4418 = vpop.f32.mrf.mxu0
    %v4419 = vadd.f32 %v4406, %v4418
    %v4420 = vpop.f32.mrf.mxu0
    %4421 = vdwg.mxu0
    %4422 = vmatpush.bf16.msra.mxu0 %v2919
    %4423 = vmatpush.bf16.msra.mxu0 %v2915
    %4424 = vmatpush.bf16.msra.mxu0 %v2911
    %4425 = vmatpush.bf16.msra.mxu0 %v2907
    %4426 = vmatpush.bf16.msra.mxu0 %v2903
    %4427 = vmatpush.bf16.msra.mxu0 %v2899
    %4428 = vmatpush.bf16.msra.mxu0 %v2895
    %4429 = vmatpush.bf16.msra.mxu0 %v2891
    %4430 = vmatmul.bf16.gmra.mxu0 %v628
    %v4431 = vpop.f32.mrf.mxu0
    %v4432 = vadd.f32 %v4419, %v4431
    %v4433 = vpop.f32.mrf.mxu0
    %4434 = vdwg.mxu0
    %4435 = vmatpush.bf16.msra.mxu0 %v2951
    %4436 = vmatpush.bf16.msra.mxu0 %v2947
    %4437 = vmatpush.bf16.msra.mxu0 %v2943
    %4438 = vmatpush.bf16.msra.mxu0 %v2939
    %4439 = vmatpush.bf16.msra.mxu0 %v2935
    %4440 = vmatpush.bf16.msra.mxu0 %v2931
    %4441 = vmatpush.bf16.msra.mxu0 %v2927
    %4442 = vmatpush.bf16.msra.mxu0 %v2923
    %4443 = vmatmul.bf16.gmra.mxu0 %v629
    %v4444 = vpop.f32.mrf.mxu0
    %v4445 = vadd.f32 %v4432, %v4444
    %v4446 = vpop.f32.mrf.mxu0
    %4447 = vdwg.mxu0
    %4448 = vmatpush.bf16.msra.mxu0 %v2983
    %4449 = vmatpush.bf16.msra.mxu0 %v2979
    %4450 = vmatpush.bf16.msra.mxu0 %v2975
    %4451 = vmatpush.bf16.msra.mxu0 %v2971
    %4452 = vmatpush.bf16.msra.mxu0 %v2967
    %4453 = vmatpush.bf16.msra.mxu0 %v2963
    %4454 = vmatpush.bf16.msra.mxu0 %v2959
    %4455 = vmatpush.bf16.msra.mxu0 %v2955
    %4456 = vmatmul.bf16.gmra.mxu0 %v630
    %v4457 = vpop.f32.mrf.mxu0
    %v4458 = vadd.f32 %v4445, %v4457
    %v4459 = vpop.f32.mrf.mxu0
    %4460 = vdwg.mxu0
    %4461 = vmatpush.bf16.msra.mxu0 %v3015
    %4462 = vmatpush.bf16.msra.mxu0 %v3011
    %4463 = vmatpush.bf16.msra.mxu0 %v3007
    %4464 = vmatpush.bf16.msra.mxu0 %v3003
    %4465 = vmatpush.bf16.msra.mxu0 %v2999
    %4466 = vmatpush.bf16.msra.mxu0 %v2995
    %4467 = vmatpush.bf16.msra.mxu0 %v2991
    %4468 = vmatpush.bf16.msra.mxu0 %v2987
    %4469 = vmatmul.bf16.gmra.mxu0 %v631
    %v4470 = vpop.f32.mrf.mxu0
    %v4471 = vadd.f32 %v4458, %v4470
    %v4472 = vpop.f32.mrf.mxu0
    %4473 = vdwg.mxu0
    %4474 = vmatpush.bf16.msra.mxu0 %v3047
    %4475 = vmatpush.bf16.msra.mxu0 %v3043
    %4476 = vmatpush.bf16.msra.mxu0 %v3039
    %4477 = vmatpush.bf16.msra.mxu0 %v3035
    %4478 = vmatpush.bf16.msra.mxu0 %v3031
    %4479 = vmatpush.bf16.msra.mxu0 %v3027
    %4480 = vmatpush.bf16.msra.mxu0 %v3023
    %4481 = vmatpush.bf16.msra.mxu0 %v3019
    %4482 = vmatmul.bf16.gmra.mxu0 %v632
    %v4483 = vpop.f32.mrf.mxu0
    %v4484 = vadd.f32 %v4471, %v4483
    %v4485 = vpop.f32.mrf.mxu0
    %4486 = vdwg.mxu0
    %4487 = vmatpush.bf16.msra.mxu0 %v3079
    %4488 = vmatpush.bf16.msra.mxu0 %v3075
    %4489 = vmatpush.bf16.msra.mxu0 %v3071
    %4490 = vmatpush.bf16.msra.mxu0 %v3067
    %4491 = vmatpush.bf16.msra.mxu0 %v3063
    %4492 = vmatpush.bf16.msra.mxu0 %v3059
    %4493 = vmatpush.bf16.msra.mxu0 %v3055
    %4494 = vmatpush.bf16.msra.mxu0 %v3051
    %4495 = vmatmul.bf16.gmra.mxu0 %v633
    %v4496 = vpop.f32.mrf.mxu0
    %v4497 = vadd.f32 %v4484, %v4496
    %v4498 = vpop.f32.mrf.mxu0
    %4499 = vdwg.mxu0
    %4500 = vmatpush.bf16.msra.mxu0 %v3111
    %4501 = vmatpush.bf16.msra.mxu0 %v3107
    %4502 = vmatpush.bf16.msra.mxu0 %v3103
    %4503 = vmatpush.bf16.msra.mxu0 %v3099
    %4504 = vmatpush.bf16.msra.mxu0 %v3095
    %4505 = vmatpush.bf16.msra.mxu0 %v3091
    %4506 = vmatpush.bf16.msra.mxu0 %v3087
    %4507 = vmatpush.bf16.msra.mxu0 %v3083
    %4508 = vmatmul.bf16.gmra.mxu0 %v634
    %v4509 = vpop.f32.mrf.mxu0
    %v4510 = vadd.f32 %v4497, %v4509
    %v4511 = vpop.f32.mrf.mxu0
    %4512 = vdwg.mxu0
    %4513 = vmatpush.bf16.msra.mxu0 %v3143
    %4514 = vmatpush.bf16.msra.mxu0 %v3139
    %4515 = vmatpush.bf16.msra.mxu0 %v3135
    %4516 = vmatpush.bf16.msra.mxu0 %v3131
    %4517 = vmatpush.bf16.msra.mxu0 %v3127
    %4518 = vmatpush.bf16.msra.mxu0 %v3123
    %4519 = vmatpush.bf16.msra.mxu0 %v3119
    %4520 = vmatpush.bf16.msra.mxu0 %v3115
    %4521 = vmatmul.bf16.gmra.mxu0 %v635
    %v4522 = vpop.f32.mrf.mxu0
    %v4523 = vadd.f32 %v4510, %v4522
    %v4524 = vpop.f32.mrf.mxu0
    %4525 = vdwg.mxu0
    %4526 = vmatpush.bf16.msra.mxu0 %v3175
    %4527 = vmatpush.bf16.msra.mxu0 %v3171
    %4528 = vmatpush.bf16.msra.mxu0 %v3167
    %4529 = vmatpush.bf16.msra.mxu0 %v3163
    %4530 = vmatpush.bf16.msra.mxu0 %v3159
    %4531 = vmatpush.bf16.msra.mxu0 %v3155
    %4532 = vmatpush.bf16.msra.mxu0 %v3151
    %4533 = vmatpush.bf16.msra.mxu0 %v3147
    %4534 = vmatmul.bf16.gmra.mxu0 %v636
    %v4535 = vpop.f32.mrf.mxu0
    %v4536 = vadd.f32 %v4523, %v4535
    %v4537 = vpop.f32.mrf.mxu0
    %4538 = vdwg.mxu0
    %4539 = vmatpush.bf16.msra.mxu0 %v3207
    %4540 = vmatpush.bf16.msra.mxu0 %v3203
    %4541 = vmatpush.bf16.msra.mxu0 %v3199
    %4542 = vmatpush.bf16.msra.mxu0 %v3195
    %4543 = vmatpush.bf16.msra.mxu0 %v3191
    %4544 = vmatpush.bf16.msra.mxu0 %v3187
    %4545 = vmatpush.bf16.msra.mxu0 %v3183
    %4546 = vmatpush.bf16.msra.mxu0 %v3179
    %4547 = vmatmul.bf16.gmra.mxu0 %v637
    %v4548 = vpop.f32.mrf.mxu0
    %v4549 = vadd.f32 %v4536, %v4548
    %v4550 = vpop.f32.mrf.mxu0
    %4551 = vdwg.mxu0
    %v4552 = vmax.f32 %v3925, 0.0
    %v4553 = vmax.f32 %v4133, 0.0
    %v4554 = vmax.f32 %v4341, 0.0
    %v4555 = vmax.f32 %v4549, 0.0
    %v4556 = vpack.c.bf16 %v4552, %v4552
    %v4557 = vpack.c.bf16 %v4553, %v4553
    %v4558 = vpack.c.bf16 %v4554, %v4554
    %v4559 = vpack.c.bf16 %v4555, %v4555
    %v4560 = vld [vmem:[#allocation11] sm:$0xff]
    %v4561 = vld [vmem:[#allocation11 + $0x8] sm:$0xff]
    %v4562 = vld [vmem:[#allocation11 + $0x10] sm:$0xff]
    %v4563 = vld [vmem:[#allocation11 + $0x18] sm:$0xff]
    %v4564 = vld [vmem:[#allocation11 + $0x20] sm:$0xff]
    %v4565 = vld [vmem:[#allocation11 + $0x28] sm:$0xff]
    %v4566 = vld [vmem:[#allocation11 + $0x30] sm:$0xff]
    %v4567 = vld [vmem:[#allocation11 + $0x38] sm:$0xff]
    %v4568 = vld [vmem:[#allocation11 + $0x40] sm:$0xff]
    %v4569 = vld [vmem:[#allocation11 + $0x48] sm:$0xff]
    %v4570 = vld [vmem:[#allocation11 + $0x50] sm:$0xff]
    %v4571 = vld [vmem:[#allocation11 + $0x58] sm:$0xff]
    %v4572 = vld [vmem:[#allocation11 + $0x60] sm:$0xff]
    %v4573 = vld [vmem:[#allocation11 + $0x68] sm:$0xff]
    %v4574 = vld [vmem:[#allocation11 + $0x70] sm:$0xff]
    %v4575 = vld [vmem:[#allocation11 + $0x78] sm:$0xff]
    %v4576 = vld [vmem:[#allocation11 + $0x80] sm:$0xff]
    %v4577 = vld [vmem:[#allocation11 + $0x88] sm:$0xff]
    %v4578 = vld [vmem:[#allocation11 + $0x90] sm:$0xff]
    %v4579 = vld [vmem:[#allocation11 + $0x98] sm:$0xff]
    %v4580 = vld [vmem:[#allocation11 + $0xa0] sm:$0xff]
    %v4581 = vld [vmem:[#allocation11 + $0xa8] sm:$0xff]
    %v4582 = vld [vmem:[#allocation11 + $0xb0] sm:$0xff]
    %v4583 = vld [vmem:[#allocation11 + $0xb8] sm:$0xff]
    %v4584 = vld [vmem:[#allocation11 + $0xc0] sm:$0xff]
    %v4585 = vld [vmem:[#allocation11 + $0xc8] sm:$0xff]
    %v4586 = vld [vmem:[#allocation11 + $0xd0] sm:$0xff]
    %v4587 = vld [vmem:[#allocation11 + $0xd8] sm:$0xff]
    %v4588 = vld [vmem:[#allocation11 + $0xe0] sm:$0xff]
    %v4589 = vld [vmem:[#allocation11 + $0xe8] sm:$0xff]
    %v4590 = vld [vmem:[#allocation11 + $0xf0] sm:$0xff]
    %v4591 = vld [vmem:[#allocation11 + $0xf8] sm:$0xff]
    %v4592 = vld [vmem:[#allocation11 + $0x100] sm:$0xff]
    %v4593 = vld [vmem:[#allocation11 + $0x108] sm:$0xff]
    %v4594 = vld [vmem:[#allocation11 + $0x110] sm:$0xff]
    %v4595 = vld [vmem:[#allocation11 + $0x118] sm:$0xff]
    %v4596 = vld [vmem:[#allocation11 + $0x120] sm:$0xff]
    %v4597 = vld [vmem:[#allocation11 + $0x128] sm:$0xff]
    %v4598 = vld [vmem:[#allocation11 + $0x130] sm:$0xff]
    %v4599 = vld [vmem:[#allocation11 + $0x138] sm:$0xff]
    %v4600 = vld [vmem:[#allocation11 + $0x140] sm:$0xff]
    %v4601 = vld [vmem:[#allocation11 + $0x148] sm:$0xff]
    %v4602 = vld [vmem:[#allocation11 + $0x150] sm:$0xff]
    %v4603 = vld [vmem:[#allocation11 + $0x158] sm:$0xff]
    %v4604 = vld [vmem:[#allocation11 + $0x160] sm:$0xff]
    %v4605 = vld [vmem:[#allocation11 + $0x168] sm:$0xff]
    %v4606 = vld [vmem:[#allocation11 + $0x170] sm:$0xff]
    %v4607 = vld [vmem:[#allocation11 + $0x178] sm:$0xff]
    %v4608 = vld [vmem:[#allocation11 + $0x180] sm:$0xff]
    %v4609 = vld [vmem:[#allocation11 + $0x188] sm:$0xff]
    %v4610 = vld [vmem:[#allocation11 + $0x190] sm:$0xff]
    %v4611 = vld [vmem:[#allocation11 + $0x198] sm:$0xff]
    %v4612 = vld [vmem:[#allocation11 + $0x1a0] sm:$0xff]
    %v4613 = vld [vmem:[#allocation11 + $0x1a8] sm:$0xff]
    %v4614 = vld [vmem:[#allocation11 + $0x1b0] sm:$0xff]
    %v4615 = vld [vmem:[#allocation11 + $0x1b8] sm:$0xff]
    %v4616 = vld [vmem:[#allocation11 + $0x1c0] sm:$0xff]
    %v4617 = vld [vmem:[#allocation11 + $0x1c8] sm:$0xff]
    %v4618 = vld [vmem:[#allocation11 + $0x1d0] sm:$0xff]
    %v4619 = vld [vmem:[#allocation11 + $0x1d8] sm:$0xff]
    %v4620 = vld [vmem:[#allocation11 + $0x1e0] sm:$0xff]
    %v4621 = vld [vmem:[#allocation11 + $0x1e8] sm:$0xff]
    %v4622 = vld [vmem:[#allocation11 + $0x1f0] sm:$0xff]
    %v4623 = vld [vmem:[#allocation11 + $0x1f8] sm:$0xff]
    %v4624 = vld [vmem:[#allocation13] sm:$0x3]
    %v4626 = vperm.slane %v4624, 0
    %v4627 = vperm.slane %v4624, 1
    %v4694 = vunpack.c.l.b16 %v4560
    %v4695 = vunpack.c.h.b16 %v4560
    %v4696 = vunpack.c.l.b16 %v4561
    %v4697 = vunpack.c.h.b16 %v4561
    %v4698 = vunpack.c.l.b16 %v4562
    %v4699 = vunpack.c.h.b16 %v4562
    %v4700 = vunpack.c.l.b16 %v4563
    %v4701 = vunpack.c.h.b16 %v4563
    %v4702 = vunpack.c.l.b16 %v4564
    %v4703 = vunpack.c.h.b16 %v4564
    %v4704 = vunpack.c.l.b16 %v4565
    %v4705 = vunpack.c.h.b16 %v4565
    %v4706 = vunpack.c.l.b16 %v4566
    %v4707 = vunpack.c.h.b16 %v4566
    %v4708 = vunpack.c.l.b16 %v4567
    %v4709 = vunpack.c.h.b16 %v4567
    %v4710 = vunpack.c.l.b16 %v4568
    %v4711 = vunpack.c.h.b16 %v4568
    %v4712 = vunpack.c.l.b16 %v4569
    %v4713 = vunpack.c.h.b16 %v4569
    %v4714 = vunpack.c.l.b16 %v4570
    %v4715 = vunpack.c.h.b16 %v4570
    %v4716 = vunpack.c.l.b16 %v4571
    %v4717 = vunpack.c.h.b16 %v4571
    %v4718 = vunpack.c.l.b16 %v4572
    %v4719 = vunpack.c.h.b16 %v4572
    %v4720 = vunpack.c.l.b16 %v4573
    %v4721 = vunpack.c.h.b16 %v4573
    %v4722 = vunpack.c.l.b16 %v4574
    %v4723 = vunpack.c.h.b16 %v4574
    %v4724 = vunpack.c.l.b16 %v4575
    %v4725 = vunpack.c.h.b16 %v4575
    %v4726 = vunpack.c.l.b16 %v4576
    %v4727 = vunpack.c.h.b16 %v4576
    %v4728 = vunpack.c.l.b16 %v4577
    %v4729 = vunpack.c.h.b16 %v4577
    %v4730 = vunpack.c.l.b16 %v4578
    %v4731 = vunpack.c.h.b16 %v4578
    %v4732 = vunpack.c.l.b16 %v4579
    %v4733 = vunpack.c.h.b16 %v4579
    %v4734 = vunpack.c.l.b16 %v4580
    %v4735 = vunpack.c.h.b16 %v4580
    %v4736 = vunpack.c.l.b16 %v4581
    %v4737 = vunpack.c.h.b16 %v4581
    %v4738 = vunpack.c.l.b16 %v4582
    %v4739 = vunpack.c.h.b16 %v4582
    %v4740 = vunpack.c.l.b16 %v4583
    %v4741 = vunpack.c.h.b16 %v4583
    %v4742 = vunpack.c.l.b16 %v4584
    %v4743 = vunpack.c.h.b16 %v4584
    %v4744 = vunpack.c.l.b16 %v4585
    %v4745 = vunpack.c.h.b16 %v4585
    %v4746 = vunpack.c.l.b16 %v4586
    %v4747 = vunpack.c.h.b16 %v4586
    %v4748 = vunpack.c.l.b16 %v4587
    %v4749 = vunpack.c.h.b16 %v4587
    %v4750 = vunpack.c.l.b16 %v4588
    %v4751 = vunpack.c.h.b16 %v4588
    %v4752 = vunpack.c.l.b16 %v4589
    %v4753 = vunpack.c.h.b16 %v4589
    %v4754 = vunpack.c.l.b16 %v4590
    %v4755 = vunpack.c.h.b16 %v4590
    %v4756 = vunpack.c.l.b16 %v4591
    %v4757 = vunpack.c.h.b16 %v4591
    %v4758 = vunpack.c.l.b16 %v4592
    %v4759 = vunpack.c.h.b16 %v4592
    %v4760 = vunpack.c.l.b16 %v4593
    %v4761 = vunpack.c.h.b16 %v4593
    %v4762 = vunpack.c.l.b16 %v4594
    %v4763 = vunpack.c.h.b16 %v4594
    %v4764 = vunpack.c.l.b16 %v4595
    %v4765 = vunpack.c.h.b16 %v4595
    %v4766 = vunpack.c.l.b16 %v4596
    %v4767 = vunpack.c.h.b16 %v4596
    %v4768 = vunpack.c.l.b16 %v4597
    %v4769 = vunpack.c.h.b16 %v4597
    %v4770 = vunpack.c.l.b16 %v4598
    %v4771 = vunpack.c.h.b16 %v4598
    %v4772 = vunpack.c.l.b16 %v4599
    %v4773 = vunpack.c.h.b16 %v4599
    %v4774 = vunpack.c.l.b16 %v4600
    %v4775 = vunpack.c.h.b16 %v4600
    %v4776 = vunpack.c.l.b16 %v4601
    %v4777 = vunpack.c.h.b16 %v4601
    %v4778 = vunpack.c.l.b16 %v4602
    %v4779 = vunpack.c.h.b16 %v4602
    %v4780 = vunpack.c.l.b16 %v4603
    %v4781 = vunpack.c.h.b16 %v4603
    %v4782 = vunpack.c.l.b16 %v4604
    %v4783 = vunpack.c.h.b16 %v4604
    %v4784 = vunpack.c.l.b16 %v4605
    %v4785 = vunpack.c.h.b16 %v4605
    %v4786 = vunpack.c.l.b16 %v4606
    %v4787 = vunpack.c.h.b16 %v4606
    %v4788 = vunpack.c.l.b16 %v4607
    %v4789 = vunpack.c.h.b16 %v4607
    %v4790 = vunpack.c.l.b16 %v4608
    %v4791 = vunpack.c.h.b16 %v4608
    %v4792 = vunpack.c.l.b16 %v4609
    %v4793 = vunpack.c.h.b16 %v4609
    %v4794 = vunpack.c.l.b16 %v4610
    %v4795 = vunpack.c.h.b16 %v4610
    %v4796 = vunpack.c.l.b16 %v4611
    %v4797 = vunpack.c.h.b16 %v4611
    %v4798 = vunpack.c.l.b16 %v4612
    %v4799 = vunpack.c.h.b16 %v4612
    %v4800 = vunpack.c.l.b16 %v4613
    %v4801 = vunpack.c.h.b16 %v4613
    %v4802 = vunpack.c.l.b16 %v4614
    %v4803 = vunpack.c.h.b16 %v4614
    %v4804 = vunpack.c.l.b16 %v4615
    %v4805 = vunpack.c.h.b16 %v4615
    %v4806 = vunpack.c.l.b16 %v4616
    %v4807 = vunpack.c.h.b16 %v4616
    %v4808 = vunpack.c.l.b16 %v4617
    %v4809 = vunpack.c.h.b16 %v4617
    %v4810 = vunpack.c.l.b16 %v4618
    %v4811 = vunpack.c.h.b16 %v4618
    %v4812 = vunpack.c.l.b16 %v4619
    %v4813 = vunpack.c.h.b16 %v4619
    %v4814 = vunpack.c.l.b16 %v4620
    %v4815 = vunpack.c.h.b16 %v4620
    %v4816 = vunpack.c.l.b16 %v4621
    %v4817 = vunpack.c.h.b16 %v4621
    %v4818 = vunpack.c.l.b16 %v4622
    %v4819 = vunpack.c.h.b16 %v4622
    %v4820 = vunpack.c.l.b16 %v4623
    %v4821 = vunpack.c.h.b16 %v4623
    %v4822 = vpack.c.b16 %v4696, %v4694
    %v4823 = vpack.c.b16 %v4697, %v4695
    %v4824 = vpack.c.b16 %v4700, %v4698
    %v4825 = vpack.c.b16 %v4701, %v4699
    %v4826 = vpack.c.b16 %v4704, %v4702
    %v4827 = vpack.c.b16 %v4705, %v4703
    %v4828 = vpack.c.b16 %v4708, %v4706
    %v4829 = vpack.c.b16 %v4709, %v4707
    %v4830 = vpack.c.b16 %v4712, %v4710
    %v4831 = vpack.c.b16 %v4713, %v4711
    %v4832 = vpack.c.b16 %v4716, %v4714
    %v4833 = vpack.c.b16 %v4717, %v4715
    %v4834 = vpack.c.b16 %v4720, %v4718
    %v4835 = vpack.c.b16 %v4721, %v4719
    %v4836 = vpack.c.b16 %v4724, %v4722
    %v4837 = vpack.c.b16 %v4725, %v4723
    %v4838 = vpack.c.b16 %v4728, %v4726
    %v4839 = vpack.c.b16 %v4729, %v4727
    %v4840 = vpack.c.b16 %v4732, %v4730
    %v4841 = vpack.c.b16 %v4733, %v4731
    %v4842 = vpack.c.b16 %v4736, %v4734
    %v4843 = vpack.c.b16 %v4737, %v4735
    %v4844 = vpack.c.b16 %v4740, %v4738
    %v4845 = vpack.c.b16 %v4741, %v4739
    %v4846 = vpack.c.b16 %v4744, %v4742
    %v4847 = vpack.c.b16 %v4745, %v4743
    %v4848 = vpack.c.b16 %v4748, %v4746
    %v4849 = vpack.c.b16 %v4749, %v4747
    %v4850 = vpack.c.b16 %v4752, %v4750
    %v4851 = vpack.c.b16 %v4753, %v4751
    %v4852 = vpack.c.b16 %v4756, %v4754
    %v4853 = vpack.c.b16 %v4757, %v4755
    %v4854 = vpack.c.b16 %v4760, %v4758
    %v4855 = vpack.c.b16 %v4761, %v4759
    %v4856 = vpack.c.b16 %v4764, %v4762
    %v4857 = vpack.c.b16 %v4765, %v4763
    %v4858 = vpack.c.b16 %v4768, %v4766
    %v4859 = vpack.c.b16 %v4769, %v4767
    %v4860 = vpack.c.b16 %v4772, %v4770
    %v4861 = vpack.c.b16 %v4773, %v4771
    %v4862 = vpack.c.b16 %v4776, %v4774
    %v4863 = vpack.c.b16 %v4777, %v4775
    %v4864 = vpack.c.b16 %v4780, %v4778
    %v4865 = vpack.c.b16 %v4781, %v4779
    %v4866 = vpack.c.b16 %v4784, %v4782
    %v4867 = vpack.c.b16 %v4785, %v4783
    %v4868 = vpack.c.b16 %v4788, %v4786
    %v4869 = vpack.c.b16 %v4789, %v4787
    %v4870 = vpack.c.b16 %v4792, %v4790
    %v4871 = vpack.c.b16 %v4793, %v4791
    %v4872 = vpack.c.b16 %v4796, %v4794
    %v4873 = vpack.c.b16 %v4797, %v4795
    %v4874 = vpack.c.b16 %v4800, %v4798
    %v4875 = vpack.c.b16 %v4801, %v4799
    %v4876 = vpack.c.b16 %v4804, %v4802
    %v4877 = vpack.c.b16 %v4805, %v4803
    %v4878 = vpack.c.b16 %v4808, %v4806
    %v4879 = vpack.c.b16 %v4809, %v4807
    %v4880 = vpack.c.b16 %v4812, %v4810
    %v4881 = vpack.c.b16 %v4813, %v4811
    %v4882 = vpack.c.b16 %v4816, %v4814
    %v4883 = vpack.c.b16 %v4817, %v4815
    %v4884 = vpack.c.b16 %v4820, %v4818
    %v4885 = vpack.c.b16 %v4821, %v4819
    %4950 = vmatpush.bf16.msra.mxu0 %v4836
    %4951 = vmatpush.bf16.msra.mxu0 %v4834
    %4952 = vmatpush.bf16.msra.mxu0 %v4832
    %4953 = vmatpush.bf16.msra.mxu0 %v4830
    %4954 = vmatpush.bf16.msra.mxu0 %v4828
    %4955 = vmatpush.bf16.msra.mxu0 %v4826
    %4956 = vmatpush.bf16.msra.mxu0 %v4824
    %4957 = vmatpush.bf16.msra.mxu0 %v4822
    %4958 = vmatmul.bf16.gmra.mxu0 %v4556
    %v4959 = vpop.f32.mrf.mxu0
    %v4960 = vadd.f32 %v4626, %v4959
    %v4961 = vpop.f32.mrf.mxu0
    %4962 = vdwg.mxu0
    %4963 = vmatpush.bf16.msra.mxu0 %v4852
    %4964 = vmatpush.bf16.msra.mxu0 %v4850
    %4965 = vmatpush.bf16.msra.mxu0 %v4848
    %4966 = vmatpush.bf16.msra.mxu0 %v4846
    %4967 = vmatpush.bf16.msra.mxu0 %v4844
    %4968 = vmatpush.bf16.msra.mxu0 %v4842
    %4969 = vmatpush.bf16.msra.mxu0 %v4840
    %4970 = vmatpush.bf16.msra.mxu0 %v4838
    %4971 = vmatmul.bf16.gmra.mxu0 %v4557
    %v4972 = vpop.f32.mrf.mxu0
    %v4973 = vadd.f32 %v4960, %v4972
    %v4974 = vpop.f32.mrf.mxu0
    %4975 = vdwg.mxu0
    %4976 = vmatpush.bf16.msra.mxu0 %v4868
    %4977 = vmatpush.bf16.msra.mxu0 %v4866
    %4978 = vmatpush.bf16.msra.mxu0 %v4864
    %4979 = vmatpush.bf16.msra.mxu0 %v4862
    %4980 = vmatpush.bf16.msra.mxu0 %v4860
    %4981 = vmatpush.bf16.msra.mxu0 %v4858
    %4982 = vmatpush.bf16.msra.mxu0 %v4856
    %4983 = vmatpush.bf16.msra.mxu0 %v4854
    %4984 = vmatmul.bf16.gmra.mxu0 %v4558
    %v4985 = vpop.f32.mrf.mxu0
    %v4986 = vadd.f32 %v4973, %v4985
    %v4987 = vpop.f32.mrf.mxu0
    %4988 = vdwg.mxu0
    %4989 = vmatpush.bf16.msra.mxu0 %v4884
    %4990 = vmatpush.bf16.msra.mxu0 %v4882
    %4991 = vmatpush.bf16.msra.mxu0 %v4880
    %4992 = vmatpush.bf16.msra.mxu0 %v4878
    %4993 = vmatpush.bf16.msra.mxu0 %v4876
    %4994 = vmatpush.bf16.msra.mxu0 %v4874
    %4995 = vmatpush.bf16.msra.mxu0 %v4872
    %4996 = vmatpush.bf16.msra.mxu0 %v4870
    %4997 = vmatmul.bf16.gmra.mxu0 %v4559
    %v4998 = vpop.f32.mrf.mxu0
    %v4999 = vadd.f32 %v4986, %v4998
    %v5000 = vpop.f32.mrf.mxu0
    %5001 = vdwg.mxu0
    %5002 = vmatpush.bf16.msra.mxu0 %v4837
    %5003 = vmatpush.bf16.msra.mxu0 %v4835
    %5004 = vmatpush.bf16.msra.mxu0 %v4833
    %5005 = vmatpush.bf16.msra.mxu0 %v4831
    %5006 = vmatpush.bf16.msra.mxu0 %v4829
    %5007 = vmatpush.bf16.msra.mxu0 %v4827
    %5008 = vmatpush.bf16.msra.mxu0 %v4825
    %5009 = vmatpush.bf16.msra.mxu0 %v4823
    %5010 = vmatmul.bf16.gmra.mxu0 %v4556
    %v5011 = vpop.f32.mrf.mxu0
    %v5012 = vadd.f32 %v4627, %v5011
    %v5013 = vpop.f32.mrf.mxu0
    %5014 = vdwg.mxu0
    %5015 = vmatpush.bf16.msra.mxu0 %v4853
    %5016 = vmatpush.bf16.msra.mxu0 %v4851
    %5017 = vmatpush.bf16.msra.mxu0 %v4849
    %5018 = vmatpush.bf16.msra.mxu0 %v4847
    %5019 = vmatpush.bf16.msra.mxu0 %v4845
    %5020 = vmatpush.bf16.msra.mxu0 %v4843
    %5021 = vmatpush.bf16.msra.mxu0 %v4841
    %5022 = vmatpush.bf16.msra.mxu0 %v4839
    %5023 = vmatmul.bf16.gmra.mxu0 %v4557
    %v5024 = vpop.f32.mrf.mxu0
    %v5025 = vadd.f32 %v5012, %v5024
    %v5026 = vpop.f32.mrf.mxu0
    %5027 = vdwg.mxu0
    %5028 = vmatpush.bf16.msra.mxu0 %v4869
    %5029 = vmatpush.bf16.msra.mxu0 %v4867
    %5030 = vmatpush.bf16.msra.mxu0 %v4865
    %5031 = vmatpush.bf16.msra.mxu0 %v4863
    %5032 = vmatpush.bf16.msra.mxu0 %v4861
    %5033 = vmatpush.bf16.msra.mxu0 %v4859
    %5034 = vmatpush.bf16.msra.mxu0 %v4857
    %5035 = vmatpush.bf16.msra.mxu0 %v4855
    %5036 = vmatmul.bf16.gmra.mxu0 %v4558
    %v5037 = vpop.f32.mrf.mxu0
    %v5038 = vadd.f32 %v5025, %v5037
    %v5039 = vpop.f32.mrf.mxu0
    %5040 = vdwg.mxu0
    %5041 = vmatpush.bf16.msra.mxu0 %v4885
    %5042 = vmatpush.bf16.msra.mxu0 %v4883
    %5043 = vmatpush.bf16.msra.mxu0 %v4881
    %5044 = vmatpush.bf16.msra.mxu0 %v4879
    %5045 = vmatpush.bf16.msra.mxu0 %v4877
    %5046 = vmatpush.bf16.msra.mxu0 %v4875
    %5047 = vmatpush.bf16.msra.mxu0 %v4873
    %5048 = vmatpush.bf16.msra.mxu0 %v4871
    %5049 = vmatmul.bf16.gmra.mxu0 %v4559
    %v5050 = vpop.f32.mrf.mxu0
    %v5051 = vadd.f32 %v5038, %v5050
    %v5052 = vpop.f32.mrf.mxu0
    %5053 = vdwg.mxu0
    %v5054 = vmax.f32 %v4999, 0.0
    %v5055 = vmax.f32 %v5051, 0.0
    %v5056 = vpack.c.bf16 %v5054, %v5054
    %v5057 = vpack.c.bf16 %v5055, %v5055
    %v5058 = vld [vmem:[#allocation14] sm:$0xf]
    %v5059 = vld [vmem:[#allocation14 + $0x4] sm:$0xf]
    %v5060 = vld [vmem:[#allocation14 + $0x8] sm:$0xf]
    %v5061 = vld [vmem:[#allocation14 + $0xc] sm:$0xf]
    %v5062 = vld [vmem:[#allocation14 + $0x10] sm:$0xf]
    %v5063 = vld [vmem:[#allocation14 + $0x14] sm:$0xf]
    %v5064 = vld [vmem:[#allocation14 + $0x18] sm:$0xf]
    %v5065 = vld [vmem:[#allocation14 + $0x1c] sm:$0xf]
    %v5066 = vld [vmem:[#allocation14 + $0x20] sm:$0xf]
    %v5067 = vld [vmem:[#allocation14 + $0x24] sm:$0xf]
    %v5068 = vld [vmem:[#allocation14 + $0x28] sm:$0xf]
    %v5069 = vld [vmem:[#allocation14 + $0x2c] sm:$0xf]
    %v5070 = vld [vmem:[#allocation14 + $0x30] sm:$0xf]
    %v5071 = vld [vmem:[#allocation14 + $0x34] sm:$0xf]
    %v5072 = vld [vmem:[#allocation14 + $0x38] sm:$0xf]
    %v5073 = vld [vmem:[#allocation14 + $0x3c] sm:$0xf]
    %v5074 = vld [vmem:[#allocation14 + $0x40] sm:$0xf]
    %v5075 = vld [vmem:[#allocation14 + $0x44] sm:$0xf]
    %v5076 = vld [vmem:[#allocation14 + $0x48] sm:$0xf]
    %v5077 = vld [vmem:[#allocation14 + $0x4c] sm:$0xf]
    %v5078 = vld [vmem:[#allocation14 + $0x50] sm:$0xf]
    %v5079 = vld [vmem:[#allocation14 + $0x54] sm:$0xf]
    %v5080 = vld [vmem:[#allocation14 + $0x58] sm:$0xf]
    %v5081 = vld [vmem:[#allocation14 + $0x5c] sm:$0xf]
    %v5082 = vld [vmem:[#allocation14 + $0x60] sm:$0xf]
    %v5083 = vld [vmem:[#allocation14 + $0x64] sm:$0xf]
    %v5084 = vld [vmem:[#allocation14 + $0x68] sm:$0xf]
    %v5085 = vld [vmem:[#allocation14 + $0x6c] sm:$0xf]
    %v5086 = vld [vmem:[#allocation14 + $0x70] sm:$0xf]
    %v5087 = vld [vmem:[#allocation14 + $0x74] sm:$0xf]
    %v5088 = vld [vmem:[#allocation14 + $0x78] sm:$0xf]
    %v5089 = vld [vmem:[#allocation14 + $0x7c] sm:$0xf]
    %v5090 = vld [vmem:[#allocation16] sm:$0x1]
    %v5092 = vperm.slane %v5090, 0
    %v5126 = vunpack.c.l.b16 %v5058
    %v5127 = vunpack.c.l.b16 %v5059
    %v5128 = vunpack.c.l.b16 %v5060
    %v5129 = vunpack.c.l.b16 %v5061
    %v5130 = vunpack.c.l.b16 %v5062
    %v5131 = vunpack.c.l.b16 %v5063
    %v5132 = vunpack.c.l.b16 %v5064
    %v5133 = vunpack.c.l.b16 %v5065
    %v5134 = vunpack.c.l.b16 %v5066
    %v5135 = vunpack.c.l.b16 %v5067
    %v5136 = vunpack.c.l.b16 %v5068
    %v5137 = vunpack.c.l.b16 %v5069
    %v5138 = vunpack.c.l.b16 %v5070
    %v5139 = vunpack.c.l.b16 %v5071
    %v5140 = vunpack.c.l.b16 %v5072
    %v5141 = vunpack.c.l.b16 %v5073
    %v5142 = vunpack.c.l.b16 %v5074
    %v5143 = vunpack.c.l.b16 %v5075
    %v5144 = vunpack.c.l.b16 %v5076
    %v5145 = vunpack.c.l.b16 %v5077
    %v5146 = vunpack.c.l.b16 %v5078
    %v5147 = vunpack.c.l.b16 %v5079
    %v5148 = vunpack.c.l.b16 %v5080
    %v5149 = vunpack.c.l.b16 %v5081
    %v5150 = vunpack.c.l.b16 %v5082
    %v5151 = vunpack.c.l.b16 %v5083
    %v5152 = vunpack.c.l.b16 %v5084
    %v5153 = vunpack.c.l.b16 %v5085
    %v5154 = vunpack.c.l.b16 %v5086
    %v5155 = vunpack.c.l.b16 %v5087
    %v5156 = vunpack.c.l.b16 %v5088
    %v5157 = vunpack.c.l.b16 %v5089
    %v5158 = vpack.c.b16 %v5127, %v5126
    %v5159 = vpack.c.b16 %v5129, %v5128
    %v5160 = vpack.c.b16 %v5131, %v5130
    %v5161 = vpack.c.b16 %v5133, %v5132
    %v5162 = vpack.c.b16 %v5135, %v5134
    %v5163 = vpack.c.b16 %v5137, %v5136
    %v5164 = vpack.c.b16 %v5139, %v5138
    %v5165 = vpack.c.b16 %v5141, %v5140
    %v5166 = vpack.c.b16 %v5143, %v5142
    %v5167 = vpack.c.b16 %v5145, %v5144
    %v5168 = vpack.c.b16 %v5147, %v5146
    %v5169 = vpack.c.b16 %v5149, %v5148
    %v5170 = vpack.c.b16 %v5151, %v5150
    %v5171 = vpack.c.b16 %v5153, %v5152
    %v5172 = vpack.c.b16 %v5155, %v5154
    %v5173 = vpack.c.b16 %v5157, %v5156
    %5190 = vmatpush.bf16.msra.mxu0 %v5165
    %5191 = vmatpush.bf16.msra.mxu0 %v5164
    %5192 = vmatpush.bf16.msra.mxu0 %v5163
    %5193 = vmatpush.bf16.msra.mxu0 %v5162
    %5194 = vmatpush.bf16.msra.mxu0 %v5161
    %5195 = vmatpush.bf16.msra.mxu0 %v5160
    %5196 = vmatpush.bf16.msra.mxu0 %v5159
    %5197 = vmatpush.bf16.msra.mxu0 %v5158
    %5198 = vmatmul.bf16.gmra.mxu0 %v5056
    %v5199 = vpop.f32.mrf.mxu0
    %v5200 = vadd.f32 %v5092, %v5199
    %v5201 = vpop.f32.mrf.mxu0
    %5202 = vdwg.mxu0
    %5203 = vmatpush.bf16.msra.mxu0 %v5173
    %5204 = vmatpush.bf16.msra.mxu0 %v5172
    %5205 = vmatpush.bf16.msra.mxu0 %v5171
    %5206 = vmatpush.bf16.msra.mxu0 %v5170
    %5207 = vmatpush.bf16.msra.mxu0 %v5169
    %5208 = vmatpush.bf16.msra.mxu0 %v5168
    %5209 = vmatpush.bf16.msra.mxu0 %v5167
    %5210 = vmatpush.bf16.msra.mxu0 %v5166
    %5211 = vmatmul.bf16.gmra.mxu0 %v5057
    %v5212 = vpop.f32.mrf.mxu0
    %v5213 = vadd.f32 %v5200, %v5212
    %v5214 = vpop.f32.mrf.mxu0
    %5215 = vdwg.mxu0
    %5216 = vst [vmem:[#allocation17] sm:$0xff] %v5213
    // Predicated region
    $region74: #{tpu_custom_call.1} parent=1 // pred_check
      _
    $region75: #{tpu_custom_call.1} parent=1 // pred_check_branch
      %5218 = sbr.rel (0) target = $region77
    $region76: #{tpu_custom_call.1} parent=1 // pred_region
      %5220 = vsyncadd [#allocation4], 0
      %s5222 = sshll.u32 [#allocation17], 4
      %s5223 = int_to_ptr.vmem [resolvable:$true] %s5222
      %s5224 = sshll.u32 %s9, 4
      %s5225 = int_to_ptr.hbm [resolvable:$true] %s5224
      %5227 = dma.vmem_to_hbm [thread:$0]  %s5223, 128, %s5225, [#allocation4]
    $region77: #{tpu_custom_call.1} parent=1 // pred_fallthru
      _
    // Predicated region
    $region78: #{tpu_custom_call.1} parent=1 // pred_check
      _
    $region79: #{tpu_custom_call.1} parent=1 // pred_check_branch
      %5229 = sbr.rel (0) target = $region81
    $region80: #{tpu_custom_call.1} parent=1 // pred_region
      %5231 = dma.done [#allocation4], 128
    $region81: #{tpu_custom_call.1} parent=1 // pred_fallthru
      _
    %5232 = vsyncpa [#allocation3], 1
    %5233 = vsyncpa [#allocation6], 1
    %5234 = vsyncpa [#allocation9], 1
    %5235 = vsyncpa [#allocation12], 1
    %5236 = vsyncpa [#allocation15], 1
    %5237 = vsyncpa [#allocation4], 1

</llo_original>
